<compile_context>
chip_gen: v6e
topology: v6e:2x2x1
jax: 0.10.0
libtpu: 0.0.40
codegen_flags: <defaults>
</compile_context>

<pallas_src>
import numpy as np
import jax
import jax.numpy as jnp
from jax import lax
from jax.experimental import pallas as pl
from jax.experimental.pallas import tpu as pltpu


_VMEM = pl.BlockSpec(memory_space=pltpu.MemorySpace.VMEM)


# ---------------- the fused whole-network kernel ----------------

def _make_fused_kernel(n_conv, relu_flags, deltas, N, PPE):
    """Build the single fused forward kernel.

    Activation layout: (channels, N*PPE), where each image occupies PPE lanes
    (the zero-padded (H+2)x(W+2) image flattened row-major, tail-padded to a
    multiple of 128).  Pixel (h, w) of image n sits at column
    n*PPE + (h+1)*(W+2) + (w+1).

    Ref order (all VMEM-resident, no grid):
      x_ref (C0, N*PPE)
      per conv l: taps (9, Co, Ci), bias (Co, 1), channel-mask (Co, 1)
      valid (1, N*PPE)            1 at interior pixels, 0 at padding/tail
      mflat (C_last, N*PPE)       flatten mask scattered to the conv layout
      w1s   (C_last, PPE, HID)    linear1 weight scattered (c-major preserved)
      b1 (1, HID), mh (1, HID), w2 (HID, NCLS), b2 (1, NCLS)
      o_ref (N, NCLS)
    """
    WT = N * PPE

    def kernel(*refs):
        x_ref = refs[0]
        conv_refs = refs[1:1 + 3 * n_conv]
        (valid_ref, mflat_ref, w1s_ref, b1_ref, mh_ref,
         w2_ref, b2_ref, o_ref) = refs[1 + 3 * n_conv:]

        valid = valid_ref[...]                              # (1, WT)
        x = x_ref[...]                                      # (C, WT)

        # ---- conv stack: each 3x3 conv = 9 shifted-tap matmul accumulations
        # on the padded-flat layout.  For interior output columns the shifted
        # read never leaves the image's own padded block; the roll wrap-around
        # only affects non-interior columns, which `valid` zeroes before they
        # can be read again.
        for l in range(n_conv):
            taps_ref = conv_refs[3 * l]                     # (9, Cout, Cin)
            bias = conv_refs[3 * l + 1][...]                # (Cout, 1)
            cmask = conv_refs[3 * l + 2][...]               # (Cout, 1)
            acc = None
            for t, d in enumerate(deltas):
                shifted = x if d == 0 else pltpu.roll(x, shift=(-d) % WT, axis=1)
                part = jnp.dot(taps_ref[t], shifted,
                               preferred_element_type=jnp.float32)
                acc = part if acc is None else acc + part
            acc = acc + bias
            if relu_flags[l]:
                acc = jnp.maximum(acc, 0.0)
            # channel mask; `valid` re-zeroes the padding border / alignment
            # tail so the next conv (and the classifier) see a clean zero-padded
            # image.
            x = acc * cmask * valid                         # (Cout, WT)

        # ---- classifier, computed in the conv's native (C, PPE) layout.
        # The flatten is free because w1 / the flatten mask were scattered to
        # the same (c-major) layout at trace time.
        xm = x * mflat_ref[...]                             # (C, WT)
        C = xm.shape[0]
        b1 = b1_ref[...]                                    # (1, HID)
        h = [b1 for _ in range(N)]                          # per-image accumulators
        for c in range(C):                                  # per-channel accumulation
            w1c = w1s_ref[c]                                # (PPE, HID)
            for n in range(N):
                h[n] = h[n] + jnp.dot(xm[c:c + 1, n * PPE:(n + 1) * PPE], w1c,
                                      preferred_element_type=jnp.float32)
        mh = mh_ref[...]                                    # (1, HID)
        w2 = w2_ref[...]                                    # (HID, NCLS)
        b2 = b2_ref[...]                                    # (1, NCLS)
        outs = [jnp.dot(jnp.maximum(h[n], 0.0) * mh, w2,
                        preferred_element_type=jnp.float32) + b2
                for n in range(N)]
        o_ref[...] = jnp.concatenate(outs, axis=0)          # (N, NCLS)

    return kernel


# ---------------- trace-time operand packing ----------------

def _pad_scatter(a_chw, H, W, PPE):
    """(C, H, W, ...) -> (C, PPE, ...): values placed at padded-flat positions
    (h+1)*(W+2)+(w+1); zeros at the spatial border and the lane-alignment tail."""
    rest = a_chw.shape[3:]
    zero = ((0, 0),) * len(rest)
    ap = jnp.pad(a_chw, ((0, 0), (1, 1), (1, 1)) + zero)
    ap = ap.reshape((a_chw.shape[0], (H + 2) * (W + 2)) + rest)
    return jnp.pad(ap, ((0, 0), (0, PPE - (H + 2) * (W + 2))) + zero)


def fused_forward(x_nchw, convs, mask_flat, w1, b1, mask_h, w2, b2):
    """Single pallas_call for the whole CONV_Mask forward."""
    N, Cin, H, W = x_nchw.shape
    Hp, Wp = H + 2, W + 2
    PP = Hp * Wp
    PPE = ((PP + 127) // 128) * 128       # lane-aligned per-image flat width
    WT = N * PPE
    HID = w1.shape[1]
    NCLS = w2.shape[1]
    C_last = convs[-1][0].shape[-1]
    assert w1.shape[0] == C_last * H * W, "classifier in_features mismatch"
    assert convs[0][0].shape[-2] == Cin, "first conv Cin mismatch"

    # input: zero-pad spatially, flatten, pad to PPE, batch-concat on lanes.
    xp = jnp.pad(x_nchw, ((0, 0), (0, 0), (1, 1), (1, 1))).reshape(N, Cin, PP)
    xp = jnp.pad(xp, ((0, 0), (0, 0), (0, PPE - PP)))
    x_in = jnp.transpose(xp, (1, 0, 2)).reshape(Cin, WT)

    # conv taps (kh-major / kw-minor -> matches `deltas`), bias, channel mask.
    conv_args = []
    for (w_hwio, b, _apply_relu, cmask) in convs:
        co, ci = w_hwio.shape[-1], w_hwio.shape[-2]
        conv_args.append(jnp.transpose(w_hwio, (0, 1, 3, 2)).reshape(9, co, ci))
        conv_args.append(b.reshape(co, 1).astype(jnp.float32))
        cm = jnp.ones((co,), jnp.float32) if cmask is None else cmask
        conv_args.append(cm.reshape(co, 1).astype(jnp.float32))
    deltas = tuple((kh - 1) * Wp + (kw - 1) for kh in range(3) for kw in range(3))
    relu_flags = tuple(c[2] for c in convs)

    # interior-pixel mask (also zeroes the lane-alignment tail).
    v = jnp.zeros((Hp, Wp), jnp.float32).at[1:H + 1, 1:W + 1].set(1.0)
    v = jnp.pad(v.reshape(1, PP), ((0, 0), (0, PPE - PP)))
    valid = jnp.tile(v, (1, N))                                     # (1, WT)

    # flatten mask + linear1 weight scattered into the conv layout; c-major row
    # order c*H*W + h*W + w is preserved, identical to torch's x.view(N, -1).
    mflat_t = jnp.tile(_pad_scatter(mask_flat.reshape(C_last, H, W), H, W, PPE),
                       (1, N))                                      # (C_last, WT)
    w1s = _pad_scatter(w1.reshape(C_last, H, W, HID), H, W, PPE)    # (C_last, PPE, HID)
    # note: cast w1s + the classifier activation to bf16 (f32 accumulation) if
    # the model is scaled up; at 2048x32 it is marginal and f32 is exact.

    kernel = _make_fused_kernel(len(convs), relu_flags, deltas, N, PPE)
    n_inputs = 1 + 3 * len(convs) + 7
    return pl.pallas_call(
        kernel,
        out_shape=jax.ShapeDtypeStruct((N, NCLS), jnp.float32),
        in_specs=[_VMEM] * n_inputs,
        out_specs=_VMEM,
        # no grid, no "parallel" batch axis: at N=2 the whole forward is a few
        # us of launch-bound work on a single TensorCore; the ~0.6 MiB working
        # set is far below even v5e's 16 MiB scoped-VMEM default.
    )(x_in, *conv_args, valid, mflat_t, w1s,
      b1.reshape(1, HID), mask_h.reshape(1, HID), w2, b2.reshape(1, NCLS))


# ---------------- CONV_Mask forward (module-structure parsing) ----------------

def conv_mask_forward(x_nchw, features, classifier, masks,
                      mask_featuresid, mask_classifierid):
    # parse the feature stack into fusable conv(+ReLU)(+channel-mask) units
    convs = []          # [w_hwio, bias, apply_relu, channel_mask]
    k = 0
    for i, layer in enumerate(features):
        kind = layer[0]
        if kind == "conv":
            convs.append([layer[1], layer[2], False, None])
        elif kind == "relu":
            assert convs, "ReLU without a preceding conv"
            convs[-1][2] = True
        else:
            raise ValueError(f"unsupported feature layer: {kind}")
        if i in mask_featuresid:
            assert convs and kind == "relu", \
                "fused kernel expects feature masks to follow a ReLU"
            convs[-1][3] = masks[k]
            k += 1

    # flatten mask
    mask_flat = masks[k]
    k += 1

    # classifier: [linear, relu(+mask), linear]
    assert (len(classifier) == 3 and classifier[0][0] == "linear"
            and classifier[1][0] == "relu" and classifier[2][0] == "linear"
            and tuple(mask_classifierid) == (1,)), \
        "fused kernel expects classifier = [linear, relu(+mask), linear]"
    w1, b1 = classifier[0][1], classifier[0][2]
    w2, b2 = classifier[2][1], classifier[2][2]
    mask_h = masks[k]
    k += 1

    return fused_forward(x_nchw, convs, mask_flat, w1, b1, mask_h, w2, b2)


# ---------------- pure-JAX reference (NCHW, torch semantics) ----------------

def reference_forward(x_nchw, features, classifier, masks,
                      mask_featuresid, mask_classifierid):
    x = x_nchw
    k = 0
    for i, layer in enumerate(features):
        if layer[0] == "conv":
            w_hwio, b = layer[1], layer[2]
            w_oihw = jnp.transpose(w_hwio, (3, 2, 0, 1))
            x = lax.conv_general_dilated(
                x, w_oihw, window_strides=(1, 1), padding="SAME",
                dimension_numbers=("NCHW", "OIHW", "NCHW")) + b.reshape(1, -1, 1, 1)
        elif layer[0] == "relu":
            x = jnp.maximum(x, 0.0)
        if i in mask_featuresid:
            x = x * masks[k].reshape(1, -1, 1, 1)
            k += 1
    x = x.reshape(x.shape[0], -1)
    x = x * masks[k]
    k += 1
    for i, layer in enumerate(classifier):
        if layer[0] == "linear":
            x = x @ layer[1] + layer[2]
        elif layer[0] == "relu":
            x = jnp.maximum(x, 0.0)
        if i in mask_classifierid:
            x = x * masks[k]
            k += 1
    return x


if __name__ == "__main__":
    key = jax.random.PRNGKey(0)
    ks = jax.random.split(key, 13)

    N, Cin, H, W = 2, 4, 16, 16
    C1, C2 = 8, 8
    HIDDEN, NCLS = 32, 10
    D = C2 * H * W  # 2048

    x = jax.random.normal(ks[0], (N, Cin, H, W), jnp.float32)

    w1 = jax.random.normal(ks[1], (3, 3, Cin, C1), jnp.float32) * 0.1
    b1 = jax.random.normal(ks[2], (C1,), jnp.float32) * 0.1
    w2 = jax.random.normal(ks[3], (3, 3, C1, C2), jnp.float32) * 0.1
    b2 = jax.random.normal(ks[4], (C2,), jnp.float32) * 0.1
    wf1 = jax.random.normal(ks[5], (D, HIDDEN), jnp.float32) * 0.05
    bf1 = jax.random.normal(ks[6], (HIDDEN,), jnp.float32) * 0.05
    wf2 = jax.random.normal(ks[7], (HIDDEN, NCLS), jnp.float32) * 0.1
    bf2 = jax.random.normal(ks[8], (NCLS,), jnp.float32) * 0.1

    # mask list order matches the module: feature masks, flatten mask, classifier mask
    masks = [
        jax.random.uniform(ks[9], (C1,), jnp.float32),
        jax.random.uniform(ks[10], (C2,), jnp.float32),
        jax.random.uniform(ks[11], (D,), jnp.float32),
        jax.random.uniform(ks[12], (HIDDEN,), jnp.float32),
    ]

    features = [("conv", w1, b1), ("relu",), ("conv", w2, b2), ("relu",)]
    classifier = [("linear", wf1, bf1), ("relu",), ("linear", wf2, bf2)]
    mask_featuresid = (1, 3)
    mask_classifierid = (1,)

    fwd = jax.jit(lambda inp: conv_mask_forward(
        inp, features, classifier, masks, mask_featuresid, mask_classifierid))
    out = jax.block_until_ready(fwd(x))

    ref = reference_forward(x, features, classifier, masks,
                            mask_featuresid, mask_classifierid)
    np.testing.assert_allclose(np.asarray(out), np.asarray(ref),
                               rtol=2e-3, atol=2e-3)
    print("KERNEL_OK")
</pallas_src>

<mosaic_0001>
module attributes {stable_mosaic.version = 11 : i64} {
  func.func @kernel(%arg0: memref<4x768xf32, #tpu.memory_space<vmem>>, %arg1: memref<9x8x4xf32, #tpu.memory_space<vmem>>, %arg2: memref<8x1xf32, #tpu.memory_space<vmem>>, %arg3: memref<8x1xf32, #tpu.memory_space<vmem>>, %arg4: memref<9x8x8xf32, #tpu.memory_space<vmem>>, %arg5: memref<8x1xf32, #tpu.memory_space<vmem>>, %arg6: memref<8x1xf32, #tpu.memory_space<vmem>>, %arg7: memref<1x768xf32, #tpu.memory_space<vmem>>, %arg8: memref<8x768xf32, #tpu.memory_space<vmem>>, %arg9: memref<8x384x32xf32, #tpu.memory_space<vmem>>, %arg10: memref<1x32xf32, #tpu.memory_space<vmem>>, %arg11: memref<1x32xf32, #tpu.memory_space<vmem>>, %arg12: memref<32x10xf32, #tpu.memory_space<vmem>>, %arg13: memref<1x10xf32, #tpu.memory_space<vmem>>, %arg14: memref<2x10xf32, #tpu.memory_space<vmem>>) attributes {dimension_semantics = [], scalar_prefetch = 0 : i64, scratch_operands = 0 : i64, tpu.core_type = #tpu.core_type<tc>} {
    %c0 = arith.constant 0 : index
    %c0_0 = arith.constant 0 : index
    %0 = vector.load %arg7[%c0, %c0_0] : memref<1x768xf32, #tpu.memory_space<vmem>>, vector<1x768xf32>
    %c0_1 = arith.constant 0 : index
    %c0_2 = arith.constant 0 : index
    %1 = vector.load %arg0[%c0_1, %c0_2] : memref<4x768xf32, #tpu.memory_space<vmem>>, vector<4x768xf32>
    %c0_3 = arith.constant 0 : index
    %c0_4 = arith.constant 0 : index
    %2 = vector.load %arg2[%c0_3, %c0_4] : memref<8x1xf32, #tpu.memory_space<vmem>>, vector<8x1xf32>
    %c0_5 = arith.constant 0 : index
    %c0_6 = arith.constant 0 : index
    %3 = vector.load %arg3[%c0_5, %c0_6] : memref<8x1xf32, #tpu.memory_space<vmem>>, vector<8x1xf32>
    %c19_i32 = arith.constant 19 : i32
    %4 = tpu.dynamic_rotate %1 by %c19_i32 dim 1 : vector<4x768xf32>, i32 -> vector<4x768xf32>
    %c0_7 = arith.constant 0 : index
    %c0_8 = arith.constant 0 : index
    %c0_9 = arith.constant 0 : index
    %5 = vector.load %arg1[%c0_7, %c0_8, %c0_9] : memref<9x8x4xf32, #tpu.memory_space<vmem>>, vector<1x8x4xf32>
    %6 = vector.shape_cast %5 : vector<1x8x4xf32> to vector<8x4xf32>
    %cst = arith.constant dense<0.000000e+00> : vector<8x768xf32>
    %7 = tpu.matmul %6, %4, %cst {dimension_numbers = #tpu.dot_dimension_numbers<[1], [0], [0], [1], [0, 0, 1, 1], [], []>} : vector<8x4xf32>, vector<4x768xf32>, vector<8x768xf32> -> vector<8x768xf32>
    %c18_i32 = arith.constant 18 : i32
    %8 = tpu.dynamic_rotate %1 by %c18_i32 dim 1 : vector<4x768xf32>, i32 -> vector<4x768xf32>
    %c1 = arith.constant 1 : index
    %c0_10 = arith.constant 0 : index
    %c0_11 = arith.constant 0 : index
    %9 = vector.load %arg1[%c1, %c0_10, %c0_11] : memref<9x8x4xf32, #tpu.memory_space<vmem>>, vector<1x8x4xf32>
    %10 = vector.shape_cast %9 : vector<1x8x4xf32> to vector<8x4xf32>
    %cst_12 = arith.constant dense<0.000000e+00> : vector<8x768xf32>
    %11 = tpu.matmul %10, %8, %cst_12 {dimension_numbers = #tpu.dot_dimension_numbers<[1], [0], [0], [1], [0, 0, 1, 1], [], []>} : vector<8x4xf32>, vector<4x768xf32>, vector<8x768xf32> -> vector<8x768xf32>
    %12 = arith.addf %7, %11 : vector<8x768xf32>
    %c17_i32 = arith.constant 17 : i32
    %13 = tpu.dynamic_rotate %1 by %c17_i32 dim 1 : vector<4x768xf32>, i32 -> vector<4x768xf32>
    %c2 = arith.constant 2 : index
    %c0_13 = arith.constant 0 : index
    %c0_14 = arith.constant 0 : index
    %14 = vector.load %arg1[%c2, %c0_13, %c0_14] : memref<9x8x4xf32, #tpu.memory_space<vmem>>, vector<1x8x4xf32>
    %15 = vector.shape_cast %14 : vector<1x8x4xf32> to vector<8x4xf32>
    %cst_15 = arith.constant dense<0.000000e+00> : vector<8x768xf32>
    %16 = tpu.matmul %15, %13, %cst_15 {dimension_numbers = #tpu.dot_dimension_numbers<[1], [0], [0], [1], [0, 0, 1, 1], [], []>} : vector<8x4xf32>, vector<4x768xf32>, vector<8x768xf32> -> vector<8x768xf32>
    %17 = arith.addf %12, %16 : vector<8x768xf32>
    %c1_i32 = arith.constant 1 : i32
    %18 = tpu.dynamic_rotate %1 by %c1_i32 dim 1 : vector<4x768xf32>, i32 -> vector<4x768xf32>
    %c3 = arith.constant 3 : index
    %c0_16 = arith.constant 0 : index
    %c0_17 = arith.constant 0 : index
    %19 = vector.load %arg1[%c3, %c0_16, %c0_17] : memref<9x8x4xf32, #tpu.memory_space<vmem>>, vector<1x8x4xf32>
    %20 = vector.shape_cast %19 : vector<1x8x4xf32> to vector<8x4xf32>
    %cst_18 = arith.constant dense<0.000000e+00> : vector<8x768xf32>
    %21 = tpu.matmul %20, %18, %cst_18 {dimension_numbers = #tpu.dot_dimension_numbers<[1], [0], [0], [1], [0, 0, 1, 1], [], []>} : vector<8x4xf32>, vector<4x768xf32>, vector<8x768xf32> -> vector<8x768xf32>
    %22 = arith.addf %17, %21 : vector<8x768xf32>
    %c4 = arith.constant 4 : index
    %c0_19 = arith.constant 0 : index
    %c0_20 = arith.constant 0 : index
    %23 = vector.load %arg1[%c4, %c0_19, %c0_20] : memref<9x8x4xf32, #tpu.memory_space<vmem>>, vector<1x8x4xf32>
    %24 = vector.shape_cast %23 : vector<1x8x4xf32> to vector<8x4xf32>
    %cst_21 = arith.constant dense<0.000000e+00> : vector<8x768xf32>
    %25 = tpu.matmul %24, %1, %cst_21 {dimension_numbers = #tpu.dot_dimension_numbers<[1], [0], [0], [1], [0, 0, 1, 1], [], []>} : vector<8x4xf32>, vector<4x768xf32>, vector<8x768xf32> -> vector<8x768xf32>
    %26 = arith.addf %22, %25 : vector<8x768xf32>
    %c767_i32 = arith.constant 767 : i32
    %27 = tpu.dynamic_rotate %1 by %c767_i32 dim 1 : vector<4x768xf32>, i32 -> vector<4x768xf32>
    %c5 = arith.constant 5 : index
    %c0_22 = arith.constant 0 : index
    %c0_23 = arith.constant 0 : index
    %28 = vector.load %arg1[%c5, %c0_22, %c0_23] : memref<9x8x4xf32, #tpu.memory_space<vmem>>, vector<1x8x4xf32>
    %29 = vector.shape_cast %28 : vector<1x8x4xf32> to vector<8x4xf32>
    %cst_24 = arith.constant dense<0.000000e+00> : vector<8x768xf32>
    %30 = tpu.matmul %29, %27, %cst_24 {dimension_numbers = #tpu.dot_dimension_numbers<[1], [0], [0], [1], [0, 0, 1, 1], [], []>} : vector<8x4xf32>, vector<4x768xf32>, vector<8x768xf32> -> vector<8x768xf32>
    %31 = arith.addf %26, %30 : vector<8x768xf32>
    %c751_i32 = arith.constant 751 : i32
    %32 = tpu.dynamic_rotate %1 by %c751_i32 dim 1 : vector<4x768xf32>, i32 -> vector<4x768xf32>
    %c6 = arith.constant 6 : index
    %c0_25 = arith.constant 0 : index
    %c0_26 = arith.constant 0 : index
    %33 = vector.load %arg1[%c6, %c0_25, %c0_26] : memref<9x8x4xf32, #tpu.memory_space<vmem>>, vector<1x8x4xf32>
    %34 = vector.shape_cast %33 : vector<1x8x4xf32> to vector<8x4xf32>
    %cst_27 = arith.constant dense<0.000000e+00> : vector<8x768xf32>
    %35 = tpu.matmul %34, %32, %cst_27 {dimension_numbers = #tpu.dot_dimension_numbers<[1], [0], [0], [1], [0, 0, 1, 1], [], []>} : vector<8x4xf32>, vector<4x768xf32>, vector<8x768xf32> -> vector<8x768xf32>
    %36 = arith.addf %31, %35 : vector<8x768xf32>
    %c750_i32 = arith.constant 750 : i32
    %37 = tpu.dynamic_rotate %1 by %c750_i32 dim 1 : vector<4x768xf32>, i32 -> vector<4x768xf32>
    %c7 = arith.constant 7 : index
    %c0_28 = arith.constant 0 : index
    %c0_29 = arith.constant 0 : index
    %38 = vector.load %arg1[%c7, %c0_28, %c0_29] : memref<9x8x4xf32, #tpu.memory_space<vmem>>, vector<1x8x4xf32>
    %39 = vector.shape_cast %38 : vector<1x8x4xf32> to vector<8x4xf32>
    %cst_30 = arith.constant dense<0.000000e+00> : vector<8x768xf32>
    %40 = tpu.matmul %39, %37, %cst_30 {dimension_numbers = #tpu.dot_dimension_numbers<[1], [0], [0], [1], [0, 0, 1, 1], [], []>} : vector<8x4xf32>, vector<4x768xf32>, vector<8x768xf32> -> vector<8x768xf32>
    %41 = arith.addf %36, %40 : vector<8x768xf32>
    %c749_i32 = arith.constant 749 : i32
    %42 = tpu.dynamic_rotate %1 by %c749_i32 dim 1 : vector<4x768xf32>, i32 -> vector<4x768xf32>
    %c8 = arith.constant 8 : index
    %c0_31 = arith.constant 0 : index
    %c0_32 = arith.constant 0 : index
    %43 = vector.load %arg1[%c8, %c0_31, %c0_32] : memref<9x8x4xf32, #tpu.memory_space<vmem>>, vector<1x8x4xf32>
    %44 = vector.shape_cast %43 : vector<1x8x4xf32> to vector<8x4xf32>
    %cst_33 = arith.constant dense<0.000000e+00> : vector<8x768xf32>
    %45 = tpu.matmul %44, %42, %cst_33 {dimension_numbers = #tpu.dot_dimension_numbers<[1], [0], [0], [1], [0, 0, 1, 1], [], []>} : vector<8x4xf32>, vector<4x768xf32>, vector<8x768xf32> -> vector<8x768xf32>
    %46 = arith.addf %41, %45 : vector<8x768xf32>
    %47 = vector.broadcast %2 : vector<8x1xf32> to vector<8x768xf32>
    %48 = arith.addf %46, %47 : vector<8x768xf32>
    %cst_34 = arith.constant 0.000000e+00 : f32
    %49 = vector.broadcast %cst_34 : f32 to vector<8x768xf32>
    %50 = arith.maximumf %48, %49 : vector<8x768xf32>
    %51 = vector.broadcast %3 : vector<8x1xf32> to vector<8x768xf32>
    %52 = arith.mulf %50, %51 : vector<8x768xf32>
    %53 = vector.broadcast %0 : vector<1x768xf32> to vector<8x768xf32>
    %54 = arith.mulf %52, %53 : vector<8x768xf32>
    %c0_35 = arith.constant 0 : index
    %c0_36 = arith.constant 0 : index
    %55 = vector.load %arg5[%c0_35, %c0_36] : memref<8x1xf32, #tpu.memory_space<vmem>>, vector<8x1xf32>
    %c0_37 = arith.constant 0 : index
    %c0_38 = arith.constant 0 : index
    %56 = vector.load %arg6[%c0_37, %c0_38] : memref<8x1xf32, #tpu.memory_space<vmem>>, vector<8x1xf32>
    %c19_i32_39 = arith.constant 19 : i32
    %57 = tpu.dynamic_rotate %54 by %c19_i32_39 dim 1 : vector<8x768xf32>, i32 -> vector<8x768xf32>
    %c0_40 = arith.constant 0 : index
    %c0_41 = arith.constant 0 : index
    %c0_42 = arith.constant 0 : index
    %58 = vector.load %arg4[%c0_40, %c0_41, %c0_42] : memref<9x8x8xf32, #tpu.memory_space<vmem>>, vector<1x8x8xf32>
    %59 = vector.shape_cast %58 : vector<1x8x8xf32> to vector<8x8xf32>
    %cst_43 = arith.constant dense<0.000000e+00> : vector<8x768xf32>
    %60 = tpu.matmul %59, %57, %cst_43 {dimension_numbers = #tpu.dot_dimension_numbers<[1], [0], [0], [1], [0, 0, 1, 1], [], []>} : vector<8x8xf32>, vector<8x768xf32>, vector<8x768xf32> -> vector<8x768xf32>
    %c18_i32_44 = arith.constant 18 : i32
    %61 = tpu.dynamic_rotate %54 by %c18_i32_44 dim 1 : vector<8x768xf32>, i32 -> vector<8x768xf32>
    %c1_45 = arith.constant 1 : index
    %c0_46 = arith.constant 0 : index
    %c0_47 = arith.constant 0 : index
    %62 = vector.load %arg4[%c1_45, %c0_46, %c0_47] : memref<9x8x8xf32, #tpu.memory_space<vmem>>, vector<1x8x8xf32>
    %63 = vector.shape_cast %62 : vector<1x8x8xf32> to vector<8x8xf32>
    %cst_48 = arith.constant dense<0.000000e+00> : vector<8x768xf32>
    %64 = tpu.matmul %63, %61, %cst_48 {dimension_numbers = #tpu.dot_dimension_numbers<[1], [0], [0], [1], [0, 0, 1, 1], [], []>} : vector<8x8xf32>, vector<8x768xf32>, vector<8x768xf32> -> vector<8x768xf32>
    %65 = arith.addf %60, %64 : vector<8x768xf32>
    %c17_i32_49 = arith.constant 17 : i32
    %66 = tpu.dynamic_rotate %54 by %c17_i32_49 dim 1 : vector<8x768xf32>, i32 -> vector<8x768xf32>
    %c2_50 = arith.constant 2 : index
    %c0_51 = arith.constant 0 : index
    %c0_52 = arith.constant 0 : index
    %67 = vector.load %arg4[%c2_50, %c0_51, %c0_52] : memref<9x8x8xf32, #tpu.memory_space<vmem>>, vector<1x8x8xf32>
    %68 = vector.shape_cast %67 : vector<1x8x8xf32> to vector<8x8xf32>
    %cst_53 = arith.constant dense<0.000000e+00> : vector<8x768xf32>
    %69 = tpu.matmul %68, %66, %cst_53 {dimension_numbers = #tpu.dot_dimension_numbers<[1], [0], [0], [1], [0, 0, 1, 1], [], []>} : vector<8x8xf32>, vector<8x768xf32>, vector<8x768xf32> -> vector<8x768xf32>
    %70 = arith.addf %65, %69 : vector<8x768xf32>
    %c1_i32_54 = arith.constant 1 : i32
    %71 = tpu.dynamic_rotate %54 by %c1_i32_54 dim 1 : vector<8x768xf32>, i32 -> vector<8x768xf32>
    %c3_55 = arith.constant 3 : index
    %c0_56 = arith.constant 0 : index
    %c0_57 = arith.constant 0 : index
    %72 = vector.load %arg4[%c3_55, %c0_56, %c0_57] : memref<9x8x8xf32, #tpu.memory_space<vmem>>, vector<1x8x8xf32>
    %73 = vector.shape_cast %72 : vector<1x8x8xf32> to vector<8x8xf32>
    %cst_58 = arith.constant dense<0.000000e+00> : vector<8x768xf32>
    %74 = tpu.matmul %73, %71, %cst_58 {dimension_numbers = #tpu.dot_dimension_numbers<[1], [0], [0], [1], [0, 0, 1, 1], [], []>} : vector<8x8xf32>, vector<8x768xf32>, vector<8x768xf32> -> vector<8x768xf32>
    %75 = arith.addf %70, %74 : vector<8x768xf32>
    %c4_59 = arith.constant 4 : index
    %c0_60 = arith.constant 0 : index
    %c0_61 = arith.constant 0 : index
    %76 = vector.load %arg4[%c4_59, %c0_60, %c0_61] : memref<9x8x8xf32, #tpu.memory_space<vmem>>, vector<1x8x8xf32>
    %77 = vector.shape_cast %76 : vector<1x8x8xf32> to vector<8x8xf32>
    %cst_62 = arith.constant dense<0.000000e+00> : vector<8x768xf32>
    %78 = tpu.matmul %77, %54, %cst_62 {dimension_numbers = #tpu.dot_dimension_numbers<[1], [0], [0], [1], [0, 0, 1, 1], [], []>} : vector<8x8xf32>, vector<8x768xf32>, vector<8x768xf32> -> vector<8x768xf32>
    %79 = arith.addf %75, %78 : vector<8x768xf32>
    %c767_i32_63 = arith.constant 767 : i32
    %80 = tpu.dynamic_rotate %54 by %c767_i32_63 dim 1 : vector<8x768xf32>, i32 -> vector<8x768xf32>
    %c5_64 = arith.constant 5 : index
    %c0_65 = arith.constant 0 : index
    %c0_66 = arith.constant 0 : index
    %81 = vector.load %arg4[%c5_64, %c0_65, %c0_66] : memref<9x8x8xf32, #tpu.memory_space<vmem>>, vector<1x8x8xf32>
    %82 = vector.shape_cast %81 : vector<1x8x8xf32> to vector<8x8xf32>
    %cst_67 = arith.constant dense<0.000000e+00> : vector<8x768xf32>
    %83 = tpu.matmul %82, %80, %cst_67 {dimension_numbers = #tpu.dot_dimension_numbers<[1], [0], [0], [1], [0, 0, 1, 1], [], []>} : vector<8x8xf32>, vector<8x768xf32>, vector<8x768xf32> -> vector<8x768xf32>
    %84 = arith.addf %79, %83 : vector<8x768xf32>
    %c751_i32_68 = arith.constant 751 : i32
    %85 = tpu.dynamic_rotate %54 by %c751_i32_68 dim 1 : vector<8x768xf32>, i32 -> vector<8x768xf32>
    %c6_69 = arith.constant 6 : index
    %c0_70 = arith.constant 0 : index
    %c0_71 = arith.constant 0 : index
    %86 = vector.load %arg4[%c6_69, %c0_70, %c0_71] : memref<9x8x8xf32, #tpu.memory_space<vmem>>, vector<1x8x8xf32>
    %87 = vector.shape_cast %86 : vector<1x8x8xf32> to vector<8x8xf32>
    %cst_72 = arith.constant dense<0.000000e+00> : vector<8x768xf32>
    %88 = tpu.matmul %87, %85, %cst_72 {dimension_numbers = #tpu.dot_dimension_numbers<[1], [0], [0], [1], [0, 0, 1, 1], [], []>} : vector<8x8xf32>, vector<8x768xf32>, vector<8x768xf32> -> vector<8x768xf32>
    %89 = arith.addf %84, %88 : vector<8x768xf32>
    %c750_i32_73 = arith.constant 750 : i32
    %90 = tpu.dynamic_rotate %54 by %c750_i32_73 dim 1 : vector<8x768xf32>, i32 -> vector<8x768xf32>
    %c7_74 = arith.constant 7 : index
    %c0_75 = arith.constant 0 : index
    %c0_76 = arith.constant 0 : index
    %91 = vector.load %arg4[%c7_74, %c0_75, %c0_76] : memref<9x8x8xf32, #tpu.memory_space<vmem>>, vector<1x8x8xf32>
    %92 = vector.shape_cast %91 : vector<1x8x8xf32> to vector<8x8xf32>
    %cst_77 = arith.constant dense<0.000000e+00> : vector<8x768xf32>
    %93 = tpu.matmul %92, %90, %cst_77 {dimension_numbers = #tpu.dot_dimension_numbers<[1], [0], [0], [1], [0, 0, 1, 1], [], []>} : vector<8x8xf32>, vector<8x768xf32>, vector<8x768xf32> -> vector<8x768xf32>
    %94 = arith.addf %89, %93 : vector<8x768xf32>
    %c749_i32_78 = arith.constant 749 : i32
    %95 = tpu.dynamic_rotate %54 by %c749_i32_78 dim 1 : vector<8x768xf32>, i32 -> vector<8x768xf32>
    %c8_79 = arith.constant 8 : index
    %c0_80 = arith.constant 0 : index
    %c0_81 = arith.constant 0 : index
    %96 = vector.load %arg4[%c8_79, %c0_80, %c0_81] : memref<9x8x8xf32, #tpu.memory_space<vmem>>, vector<1x8x8xf32>
    %97 = vector.shape_cast %96 : vector<1x8x8xf32> to vector<8x8xf32>
    %cst_82 = arith.constant dense<0.000000e+00> : vector<8x768xf32>
    %98 = tpu.matmul %97, %95, %cst_82 {dimension_numbers = #tpu.dot_dimension_numbers<[1], [0], [0], [1], [0, 0, 1, 1], [], []>} : vector<8x8xf32>, vector<8x768xf32>, vector<8x768xf32> -> vector<8x768xf32>
    %99 = arith.addf %94, %98 : vector<8x768xf32>
    %100 = vector.broadcast %55 : vector<8x1xf32> to vector<8x768xf32>
    %101 = arith.addf %99, %100 : vector<8x768xf32>
    %cst_83 = arith.constant 0.000000e+00 : f32
    %102 = vector.broadcast %cst_83 : f32 to vector<8x768xf32>
    %103 = arith.maximumf %101, %102 : vector<8x768xf32>
    %104 = vector.broadcast %56 : vector<8x1xf32> to vector<8x768xf32>
    %105 = arith.mulf %103, %104 : vector<8x768xf32>
    %106 = vector.broadcast %0 : vector<1x768xf32> to vector<8x768xf32>
    %107 = arith.mulf %105, %106 : vector<8x768xf32>
    %c0_84 = arith.constant 0 : index
    %c0_85 = arith.constant 0 : index
    %108 = vector.load %arg8[%c0_84, %c0_85] : memref<8x768xf32, #tpu.memory_space<vmem>>, vector<8x768xf32>
    %109 = arith.mulf %107, %108 : vector<8x768xf32>
    %c0_86 = arith.constant 0 : index
    %c0_87 = arith.constant 0 : index
    %110 = vector.load %arg10[%c0_86, %c0_87] : memref<1x32xf32, #tpu.memory_space<vmem>>, vector<1x32xf32>
    %c0_88 = arith.constant 0 : index
    %c0_89 = arith.constant 0 : index
    %c0_90 = arith.constant 0 : index
    %111 = vector.load %arg9[%c0_88, %c0_89, %c0_90] : memref<8x384x32xf32, #tpu.memory_space<vmem>>, vector<1x384x32xf32>
    %112 = vector.shape_cast %111 : vector<1x384x32xf32> to vector<384x32xf32>
    %113 = vector.extract_strided_slice %109 {offsets = [0, 0], sizes = [1, 384], strides = [1, 1]} : vector<8x768xf32> to vector<1x384xf32>
    %cst_91 = arith.constant dense<0.000000e+00> : vector<1x32xf32>
    %114 = tpu.matmul %113, %112, %cst_91 {dimension_numbers = #tpu.dot_dimension_numbers<[1], [0], [0], [1], [0, 0, 1, 1], [], []>} : vector<1x384xf32>, vector<384x32xf32>, vector<1x32xf32> -> vector<1x32xf32>
    %115 = arith.addf %110, %114 : vector<1x32xf32>
    %116 = vector.extract_strided_slice %109 {offsets = [0, 384], sizes = [1, 384], strides = [1, 1]} : vector<8x768xf32> to vector<1x384xf32>
    %cst_92 = arith.constant dense<0.000000e+00> : vector<1x32xf32>
    %117 = tpu.matmul %116, %112, %cst_92 {dimension_numbers = #tpu.dot_dimension_numbers<[1], [0], [0], [1], [0, 0, 1, 1], [], []>} : vector<1x384xf32>, vector<384x32xf32>, vector<1x32xf32> -> vector<1x32xf32>
    %118 = arith.addf %110, %117 : vector<1x32xf32>
    %c1_93 = arith.constant 1 : index
    %c0_94 = arith.constant 0 : index
    %c0_95 = arith.constant 0 : index
    %119 = vector.load %arg9[%c1_93, %c0_94, %c0_95] : memref<8x384x32xf32, #tpu.memory_space<vmem>>, vector<1x384x32xf32>
    %120 = vector.shape_cast %119 : vector<1x384x32xf32> to vector<384x32xf32>
    %121 = vector.extract_strided_slice %109 {offsets = [1, 0], sizes = [1, 384], strides = [1, 1]} : vector<8x768xf32> to vector<1x384xf32>
    %cst_96 = arith.constant dense<0.000000e+00> : vector<1x32xf32>
    %122 = tpu.matmul %121, %120, %cst_96 {dimension_numbers = #tpu.dot_dimension_numbers<[1], [0], [0], [1], [0, 0, 1, 1], [], []>} : vector<1x384xf32>, vector<384x32xf32>, vector<1x32xf32> -> vector<1x32xf32>
    %123 = arith.addf %115, %122 : vector<1x32xf32>
    %124 = vector.extract_strided_slice %109 {offsets = [1, 384], sizes = [1, 384], strides = [1, 1]} : vector<8x768xf32> to vector<1x384xf32>
    %cst_97 = arith.constant dense<0.000000e+00> : vector<1x32xf32>
    %125 = tpu.matmul %124, %120, %cst_97 {dimension_numbers = #tpu.dot_dimension_numbers<[1], [0], [0], [1], [0, 0, 1, 1], [], []>} : vector<1x384xf32>, vector<384x32xf32>, vector<1x32xf32> -> vector<1x32xf32>
    %126 = arith.addf %118, %125 : vector<1x32xf32>
    %c2_98 = arith.constant 2 : index
    %c0_99 = arith.constant 0 : index
    %c0_100 = arith.constant 0 : index
    %127 = vector.load %arg9[%c2_98, %c0_99, %c0_100] : memref<8x384x32xf32, #tpu.memory_space<vmem>>, vector<1x384x32xf32>
    %128 = vector.shape_cast %127 : vector<1x384x32xf32> to vector<384x32xf32>
    %129 = vector.extract_strided_slice %109 {offsets = [2, 0], sizes = [1, 384], strides = [1, 1]} : vector<8x768xf32> to vector<1x384xf32>
    %cst_101 = arith.constant dense<0.000000e+00> : vector<1x32xf32>
    %130 = tpu.matmul %129, %128, %cst_101 {dimension_numbers = #tpu.dot_dimension_numbers<[1], [0], [0], [1], [0, 0, 1, 1], [], []>} : vector<1x384xf32>, vector<384x32xf32>, vector<1x32xf32> -> vector<1x32xf32>
    %131 = arith.addf %123, %130 : vector<1x32xf32>
    %132 = vector.extract_strided_slice %109 {offsets = [2, 384], sizes = [1, 384], strides = [1, 1]} : vector<8x768xf32> to vector<1x384xf32>
    %cst_102 = arith.constant dense<0.000000e+00> : vector<1x32xf32>
    %133 = tpu.matmul %132, %128, %cst_102 {dimension_numbers = #tpu.dot_dimension_numbers<[1], [0], [0], [1], [0, 0, 1, 1], [], []>} : vector<1x384xf32>, vector<384x32xf32>, vector<1x32xf32> -> vector<1x32xf32>
    %134 = arith.addf %126, %133 : vector<1x32xf32>
    %c3_103 = arith.constant 3 : index
    %c0_104 = arith.constant 0 : index
    %c0_105 = arith.constant 0 : index
    %135 = vector.load %arg9[%c3_103, %c0_104, %c0_105] : memref<8x384x32xf32, #tpu.memory_space<vmem>>, vector<1x384x32xf32>
    %136 = vector.shape_cast %135 : vector<1x384x32xf32> to vector<384x32xf32>
    %137 = vector.extract_strided_slice %109 {offsets = [3, 0], sizes = [1, 384], strides = [1, 1]} : vector<8x768xf32> to vector<1x384xf32>
    %cst_106 = arith.constant dense<0.000000e+00> : vector<1x32xf32>
    %138 = tpu.matmul %137, %136, %cst_106 {dimension_numbers = #tpu.dot_dimension_numbers<[1], [0], [0], [1], [0, 0, 1, 1], [], []>} : vector<1x384xf32>, vector<384x32xf32>, vector<1x32xf32> -> vector<1x32xf32>
    %139 = arith.addf %131, %138 : vector<1x32xf32>
    %140 = vector.extract_strided_slice %109 {offsets = [3, 384], sizes = [1, 384], strides = [1, 1]} : vector<8x768xf32> to vector<1x384xf32>
    %cst_107 = arith.constant dense<0.000000e+00> : vector<1x32xf32>
    %141 = tpu.matmul %140, %136, %cst_107 {dimension_numbers = #tpu.dot_dimension_numbers<[1], [0], [0], [1], [0, 0, 1, 1], [], []>} : vector<1x384xf32>, vector<384x32xf32>, vector<1x32xf32> -> vector<1x32xf32>
    %142 = arith.addf %134, %141 : vector<1x32xf32>
    %c4_108 = arith.constant 4 : index
    %c0_109 = arith.constant 0 : index
    %c0_110 = arith.constant 0 : index
    %143 = vector.load %arg9[%c4_108, %c0_109, %c0_110] : memref<8x384x32xf32, #tpu.memory_space<vmem>>, vector<1x384x32xf32>
    %144 = vector.shape_cast %143 : vector<1x384x32xf32> to vector<384x32xf32>
    %145 = vector.extract_strided_slice %109 {offsets = [4, 0], sizes = [1, 384], strides = [1, 1]} : vector<8x768xf32> to vector<1x384xf32>
    %cst_111 = arith.constant dense<0.000000e+00> : vector<1x32xf32>
    %146 = tpu.matmul %145, %144, %cst_111 {dimension_numbers = #tpu.dot_dimension_numbers<[1], [0], [0], [1], [0, 0, 1, 1], [], []>} : vector<1x384xf32>, vector<384x32xf32>, vector<1x32xf32> -> vector<1x32xf32>
    %147 = arith.addf %139, %146 : vector<1x32xf32>
    %148 = vector.extract_strided_slice %109 {offsets = [4, 384], sizes = [1, 384], strides = [1, 1]} : vector<8x768xf32> to vector<1x384xf32>
    %cst_112 = arith.constant dense<0.000000e+00> : vector<1x32xf32>
    %149 = tpu.matmul %148, %144, %cst_112 {dimension_numbers = #tpu.dot_dimension_numbers<[1], [0], [0], [1], [0, 0, 1, 1], [], []>} : vector<1x384xf32>, vector<384x32xf32>, vector<1x32xf32> -> vector<1x32xf32>
    %150 = arith.addf %142, %149 : vector<1x32xf32>
    %c5_113 = arith.constant 5 : index
    %c0_114 = arith.constant 0 : index
    %c0_115 = arith.constant 0 : index
    %151 = vector.load %arg9[%c5_113, %c0_114, %c0_115] : memref<8x384x32xf32, #tpu.memory_space<vmem>>, vector<1x384x32xf32>
    %152 = vector.shape_cast %151 : vector<1x384x32xf32> to vector<384x32xf32>
    %153 = vector.extract_strided_slice %109 {offsets = [5, 0], sizes = [1, 384], strides = [1, 1]} : vector<8x768xf32> to vector<1x384xf32>
    %cst_116 = arith.constant dense<0.000000e+00> : vector<1x32xf32>
    %154 = tpu.matmul %153, %152, %cst_116 {dimension_numbers = #tpu.dot_dimension_numbers<[1], [0], [0], [1], [0, 0, 1, 1], [], []>} : vector<1x384xf32>, vector<384x32xf32>, vector<1x32xf32> -> vector<1x32xf32>
    %155 = arith.addf %147, %154 : vector<1x32xf32>
    %156 = vector.extract_strided_slice %109 {offsets = [5, 384], sizes = [1, 384], strides = [1, 1]} : vector<8x768xf32> to vector<1x384xf32>
    %cst_117 = arith.constant dense<0.000000e+00> : vector<1x32xf32>
    %157 = tpu.matmul %156, %152, %cst_117 {dimension_numbers = #tpu.dot_dimension_numbers<[1], [0], [0], [1], [0, 0, 1, 1], [], []>} : vector<1x384xf32>, vector<384x32xf32>, vector<1x32xf32> -> vector<1x32xf32>
    %158 = arith.addf %150, %157 : vector<1x32xf32>
    %c6_118 = arith.constant 6 : index
    %c0_119 = arith.constant 0 : index
    %c0_120 = arith.constant 0 : index
    %159 = vector.load %arg9[%c6_118, %c0_119, %c0_120] : memref<8x384x32xf32, #tpu.memory_space<vmem>>, vector<1x384x32xf32>
    %160 = vector.shape_cast %159 : vector<1x384x32xf32> to vector<384x32xf32>
    %161 = vector.extract_strided_slice %109 {offsets = [6, 0], sizes = [1, 384], strides = [1, 1]} : vector<8x768xf32> to vector<1x384xf32>
    %cst_121 = arith.constant dense<0.000000e+00> : vector<1x32xf32>
    %162 = tpu.matmul %161, %160, %cst_121 {dimension_numbers = #tpu.dot_dimension_numbers<[1], [0], [0], [1], [0, 0, 1, 1], [], []>} : vector<1x384xf32>, vector<384x32xf32>, vector<1x32xf32> -> vector<1x32xf32>
    %163 = arith.addf %155, %162 : vector<1x32xf32>
    %164 = vector.extract_strided_slice %109 {offsets = [6, 384], sizes = [1, 384], strides = [1, 1]} : vector<8x768xf32> to vector<1x384xf32>
    %cst_122 = arith.constant dense<0.000000e+00> : vector<1x32xf32>
    %165 = tpu.matmul %164, %160, %cst_122 {dimension_numbers = #tpu.dot_dimension_numbers<[1], [0], [0], [1], [0, 0, 1, 1], [], []>} : vector<1x384xf32>, vector<384x32xf32>, vector<1x32xf32> -> vector<1x32xf32>
    %166 = arith.addf %158, %165 : vector<1x32xf32>
    %c7_123 = arith.constant 7 : index
    %c0_124 = arith.constant 0 : index
    %c0_125 = arith.constant 0 : index
    %167 = vector.load %arg9[%c7_123, %c0_124, %c0_125] : memref<8x384x32xf32, #tpu.memory_space<vmem>>, vector<1x384x32xf32>
    %168 = vector.shape_cast %167 : vector<1x384x32xf32> to vector<384x32xf32>
    %169 = vector.extract_strided_slice %109 {offsets = [7, 0], sizes = [1, 384], strides = [1, 1]} : vector<8x768xf32> to vector<1x384xf32>
    %cst_126 = arith.constant dense<0.000000e+00> : vector<1x32xf32>
    %170 = tpu.matmul %169, %168, %cst_126 {dimension_numbers = #tpu.dot_dimension_numbers<[1], [0], [0], [1], [0, 0, 1, 1], [], []>} : vector<1x384xf32>, vector<384x32xf32>, vector<1x32xf32> -> vector<1x32xf32>
    %171 = arith.addf %163, %170 : vector<1x32xf32>
    %172 = vector.extract_strided_slice %109 {offsets = [7, 384], sizes = [1, 384], strides = [1, 1]} : vector<8x768xf32> to vector<1x384xf32>
    %cst_127 = arith.constant dense<0.000000e+00> : vector<1x32xf32>
    %173 = tpu.matmul %172, %168, %cst_127 {dimension_numbers = #tpu.dot_dimension_numbers<[1], [0], [0], [1], [0, 0, 1, 1], [], []>} : vector<1x384xf32>, vector<384x32xf32>, vector<1x32xf32> -> vector<1x32xf32>
    %174 = arith.addf %166, %173 : vector<1x32xf32>
    %c0_128 = arith.constant 0 : index
    %c0_129 = arith.constant 0 : index
    %175 = vector.load %arg11[%c0_128, %c0_129] : memref<1x32xf32, #tpu.memory_space<vmem>>, vector<1x32xf32>
    %c0_130 = arith.constant 0 : index
    %c0_131 = arith.constant 0 : index
    %176 = vector.load %arg12[%c0_130, %c0_131] : memref<32x10xf32, #tpu.memory_space<vmem>>, vector<32x10xf32>
    %c0_132 = arith.constant 0 : index
    %c0_133 = arith.constant 0 : index
    %177 = vector.load %arg13[%c0_132, %c0_133] : memref<1x10xf32, #tpu.memory_space<vmem>>, vector<1x10xf32>
    %cst_134 = arith.constant 0.000000e+00 : f32
    %178 = vector.broadcast %cst_134 : f32 to vector<1x32xf32>
    %179 = arith.maximumf %171, %178 : vector<1x32xf32>
    %180 = arith.mulf %179, %175 : vector<1x32xf32>
    %cst_135 = arith.constant dense<0.000000e+00> : vector<1x10xf32>
    %181 = tpu.matmul %180, %176, %cst_135 {dimension_numbers = #tpu.dot_dimension_numbers<[1], [0], [0], [1], [0, 0, 1, 1], [], []>} : vector<1x32xf32>, vector<32x10xf32>, vector<1x10xf32> -> vector<1x10xf32>
    %182 = arith.addf %181, %177 : vector<1x10xf32>
    %cst_136 = arith.constant 0.000000e+00 : f32
    %183 = vector.broadcast %cst_136 : f32 to vector<1x32xf32>
    %184 = arith.maximumf %174, %183 : vector<1x32xf32>
    %185 = arith.mulf %184, %175 : vector<1x32xf32>
    %cst_137 = arith.constant dense<0.000000e+00> : vector<1x10xf32>
    %186 = tpu.matmul %185, %176, %cst_137 {dimension_numbers = #tpu.dot_dimension_numbers<[1], [0], [0], [1], [0, 0, 1, 1], [], []>} : vector<1x32xf32>, vector<32x10xf32>, vector<1x10xf32> -> vector<1x10xf32>
    %187 = arith.addf %186, %177 : vector<1x10xf32>
    %188 = tpu.concatenate %182, %187 in 0 : vector<1x10xf32>, vector<1x10xf32> -> vector<2x10xf32>
    %c0_138 = arith.constant 0 : index
    %c0_139 = arith.constant 0 : index
    %189 = vector.load %arg14[%c0_138, %c0_139] : memref<2x10xf32, #tpu.memory_space<vmem>>, vector<2x10xf32>
    tpu.vector_store %arg14[%c0_138, %c0_139], %188 {strides = array<i32>} : memref<2x10xf32, #tpu.memory_space<vmem>>, vector<2x10xf32>,
    return
  }
}

</mosaic_0001>

<llo_original>
// kernel: _lambda_.1
$region0: #{_lambda_.1}
  #allocation0 [shape = 'u32[]', space=smem, size = 0x4, offset = 0x4, fixed_abs, tag = 'smem constant byte address 0x4 - core index']
  #allocation1 [shape = 'u32[144,128]{1,0:T(1,128)}', space=vmem, size = 0x12000, scoped, tag = 'internal scratch']
  %s0 = inlined_call_operand.vmem [shape: f32[4,768], index: 0, kind: input, shape index: {}]
  %s1 = inlined_call_operand.hbm [shape: f32[9,8,4], index: 1, kind: input, shape index: {}]
  %s2 = inlined_call_operand.hbm [shape: f32[8,1], index: 2, kind: input, shape index: {}]
  %s3 = inlined_call_operand.hbm [shape: f32[8,1], index: 3, kind: input, shape index: {}]
  %s4 = inlined_call_operand.hbm [shape: f32[9,8,8], index: 4, kind: input, shape index: {}]
  %s5 = inlined_call_operand.hbm [shape: f32[8,1], index: 5, kind: input, shape index: {}]
  %s6 = inlined_call_operand.hbm [shape: f32[8,1], index: 6, kind: input, shape index: {}]
  %s7 = inlined_call_operand.vmem [shape: f32[1,768], index: 7, kind: input, shape index: {}]
  %s8 = inlined_call_operand.vmem [shape: f32[8,768], index: 8, kind: input, shape index: {}]
  %s9 = inlined_call_operand.hbm [shape: f32[8,384,32], index: 9, kind: input, shape index: {}]
  %s10 = inlined_call_operand.hbm [shape: f32[1,32], index: 10, kind: input, shape index: {}]
  %s11 = inlined_call_operand.hbm [shape: f32[1,32], index: 11, kind: input, shape index: {}]
  %s12 = inlined_call_operand.hbm [shape: f32[32,10], index: 12, kind: input, shape index: {}]
  %s13 = inlined_call_operand.hbm [shape: f32[1,10], index: 13, kind: input, shape index: {}]
  %s14 = inlined_call_operand.hbm [shape: f32[2,10], index: 14, kind: output, shape index: {}]
  %s15 = sld [smem:[#allocation0]]
  $region110: #{_lambda_.1} parent=0
    _
  %s17 = ssub.s32 1, %s15
  %s18 = scalar_select 0, %s17, %s15
  $region1: #{_lambda_.1} parent=0
    #allocation2 [shape = 'u8[36864]{0}', space=vmem, size = 0x9000, scoped, tag = 'input window, operand 1, single buffered']
    #allocation3 [shape = 's32[1]{0}', space=sflag, size = 0x4, scoped, tag = 'scoped memory for _lambda_.1']
    #allocation4 [shape = 's32[1]{0}', space=sflag, size = 0x4, scoped, tag = 'scoped memory for _lambda_.1']
    #allocation5 [shape = 'u8[4096]{0}', space=vmem, size = 0x1000, scoped, tag = 'input window, operand 2, single buffered']
    #allocation6 [shape = 's32[1]{0}', space=sflag, size = 0x4, scoped, tag = 'scoped memory for _lambda_.1']
    #allocation7 [shape = 'u8[4096]{0}', space=vmem, size = 0x1000, scoped, tag = 'input window, operand 3, single buffered']
    #allocation8 [shape = 'u8[36864]{0}', space=vmem, size = 0x9000, scoped, tag = 'input window, operand 4, single buffered']
    #allocation9 [shape = 's32[1]{0}', space=sflag, size = 0x4, scoped, tag = 'scoped memory for _lambda_.1']
    #allocation10 [shape = 'u8[4096]{0}', space=vmem, size = 0x1000, scoped, tag = 'input window, operand 5, single buffered']
    #allocation11 [shape = 'u8[4096]{0}', space=vmem, size = 0x1000, scoped, tag = 'input window, operand 6, single buffered']
    #allocation12 [shape = 's32[1]{0}', space=sflag, size = 0x4, scoped, tag = 'scoped memory for _lambda_.1']
    #allocation13 [shape = 'u8[1572864]{0}', space=vmem, size = 0x180000, scoped, tag = 'input window, operand 9, single buffered']
    #allocation14 [shape = 'u8[512]{0}', space=vmem, size = 0x400, scoped, tag = 'input window, operand 10, single buffered']
    #allocation15 [shape = 's32[1]{0}', space=sflag, size = 0x4, scoped, tag = 'scoped memory for _lambda_.1']
    #allocation16 [shape = 'u8[512]{0}', space=vmem, size = 0x400, scoped, tag = 'input window, operand 11, single buffered']
    #allocation17 [shape = 'u8[16384]{0}', space=vmem, size = 0x4000, scoped, tag = 'input window, operand 12, single buffered']
    #allocation18 [shape = 's32[1]{0}', space=sflag, size = 0x4, scoped, tag = 'scoped memory for _lambda_.1']
    #allocation19 [shape = 'u8[512]{0}', space=vmem, size = 0x400, scoped, tag = 'input window, operand 13, single buffered']
    #allocation20 [shape = 'u8[1024]{0}', space=vmem, size = 0x400, scoped, tag = 'output window, operand 0, single buffered']
    %19 = vsyncpa [#allocation3], 0
    %20 = vsyncpa [#allocation6], 0
    %21 = vsyncpa [#allocation9], 0
    %22 = vsyncpa [#allocation12], 0
    %23 = vsyncpa [#allocation15], 0
    %24 = vsyncpa [#allocation18], 0
    %25 = vsyncpa [#allocation4], 0
    // Predicated region
    $region2: #{_lambda_.1} parent=1 // pred_check
      _
    $region3: #{_lambda_.1} parent=1 // pred_check_branch
      %27 = sbr.rel (0) target = $region5
    $region4: #{_lambda_.1} parent=1 // pred_region
      _
    $region5: #{_lambda_.1} parent=1 // pred_fallthru
      _
    // Predicated region
    $region6: #{_lambda_.1} parent=1 // pred_check
      _
    $region7: #{_lambda_.1} parent=1 // pred_check_branch
      %29 = sbr.rel (0) target = $region9
    $region8: #{_lambda_.1} parent=1 // pred_region
      %s31 = ssub.s32 1152, 1152
      %32 = vsyncadd [#allocation3], %s31
      %s33 = sshll.u32 [#allocation2], 4
      %s34 = int_to_ptr.vmem [resolvable:$true] %s33
      %39 = dma.hbm_to_vmem [thread:$0]  %s1, 1152, %s34, [#allocation3], 128, 128, 8
    $region9: #{_lambda_.1} parent=1 // pred_fallthru
      _
    // Predicated region
    $region10: #{_lambda_.1} parent=1 // pred_check
      _
    $region11: #{_lambda_.1} parent=1 // pred_check_branch
      %41 = sbr.rel (0) target = $region13
    $region12: #{_lambda_.1} parent=1 // pred_region
      %s43 = ssub.s32 128, 128
      %44 = vsyncadd [#allocation6], %s43
      %s46 = sshll.u32 [#allocation5], 4
      %s47 = int_to_ptr.vmem [resolvable:$true] %s46
      %49 = dma.hbm_to_vmem [thread:$0]  %s2, 128, %s47, [#allocation6]
    $region13: #{_lambda_.1} parent=1 // pred_fallthru
      _
    // Predicated region
    $region14: #{_lambda_.1} parent=1 // pred_check
      _
    $region15: #{_lambda_.1} parent=1 // pred_check_branch
      %51 = sbr.rel (0) target = $region17
    $region16: #{_lambda_.1} parent=1 // pred_region
      %s53 = ssub.s32 128, 128
      %54 = vsyncadd [#allocation6], %s53
      %s56 = sshll.u32 [#allocation7], 4
      %s57 = int_to_ptr.vmem [resolvable:$true] %s56
      %59 = dma.hbm_to_vmem [thread:$0]  %s3, 128, %s57, [#allocation6]
    $region17: #{_lambda_.1} parent=1 // pred_fallthru
      _
    // Predicated region
    $region18: #{_lambda_.1} parent=1 // pred_check
      _
    $region19: #{_lambda_.1} parent=1 // pred_check_branch
      %61 = sbr.rel (0) target = $region21
    $region20: #{_lambda_.1} parent=1 // pred_region
      %s63 = ssub.s32 1152, 1152
      %64 = vsyncadd [#allocation9], %s63
      %s65 = sshll.u32 [#allocation8], 4
      %s66 = int_to_ptr.vmem [resolvable:$true] %s65
      %71 = dma.hbm_to_vmem [thread:$0]  %s4, 1152, %s66, [#allocation9], 128, 128, 8
    $region21: #{_lambda_.1} parent=1 // pred_fallthru
      _
    // Predicated region
    $region22: #{_lambda_.1} parent=1 // pred_check
      _
    $region23: #{_lambda_.1} parent=1 // pred_check_branch
      %73 = sbr.rel (0) target = $region25
    $region24: #{_lambda_.1} parent=1 // pred_region
      %s75 = ssub.s32 128, 128
      %76 = vsyncadd [#allocation9], %s75
      %s78 = sshll.u32 [#allocation10], 4
      %s79 = int_to_ptr.vmem [resolvable:$true] %s78
      %81 = dma.hbm_to_vmem [thread:$0]  %s5, 128, %s79, [#allocation9]
    $region25: #{_lambda_.1} parent=1 // pred_fallthru
      _
    // Predicated region
    $region26: #{_lambda_.1} parent=1 // pred_check
      _
    $region27: #{_lambda_.1} parent=1 // pred_check_branch
      %83 = sbr.rel (0) target = $region29
    $region28: #{_lambda_.1} parent=1 // pred_region
      %s85 = ssub.s32 128, 128
      %86 = vsyncadd [#allocation12], %s85
      %s88 = sshll.u32 [#allocation11], 4
      %s89 = int_to_ptr.vmem [resolvable:$true] %s88
      %91 = dma.hbm_to_vmem [thread:$0]  %s6, 128, %s89, [#allocation12]
    $region29: #{_lambda_.1} parent=1 // pred_fallthru
      _
    // Predicated region
    $region30: #{_lambda_.1} parent=1 // pred_check
      _
    $region31: #{_lambda_.1} parent=1 // pred_check_branch
      %93 = sbr.rel (0) target = $region33
    $region32: #{_lambda_.1} parent=1 // pred_region
      _
    $region33: #{_lambda_.1} parent=1 // pred_fallthru
      _
    // Predicated region
    $region34: #{_lambda_.1} parent=1 // pred_check
      _
    $region35: #{_lambda_.1} parent=1 // pred_check_branch
      %95 = sbr.rel (0) target = $region37
    $region36: #{_lambda_.1} parent=1 // pred_region
      _
    $region37: #{_lambda_.1} parent=1 // pred_fallthru
      _
    // Predicated region
    $region38: #{_lambda_.1} parent=1 // pred_check
      _
    $region39: #{_lambda_.1} parent=1 // pred_check_branch
      %97 = sbr.rel (0) target = $region41
    $region40: #{_lambda_.1} parent=1 // pred_region
      %s99 = ssub.s32 49152, 49152
      %100 = vsyncadd [#allocation12], %s99
      %s101 = sshll.u32 [#allocation13], 4
      %s102 = int_to_ptr.vmem [resolvable:$true] %s101
      %107 = dma.hbm_to_vmem [thread:$0]  %s9, 49152, %s102, [#allocation12], 128, 128, 8
    $region41: #{_lambda_.1} parent=1 // pred_fallthru
      _
    // Predicated region
    $region42: #{_lambda_.1} parent=1 // pred_check
      _
    $region43: #{_lambda_.1} parent=1 // pred_check_branch
      %109 = sbr.rel (0) target = $region45
    $region44: #{_lambda_.1} parent=1 // pred_region
      %s111 = ssub.s32 16, 16
      %112 = vsyncadd [#allocation15], %s111
      %s114 = sshll.u32 [#allocation14], 4
      %s115 = int_to_ptr.vmem [resolvable:$true] %s114
      %117 = dma.hbm_to_vmem [thread:$0]  %s10, 16, %s115, [#allocation15]
    $region45: #{_lambda_.1} parent=1 // pred_fallthru
      _
    // Predicated region
    $region46: #{_lambda_.1} parent=1 // pred_check
      _
    $region47: #{_lambda_.1} parent=1 // pred_check_branch
      %119 = sbr.rel (0) target = $region49
    $region48: #{_lambda_.1} parent=1 // pred_region
      %s121 = ssub.s32 16, 16
      %122 = vsyncadd [#allocation15], %s121
      %s124 = sshll.u32 [#allocation16], 4
      %s125 = int_to_ptr.vmem [resolvable:$true] %s124
      %127 = dma.hbm_to_vmem [thread:$0]  %s11, 16, %s125, [#allocation15]
    $region49: #{_lambda_.1} parent=1 // pred_fallthru
      _
    // Predicated region
    $region50: #{_lambda_.1} parent=1 // pred_check
      _
    $region51: #{_lambda_.1} parent=1 // pred_check_branch
      %129 = sbr.rel (0) target = $region53
    $region52: #{_lambda_.1} parent=1 // pred_region
      %s131 = ssub.s32 512, 512
      %132 = vsyncadd [#allocation18], %s131
      %s133 = sshll.u32 [#allocation17], 4
      %s134 = int_to_ptr.vmem [resolvable:$true] %s133
      %139 = dma.hbm_to_vmem [thread:$0]  %s12, 512, %s134, [#allocation18], 128, 128, 8
    $region53: #{_lambda_.1} parent=1 // pred_fallthru
      _
    // Predicated region
    $region54: #{_lambda_.1} parent=1 // pred_check
      _
    $region55: #{_lambda_.1} parent=1 // pred_check_branch
      %141 = sbr.rel (0) target = $region57
    $region56: #{_lambda_.1} parent=1 // pred_region
      %s143 = ssub.s32 16, 16
      %144 = vsyncadd [#allocation18], %s143
      %s146 = sshll.u32 [#allocation19], 4
      %s147 = int_to_ptr.vmem [resolvable:$true] %s146
      %149 = dma.hbm_to_vmem [thread:$0]  %s13, 16, %s147, [#allocation18]
    $region57: #{_lambda_.1} parent=1 // pred_fallthru
      _
    // Predicated region
    $region58: #{_lambda_.1} parent=1 // pred_check
      _
    $region59: #{_lambda_.1} parent=1 // pred_check_branch
      %151 = sbr.rel (0) target = $region61
    $region60: #{_lambda_.1} parent=1 // pred_region
      %152 = dma.done [#allocation3], 1152
    $region61: #{_lambda_.1} parent=1 // pred_fallthru
      _
    // Predicated region
    $region62: #{_lambda_.1} parent=1 // pred_check
      _
    $region63: #{_lambda_.1} parent=1 // pred_check_branch
      %154 = sbr.rel (0) target = $region65
    $region64: #{_lambda_.1} parent=1 // pred_region
      %155 = dma.done [#allocation6], 128
    $region65: #{_lambda_.1} parent=1 // pred_fallthru
      _
    // Predicated region
    $region66: #{_lambda_.1} parent=1 // pred_check
      _
    $region67: #{_lambda_.1} parent=1 // pred_check_branch
      %157 = sbr.rel (0) target = $region69
    $region68: #{_lambda_.1} parent=1 // pred_region
      %158 = dma.done [#allocation6], 128
    $region69: #{_lambda_.1} parent=1 // pred_fallthru
      _
    // Predicated region
    $region70: #{_lambda_.1} parent=1 // pred_check
      _
    $region71: #{_lambda_.1} parent=1 // pred_check_branch
      %160 = sbr.rel (0) target = $region73
    $region72: #{_lambda_.1} parent=1 // pred_region
      %161 = dma.done [#allocation9], 1152
    $region73: #{_lambda_.1} parent=1 // pred_fallthru
      _
    // Predicated region
    $region74: #{_lambda_.1} parent=1 // pred_check
      _
    $region75: #{_lambda_.1} parent=1 // pred_check_branch
      %163 = sbr.rel (0) target = $region77
    $region76: #{_lambda_.1} parent=1 // pred_region
      %164 = dma.done [#allocation9], 128
    $region77: #{_lambda_.1} parent=1 // pred_fallthru
      _
    // Predicated region
    $region78: #{_lambda_.1} parent=1 // pred_check
      _
    $region79: #{_lambda_.1} parent=1 // pred_check_branch
      %166 = sbr.rel (0) target = $region81
    $region80: #{_lambda_.1} parent=1 // pred_region
      %167 = dma.done [#allocation12], 128
    $region81: #{_lambda_.1} parent=1 // pred_fallthru
      _
    // Predicated region
    $region82: #{_lambda_.1} parent=1 // pred_check
      _
    $region83: #{_lambda_.1} parent=1 // pred_check_branch
      %169 = sbr.rel (0) target = $region85
    $region84: #{_lambda_.1} parent=1 // pred_region
      %170 = dma.done [#allocation12], 49152
    $region85: #{_lambda_.1} parent=1 // pred_fallthru
      _
    // Predicated region
    $region86: #{_lambda_.1} parent=1 // pred_check
      _
    $region87: #{_lambda_.1} parent=1 // pred_check_branch
      %172 = sbr.rel (0) target = $region89
    $region88: #{_lambda_.1} parent=1 // pred_region
      %173 = dma.done [#allocation15], 16
    $region89: #{_lambda_.1} parent=1 // pred_fallthru
      _
    // Predicated region
    $region90: #{_lambda_.1} parent=1 // pred_check
      _
    $region91: #{_lambda_.1} parent=1 // pred_check_branch
      %175 = sbr.rel (0) target = $region93
    $region92: #{_lambda_.1} parent=1 // pred_region
      %176 = dma.done [#allocation15], 16
    $region93: #{_lambda_.1} parent=1 // pred_fallthru
      _
    // Predicated region
    $region94: #{_lambda_.1} parent=1 // pred_check
      _
    $region95: #{_lambda_.1} parent=1 // pred_check_branch
      %178 = sbr.rel (0) target = $region97
    $region96: #{_lambda_.1} parent=1 // pred_region
      %179 = dma.done [#allocation18], 512
    $region97: #{_lambda_.1} parent=1 // pred_fallthru
      _
    // Predicated region
    $region98: #{_lambda_.1} parent=1 // pred_check
      _
    $region99: #{_lambda_.1} parent=1 // pred_check_branch
      %181 = sbr.rel (0) target = $region101
    $region100: #{_lambda_.1} parent=1 // pred_region
      %182 = dma.done [#allocation18], 16
    $region101: #{_lambda_.1} parent=1 // pred_fallthru
      _
    %v183 = vld [vmem:[%s7] sm:$0x3f]
    %v184 = vld [vmem:[%s0] sm:$0xff]
    %v185 = vld [vmem:[%s0 + $0x8] sm:$0xff]
    %v186 = vld [vmem:[%s0 + $0x10] sm:$0xff]
    %v187 = vld [vmem:[#allocation5] sm:$0xff]
    %v188 = vld [vmem:[#allocation7] sm:$0xff]
    %v192 = vcombine.high %v184, %v184
    %v193 = vcombine.high %v185, %v185
    %v194 = vcombine.high %v186, %v186
    %198 = vrot.lane.b32.xlu0 %v184, 19
    %v199 = vpop.permute.xlu0 %198
    %200 = vrot.lane.b32.xlu0 %v192, 19
    %v201 = vpop.permute.xlu0 %200
    %202 = vrot.lane.b32.xlu0 %v185, 19
    %v203 = vpop.permute.xlu0 %202
    %204 = vrot.lane.b32.xlu0 %v193, 19
    %v205 = vpop.permute.xlu0 %204
    %206 = vrot.lane.b32.xlu0 %v186, 19
    %v207 = vpop.permute.xlu0 %206
    %208 = vrot.lane.b32.xlu0 %v194, 19
    %v209 = vpop.permute.xlu0 %208
    %v210 = vlaneseq
    %v211 = vand.u32 %v210, 127
    %vm212 = vcmp.lt.s32.totalorder %v211, 19
    %v213 = vsel %vm212, %v207, %v209
    %v214 = vsel %vm212, %v205, %v207
    %v215 = vsel %vm212, %v203, %v205
    %v216 = vsel %vm212, %v201, %v203
    %v217 = vsel %vm212, %v199, %v201
    %v218 = vsel %vm212, %v209, %v199
    %v219 = vld [vmem:[#allocation2] sm:$0xff]
    %220 = vrot.lane.b32.xlu0 %v184, 18
    %v221 = vpop.permute.xlu0 %220
    %222 = vrot.lane.b32.xlu0 %v192, 18
    %v223 = vpop.permute.xlu0 %222
    %224 = vrot.lane.b32.xlu0 %v185, 18
    %v225 = vpop.permute.xlu0 %224
    %226 = vrot.lane.b32.xlu0 %v193, 18
    %v227 = vpop.permute.xlu0 %226
    %228 = vrot.lane.b32.xlu0 %v186, 18
    %v229 = vpop.permute.xlu0 %228
    %230 = vrot.lane.b32.xlu0 %v194, 18
    %v231 = vpop.permute.xlu0 %230
    %vm232 = vcmp.lt.s32.totalorder %v211, 18
    %v233 = vsel %vm232, %v229, %v231
    %v234 = vsel %vm232, %v227, %v229
    %v235 = vsel %vm232, %v225, %v227
    %v236 = vsel %vm232, %v223, %v225
    %v237 = vsel %vm232, %v221, %v223
    %v238 = vsel %vm232, %v231, %v221
    %s239 = scalar_lea.vmem [#allocation2], 8
    %v240 = vld [vmem:[%s239] sm:$0xff]
    %vm241 = vcmask 31744
    %v243 = vsel %vm241, %v240, 0
    %vm245 = vcmask 1043456
    %v247 = vsel %vm245, %v238, 0
    %v250 = vsel %vm245, %v237, 0
    %v253 = vsel %vm245, %v236, 0
    %v256 = vsel %vm245, %v235, 0
    %v259 = vsel %vm245, %v234, 0
    %v262 = vsel %vm245, %v233, 0
    %264 = vmatprep.subr.mxu0 0.0
    %265 = vmatpush1.msra.mxu0 0.0
    %266 = vmatprep.subr.mxu0 0.0
    %267 = vmatpush1.msra.mxu0 0.0
    %268 = vmatprep.subr.mxu0 0.0
    %269 = vmatpush1.msra.mxu0 0.0
    %270 = vmatprep.subr.mxu0 0.0
    %271 = vmatpush1.msra.mxu0 0.0
    %272 = vmatprep.subr.mxu0 0.0
    %273 = vmatpush1.msra.mxu0 0.0
    %274 = vmatprep.subr.mxu0 0.0
    %275 = vmatpush1.msra.mxu0 0.0
    %276 = vmatprep.subr.mxu0 0.0
    %277 = vmatpush1.msra.mxu0 0.0
    %278 = vmatprep.subr.mxu0 0.0
    %279 = vmatpush1.msra.mxu0 0.0
    %280 = vmatprep.subr.mxu0 0.0
    %281 = vmatpush1.msra.mxu0 0.0
    %282 = vmatprep.subr.mxu0 0.0
    %283 = vmatpush1.msra.mxu0 0.0
    %284 = vmatprep.subr.mxu0 0.0
    %285 = vmatpush1.msra.mxu0 0.0
    %286 = vmatprep.subr.mxu0 0.0
    %287 = vmatpush1.msra.mxu0 0.0
    %288 = vmatprep.subr.mxu0 0.0
    %289 = vmatpush1.msra.mxu0 0.0
    %290 = vmatprep.subr.mxu0 0.0
    %291 = vmatpush1.msra.mxu0 0.0
    %292 = vmatprep.subr.mxu0 0.0
    %293 = vmatpush1.msra.mxu0 0.0
    %294 = vmatprep.subr.mxu0 %v250
    %295 = vmatpush1.msra.mxu0 %v247
    %296 = vmatprep.subr.mxu0 0.0
    %297 = vmatpush2.msra.mxu0 0.0
    %298 = vmatprep.subr.mxu0 0.0
    %299 = vmatpush2.msra.mxu0 0.0
    %300 = vmatprep.subr.mxu0 0.0
    %301 = vmatpush2.msra.mxu0 0.0
    %302 = vmatprep.subr.mxu0 0.0
    %303 = vmatpush2.msra.mxu0 0.0
    %304 = vmatprep.subr.mxu0 0.0
    %305 = vmatpush2.msra.mxu0 0.0
    %306 = vmatprep.subr.mxu0 0.0
    %307 = vmatpush2.msra.mxu0 0.0
    %308 = vmatprep.subr.mxu0 0.0
    %309 = vmatpush2.msra.mxu0 0.0
    %310 = vmatprep.subr.mxu0 0.0
    %311 = vmatpush2.msra.mxu0 0.0
    %312 = vmatprep.subr.mxu0 0.0
    %313 = vmatpush2.msra.mxu0 0.0
    %314 = vmatprep.subr.mxu0 0.0
    %315 = vmatpush2.msra.mxu0 0.0
    %316 = vmatprep.subr.mxu0 0.0
    %317 = vmatpush2.msra.mxu0 0.0
    %318 = vmatprep.subr.mxu0 0.0
    %319 = vmatpush2.msra.mxu0 0.0
    %320 = vmatprep.subr.mxu0 0.0
    %321 = vmatpush2.msra.mxu0 0.0
    %322 = vmatprep.subr.mxu0 0.0
    %323 = vmatpush2.msra.mxu0 0.0
    %324 = vmatprep.subr.mxu0 0.0
    %325 = vmatpush2.msra.mxu0 0.0
    %326 = vmatprep.subr.mxu0 0.0
    %327 = vmatpush2.msra.mxu0 0.0
    %328 = vmatprep.mubr.f32.mxu0 0.0
    %329 = vmatmul.mubr.f32.gmra.mxu0 %v243
    %v330 = vpop.f32.mrf.mxu0
    %v331 = vadd.f32 0.0, %v330
    %v332 = vpop.f32.mrf.mxu0
    %v333 = vadd.f32 0.0, %v332
    %334 = vdwg.mxu0
    %335 = vmatprep.subr.mxu0 0.0
    %336 = vmatpush1.msra.mxu0 0.0
    %337 = vmatprep.subr.mxu0 0.0
    %338 = vmatpush1.msra.mxu0 0.0
    %339 = vmatprep.subr.mxu0 0.0
    %340 = vmatpush1.msra.mxu0 0.0
    %341 = vmatprep.subr.mxu0 0.0
    %342 = vmatpush1.msra.mxu0 0.0
    %343 = vmatprep.subr.mxu0 0.0
    %344 = vmatpush1.msra.mxu0 0.0
    %345 = vmatprep.subr.mxu0 0.0
    %346 = vmatpush1.msra.mxu0 0.0
    %347 = vmatprep.subr.mxu0 0.0
    %348 = vmatpush1.msra.mxu0 0.0
    %349 = vmatprep.subr.mxu0 0.0
    %350 = vmatpush1.msra.mxu0 0.0
    %351 = vmatprep.subr.mxu0 0.0
    %352 = vmatpush1.msra.mxu0 0.0
    %353 = vmatprep.subr.mxu0 0.0
    %354 = vmatpush1.msra.mxu0 0.0
    %355 = vmatprep.subr.mxu0 0.0
    %356 = vmatpush1.msra.mxu0 0.0
    %357 = vmatprep.subr.mxu0 0.0
    %358 = vmatpush1.msra.mxu0 0.0
    %359 = vmatprep.subr.mxu0 0.0
    %360 = vmatpush1.msra.mxu0 0.0
    %361 = vmatprep.subr.mxu0 0.0
    %362 = vmatpush1.msra.mxu0 0.0
    %363 = vmatprep.subr.mxu0 0.0
    %364 = vmatpush1.msra.mxu0 0.0
    %365 = vmatprep.subr.mxu0 %v256
    %366 = vmatpush1.msra.mxu0 %v253
    %367 = vmatprep.subr.mxu0 0.0
    %368 = vmatpush2.msra.mxu0 0.0
    %369 = vmatprep.subr.mxu0 0.0
    %370 = vmatpush2.msra.mxu0 0.0
    %371 = vmatprep.subr.mxu0 0.0
    %372 = vmatpush2.msra.mxu0 0.0
    %373 = vmatprep.subr.mxu0 0.0
    %374 = vmatpush2.msra.mxu0 0.0
    %375 = vmatprep.subr.mxu0 0.0
    %376 = vmatpush2.msra.mxu0 0.0
    %377 = vmatprep.subr.mxu0 0.0
    %378 = vmatpush2.msra.mxu0 0.0
    %379 = vmatprep.subr.mxu0 0.0
    %380 = vmatpush2.msra.mxu0 0.0
    %381 = vmatprep.subr.mxu0 0.0
    %382 = vmatpush2.msra.mxu0 0.0
    %383 = vmatprep.subr.mxu0 0.0
    %384 = vmatpush2.msra.mxu0 0.0
    %385 = vmatprep.subr.mxu0 0.0
    %386 = vmatpush2.msra.mxu0 0.0
    %387 = vmatprep.subr.mxu0 0.0
    %388 = vmatpush2.msra.mxu0 0.0
    %389 = vmatprep.subr.mxu0 0.0
    %390 = vmatpush2.msra.mxu0 0.0
    %391 = vmatprep.subr.mxu0 0.0
    %392 = vmatpush2.msra.mxu0 0.0
    %393 = vmatprep.subr.mxu0 0.0
    %394 = vmatpush2.msra.mxu0 0.0
    %395 = vmatprep.subr.mxu0 0.0
    %396 = vmatpush2.msra.mxu0 0.0
    %397 = vmatprep.subr.mxu0 0.0
    %398 = vmatpush2.msra.mxu0 0.0
    %399 = vmatprep.mubr.f32.mxu0 0.0
    %400 = vmatmul.mubr.f32.gmra.mxu0 %v243
    %v401 = vpop.f32.mrf.mxu0
    %v402 = vadd.f32 0.0, %v401
    %v403 = vpop.f32.mrf.mxu0
    %v404 = vadd.f32 0.0, %v403
    %405 = vdwg.mxu0
    %406 = vmatprep.subr.mxu0 0.0
    %407 = vmatpush1.msra.mxu0 0.0
    %408 = vmatprep.subr.mxu0 0.0
    %409 = vmatpush1.msra.mxu0 0.0
    %410 = vmatprep.subr.mxu0 0.0
    %411 = vmatpush1.msra.mxu0 0.0
    %412 = vmatprep.subr.mxu0 0.0
    %413 = vmatpush1.msra.mxu0 0.0
    %414 = vmatprep.subr.mxu0 0.0
    %415 = vmatpush1.msra.mxu0 0.0
    %416 = vmatprep.subr.mxu0 0.0
    %417 = vmatpush1.msra.mxu0 0.0
    %418 = vmatprep.subr.mxu0 0.0
    %419 = vmatpush1.msra.mxu0 0.0
    %420 = vmatprep.subr.mxu0 0.0
    %421 = vmatpush1.msra.mxu0 0.0
    %422 = vmatprep.subr.mxu0 0.0
    %423 = vmatpush1.msra.mxu0 0.0
    %424 = vmatprep.subr.mxu0 0.0
    %425 = vmatpush1.msra.mxu0 0.0
    %426 = vmatprep.subr.mxu0 0.0
    %427 = vmatpush1.msra.mxu0 0.0
    %428 = vmatprep.subr.mxu0 0.0
    %429 = vmatpush1.msra.mxu0 0.0
    %430 = vmatprep.subr.mxu0 0.0
    %431 = vmatpush1.msra.mxu0 0.0
    %432 = vmatprep.subr.mxu0 0.0
    %433 = vmatpush1.msra.mxu0 0.0
    %434 = vmatprep.subr.mxu0 0.0
    %435 = vmatpush1.msra.mxu0 0.0
    %436 = vmatprep.subr.mxu0 %v262
    %437 = vmatpush1.msra.mxu0 %v259
    %438 = vmatprep.subr.mxu0 0.0
    %439 = vmatpush2.msra.mxu0 0.0
    %440 = vmatprep.subr.mxu0 0.0
    %441 = vmatpush2.msra.mxu0 0.0
    %442 = vmatprep.subr.mxu0 0.0
    %443 = vmatpush2.msra.mxu0 0.0
    %444 = vmatprep.subr.mxu0 0.0
    %445 = vmatpush2.msra.mxu0 0.0
    %446 = vmatprep.subr.mxu0 0.0
    %447 = vmatpush2.msra.mxu0 0.0
    %448 = vmatprep.subr.mxu0 0.0
    %449 = vmatpush2.msra.mxu0 0.0
    %450 = vmatprep.subr.mxu0 0.0
    %451 = vmatpush2.msra.mxu0 0.0
    %452 = vmatprep.subr.mxu0 0.0
    %453 = vmatpush2.msra.mxu0 0.0
    %454 = vmatprep.subr.mxu0 0.0
    %455 = vmatpush2.msra.mxu0 0.0
    %456 = vmatprep.subr.mxu0 0.0
    %457 = vmatpush2.msra.mxu0 0.0
    %458 = vmatprep.subr.mxu0 0.0
    %459 = vmatpush2.msra.mxu0 0.0
    %460 = vmatprep.subr.mxu0 0.0
    %461 = vmatpush2.msra.mxu0 0.0
    %462 = vmatprep.subr.mxu0 0.0
    %463 = vmatpush2.msra.mxu0 0.0
    %464 = vmatprep.subr.mxu0 0.0
    %465 = vmatpush2.msra.mxu0 0.0
    %466 = vmatprep.subr.mxu0 0.0
    %467 = vmatpush2.msra.mxu0 0.0
    %468 = vmatprep.subr.mxu0 0.0
    %469 = vmatpush2.msra.mxu0 0.0
    %470 = vmatprep.mubr.f32.mxu0 0.0
    %471 = vmatmul.mubr.f32.gmra.mxu0 %v243
    %v472 = vpop.f32.mrf.mxu0
    %v473 = vadd.f32 0.0, %v472
    %v474 = vpop.f32.mrf.mxu0
    %v475 = vadd.f32 0.0, %v474
    %476 = vdwg.mxu0
    %v478 = vsel %vm241, %v219, 0
    %v481 = vsel %vm245, %v218, 0
    %v484 = vsel %vm245, %v217, 0
    %v487 = vsel %vm245, %v216, 0
    %v490 = vsel %vm245, %v215, 0
    %v493 = vsel %vm245, %v214, 0
    %v496 = vsel %vm245, %v213, 0
    %498 = vmatprep.subr.mxu0 0.0
    %499 = vmatpush1.msra.mxu0 0.0
    %500 = vmatprep.subr.mxu0 0.0
    %501 = vmatpush1.msra.mxu0 0.0
    %502 = vmatprep.subr.mxu0 0.0
    %503 = vmatpush1.msra.mxu0 0.0
    %504 = vmatprep.subr.mxu0 0.0
    %505 = vmatpush1.msra.mxu0 0.0
    %506 = vmatprep.subr.mxu0 0.0
    %507 = vmatpush1.msra.mxu0 0.0
    %508 = vmatprep.subr.mxu0 0.0
    %509 = vmatpush1.msra.mxu0 0.0
    %510 = vmatprep.subr.mxu0 0.0
    %511 = vmatpush1.msra.mxu0 0.0
    %512 = vmatprep.subr.mxu0 0.0
    %513 = vmatpush1.msra.mxu0 0.0
    %514 = vmatprep.subr.mxu0 0.0
    %515 = vmatpush1.msra.mxu0 0.0
    %516 = vmatprep.subr.mxu0 0.0
    %517 = vmatpush1.msra.mxu0 0.0
    %518 = vmatprep.subr.mxu0 0.0
    %519 = vmatpush1.msra.mxu0 0.0
    %520 = vmatprep.subr.mxu0 0.0
    %521 = vmatpush1.msra.mxu0 0.0
    %522 = vmatprep.subr.mxu0 0.0
    %523 = vmatpush1.msra.mxu0 0.0
    %524 = vmatprep.subr.mxu0 0.0
    %525 = vmatpush1.msra.mxu0 0.0
    %526 = vmatprep.subr.mxu0 0.0
    %527 = vmatpush1.msra.mxu0 0.0
    %528 = vmatprep.subr.mxu0 %v484
    %529 = vmatpush1.msra.mxu0 %v481
    %530 = vmatprep.subr.mxu0 0.0
    %531 = vmatpush2.msra.mxu0 0.0
    %532 = vmatprep.subr.mxu0 0.0
    %533 = vmatpush2.msra.mxu0 0.0
    %534 = vmatprep.subr.mxu0 0.0
    %535 = vmatpush2.msra.mxu0 0.0
    %536 = vmatprep.subr.mxu0 0.0
    %537 = vmatpush2.msra.mxu0 0.0
    %538 = vmatprep.subr.mxu0 0.0
    %539 = vmatpush2.msra.mxu0 0.0
    %540 = vmatprep.subr.mxu0 0.0
    %541 = vmatpush2.msra.mxu0 0.0
    %542 = vmatprep.subr.mxu0 0.0
    %543 = vmatpush2.msra.mxu0 0.0
    %544 = vmatprep.subr.mxu0 0.0
    %545 = vmatpush2.msra.mxu0 0.0
    %546 = vmatprep.subr.mxu0 0.0
    %547 = vmatpush2.msra.mxu0 0.0
    %548 = vmatprep.subr.mxu0 0.0
    %549 = vmatpush2.msra.mxu0 0.0
    %550 = vmatprep.subr.mxu0 0.0
    %551 = vmatpush2.msra.mxu0 0.0
    %552 = vmatprep.subr.mxu0 0.0
    %553 = vmatpush2.msra.mxu0 0.0
    %554 = vmatprep.subr.mxu0 0.0
    %555 = vmatpush2.msra.mxu0 0.0
    %556 = vmatprep.subr.mxu0 0.0
    %557 = vmatpush2.msra.mxu0 0.0
    %558 = vmatprep.subr.mxu0 0.0
    %559 = vmatpush2.msra.mxu0 0.0
    %560 = vmatprep.subr.mxu0 0.0
    %561 = vmatpush2.msra.mxu0 0.0
    %562 = vmatprep.mubr.f32.mxu0 0.0
    %563 = vmatmul.mubr.f32.gmra.mxu0 %v478
    %v564 = vpop.f32.mrf.mxu0
    %v565 = vadd.f32 %v331, %v564
    %v566 = vpop.f32.mrf.mxu0
    %v567 = vadd.f32 %v333, %v566
    %568 = vdwg.mxu0
    %569 = vmatprep.subr.mxu0 0.0
    %570 = vmatpush1.msra.mxu0 0.0
    %571 = vmatprep.subr.mxu0 0.0
    %572 = vmatpush1.msra.mxu0 0.0
    %573 = vmatprep.subr.mxu0 0.0
    %574 = vmatpush1.msra.mxu0 0.0
    %575 = vmatprep.subr.mxu0 0.0
    %576 = vmatpush1.msra.mxu0 0.0
    %577 = vmatprep.subr.mxu0 0.0
    %578 = vmatpush1.msra.mxu0 0.0
    %579 = vmatprep.subr.mxu0 0.0
    %580 = vmatpush1.msra.mxu0 0.0
    %581 = vmatprep.subr.mxu0 0.0
    %582 = vmatpush1.msra.mxu0 0.0
    %583 = vmatprep.subr.mxu0 0.0
    %584 = vmatpush1.msra.mxu0 0.0
    %585 = vmatprep.subr.mxu0 0.0
    %586 = vmatpush1.msra.mxu0 0.0
    %587 = vmatprep.subr.mxu0 0.0
    %588 = vmatpush1.msra.mxu0 0.0
    %589 = vmatprep.subr.mxu0 0.0
    %590 = vmatpush1.msra.mxu0 0.0
    %591 = vmatprep.subr.mxu0 0.0
    %592 = vmatpush1.msra.mxu0 0.0
    %593 = vmatprep.subr.mxu0 0.0
    %594 = vmatpush1.msra.mxu0 0.0
    %595 = vmatprep.subr.mxu0 0.0
    %596 = vmatpush1.msra.mxu0 0.0
    %597 = vmatprep.subr.mxu0 0.0
    %598 = vmatpush1.msra.mxu0 0.0
    %599 = vmatprep.subr.mxu0 %v490
    %600 = vmatpush1.msra.mxu0 %v487
    %601 = vmatprep.subr.mxu0 0.0
    %602 = vmatpush2.msra.mxu0 0.0
    %603 = vmatprep.subr.mxu0 0.0
    %604 = vmatpush2.msra.mxu0 0.0
    %605 = vmatprep.subr.mxu0 0.0
    %606 = vmatpush2.msra.mxu0 0.0
    %607 = vmatprep.subr.mxu0 0.0
    %608 = vmatpush2.msra.mxu0 0.0
    %609 = vmatprep.subr.mxu0 0.0
    %610 = vmatpush2.msra.mxu0 0.0
    %611 = vmatprep.subr.mxu0 0.0
    %612 = vmatpush2.msra.mxu0 0.0
    %613 = vmatprep.subr.mxu0 0.0
    %614 = vmatpush2.msra.mxu0 0.0
    %615 = vmatprep.subr.mxu0 0.0
    %616 = vmatpush2.msra.mxu0 0.0
    %617 = vmatprep.subr.mxu0 0.0
    %618 = vmatpush2.msra.mxu0 0.0
    %619 = vmatprep.subr.mxu0 0.0
    %620 = vmatpush2.msra.mxu0 0.0
    %621 = vmatprep.subr.mxu0 0.0
    %622 = vmatpush2.msra.mxu0 0.0
    %623 = vmatprep.subr.mxu0 0.0
    %624 = vmatpush2.msra.mxu0 0.0
    %625 = vmatprep.subr.mxu0 0.0
    %626 = vmatpush2.msra.mxu0 0.0
    %627 = vmatprep.subr.mxu0 0.0
    %628 = vmatpush2.msra.mxu0 0.0
    %629 = vmatprep.subr.mxu0 0.0
    %630 = vmatpush2.msra.mxu0 0.0
    %631 = vmatprep.subr.mxu0 0.0
    %632 = vmatpush2.msra.mxu0 0.0
    %633 = vmatprep.mubr.f32.mxu0 0.0
    %634 = vmatmul.mubr.f32.gmra.mxu0 %v478
    %v635 = vpop.f32.mrf.mxu0
    %v636 = vadd.f32 %v402, %v635
    %v637 = vpop.f32.mrf.mxu0
    %v638 = vadd.f32 %v404, %v637
    %639 = vdwg.mxu0
    %640 = vmatprep.subr.mxu0 0.0
    %641 = vmatpush1.msra.mxu0 0.0
    %642 = vmatprep.subr.mxu0 0.0
    %643 = vmatpush1.msra.mxu0 0.0
    %644 = vmatprep.subr.mxu0 0.0
    %645 = vmatpush1.msra.mxu0 0.0
    %646 = vmatprep.subr.mxu0 0.0
    %647 = vmatpush1.msra.mxu0 0.0
    %648 = vmatprep.subr.mxu0 0.0
    %649 = vmatpush1.msra.mxu0 0.0
    %650 = vmatprep.subr.mxu0 0.0
    %651 = vmatpush1.msra.mxu0 0.0
    %652 = vmatprep.subr.mxu0 0.0
    %653 = vmatpush1.msra.mxu0 0.0
    %654 = vmatprep.subr.mxu0 0.0
    %655 = vmatpush1.msra.mxu0 0.0
    %656 = vmatprep.subr.mxu0 0.0
    %657 = vmatpush1.msra.mxu0 0.0
    %658 = vmatprep.subr.mxu0 0.0
    %659 = vmatpush1.msra.mxu0 0.0
    %660 = vmatprep.subr.mxu0 0.0
    %661 = vmatpush1.msra.mxu0 0.0
    %662 = vmatprep.subr.mxu0 0.0
    %663 = vmatpush1.msra.mxu0 0.0
    %664 = vmatprep.subr.mxu0 0.0
    %665 = vmatpush1.msra.mxu0 0.0
    %666 = vmatprep.subr.mxu0 0.0
    %667 = vmatpush1.msra.mxu0 0.0
    %668 = vmatprep.subr.mxu0 0.0
    %669 = vmatpush1.msra.mxu0 0.0
    %670 = vmatprep.subr.mxu0 %v496
    %671 = vmatpush1.msra.mxu0 %v493
    %672 = vmatprep.subr.mxu0 0.0
    %673 = vmatpush2.msra.mxu0 0.0
    %674 = vmatprep.subr.mxu0 0.0
    %675 = vmatpush2.msra.mxu0 0.0
    %676 = vmatprep.subr.mxu0 0.0
    %677 = vmatpush2.msra.mxu0 0.0
    %678 = vmatprep.subr.mxu0 0.0
    %679 = vmatpush2.msra.mxu0 0.0
    %680 = vmatprep.subr.mxu0 0.0
    %681 = vmatpush2.msra.mxu0 0.0
    %682 = vmatprep.subr.mxu0 0.0
    %683 = vmatpush2.msra.mxu0 0.0
    %684 = vmatprep.subr.mxu0 0.0
    %685 = vmatpush2.msra.mxu0 0.0
    %686 = vmatprep.subr.mxu0 0.0
    %687 = vmatpush2.msra.mxu0 0.0
    %688 = vmatprep.subr.mxu0 0.0
    %689 = vmatpush2.msra.mxu0 0.0
    %690 = vmatprep.subr.mxu0 0.0
    %691 = vmatpush2.msra.mxu0 0.0
    %692 = vmatprep.subr.mxu0 0.0
    %693 = vmatpush2.msra.mxu0 0.0
    %694 = vmatprep.subr.mxu0 0.0
    %695 = vmatpush2.msra.mxu0 0.0
    %696 = vmatprep.subr.mxu0 0.0
    %697 = vmatpush2.msra.mxu0 0.0
    %698 = vmatprep.subr.mxu0 0.0
    %699 = vmatpush2.msra.mxu0 0.0
    %700 = vmatprep.subr.mxu0 0.0
    %701 = vmatpush2.msra.mxu0 0.0
    %702 = vmatprep.subr.mxu0 0.0
    %703 = vmatpush2.msra.mxu0 0.0
    %704 = vmatprep.mubr.f32.mxu0 0.0
    %705 = vmatmul.mubr.f32.gmra.mxu0 %v478
    %v706 = vpop.f32.mrf.mxu0
    %v707 = vadd.f32 %v473, %v706
    %v708 = vpop.f32.mrf.mxu0
    %v709 = vadd.f32 %v475, %v708
    %710 = vdwg.mxu0
    %711 = vrot.lane.b32.xlu0 %v184, 17
    %v712 = vpop.permute.xlu0 %711
    %713 = vrot.lane.b32.xlu0 %v192, 17
    %v714 = vpop.permute.xlu0 %713
    %715 = vrot.lane.b32.xlu0 %v185, 17
    %v716 = vpop.permute.xlu0 %715
    %717 = vrot.lane.b32.xlu0 %v193, 17
    %v718 = vpop.permute.xlu0 %717
    %719 = vrot.lane.b32.xlu0 %v186, 17
    %v720 = vpop.permute.xlu0 %719
    %721 = vrot.lane.b32.xlu0 %v194, 17
    %v722 = vpop.permute.xlu0 %721
    %vm723 = vcmp.lt.s32.totalorder %v211, 17
    %v724 = vsel %vm723, %v720, %v722
    %v725 = vsel %vm723, %v718, %v720
    %v726 = vsel %vm723, %v716, %v718
    %v727 = vsel %vm723, %v714, %v716
    %v728 = vsel %vm723, %v712, %v714
    %v729 = vsel %vm723, %v722, %v712
    %s730 = scalar_lea.vmem [#allocation2], 16
    %v731 = vld [vmem:[%s730] sm:$0xff]
    %v733 = vsel %vm241, %v731, 0
    %v736 = vsel %vm245, %v729, 0
    %v739 = vsel %vm245, %v728, 0
    %v742 = vsel %vm245, %v727, 0
    %v745 = vsel %vm245, %v726, 0
    %v748 = vsel %vm245, %v725, 0
    %v751 = vsel %vm245, %v724, 0
    %753 = vmatprep.subr.mxu0 0.0
    %754 = vmatpush1.msra.mxu0 0.0
    %755 = vmatprep.subr.mxu0 0.0
    %756 = vmatpush1.msra.mxu0 0.0
    %757 = vmatprep.subr.mxu0 0.0
    %758 = vmatpush1.msra.mxu0 0.0
    %759 = vmatprep.subr.mxu0 0.0
    %760 = vmatpush1.msra.mxu0 0.0
    %761 = vmatprep.subr.mxu0 0.0
    %762 = vmatpush1.msra.mxu0 0.0
    %763 = vmatprep.subr.mxu0 0.0
    %764 = vmatpush1.msra.mxu0 0.0
    %765 = vmatprep.subr.mxu0 0.0
    %766 = vmatpush1.msra.mxu0 0.0
    %767 = vmatprep.subr.mxu0 0.0
    %768 = vmatpush1.msra.mxu0 0.0
    %769 = vmatprep.subr.mxu0 0.0
    %770 = vmatpush1.msra.mxu0 0.0
    %771 = vmatprep.subr.mxu0 0.0
    %772 = vmatpush1.msra.mxu0 0.0
    %773 = vmatprep.subr.mxu0 0.0
    %774 = vmatpush1.msra.mxu0 0.0
    %775 = vmatprep.subr.mxu0 0.0
    %776 = vmatpush1.msra.mxu0 0.0
    %777 = vmatprep.subr.mxu0 0.0
    %778 = vmatpush1.msra.mxu0 0.0
    %779 = vmatprep.subr.mxu0 0.0
    %780 = vmatpush1.msra.mxu0 0.0
    %781 = vmatprep.subr.mxu0 0.0
    %782 = vmatpush1.msra.mxu0 0.0
    %783 = vmatprep.subr.mxu0 %v739
    %784 = vmatpush1.msra.mxu0 %v736
    %785 = vmatprep.subr.mxu0 0.0
    %786 = vmatpush2.msra.mxu0 0.0
    %787 = vmatprep.subr.mxu0 0.0
    %788 = vmatpush2.msra.mxu0 0.0
    %789 = vmatprep.subr.mxu0 0.0
    %790 = vmatpush2.msra.mxu0 0.0
    %791 = vmatprep.subr.mxu0 0.0
    %792 = vmatpush2.msra.mxu0 0.0
    %793 = vmatprep.subr.mxu0 0.0
    %794 = vmatpush2.msra.mxu0 0.0
    %795 = vmatprep.subr.mxu0 0.0
    %796 = vmatpush2.msra.mxu0 0.0
    %797 = vmatprep.subr.mxu0 0.0
    %798 = vmatpush2.msra.mxu0 0.0
    %799 = vmatprep.subr.mxu0 0.0
    %800 = vmatpush2.msra.mxu0 0.0
    %801 = vmatprep.subr.mxu0 0.0
    %802 = vmatpush2.msra.mxu0 0.0
    %803 = vmatprep.subr.mxu0 0.0
    %804 = vmatpush2.msra.mxu0 0.0
    %805 = vmatprep.subr.mxu0 0.0
    %806 = vmatpush2.msra.mxu0 0.0
    %807 = vmatprep.subr.mxu0 0.0
    %808 = vmatpush2.msra.mxu0 0.0
    %809 = vmatprep.subr.mxu0 0.0
    %810 = vmatpush2.msra.mxu0 0.0
    %811 = vmatprep.subr.mxu0 0.0
    %812 = vmatpush2.msra.mxu0 0.0
    %813 = vmatprep.subr.mxu0 0.0
    %814 = vmatpush2.msra.mxu0 0.0
    %815 = vmatprep.subr.mxu0 0.0
    %816 = vmatpush2.msra.mxu0 0.0
    %817 = vmatprep.mubr.f32.mxu0 0.0
    %818 = vmatmul.mubr.f32.gmra.mxu0 %v733
    %v819 = vpop.f32.mrf.mxu0
    %v820 = vadd.f32 0.0, %v819
    %v821 = vpop.f32.mrf.mxu0
    %v822 = vadd.f32 0.0, %v821
    %823 = vdwg.mxu0
    %824 = vmatprep.subr.mxu0 0.0
    %825 = vmatpush1.msra.mxu0 0.0
    %826 = vmatprep.subr.mxu0 0.0
    %827 = vmatpush1.msra.mxu0 0.0
    %828 = vmatprep.subr.mxu0 0.0
    %829 = vmatpush1.msra.mxu0 0.0
    %830 = vmatprep.subr.mxu0 0.0
    %831 = vmatpush1.msra.mxu0 0.0
    %832 = vmatprep.subr.mxu0 0.0
    %833 = vmatpush1.msra.mxu0 0.0
    %834 = vmatprep.subr.mxu0 0.0
    %835 = vmatpush1.msra.mxu0 0.0
    %836 = vmatprep.subr.mxu0 0.0
    %837 = vmatpush1.msra.mxu0 0.0
    %838 = vmatprep.subr.mxu0 0.0
    %839 = vmatpush1.msra.mxu0 0.0
    %840 = vmatprep.subr.mxu0 0.0
    %841 = vmatpush1.msra.mxu0 0.0
    %842 = vmatprep.subr.mxu0 0.0
    %843 = vmatpush1.msra.mxu0 0.0
    %844 = vmatprep.subr.mxu0 0.0
    %845 = vmatpush1.msra.mxu0 0.0
    %846 = vmatprep.subr.mxu0 0.0
    %847 = vmatpush1.msra.mxu0 0.0
    %848 = vmatprep.subr.mxu0 0.0
    %849 = vmatpush1.msra.mxu0 0.0
    %850 = vmatprep.subr.mxu0 0.0
    %851 = vmatpush1.msra.mxu0 0.0
    %852 = vmatprep.subr.mxu0 0.0
    %853 = vmatpush1.msra.mxu0 0.0
    %854 = vmatprep.subr.mxu0 %v745
    %855 = vmatpush1.msra.mxu0 %v742
    %856 = vmatprep.subr.mxu0 0.0
    %857 = vmatpush2.msra.mxu0 0.0
    %858 = vmatprep.subr.mxu0 0.0
    %859 = vmatpush2.msra.mxu0 0.0
    %860 = vmatprep.subr.mxu0 0.0
    %861 = vmatpush2.msra.mxu0 0.0
    %862 = vmatprep.subr.mxu0 0.0
    %863 = vmatpush2.msra.mxu0 0.0
    %864 = vmatprep.subr.mxu0 0.0
    %865 = vmatpush2.msra.mxu0 0.0
    %866 = vmatprep.subr.mxu0 0.0
    %867 = vmatpush2.msra.mxu0 0.0
    %868 = vmatprep.subr.mxu0 0.0
    %869 = vmatpush2.msra.mxu0 0.0
    %870 = vmatprep.subr.mxu0 0.0
    %871 = vmatpush2.msra.mxu0 0.0
    %872 = vmatprep.subr.mxu0 0.0
    %873 = vmatpush2.msra.mxu0 0.0
    %874 = vmatprep.subr.mxu0 0.0
    %875 = vmatpush2.msra.mxu0 0.0
    %876 = vmatprep.subr.mxu0 0.0
    %877 = vmatpush2.msra.mxu0 0.0
    %878 = vmatprep.subr.mxu0 0.0
    %879 = vmatpush2.msra.mxu0 0.0
    %880 = vmatprep.subr.mxu0 0.0
    %881 = vmatpush2.msra.mxu0 0.0
    %882 = vmatprep.subr.mxu0 0.0
    %883 = vmatpush2.msra.mxu0 0.0
    %884 = vmatprep.subr.mxu0 0.0
    %885 = vmatpush2.msra.mxu0 0.0
    %886 = vmatprep.subr.mxu0 0.0
    %887 = vmatpush2.msra.mxu0 0.0
    %888 = vmatprep.mubr.f32.mxu0 0.0
    %889 = vmatmul.mubr.f32.gmra.mxu0 %v733
    %v890 = vpop.f32.mrf.mxu0
    %v891 = vadd.f32 0.0, %v890
    %v892 = vpop.f32.mrf.mxu0
    %v893 = vadd.f32 0.0, %v892
    %894 = vdwg.mxu0
    %895 = vmatprep.subr.mxu0 0.0
    %896 = vmatpush1.msra.mxu0 0.0
    %897 = vmatprep.subr.mxu0 0.0
    %898 = vmatpush1.msra.mxu0 0.0
    %899 = vmatprep.subr.mxu0 0.0
    %900 = vmatpush1.msra.mxu0 0.0
    %901 = vmatprep.subr.mxu0 0.0
    %902 = vmatpush1.msra.mxu0 0.0
    %903 = vmatprep.subr.mxu0 0.0
    %904 = vmatpush1.msra.mxu0 0.0
    %905 = vmatprep.subr.mxu0 0.0
    %906 = vmatpush1.msra.mxu0 0.0
    %907 = vmatprep.subr.mxu0 0.0
    %908 = vmatpush1.msra.mxu0 0.0
    %909 = vmatprep.subr.mxu0 0.0
    %910 = vmatpush1.msra.mxu0 0.0
    %911 = vmatprep.subr.mxu0 0.0
    %912 = vmatpush1.msra.mxu0 0.0
    %913 = vmatprep.subr.mxu0 0.0
    %914 = vmatpush1.msra.mxu0 0.0
    %915 = vmatprep.subr.mxu0 0.0
    %916 = vmatpush1.msra.mxu0 0.0
    %917 = vmatprep.subr.mxu0 0.0
    %918 = vmatpush1.msra.mxu0 0.0
    %919 = vmatprep.subr.mxu0 0.0
    %920 = vmatpush1.msra.mxu0 0.0
    %921 = vmatprep.subr.mxu0 0.0
    %922 = vmatpush1.msra.mxu0 0.0
    %923 = vmatprep.subr.mxu0 0.0
    %924 = vmatpush1.msra.mxu0 0.0
    %925 = vmatprep.subr.mxu0 %v751
    %926 = vmatpush1.msra.mxu0 %v748
    %927 = vmatprep.subr.mxu0 0.0
    %928 = vmatpush2.msra.mxu0 0.0
    %929 = vmatprep.subr.mxu0 0.0
    %930 = vmatpush2.msra.mxu0 0.0
    %931 = vmatprep.subr.mxu0 0.0
    %932 = vmatpush2.msra.mxu0 0.0
    %933 = vmatprep.subr.mxu0 0.0
    %934 = vmatpush2.msra.mxu0 0.0
    %935 = vmatprep.subr.mxu0 0.0
    %936 = vmatpush2.msra.mxu0 0.0
    %937 = vmatprep.subr.mxu0 0.0
    %938 = vmatpush2.msra.mxu0 0.0
    %939 = vmatprep.subr.mxu0 0.0
    %940 = vmatpush2.msra.mxu0 0.0
    %941 = vmatprep.subr.mxu0 0.0
    %942 = vmatpush2.msra.mxu0 0.0
    %943 = vmatprep.subr.mxu0 0.0
    %944 = vmatpush2.msra.mxu0 0.0
    %945 = vmatprep.subr.mxu0 0.0
    %946 = vmatpush2.msra.mxu0 0.0
    %947 = vmatprep.subr.mxu0 0.0
    %948 = vmatpush2.msra.mxu0 0.0
    %949 = vmatprep.subr.mxu0 0.0
    %950 = vmatpush2.msra.mxu0 0.0
    %951 = vmatprep.subr.mxu0 0.0
    %952 = vmatpush2.msra.mxu0 0.0
    %953 = vmatprep.subr.mxu0 0.0
    %954 = vmatpush2.msra.mxu0 0.0
    %955 = vmatprep.subr.mxu0 0.0
    %956 = vmatpush2.msra.mxu0 0.0
    %957 = vmatprep.subr.mxu0 0.0
    %958 = vmatpush2.msra.mxu0 0.0
    %959 = vmatprep.mubr.f32.mxu0 0.0
    %960 = vmatmul.mubr.f32.gmra.mxu0 %v733
    %v961 = vpop.f32.mrf.mxu0
    %v962 = vadd.f32 0.0, %v961
    %v963 = vpop.f32.mrf.mxu0
    %v964 = vadd.f32 0.0, %v963
    %965 = vdwg.mxu0
    %v966 = vadd.f32 %v565, %v820
    %v967 = vadd.f32 %v567, %v822
    %v968 = vadd.f32 %v636, %v891
    %v969 = vadd.f32 %v638, %v893
    %v970 = vadd.f32 %v707, %v962
    %v971 = vadd.f32 %v709, %v964
    %972 = vrot.lane.b32.xlu0 %v184, 1
    %v973 = vpop.permute.xlu0 %972
    %974 = vrot.lane.b32.xlu0 %v192, 1
    %v975 = vpop.permute.xlu0 %974
    %976 = vrot.lane.b32.xlu0 %v185, 1
    %v977 = vpop.permute.xlu0 %976
    %978 = vrot.lane.b32.xlu0 %v193, 1
    %v979 = vpop.permute.xlu0 %978
    %980 = vrot.lane.b32.xlu0 %v186, 1
    %v981 = vpop.permute.xlu0 %980
    %982 = vrot.lane.b32.xlu0 %v194, 1
    %v983 = vpop.permute.xlu0 %982
    %vm984 = vcmp.lt.s32.totalorder %v211, 1
    %v985 = vsel %vm984, %v981, %v983
    %v986 = vsel %vm984, %v979, %v981
    %v987 = vsel %vm984, %v977, %v979
    %v988 = vsel %vm984, %v975, %v977
    %v989 = vsel %vm984, %v973, %v975
    %v990 = vsel %vm984, %v983, %v973
    %s991 = scalar_lea.vmem [#allocation2], 24
    %v992 = vld [vmem:[%s991] sm:$0xff]
    %v994 = vsel %vm241, %v992, 0
    %v997 = vsel %vm245, %v990, 0
    %v1000 = vsel %vm245, %v989, 0
    %v1003 = vsel %vm245, %v988, 0
    %v1006 = vsel %vm245, %v987, 0
    %v1009 = vsel %vm245, %v986, 0
    %v1012 = vsel %vm245, %v985, 0
    %1014 = vmatprep.subr.mxu0 0.0
    %1015 = vmatpush1.msra.mxu0 0.0
    %1016 = vmatprep.subr.mxu0 0.0
    %1017 = vmatpush1.msra.mxu0 0.0
    %1018 = vmatprep.subr.mxu0 0.0
    %1019 = vmatpush1.msra.mxu0 0.0
    %1020 = vmatprep.subr.mxu0 0.0
    %1021 = vmatpush1.msra.mxu0 0.0
    %1022 = vmatprep.subr.mxu0 0.0
    %1023 = vmatpush1.msra.mxu0 0.0
    %1024 = vmatprep.subr.mxu0 0.0
    %1025 = vmatpush1.msra.mxu0 0.0
    %1026 = vmatprep.subr.mxu0 0.0
    %1027 = vmatpush1.msra.mxu0 0.0
    %1028 = vmatprep.subr.mxu0 0.0
    %1029 = vmatpush1.msra.mxu0 0.0
    %1030 = vmatprep.subr.mxu0 0.0
    %1031 = vmatpush1.msra.mxu0 0.0
    %1032 = vmatprep.subr.mxu0 0.0
    %1033 = vmatpush1.msra.mxu0 0.0
    %1034 = vmatprep.subr.mxu0 0.0
    %1035 = vmatpush1.msra.mxu0 0.0
    %1036 = vmatprep.subr.mxu0 0.0
    %1037 = vmatpush1.msra.mxu0 0.0
    %1038 = vmatprep.subr.mxu0 0.0
    %1039 = vmatpush1.msra.mxu0 0.0
    %1040 = vmatprep.subr.mxu0 0.0
    %1041 = vmatpush1.msra.mxu0 0.0
    %1042 = vmatprep.subr.mxu0 0.0
    %1043 = vmatpush1.msra.mxu0 0.0
    %1044 = vmatprep.subr.mxu0 %v1000
    %1045 = vmatpush1.msra.mxu0 %v997
    %1046 = vmatprep.subr.mxu0 0.0
    %1047 = vmatpush2.msra.mxu0 0.0
    %1048 = vmatprep.subr.mxu0 0.0
    %1049 = vmatpush2.msra.mxu0 0.0
    %1050 = vmatprep.subr.mxu0 0.0
    %1051 = vmatpush2.msra.mxu0 0.0
    %1052 = vmatprep.subr.mxu0 0.0
    %1053 = vmatpush2.msra.mxu0 0.0
    %1054 = vmatprep.subr.mxu0 0.0
    %1055 = vmatpush2.msra.mxu0 0.0
    %1056 = vmatprep.subr.mxu0 0.0
    %1057 = vmatpush2.msra.mxu0 0.0
    %1058 = vmatprep.subr.mxu0 0.0
    %1059 = vmatpush2.msra.mxu0 0.0
    %1060 = vmatprep.subr.mxu0 0.0
    %1061 = vmatpush2.msra.mxu0 0.0
    %1062 = vmatprep.subr.mxu0 0.0
    %1063 = vmatpush2.msra.mxu0 0.0
    %1064 = vmatprep.subr.mxu0 0.0
    %1065 = vmatpush2.msra.mxu0 0.0
    %1066 = vmatprep.subr.mxu0 0.0
    %1067 = vmatpush2.msra.mxu0 0.0
    %1068 = vmatprep.subr.mxu0 0.0
    %1069 = vmatpush2.msra.mxu0 0.0
    %1070 = vmatprep.subr.mxu0 0.0
    %1071 = vmatpush2.msra.mxu0 0.0
    %1072 = vmatprep.subr.mxu0 0.0
    %1073 = vmatpush2.msra.mxu0 0.0
    %1074 = vmatprep.subr.mxu0 0.0
    %1075 = vmatpush2.msra.mxu0 0.0
    %1076 = vmatprep.subr.mxu0 0.0
    %1077 = vmatpush2.msra.mxu0 0.0
    %1078 = vmatprep.mubr.f32.mxu0 0.0
    %1079 = vmatmul.mubr.f32.gmra.mxu0 %v994
    %v1080 = vpop.f32.mrf.mxu0
    %v1081 = vadd.f32 0.0, %v1080
    %v1082 = vpop.f32.mrf.mxu0
    %v1083 = vadd.f32 0.0, %v1082
    %1084 = vdwg.mxu0
    %1085 = vmatprep.subr.mxu0 0.0
    %1086 = vmatpush1.msra.mxu0 0.0
    %1087 = vmatprep.subr.mxu0 0.0
    %1088 = vmatpush1.msra.mxu0 0.0
    %1089 = vmatprep.subr.mxu0 0.0
    %1090 = vmatpush1.msra.mxu0 0.0
    %1091 = vmatprep.subr.mxu0 0.0
    %1092 = vmatpush1.msra.mxu0 0.0
    %1093 = vmatprep.subr.mxu0 0.0
    %1094 = vmatpush1.msra.mxu0 0.0
    %1095 = vmatprep.subr.mxu0 0.0
    %1096 = vmatpush1.msra.mxu0 0.0
    %1097 = vmatprep.subr.mxu0 0.0
    %1098 = vmatpush1.msra.mxu0 0.0
    %1099 = vmatprep.subr.mxu0 0.0
    %1100 = vmatpush1.msra.mxu0 0.0
    %1101 = vmatprep.subr.mxu0 0.0
    %1102 = vmatpush1.msra.mxu0 0.0
    %1103 = vmatprep.subr.mxu0 0.0
    %1104 = vmatpush1.msra.mxu0 0.0
    %1105 = vmatprep.subr.mxu0 0.0
    %1106 = vmatpush1.msra.mxu0 0.0
    %1107 = vmatprep.subr.mxu0 0.0
    %1108 = vmatpush1.msra.mxu0 0.0
    %1109 = vmatprep.subr.mxu0 0.0
    %1110 = vmatpush1.msra.mxu0 0.0
    %1111 = vmatprep.subr.mxu0 0.0
    %1112 = vmatpush1.msra.mxu0 0.0
    %1113 = vmatprep.subr.mxu0 0.0
    %1114 = vmatpush1.msra.mxu0 0.0
    %1115 = vmatprep.subr.mxu0 %v1006
    %1116 = vmatpush1.msra.mxu0 %v1003
    %1117 = vmatprep.subr.mxu0 0.0
    %1118 = vmatpush2.msra.mxu0 0.0
    %1119 = vmatprep.subr.mxu0 0.0
    %1120 = vmatpush2.msra.mxu0 0.0
    %1121 = vmatprep.subr.mxu0 0.0
    %1122 = vmatpush2.msra.mxu0 0.0
    %1123 = vmatprep.subr.mxu0 0.0
    %1124 = vmatpush2.msra.mxu0 0.0
    %1125 = vmatprep.subr.mxu0 0.0
    %1126 = vmatpush2.msra.mxu0 0.0
    %1127 = vmatprep.subr.mxu0 0.0
    %1128 = vmatpush2.msra.mxu0 0.0
    %1129 = vmatprep.subr.mxu0 0.0
    %1130 = vmatpush2.msra.mxu0 0.0
    %1131 = vmatprep.subr.mxu0 0.0
    %1132 = vmatpush2.msra.mxu0 0.0
    %1133 = vmatprep.subr.mxu0 0.0
    %1134 = vmatpush2.msra.mxu0 0.0
    %1135 = vmatprep.subr.mxu0 0.0
    %1136 = vmatpush2.msra.mxu0 0.0
    %1137 = vmatprep.subr.mxu0 0.0
    %1138 = vmatpush2.msra.mxu0 0.0
    %1139 = vmatprep.subr.mxu0 0.0
    %1140 = vmatpush2.msra.mxu0 0.0
    %1141 = vmatprep.subr.mxu0 0.0
    %1142 = vmatpush2.msra.mxu0 0.0
    %1143 = vmatprep.subr.mxu0 0.0
    %1144 = vmatpush2.msra.mxu0 0.0
    %1145 = vmatprep.subr.mxu0 0.0
    %1146 = vmatpush2.msra.mxu0 0.0
    %1147 = vmatprep.subr.mxu0 0.0
    %1148 = vmatpush2.msra.mxu0 0.0
    %1149 = vmatprep.mubr.f32.mxu0 0.0
    %1150 = vmatmul.mubr.f32.gmra.mxu0 %v994
    %v1151 = vpop.f32.mrf.mxu0
    %v1152 = vadd.f32 0.0, %v1151
    %v1153 = vpop.f32.mrf.mxu0
    %v1154 = vadd.f32 0.0, %v1153
    %1155 = vdwg.mxu0
    %1156 = vmatprep.subr.mxu0 0.0
    %1157 = vmatpush1.msra.mxu0 0.0
    %1158 = vmatprep.subr.mxu0 0.0
    %1159 = vmatpush1.msra.mxu0 0.0
    %1160 = vmatprep.subr.mxu0 0.0
    %1161 = vmatpush1.msra.mxu0 0.0
    %1162 = vmatprep.subr.mxu0 0.0
    %1163 = vmatpush1.msra.mxu0 0.0
    %1164 = vmatprep.subr.mxu0 0.0
    %1165 = vmatpush1.msra.mxu0 0.0
    %1166 = vmatprep.subr.mxu0 0.0
    %1167 = vmatpush1.msra.mxu0 0.0
    %1168 = vmatprep.subr.mxu0 0.0
    %1169 = vmatpush1.msra.mxu0 0.0
    %1170 = vmatprep.subr.mxu0 0.0
    %1171 = vmatpush1.msra.mxu0 0.0
    %1172 = vmatprep.subr.mxu0 0.0
    %1173 = vmatpush1.msra.mxu0 0.0
    %1174 = vmatprep.subr.mxu0 0.0
    %1175 = vmatpush1.msra.mxu0 0.0
    %1176 = vmatprep.subr.mxu0 0.0
    %1177 = vmatpush1.msra.mxu0 0.0
    %1178 = vmatprep.subr.mxu0 0.0
    %1179 = vmatpush1.msra.mxu0 0.0
    %1180 = vmatprep.subr.mxu0 0.0
    %1181 = vmatpush1.msra.mxu0 0.0
    %1182 = vmatprep.subr.mxu0 0.0
    %1183 = vmatpush1.msra.mxu0 0.0
    %1184 = vmatprep.subr.mxu0 0.0
    %1185 = vmatpush1.msra.mxu0 0.0
    %1186 = vmatprep.subr.mxu0 %v1012
    %1187 = vmatpush1.msra.mxu0 %v1009
    %1188 = vmatprep.subr.mxu0 0.0
    %1189 = vmatpush2.msra.mxu0 0.0
    %1190 = vmatprep.subr.mxu0 0.0
    %1191 = vmatpush2.msra.mxu0 0.0
    %1192 = vmatprep.subr.mxu0 0.0
    %1193 = vmatpush2.msra.mxu0 0.0
    %1194 = vmatprep.subr.mxu0 0.0
    %1195 = vmatpush2.msra.mxu0 0.0
    %1196 = vmatprep.subr.mxu0 0.0
    %1197 = vmatpush2.msra.mxu0 0.0
    %1198 = vmatprep.subr.mxu0 0.0
    %1199 = vmatpush2.msra.mxu0 0.0
    %1200 = vmatprep.subr.mxu0 0.0
    %1201 = vmatpush2.msra.mxu0 0.0
    %1202 = vmatprep.subr.mxu0 0.0
    %1203 = vmatpush2.msra.mxu0 0.0
    %1204 = vmatprep.subr.mxu0 0.0
    %1205 = vmatpush2.msra.mxu0 0.0
    %1206 = vmatprep.subr.mxu0 0.0
    %1207 = vmatpush2.msra.mxu0 0.0
    %1208 = vmatprep.subr.mxu0 0.0
    %1209 = vmatpush2.msra.mxu0 0.0
    %1210 = vmatprep.subr.mxu0 0.0
    %1211 = vmatpush2.msra.mxu0 0.0
    %1212 = vmatprep.subr.mxu0 0.0
    %1213 = vmatpush2.msra.mxu0 0.0
    %1214 = vmatprep.subr.mxu0 0.0
    %1215 = vmatpush2.msra.mxu0 0.0
    %1216 = vmatprep.subr.mxu0 0.0
    %1217 = vmatpush2.msra.mxu0 0.0
    %1218 = vmatprep.subr.mxu0 0.0
    %1219 = vmatpush2.msra.mxu0 0.0
    %1220 = vmatprep.mubr.f32.mxu0 0.0
    %1221 = vmatmul.mubr.f32.gmra.mxu0 %v994
    %v1222 = vpop.f32.mrf.mxu0
    %v1223 = vadd.f32 0.0, %v1222
    %v1224 = vpop.f32.mrf.mxu0
    %v1225 = vadd.f32 0.0, %v1224
    %1226 = vdwg.mxu0
    %v1227 = vadd.f32 %v966, %v1081
    %v1228 = vadd.f32 %v967, %v1083
    %v1229 = vadd.f32 %v968, %v1152
    %v1230 = vadd.f32 %v969, %v1154
    %v1231 = vadd.f32 %v970, %v1223
    %v1232 = vadd.f32 %v971, %v1225
    %s1233 = scalar_lea.vmem [#allocation2], 32
    %v1234 = vld [vmem:[%s1233] sm:$0xff]
    %v1236 = vsel %vm241, %v1234, 0
    %v1238 = vsel %vm245, %v184, 0
    %v1240 = vsel %vm245, %v192, 0
    %v1242 = vsel %vm245, %v185, 0
    %v1244 = vsel %vm245, %v193, 0
    %v1246 = vsel %vm245, %v186, 0
    %v1248 = vsel %vm245, %v194, 0
    %1250 = vmatprep.subr.mxu0 0.0
    %1251 = vmatpush1.msra.mxu0 0.0
    %1252 = vmatprep.subr.mxu0 0.0
    %1253 = vmatpush1.msra.mxu0 0.0
    %1254 = vmatprep.subr.mxu0 0.0
    %1255 = vmatpush1.msra.mxu0 0.0
    %1256 = vmatprep.subr.mxu0 0.0
    %1257 = vmatpush1.msra.mxu0 0.0
    %1258 = vmatprep.subr.mxu0 0.0
    %1259 = vmatpush1.msra.mxu0 0.0
    %1260 = vmatprep.subr.mxu0 0.0
    %1261 = vmatpush1.msra.mxu0 0.0
    %1262 = vmatprep.subr.mxu0 0.0
    %1263 = vmatpush1.msra.mxu0 0.0
    %1264 = vmatprep.subr.mxu0 0.0
    %1265 = vmatpush1.msra.mxu0 0.0
    %1266 = vmatprep.subr.mxu0 0.0
    %1267 = vmatpush1.msra.mxu0 0.0
    %1268 = vmatprep.subr.mxu0 0.0
    %1269 = vmatpush1.msra.mxu0 0.0
    %1270 = vmatprep.subr.mxu0 0.0
    %1271 = vmatpush1.msra.mxu0 0.0
    %1272 = vmatprep.subr.mxu0 0.0
    %1273 = vmatpush1.msra.mxu0 0.0
    %1274 = vmatprep.subr.mxu0 0.0
    %1275 = vmatpush1.msra.mxu0 0.0
    %1276 = vmatprep.subr.mxu0 0.0
    %1277 = vmatpush1.msra.mxu0 0.0
    %1278 = vmatprep.subr.mxu0 0.0
    %1279 = vmatpush1.msra.mxu0 0.0
    %1280 = vmatprep.subr.mxu0 %v1240
    %1281 = vmatpush1.msra.mxu0 %v1238
    %1282 = vmatprep.subr.mxu0 0.0
    %1283 = vmatpush2.msra.mxu0 0.0
    %1284 = vmatprep.subr.mxu0 0.0
    %1285 = vmatpush2.msra.mxu0 0.0
    %1286 = vmatprep.subr.mxu0 0.0
    %1287 = vmatpush2.msra.mxu0 0.0
    %1288 = vmatprep.subr.mxu0 0.0
    %1289 = vmatpush2.msra.mxu0 0.0
    %1290 = vmatprep.subr.mxu0 0.0
    %1291 = vmatpush2.msra.mxu0 0.0
    %1292 = vmatprep.subr.mxu0 0.0
    %1293 = vmatpush2.msra.mxu0 0.0
    %1294 = vmatprep.subr.mxu0 0.0
    %1295 = vmatpush2.msra.mxu0 0.0
    %1296 = vmatprep.subr.mxu0 0.0
    %1297 = vmatpush2.msra.mxu0 0.0
    %1298 = vmatprep.subr.mxu0 0.0
    %1299 = vmatpush2.msra.mxu0 0.0
    %1300 = vmatprep.subr.mxu0 0.0
    %1301 = vmatpush2.msra.mxu0 0.0
    %1302 = vmatprep.subr.mxu0 0.0
    %1303 = vmatpush2.msra.mxu0 0.0
    %1304 = vmatprep.subr.mxu0 0.0
    %1305 = vmatpush2.msra.mxu0 0.0
    %1306 = vmatprep.subr.mxu0 0.0
    %1307 = vmatpush2.msra.mxu0 0.0
    %1308 = vmatprep.subr.mxu0 0.0
    %1309 = vmatpush2.msra.mxu0 0.0
    %1310 = vmatprep.subr.mxu0 0.0
    %1311 = vmatpush2.msra.mxu0 0.0
    %1312 = vmatprep.subr.mxu0 0.0
    %1313 = vmatpush2.msra.mxu0 0.0
    %1314 = vmatprep.mubr.f32.mxu0 0.0
    %1315 = vmatmul.mubr.f32.gmra.mxu0 %v1236
    %v1316 = vpop.f32.mrf.mxu0
    %v1317 = vadd.f32 0.0, %v1316
    %v1318 = vpop.f32.mrf.mxu0
    %v1319 = vadd.f32 0.0, %v1318
    %1320 = vdwg.mxu0
    %1321 = vmatprep.subr.mxu0 0.0
    %1322 = vmatpush1.msra.mxu0 0.0
    %1323 = vmatprep.subr.mxu0 0.0
    %1324 = vmatpush1.msra.mxu0 0.0
    %1325 = vmatprep.subr.mxu0 0.0
    %1326 = vmatpush1.msra.mxu0 0.0
    %1327 = vmatprep.subr.mxu0 0.0
    %1328 = vmatpush1.msra.mxu0 0.0
    %1329 = vmatprep.subr.mxu0 0.0
    %1330 = vmatpush1.msra.mxu0 0.0
    %1331 = vmatprep.subr.mxu0 0.0
    %1332 = vmatpush1.msra.mxu0 0.0
    %1333 = vmatprep.subr.mxu0 0.0
    %1334 = vmatpush1.msra.mxu0 0.0
    %1335 = vmatprep.subr.mxu0 0.0
    %1336 = vmatpush1.msra.mxu0 0.0
    %1337 = vmatprep.subr.mxu0 0.0
    %1338 = vmatpush1.msra.mxu0 0.0
    %1339 = vmatprep.subr.mxu0 0.0
    %1340 = vmatpush1.msra.mxu0 0.0
    %1341 = vmatprep.subr.mxu0 0.0
    %1342 = vmatpush1.msra.mxu0 0.0
    %1343 = vmatprep.subr.mxu0 0.0
    %1344 = vmatpush1.msra.mxu0 0.0
    %1345 = vmatprep.subr.mxu0 0.0
    %1346 = vmatpush1.msra.mxu0 0.0
    %1347 = vmatprep.subr.mxu0 0.0
    %1348 = vmatpush1.msra.mxu0 0.0
    %1349 = vmatprep.subr.mxu0 0.0
    %1350 = vmatpush1.msra.mxu0 0.0
    %1351 = vmatprep.subr.mxu0 %v1244
    %1352 = vmatpush1.msra.mxu0 %v1242
    %1353 = vmatprep.subr.mxu0 0.0
    %1354 = vmatpush2.msra.mxu0 0.0
    %1355 = vmatprep.subr.mxu0 0.0
    %1356 = vmatpush2.msra.mxu0 0.0
    %1357 = vmatprep.subr.mxu0 0.0
    %1358 = vmatpush2.msra.mxu0 0.0
    %1359 = vmatprep.subr.mxu0 0.0
    %1360 = vmatpush2.msra.mxu0 0.0
    %1361 = vmatprep.subr.mxu0 0.0
    %1362 = vmatpush2.msra.mxu0 0.0
    %1363 = vmatprep.subr.mxu0 0.0
    %1364 = vmatpush2.msra.mxu0 0.0
    %1365 = vmatprep.subr.mxu0 0.0
    %1366 = vmatpush2.msra.mxu0 0.0
    %1367 = vmatprep.subr.mxu0 0.0
    %1368 = vmatpush2.msra.mxu0 0.0
    %1369 = vmatprep.subr.mxu0 0.0
    %1370 = vmatpush2.msra.mxu0 0.0
    %1371 = vmatprep.subr.mxu0 0.0
    %1372 = vmatpush2.msra.mxu0 0.0
    %1373 = vmatprep.subr.mxu0 0.0
    %1374 = vmatpush2.msra.mxu0 0.0
    %1375 = vmatprep.subr.mxu0 0.0
    %1376 = vmatpush2.msra.mxu0 0.0
    %1377 = vmatprep.subr.mxu0 0.0
    %1378 = vmatpush2.msra.mxu0 0.0
    %1379 = vmatprep.subr.mxu0 0.0
    %1380 = vmatpush2.msra.mxu0 0.0
    %1381 = vmatprep.subr.mxu0 0.0
    %1382 = vmatpush2.msra.mxu0 0.0
    %1383 = vmatprep.subr.mxu0 0.0
    %1384 = vmatpush2.msra.mxu0 0.0
    %1385 = vmatprep.mubr.f32.mxu0 0.0
    %1386 = vmatmul.mubr.f32.gmra.mxu0 %v1236
    %v1387 = vpop.f32.mrf.mxu0
    %v1388 = vadd.f32 0.0, %v1387
    %v1389 = vpop.f32.mrf.mxu0
    %v1390 = vadd.f32 0.0, %v1389
    %1391 = vdwg.mxu0
    %1392 = vmatprep.subr.mxu0 0.0
    %1393 = vmatpush1.msra.mxu0 0.0
    %1394 = vmatprep.subr.mxu0 0.0
    %1395 = vmatpush1.msra.mxu0 0.0
    %1396 = vmatprep.subr.mxu0 0.0
    %1397 = vmatpush1.msra.mxu0 0.0
    %1398 = vmatprep.subr.mxu0 0.0
    %1399 = vmatpush1.msra.mxu0 0.0
    %1400 = vmatprep.subr.mxu0 0.0
    %1401 = vmatpush1.msra.mxu0 0.0
    %1402 = vmatprep.subr.mxu0 0.0
    %1403 = vmatpush1.msra.mxu0 0.0
    %1404 = vmatprep.subr.mxu0 0.0
    %1405 = vmatpush1.msra.mxu0 0.0
    %1406 = vmatprep.subr.mxu0 0.0
    %1407 = vmatpush1.msra.mxu0 0.0
    %1408 = vmatprep.subr.mxu0 0.0
    %1409 = vmatpush1.msra.mxu0 0.0
    %1410 = vmatprep.subr.mxu0 0.0
    %1411 = vmatpush1.msra.mxu0 0.0
    %1412 = vmatprep.subr.mxu0 0.0
    %1413 = vmatpush1.msra.mxu0 0.0
    %1414 = vmatprep.subr.mxu0 0.0
    %1415 = vmatpush1.msra.mxu0 0.0
    %1416 = vmatprep.subr.mxu0 0.0
    %1417 = vmatpush1.msra.mxu0 0.0
    %1418 = vmatprep.subr.mxu0 0.0
    %1419 = vmatpush1.msra.mxu0 0.0
    %1420 = vmatprep.subr.mxu0 0.0
    %1421 = vmatpush1.msra.mxu0 0.0
    %1422 = vmatprep.subr.mxu0 %v1248
    %1423 = vmatpush1.msra.mxu0 %v1246
    %1424 = vmatprep.subr.mxu0 0.0
    %1425 = vmatpush2.msra.mxu0 0.0
    %1426 = vmatprep.subr.mxu0 0.0
    %1427 = vmatpush2.msra.mxu0 0.0
    %1428 = vmatprep.subr.mxu0 0.0
    %1429 = vmatpush2.msra.mxu0 0.0
    %1430 = vmatprep.subr.mxu0 0.0
    %1431 = vmatpush2.msra.mxu0 0.0
    %1432 = vmatprep.subr.mxu0 0.0
    %1433 = vmatpush2.msra.mxu0 0.0
    %1434 = vmatprep.subr.mxu0 0.0
    %1435 = vmatpush2.msra.mxu0 0.0
    %1436 = vmatprep.subr.mxu0 0.0
    %1437 = vmatpush2.msra.mxu0 0.0
    %1438 = vmatprep.subr.mxu0 0.0
    %1439 = vmatpush2.msra.mxu0 0.0
    %1440 = vmatprep.subr.mxu0 0.0
    %1441 = vmatpush2.msra.mxu0 0.0
    %1442 = vmatprep.subr.mxu0 0.0
    %1443 = vmatpush2.msra.mxu0 0.0
    %1444 = vmatprep.subr.mxu0 0.0
    %1445 = vmatpush2.msra.mxu0 0.0
    %1446 = vmatprep.subr.mxu0 0.0
    %1447 = vmatpush2.msra.mxu0 0.0
    %1448 = vmatprep.subr.mxu0 0.0
    %1449 = vmatpush2.msra.mxu0 0.0
    %1450 = vmatprep.subr.mxu0 0.0
    %1451 = vmatpush2.msra.mxu0 0.0
    %1452 = vmatprep.subr.mxu0 0.0
    %1453 = vmatpush2.msra.mxu0 0.0
    %1454 = vmatprep.subr.mxu0 0.0
    %1455 = vmatpush2.msra.mxu0 0.0
    %1456 = vmatprep.mubr.f32.mxu0 0.0
    %1457 = vmatmul.mubr.f32.gmra.mxu0 %v1236
    %v1458 = vpop.f32.mrf.mxu0
    %v1459 = vadd.f32 0.0, %v1458
    %v1460 = vpop.f32.mrf.mxu0
    %v1461 = vadd.f32 0.0, %v1460
    %1462 = vdwg.mxu0
    %v1463 = vadd.f32 %v1227, %v1317
    %v1464 = vadd.f32 %v1228, %v1319
    %v1465 = vadd.f32 %v1229, %v1388
    %v1466 = vadd.f32 %v1230, %v1390
    %v1467 = vadd.f32 %v1231, %v1459
    %v1468 = vadd.f32 %v1232, %v1461
    %1469 = vrot.lane.b32.xlu0 %v184, 127
    %v1470 = vpop.permute.xlu0 %1469
    %1471 = vrot.lane.b32.xlu0 %v192, 127
    %v1472 = vpop.permute.xlu0 %1471
    %1473 = vrot.lane.b32.xlu0 %v185, 127
    %v1474 = vpop.permute.xlu0 %1473
    %1475 = vrot.lane.b32.xlu0 %v193, 127
    %v1476 = vpop.permute.xlu0 %1475
    %1477 = vrot.lane.b32.xlu0 %v186, 127
    %v1478 = vpop.permute.xlu0 %1477
    %1479 = vrot.lane.b32.xlu0 %v194, 127
    %v1480 = vpop.permute.xlu0 %1479
    %vm1481 = vcmp.lt.s32.totalorder %v211, 127
    %v1482 = vsel %vm1481, %v1478, %v1480
    %v1483 = vsel %vm1481, %v1476, %v1478
    %v1484 = vsel %vm1481, %v1474, %v1476
    %v1485 = vsel %vm1481, %v1472, %v1474
    %v1486 = vsel %vm1481, %v1470, %v1472
    %v1487 = vsel %vm1481, %v1480, %v1470
    %s1488 = scalar_lea.vmem [#allocation2], 40
    %v1489 = vld [vmem:[%s1488] sm:$0xff]
    %v1491 = vsel %vm241, %v1489, 0
    %v1494 = vsel %vm245, %v1486, 0
    %v1497 = vsel %vm245, %v1485, 0
    %v1500 = vsel %vm245, %v1484, 0
    %v1503 = vsel %vm245, %v1483, 0
    %v1506 = vsel %vm245, %v1482, 0
    %v1509 = vsel %vm245, %v1487, 0
    %1511 = vmatprep.subr.mxu0 0.0
    %1512 = vmatpush1.msra.mxu0 0.0
    %1513 = vmatprep.subr.mxu0 0.0
    %1514 = vmatpush1.msra.mxu0 0.0
    %1515 = vmatprep.subr.mxu0 0.0
    %1516 = vmatpush1.msra.mxu0 0.0
    %1517 = vmatprep.subr.mxu0 0.0
    %1518 = vmatpush1.msra.mxu0 0.0
    %1519 = vmatprep.subr.mxu0 0.0
    %1520 = vmatpush1.msra.mxu0 0.0
    %1521 = vmatprep.subr.mxu0 0.0
    %1522 = vmatpush1.msra.mxu0 0.0
    %1523 = vmatprep.subr.mxu0 0.0
    %1524 = vmatpush1.msra.mxu0 0.0
    %1525 = vmatprep.subr.mxu0 0.0
    %1526 = vmatpush1.msra.mxu0 0.0
    %1527 = vmatprep.subr.mxu0 0.0
    %1528 = vmatpush1.msra.mxu0 0.0
    %1529 = vmatprep.subr.mxu0 0.0
    %1530 = vmatpush1.msra.mxu0 0.0
    %1531 = vmatprep.subr.mxu0 0.0
    %1532 = vmatpush1.msra.mxu0 0.0
    %1533 = vmatprep.subr.mxu0 0.0
    %1534 = vmatpush1.msra.mxu0 0.0
    %1535 = vmatprep.subr.mxu0 0.0
    %1536 = vmatpush1.msra.mxu0 0.0
    %1537 = vmatprep.subr.mxu0 0.0
    %1538 = vmatpush1.msra.mxu0 0.0
    %1539 = vmatprep.subr.mxu0 0.0
    %1540 = vmatpush1.msra.mxu0 0.0
    %1541 = vmatprep.subr.mxu0 %v1497
    %1542 = vmatpush1.msra.mxu0 %v1494
    %1543 = vmatprep.subr.mxu0 0.0
    %1544 = vmatpush2.msra.mxu0 0.0
    %1545 = vmatprep.subr.mxu0 0.0
    %1546 = vmatpush2.msra.mxu0 0.0
    %1547 = vmatprep.subr.mxu0 0.0
    %1548 = vmatpush2.msra.mxu0 0.0
    %1549 = vmatprep.subr.mxu0 0.0
    %1550 = vmatpush2.msra.mxu0 0.0
    %1551 = vmatprep.subr.mxu0 0.0
    %1552 = vmatpush2.msra.mxu0 0.0
    %1553 = vmatprep.subr.mxu0 0.0
    %1554 = vmatpush2.msra.mxu0 0.0
    %1555 = vmatprep.subr.mxu0 0.0
    %1556 = vmatpush2.msra.mxu0 0.0
    %1557 = vmatprep.subr.mxu0 0.0
    %1558 = vmatpush2.msra.mxu0 0.0
    %1559 = vmatprep.subr.mxu0 0.0
    %1560 = vmatpush2.msra.mxu0 0.0
    %1561 = vmatprep.subr.mxu0 0.0
    %1562 = vmatpush2.msra.mxu0 0.0
    %1563 = vmatprep.subr.mxu0 0.0
    %1564 = vmatpush2.msra.mxu0 0.0
    %1565 = vmatprep.subr.mxu0 0.0
    %1566 = vmatpush2.msra.mxu0 0.0
    %1567 = vmatprep.subr.mxu0 0.0
    %1568 = vmatpush2.msra.mxu0 0.0
    %1569 = vmatprep.subr.mxu0 0.0
    %1570 = vmatpush2.msra.mxu0 0.0
    %1571 = vmatprep.subr.mxu0 0.0
    %1572 = vmatpush2.msra.mxu0 0.0
    %1573 = vmatprep.subr.mxu0 0.0
    %1574 = vmatpush2.msra.mxu0 0.0
    %1575 = vmatprep.mubr.f32.mxu0 0.0
    %1576 = vmatmul.mubr.f32.gmra.mxu0 %v1491
    %v1577 = vpop.f32.mrf.mxu0
    %v1578 = vadd.f32 0.0, %v1577
    %v1579 = vpop.f32.mrf.mxu0
    %v1580 = vadd.f32 0.0, %v1579
    %1581 = vdwg.mxu0
    %1582 = vmatprep.subr.mxu0 0.0
    %1583 = vmatpush1.msra.mxu0 0.0
    %1584 = vmatprep.subr.mxu0 0.0
    %1585 = vmatpush1.msra.mxu0 0.0
    %1586 = vmatprep.subr.mxu0 0.0
    %1587 = vmatpush1.msra.mxu0 0.0
    %1588 = vmatprep.subr.mxu0 0.0
    %1589 = vmatpush1.msra.mxu0 0.0
    %1590 = vmatprep.subr.mxu0 0.0
    %1591 = vmatpush1.msra.mxu0 0.0
    %1592 = vmatprep.subr.mxu0 0.0
    %1593 = vmatpush1.msra.mxu0 0.0
    %1594 = vmatprep.subr.mxu0 0.0
    %1595 = vmatpush1.msra.mxu0 0.0
    %1596 = vmatprep.subr.mxu0 0.0
    %1597 = vmatpush1.msra.mxu0 0.0
    %1598 = vmatprep.subr.mxu0 0.0
    %1599 = vmatpush1.msra.mxu0 0.0
    %1600 = vmatprep.subr.mxu0 0.0
    %1601 = vmatpush1.msra.mxu0 0.0
    %1602 = vmatprep.subr.mxu0 0.0
    %1603 = vmatpush1.msra.mxu0 0.0
    %1604 = vmatprep.subr.mxu0 0.0
    %1605 = vmatpush1.msra.mxu0 0.0
    %1606 = vmatprep.subr.mxu0 0.0
    %1607 = vmatpush1.msra.mxu0 0.0
    %1608 = vmatprep.subr.mxu0 0.0
    %1609 = vmatpush1.msra.mxu0 0.0
    %1610 = vmatprep.subr.mxu0 0.0
    %1611 = vmatpush1.msra.mxu0 0.0
    %1612 = vmatprep.subr.mxu0 %v1503
    %1613 = vmatpush1.msra.mxu0 %v1500
    %1614 = vmatprep.subr.mxu0 0.0
    %1615 = vmatpush2.msra.mxu0 0.0
    %1616 = vmatprep.subr.mxu0 0.0
    %1617 = vmatpush2.msra.mxu0 0.0
    %1618 = vmatprep.subr.mxu0 0.0
    %1619 = vmatpush2.msra.mxu0 0.0
    %1620 = vmatprep.subr.mxu0 0.0
    %1621 = vmatpush2.msra.mxu0 0.0
    %1622 = vmatprep.subr.mxu0 0.0
    %1623 = vmatpush2.msra.mxu0 0.0
    %1624 = vmatprep.subr.mxu0 0.0
    %1625 = vmatpush2.msra.mxu0 0.0
    %1626 = vmatprep.subr.mxu0 0.0
    %1627 = vmatpush2.msra.mxu0 0.0
    %1628 = vmatprep.subr.mxu0 0.0
    %1629 = vmatpush2.msra.mxu0 0.0
    %1630 = vmatprep.subr.mxu0 0.0
    %1631 = vmatpush2.msra.mxu0 0.0
    %1632 = vmatprep.subr.mxu0 0.0
    %1633 = vmatpush2.msra.mxu0 0.0
    %1634 = vmatprep.subr.mxu0 0.0
    %1635 = vmatpush2.msra.mxu0 0.0
    %1636 = vmatprep.subr.mxu0 0.0
    %1637 = vmatpush2.msra.mxu0 0.0
    %1638 = vmatprep.subr.mxu0 0.0
    %1639 = vmatpush2.msra.mxu0 0.0
    %1640 = vmatprep.subr.mxu0 0.0
    %1641 = vmatpush2.msra.mxu0 0.0
    %1642 = vmatprep.subr.mxu0 0.0
    %1643 = vmatpush2.msra.mxu0 0.0
    %1644 = vmatprep.subr.mxu0 0.0
    %1645 = vmatpush2.msra.mxu0 0.0
    %1646 = vmatprep.mubr.f32.mxu0 0.0
    %1647 = vmatmul.mubr.f32.gmra.mxu0 %v1491
    %v1648 = vpop.f32.mrf.mxu0
    %v1649 = vadd.f32 0.0, %v1648
    %v1650 = vpop.f32.mrf.mxu0
    %v1651 = vadd.f32 0.0, %v1650
    %1652 = vdwg.mxu0
    %1653 = vmatprep.subr.mxu0 0.0
    %1654 = vmatpush1.msra.mxu0 0.0
    %1655 = vmatprep.subr.mxu0 0.0
    %1656 = vmatpush1.msra.mxu0 0.0
    %1657 = vmatprep.subr.mxu0 0.0
    %1658 = vmatpush1.msra.mxu0 0.0
    %1659 = vmatprep.subr.mxu0 0.0
    %1660 = vmatpush1.msra.mxu0 0.0
    %1661 = vmatprep.subr.mxu0 0.0
    %1662 = vmatpush1.msra.mxu0 0.0
    %1663 = vmatprep.subr.mxu0 0.0
    %1664 = vmatpush1.msra.mxu0 0.0
    %1665 = vmatprep.subr.mxu0 0.0
    %1666 = vmatpush1.msra.mxu0 0.0
    %1667 = vmatprep.subr.mxu0 0.0
    %1668 = vmatpush1.msra.mxu0 0.0
    %1669 = vmatprep.subr.mxu0 0.0
    %1670 = vmatpush1.msra.mxu0 0.0
    %1671 = vmatprep.subr.mxu0 0.0
    %1672 = vmatpush1.msra.mxu0 0.0
    %1673 = vmatprep.subr.mxu0 0.0
    %1674 = vmatpush1.msra.mxu0 0.0
    %1675 = vmatprep.subr.mxu0 0.0
    %1676 = vmatpush1.msra.mxu0 0.0
    %1677 = vmatprep.subr.mxu0 0.0
    %1678 = vmatpush1.msra.mxu0 0.0
    %1679 = vmatprep.subr.mxu0 0.0
    %1680 = vmatpush1.msra.mxu0 0.0
    %1681 = vmatprep.subr.mxu0 0.0
    %1682 = vmatpush1.msra.mxu0 0.0
    %1683 = vmatprep.subr.mxu0 %v1509
    %1684 = vmatpush1.msra.mxu0 %v1506
    %1685 = vmatprep.subr.mxu0 0.0
    %1686 = vmatpush2.msra.mxu0 0.0
    %1687 = vmatprep.subr.mxu0 0.0
    %1688 = vmatpush2.msra.mxu0 0.0
    %1689 = vmatprep.subr.mxu0 0.0
    %1690 = vmatpush2.msra.mxu0 0.0
    %1691 = vmatprep.subr.mxu0 0.0
    %1692 = vmatpush2.msra.mxu0 0.0
    %1693 = vmatprep.subr.mxu0 0.0
    %1694 = vmatpush2.msra.mxu0 0.0
    %1695 = vmatprep.subr.mxu0 0.0
    %1696 = vmatpush2.msra.mxu0 0.0
    %1697 = vmatprep.subr.mxu0 0.0
    %1698 = vmatpush2.msra.mxu0 0.0
    %1699 = vmatprep.subr.mxu0 0.0
    %1700 = vmatpush2.msra.mxu0 0.0
    %1701 = vmatprep.subr.mxu0 0.0
    %1702 = vmatpush2.msra.mxu0 0.0
    %1703 = vmatprep.subr.mxu0 0.0
    %1704 = vmatpush2.msra.mxu0 0.0
    %1705 = vmatprep.subr.mxu0 0.0
    %1706 = vmatpush2.msra.mxu0 0.0
    %1707 = vmatprep.subr.mxu0 0.0
    %1708 = vmatpush2.msra.mxu0 0.0
    %1709 = vmatprep.subr.mxu0 0.0
    %1710 = vmatpush2.msra.mxu0 0.0
    %1711 = vmatprep.subr.mxu0 0.0
    %1712 = vmatpush2.msra.mxu0 0.0
    %1713 = vmatprep.subr.mxu0 0.0
    %1714 = vmatpush2.msra.mxu0 0.0
    %1715 = vmatprep.subr.mxu0 0.0
    %1716 = vmatpush2.msra.mxu0 0.0
    %1717 = vmatprep.mubr.f32.mxu0 0.0
    %1718 = vmatmul.mubr.f32.gmra.mxu0 %v1491
    %v1719 = vpop.f32.mrf.mxu0
    %v1720 = vadd.f32 0.0, %v1719
    %v1721 = vpop.f32.mrf.mxu0
    %v1722 = vadd.f32 0.0, %v1721
    %1723 = vdwg.mxu0
    %v1724 = vadd.f32 %v1463, %v1578
    %v1725 = vadd.f32 %v1464, %v1580
    %v1726 = vadd.f32 %v1465, %v1649
    %v1727 = vadd.f32 %v1466, %v1651
    %v1728 = vadd.f32 %v1467, %v1720
    %v1729 = vadd.f32 %v1468, %v1722
    %1730 = vrot.lane.b32.xlu0 %v184, 111
    %v1731 = vpop.permute.xlu0 %1730
    %1732 = vrot.lane.b32.xlu0 %v192, 111
    %v1733 = vpop.permute.xlu0 %1732
    %1734 = vrot.lane.b32.xlu0 %v185, 111
    %v1735 = vpop.permute.xlu0 %1734
    %1736 = vrot.lane.b32.xlu0 %v193, 111
    %v1737 = vpop.permute.xlu0 %1736
    %1738 = vrot.lane.b32.xlu0 %v186, 111
    %v1739 = vpop.permute.xlu0 %1738
    %1740 = vrot.lane.b32.xlu0 %v194, 111
    %v1741 = vpop.permute.xlu0 %1740
    %vm1742 = vcmp.lt.s32.totalorder %v211, 111
    %v1743 = vsel %vm1742, %v1739, %v1741
    %v1744 = vsel %vm1742, %v1737, %v1739
    %v1745 = vsel %vm1742, %v1735, %v1737
    %v1746 = vsel %vm1742, %v1733, %v1735
    %v1747 = vsel %vm1742, %v1731, %v1733
    %v1748 = vsel %vm1742, %v1741, %v1731
    %s1749 = scalar_lea.vmem [#allocation2], 48
    %v1750 = vld [vmem:[%s1749] sm:$0xff]
    %v1752 = vsel %vm241, %v1750, 0
    %v1755 = vsel %vm245, %v1747, 0
    %v1758 = vsel %vm245, %v1746, 0
    %v1761 = vsel %vm245, %v1745, 0
    %v1764 = vsel %vm245, %v1744, 0
    %v1767 = vsel %vm245, %v1743, 0
    %v1770 = vsel %vm245, %v1748, 0
    %1772 = vmatprep.subr.mxu0 0.0
    %1773 = vmatpush1.msra.mxu0 0.0
    %1774 = vmatprep.subr.mxu0 0.0
    %1775 = vmatpush1.msra.mxu0 0.0
    %1776 = vmatprep.subr.mxu0 0.0
    %1777 = vmatpush1.msra.mxu0 0.0
    %1778 = vmatprep.subr.mxu0 0.0
    %1779 = vmatpush1.msra.mxu0 0.0
    %1780 = vmatprep.subr.mxu0 0.0
    %1781 = vmatpush1.msra.mxu0 0.0
    %1782 = vmatprep.subr.mxu0 0.0
    %1783 = vmatpush1.msra.mxu0 0.0
    %1784 = vmatprep.subr.mxu0 0.0
    %1785 = vmatpush1.msra.mxu0 0.0
    %1786 = vmatprep.subr.mxu0 0.0
    %1787 = vmatpush1.msra.mxu0 0.0
    %1788 = vmatprep.subr.mxu0 0.0
    %1789 = vmatpush1.msra.mxu0 0.0
    %1790 = vmatprep.subr.mxu0 0.0
    %1791 = vmatpush1.msra.mxu0 0.0
    %1792 = vmatprep.subr.mxu0 0.0
    %1793 = vmatpush1.msra.mxu0 0.0
    %1794 = vmatprep.subr.mxu0 0.0
    %1795 = vmatpush1.msra.mxu0 0.0
    %1796 = vmatprep.subr.mxu0 0.0
    %1797 = vmatpush1.msra.mxu0 0.0
    %1798 = vmatprep.subr.mxu0 0.0
    %1799 = vmatpush1.msra.mxu0 0.0
    %1800 = vmatprep.subr.mxu0 0.0
    %1801 = vmatpush1.msra.mxu0 0.0
    %1802 = vmatprep.subr.mxu0 %v1758
    %1803 = vmatpush1.msra.mxu0 %v1755
    %1804 = vmatprep.subr.mxu0 0.0
    %1805 = vmatpush2.msra.mxu0 0.0
    %1806 = vmatprep.subr.mxu0 0.0
    %1807 = vmatpush2.msra.mxu0 0.0
    %1808 = vmatprep.subr.mxu0 0.0
    %1809 = vmatpush2.msra.mxu0 0.0
    %1810 = vmatprep.subr.mxu0 0.0
    %1811 = vmatpush2.msra.mxu0 0.0
    %1812 = vmatprep.subr.mxu0 0.0
    %1813 = vmatpush2.msra.mxu0 0.0
    %1814 = vmatprep.subr.mxu0 0.0
    %1815 = vmatpush2.msra.mxu0 0.0
    %1816 = vmatprep.subr.mxu0 0.0
    %1817 = vmatpush2.msra.mxu0 0.0
    %1818 = vmatprep.subr.mxu0 0.0
    %1819 = vmatpush2.msra.mxu0 0.0
    %1820 = vmatprep.subr.mxu0 0.0
    %1821 = vmatpush2.msra.mxu0 0.0
    %1822 = vmatprep.subr.mxu0 0.0
    %1823 = vmatpush2.msra.mxu0 0.0
    %1824 = vmatprep.subr.mxu0 0.0
    %1825 = vmatpush2.msra.mxu0 0.0
    %1826 = vmatprep.subr.mxu0 0.0
    %1827 = vmatpush2.msra.mxu0 0.0
    %1828 = vmatprep.subr.mxu0 0.0
    %1829 = vmatpush2.msra.mxu0 0.0
    %1830 = vmatprep.subr.mxu0 0.0
    %1831 = vmatpush2.msra.mxu0 0.0
    %1832 = vmatprep.subr.mxu0 0.0
    %1833 = vmatpush2.msra.mxu0 0.0
    %1834 = vmatprep.subr.mxu0 0.0
    %1835 = vmatpush2.msra.mxu0 0.0
    %1836 = vmatprep.mubr.f32.mxu0 0.0
    %1837 = vmatmul.mubr.f32.gmra.mxu0 %v1752
    %v1838 = vpop.f32.mrf.mxu0
    %v1839 = vadd.f32 0.0, %v1838
    %v1840 = vpop.f32.mrf.mxu0
    %v1841 = vadd.f32 0.0, %v1840
    %1842 = vdwg.mxu0
    %1843 = vmatprep.subr.mxu0 0.0
    %1844 = vmatpush1.msra.mxu0 0.0
    %1845 = vmatprep.subr.mxu0 0.0
    %1846 = vmatpush1.msra.mxu0 0.0
    %1847 = vmatprep.subr.mxu0 0.0
    %1848 = vmatpush1.msra.mxu0 0.0
    %1849 = vmatprep.subr.mxu0 0.0
    %1850 = vmatpush1.msra.mxu0 0.0
    %1851 = vmatprep.subr.mxu0 0.0
    %1852 = vmatpush1.msra.mxu0 0.0
    %1853 = vmatprep.subr.mxu0 0.0
    %1854 = vmatpush1.msra.mxu0 0.0
    %1855 = vmatprep.subr.mxu0 0.0
    %1856 = vmatpush1.msra.mxu0 0.0
    %1857 = vmatprep.subr.mxu0 0.0
    %1858 = vmatpush1.msra.mxu0 0.0
    %1859 = vmatprep.subr.mxu0 0.0
    %1860 = vmatpush1.msra.mxu0 0.0
    %1861 = vmatprep.subr.mxu0 0.0
    %1862 = vmatpush1.msra.mxu0 0.0
    %1863 = vmatprep.subr.mxu0 0.0
    %1864 = vmatpush1.msra.mxu0 0.0
    %1865 = vmatprep.subr.mxu0 0.0
    %1866 = vmatpush1.msra.mxu0 0.0
    %1867 = vmatprep.subr.mxu0 0.0
    %1868 = vmatpush1.msra.mxu0 0.0
    %1869 = vmatprep.subr.mxu0 0.0
    %1870 = vmatpush1.msra.mxu0 0.0
    %1871 = vmatprep.subr.mxu0 0.0
    %1872 = vmatpush1.msra.mxu0 0.0
    %1873 = vmatprep.subr.mxu0 %v1764
    %1874 = vmatpush1.msra.mxu0 %v1761
    %1875 = vmatprep.subr.mxu0 0.0
    %1876 = vmatpush2.msra.mxu0 0.0
    %1877 = vmatprep.subr.mxu0 0.0
    %1878 = vmatpush2.msra.mxu0 0.0
    %1879 = vmatprep.subr.mxu0 0.0
    %1880 = vmatpush2.msra.mxu0 0.0
    %1881 = vmatprep.subr.mxu0 0.0
    %1882 = vmatpush2.msra.mxu0 0.0
    %1883 = vmatprep.subr.mxu0 0.0
    %1884 = vmatpush2.msra.mxu0 0.0
    %1885 = vmatprep.subr.mxu0 0.0
    %1886 = vmatpush2.msra.mxu0 0.0
    %1887 = vmatprep.subr.mxu0 0.0
    %1888 = vmatpush2.msra.mxu0 0.0
    %1889 = vmatprep.subr.mxu0 0.0
    %1890 = vmatpush2.msra.mxu0 0.0
    %1891 = vmatprep.subr.mxu0 0.0
    %1892 = vmatpush2.msra.mxu0 0.0
    %1893 = vmatprep.subr.mxu0 0.0
    %1894 = vmatpush2.msra.mxu0 0.0
    %1895 = vmatprep.subr.mxu0 0.0
    %1896 = vmatpush2.msra.mxu0 0.0
    %1897 = vmatprep.subr.mxu0 0.0
    %1898 = vmatpush2.msra.mxu0 0.0
    %1899 = vmatprep.subr.mxu0 0.0
    %1900 = vmatpush2.msra.mxu0 0.0
    %1901 = vmatprep.subr.mxu0 0.0
    %1902 = vmatpush2.msra.mxu0 0.0
    %1903 = vmatprep.subr.mxu0 0.0
    %1904 = vmatpush2.msra.mxu0 0.0
    %1905 = vmatprep.subr.mxu0 0.0
    %1906 = vmatpush2.msra.mxu0 0.0
    %1907 = vmatprep.mubr.f32.mxu0 0.0
    %1908 = vmatmul.mubr.f32.gmra.mxu0 %v1752
    %v1909 = vpop.f32.mrf.mxu0
    %v1910 = vadd.f32 0.0, %v1909
    %v1911 = vpop.f32.mrf.mxu0
    %v1912 = vadd.f32 0.0, %v1911
    %1913 = vdwg.mxu0
    %1914 = vmatprep.subr.mxu0 0.0
    %1915 = vmatpush1.msra.mxu0 0.0
    %1916 = vmatprep.subr.mxu0 0.0
    %1917 = vmatpush1.msra.mxu0 0.0
    %1918 = vmatprep.subr.mxu0 0.0
    %1919 = vmatpush1.msra.mxu0 0.0
    %1920 = vmatprep.subr.mxu0 0.0
    %1921 = vmatpush1.msra.mxu0 0.0
    %1922 = vmatprep.subr.mxu0 0.0
    %1923 = vmatpush1.msra.mxu0 0.0
    %1924 = vmatprep.subr.mxu0 0.0
    %1925 = vmatpush1.msra.mxu0 0.0
    %1926 = vmatprep.subr.mxu0 0.0
    %1927 = vmatpush1.msra.mxu0 0.0
    %1928 = vmatprep.subr.mxu0 0.0
    %1929 = vmatpush1.msra.mxu0 0.0
    %1930 = vmatprep.subr.mxu0 0.0
    %1931 = vmatpush1.msra.mxu0 0.0
    %1932 = vmatprep.subr.mxu0 0.0
    %1933 = vmatpush1.msra.mxu0 0.0
    %1934 = vmatprep.subr.mxu0 0.0
    %1935 = vmatpush1.msra.mxu0 0.0
    %1936 = vmatprep.subr.mxu0 0.0
    %1937 = vmatpush1.msra.mxu0 0.0
    %1938 = vmatprep.subr.mxu0 0.0
    %1939 = vmatpush1.msra.mxu0 0.0
    %1940 = vmatprep.subr.mxu0 0.0
    %1941 = vmatpush1.msra.mxu0 0.0
    %1942 = vmatprep.subr.mxu0 0.0
    %1943 = vmatpush1.msra.mxu0 0.0
    %1944 = vmatprep.subr.mxu0 %v1770
    %1945 = vmatpush1.msra.mxu0 %v1767
    %1946 = vmatprep.subr.mxu0 0.0
    %1947 = vmatpush2.msra.mxu0 0.0
    %1948 = vmatprep.subr.mxu0 0.0
    %1949 = vmatpush2.msra.mxu0 0.0
    %1950 = vmatprep.subr.mxu0 0.0
    %1951 = vmatpush2.msra.mxu0 0.0
    %1952 = vmatprep.subr.mxu0 0.0
    %1953 = vmatpush2.msra.mxu0 0.0
    %1954 = vmatprep.subr.mxu0 0.0
    %1955 = vmatpush2.msra.mxu0 0.0
    %1956 = vmatprep.subr.mxu0 0.0
    %1957 = vmatpush2.msra.mxu0 0.0
    %1958 = vmatprep.subr.mxu0 0.0
    %1959 = vmatpush2.msra.mxu0 0.0
    %1960 = vmatprep.subr.mxu0 0.0
    %1961 = vmatpush2.msra.mxu0 0.0
    %1962 = vmatprep.subr.mxu0 0.0
    %1963 = vmatpush2.msra.mxu0 0.0
    %1964 = vmatprep.subr.mxu0 0.0
    %1965 = vmatpush2.msra.mxu0 0.0
    %1966 = vmatprep.subr.mxu0 0.0
    %1967 = vmatpush2.msra.mxu0 0.0
    %1968 = vmatprep.subr.mxu0 0.0
    %1969 = vmatpush2.msra.mxu0 0.0
    %1970 = vmatprep.subr.mxu0 0.0
    %1971 = vmatpush2.msra.mxu0 0.0
    %1972 = vmatprep.subr.mxu0 0.0
    %1973 = vmatpush2.msra.mxu0 0.0
    %1974 = vmatprep.subr.mxu0 0.0
    %1975 = vmatpush2.msra.mxu0 0.0
    %1976 = vmatprep.subr.mxu0 0.0
    %1977 = vmatpush2.msra.mxu0 0.0
    %1978 = vmatprep.mubr.f32.mxu0 0.0
    %1979 = vmatmul.mubr.f32.gmra.mxu0 %v1752
    %v1980 = vpop.f32.mrf.mxu0
    %v1981 = vadd.f32 0.0, %v1980
    %v1982 = vpop.f32.mrf.mxu0
    %v1983 = vadd.f32 0.0, %v1982
    %1984 = vdwg.mxu0
    %v1985 = vadd.f32 %v1724, %v1839
    %v1986 = vadd.f32 %v1725, %v1841
    %v1987 = vadd.f32 %v1726, %v1910
    %v1988 = vadd.f32 %v1727, %v1912
    %v1989 = vadd.f32 %v1728, %v1981
    %v1990 = vadd.f32 %v1729, %v1983
    %1991 = vrot.lane.b32.xlu0 %v184, 110
    %v1992 = vpop.permute.xlu0 %1991
    %1993 = vrot.lane.b32.xlu0 %v192, 110
    %v1994 = vpop.permute.xlu0 %1993
    %1995 = vrot.lane.b32.xlu0 %v185, 110
    %v1996 = vpop.permute.xlu0 %1995
    %1997 = vrot.lane.b32.xlu0 %v193, 110
    %v1998 = vpop.permute.xlu0 %1997
    %1999 = vrot.lane.b32.xlu0 %v186, 110
    %v2000 = vpop.permute.xlu0 %1999
    %2001 = vrot.lane.b32.xlu0 %v194, 110
    %v2002 = vpop.permute.xlu0 %2001
    %vm2003 = vcmp.lt.s32.totalorder %v211, 110
    %v2004 = vsel %vm2003, %v2000, %v2002
    %v2005 = vsel %vm2003, %v1998, %v2000
    %v2006 = vsel %vm2003, %v1996, %v1998
    %v2007 = vsel %vm2003, %v1994, %v1996
    %v2008 = vsel %vm2003, %v1992, %v1994
    %v2009 = vsel %vm2003, %v2002, %v1992
    %s2010 = scalar_lea.vmem [#allocation2], 56
    %v2011 = vld [vmem:[%s2010] sm:$0xff]
    %v2013 = vsel %vm241, %v2011, 0
    %v2016 = vsel %vm245, %v2008, 0
    %v2019 = vsel %vm245, %v2007, 0
    %v2022 = vsel %vm245, %v2006, 0
    %v2025 = vsel %vm245, %v2005, 0
    %v2028 = vsel %vm245, %v2004, 0
    %v2031 = vsel %vm245, %v2009, 0
    %2033 = vmatprep.subr.mxu0 0.0
    %2034 = vmatpush1.msra.mxu0 0.0
    %2035 = vmatprep.subr.mxu0 0.0
    %2036 = vmatpush1.msra.mxu0 0.0
    %2037 = vmatprep.subr.mxu0 0.0
    %2038 = vmatpush1.msra.mxu0 0.0
    %2039 = vmatprep.subr.mxu0 0.0
    %2040 = vmatpush1.msra.mxu0 0.0
    %2041 = vmatprep.subr.mxu0 0.0
    %2042 = vmatpush1.msra.mxu0 0.0
    %2043 = vmatprep.subr.mxu0 0.0
    %2044 = vmatpush1.msra.mxu0 0.0
    %2045 = vmatprep.subr.mxu0 0.0
    %2046 = vmatpush1.msra.mxu0 0.0
    %2047 = vmatprep.subr.mxu0 0.0
    %2048 = vmatpush1.msra.mxu0 0.0
    %2049 = vmatprep.subr.mxu0 0.0
    %2050 = vmatpush1.msra.mxu0 0.0
    %2051 = vmatprep.subr.mxu0 0.0
    %2052 = vmatpush1.msra.mxu0 0.0
    %2053 = vmatprep.subr.mxu0 0.0
    %2054 = vmatpush1.msra.mxu0 0.0
    %2055 = vmatprep.subr.mxu0 0.0
    %2056 = vmatpush1.msra.mxu0 0.0
    %2057 = vmatprep.subr.mxu0 0.0
    %2058 = vmatpush1.msra.mxu0 0.0
    %2059 = vmatprep.subr.mxu0 0.0
    %2060 = vmatpush1.msra.mxu0 0.0
    %2061 = vmatprep.subr.mxu0 0.0
    %2062 = vmatpush1.msra.mxu0 0.0
    %2063 = vmatprep.subr.mxu0 %v2019
    %2064 = vmatpush1.msra.mxu0 %v2016
    %2065 = vmatprep.subr.mxu0 0.0
    %2066 = vmatpush2.msra.mxu0 0.0
    %2067 = vmatprep.subr.mxu0 0.0
    %2068 = vmatpush2.msra.mxu0 0.0
    %2069 = vmatprep.subr.mxu0 0.0
    %2070 = vmatpush2.msra.mxu0 0.0
    %2071 = vmatprep.subr.mxu0 0.0
    %2072 = vmatpush2.msra.mxu0 0.0
    %2073 = vmatprep.subr.mxu0 0.0
    %2074 = vmatpush2.msra.mxu0 0.0
    %2075 = vmatprep.subr.mxu0 0.0
    %2076 = vmatpush2.msra.mxu0 0.0
    %2077 = vmatprep.subr.mxu0 0.0
    %2078 = vmatpush2.msra.mxu0 0.0
    %2079 = vmatprep.subr.mxu0 0.0
    %2080 = vmatpush2.msra.mxu0 0.0
    %2081 = vmatprep.subr.mxu0 0.0
    %2082 = vmatpush2.msra.mxu0 0.0
    %2083 = vmatprep.subr.mxu0 0.0
    %2084 = vmatpush2.msra.mxu0 0.0
    %2085 = vmatprep.subr.mxu0 0.0
    %2086 = vmatpush2.msra.mxu0 0.0
    %2087 = vmatprep.subr.mxu0 0.0
    %2088 = vmatpush2.msra.mxu0 0.0
    %2089 = vmatprep.subr.mxu0 0.0
    %2090 = vmatpush2.msra.mxu0 0.0
    %2091 = vmatprep.subr.mxu0 0.0
    %2092 = vmatpush2.msra.mxu0 0.0
    %2093 = vmatprep.subr.mxu0 0.0
    %2094 = vmatpush2.msra.mxu0 0.0
    %2095 = vmatprep.subr.mxu0 0.0
    %2096 = vmatpush2.msra.mxu0 0.0
    %2097 = vmatprep.mubr.f32.mxu0 0.0
    %2098 = vmatmul.mubr.f32.gmra.mxu0 %v2013
    %v2099 = vpop.f32.mrf.mxu0
    %v2100 = vadd.f32 0.0, %v2099
    %v2101 = vpop.f32.mrf.mxu0
    %v2102 = vadd.f32 0.0, %v2101
    %2103 = vdwg.mxu0
    %2104 = vmatprep.subr.mxu0 0.0
    %2105 = vmatpush1.msra.mxu0 0.0
    %2106 = vmatprep.subr.mxu0 0.0
    %2107 = vmatpush1.msra.mxu0 0.0
    %2108 = vmatprep.subr.mxu0 0.0
    %2109 = vmatpush1.msra.mxu0 0.0
    %2110 = vmatprep.subr.mxu0 0.0
    %2111 = vmatpush1.msra.mxu0 0.0
    %2112 = vmatprep.subr.mxu0 0.0
    %2113 = vmatpush1.msra.mxu0 0.0
    %2114 = vmatprep.subr.mxu0 0.0
    %2115 = vmatpush1.msra.mxu0 0.0
    %2116 = vmatprep.subr.mxu0 0.0
    %2117 = vmatpush1.msra.mxu0 0.0
    %2118 = vmatprep.subr.mxu0 0.0
    %2119 = vmatpush1.msra.mxu0 0.0
    %2120 = vmatprep.subr.mxu0 0.0
    %2121 = vmatpush1.msra.mxu0 0.0
    %2122 = vmatprep.subr.mxu0 0.0
    %2123 = vmatpush1.msra.mxu0 0.0
    %2124 = vmatprep.subr.mxu0 0.0
    %2125 = vmatpush1.msra.mxu0 0.0
    %2126 = vmatprep.subr.mxu0 0.0
    %2127 = vmatpush1.msra.mxu0 0.0
    %2128 = vmatprep.subr.mxu0 0.0
    %2129 = vmatpush1.msra.mxu0 0.0
    %2130 = vmatprep.subr.mxu0 0.0
    %2131 = vmatpush1.msra.mxu0 0.0
    %2132 = vmatprep.subr.mxu0 0.0
    %2133 = vmatpush1.msra.mxu0 0.0
    %2134 = vmatprep.subr.mxu0 %v2025
    %2135 = vmatpush1.msra.mxu0 %v2022
    %2136 = vmatprep.subr.mxu0 0.0
    %2137 = vmatpush2.msra.mxu0 0.0
    %2138 = vmatprep.subr.mxu0 0.0
    %2139 = vmatpush2.msra.mxu0 0.0
    %2140 = vmatprep.subr.mxu0 0.0
    %2141 = vmatpush2.msra.mxu0 0.0
    %2142 = vmatprep.subr.mxu0 0.0
    %2143 = vmatpush2.msra.mxu0 0.0
    %2144 = vmatprep.subr.mxu0 0.0
    %2145 = vmatpush2.msra.mxu0 0.0
    %2146 = vmatprep.subr.mxu0 0.0
    %2147 = vmatpush2.msra.mxu0 0.0
    %2148 = vmatprep.subr.mxu0 0.0
    %2149 = vmatpush2.msra.mxu0 0.0
    %2150 = vmatprep.subr.mxu0 0.0
    %2151 = vmatpush2.msra.mxu0 0.0
    %2152 = vmatprep.subr.mxu0 0.0
    %2153 = vmatpush2.msra.mxu0 0.0
    %2154 = vmatprep.subr.mxu0 0.0
    %2155 = vmatpush2.msra.mxu0 0.0
    %2156 = vmatprep.subr.mxu0 0.0
    %2157 = vmatpush2.msra.mxu0 0.0
    %2158 = vmatprep.subr.mxu0 0.0
    %2159 = vmatpush2.msra.mxu0 0.0
    %2160 = vmatprep.subr.mxu0 0.0
    %2161 = vmatpush2.msra.mxu0 0.0
    %2162 = vmatprep.subr.mxu0 0.0
    %2163 = vmatpush2.msra.mxu0 0.0
    %2164 = vmatprep.subr.mxu0 0.0
    %2165 = vmatpush2.msra.mxu0 0.0
    %2166 = vmatprep.subr.mxu0 0.0
    %2167 = vmatpush2.msra.mxu0 0.0
    %2168 = vmatprep.mubr.f32.mxu0 0.0
    %2169 = vmatmul.mubr.f32.gmra.mxu0 %v2013
    %v2170 = vpop.f32.mrf.mxu0
    %v2171 = vadd.f32 0.0, %v2170
    %v2172 = vpop.f32.mrf.mxu0
    %v2173 = vadd.f32 0.0, %v2172
    %2174 = vdwg.mxu0
    %2175 = vmatprep.subr.mxu0 0.0
    %2176 = vmatpush1.msra.mxu0 0.0
    %2177 = vmatprep.subr.mxu0 0.0
    %2178 = vmatpush1.msra.mxu0 0.0
    %2179 = vmatprep.subr.mxu0 0.0
    %2180 = vmatpush1.msra.mxu0 0.0
    %2181 = vmatprep.subr.mxu0 0.0
    %2182 = vmatpush1.msra.mxu0 0.0
    %2183 = vmatprep.subr.mxu0 0.0
    %2184 = vmatpush1.msra.mxu0 0.0
    %2185 = vmatprep.subr.mxu0 0.0
    %2186 = vmatpush1.msra.mxu0 0.0
    %2187 = vmatprep.subr.mxu0 0.0
    %2188 = vmatpush1.msra.mxu0 0.0
    %2189 = vmatprep.subr.mxu0 0.0
    %2190 = vmatpush1.msra.mxu0 0.0
    %2191 = vmatprep.subr.mxu0 0.0
    %2192 = vmatpush1.msra.mxu0 0.0
    %2193 = vmatprep.subr.mxu0 0.0
    %2194 = vmatpush1.msra.mxu0 0.0
    %2195 = vmatprep.subr.mxu0 0.0
    %2196 = vmatpush1.msra.mxu0 0.0
    %2197 = vmatprep.subr.mxu0 0.0
    %2198 = vmatpush1.msra.mxu0 0.0
    %2199 = vmatprep.subr.mxu0 0.0
    %2200 = vmatpush1.msra.mxu0 0.0
    %2201 = vmatprep.subr.mxu0 0.0
    %2202 = vmatpush1.msra.mxu0 0.0
    %2203 = vmatprep.subr.mxu0 0.0
    %2204 = vmatpush1.msra.mxu0 0.0
    %2205 = vmatprep.subr.mxu0 %v2031
    %2206 = vmatpush1.msra.mxu0 %v2028
    %2207 = vmatprep.subr.mxu0 0.0
    %2208 = vmatpush2.msra.mxu0 0.0
    %2209 = vmatprep.subr.mxu0 0.0
    %2210 = vmatpush2.msra.mxu0 0.0
    %2211 = vmatprep.subr.mxu0 0.0
    %2212 = vmatpush2.msra.mxu0 0.0
    %2213 = vmatprep.subr.mxu0 0.0
    %2214 = vmatpush2.msra.mxu0 0.0
    %2215 = vmatprep.subr.mxu0 0.0
    %2216 = vmatpush2.msra.mxu0 0.0
    %2217 = vmatprep.subr.mxu0 0.0
    %2218 = vmatpush2.msra.mxu0 0.0
    %2219 = vmatprep.subr.mxu0 0.0
    %2220 = vmatpush2.msra.mxu0 0.0
    %2221 = vmatprep.subr.mxu0 0.0
    %2222 = vmatpush2.msra.mxu0 0.0
    %2223 = vmatprep.subr.mxu0 0.0
    %2224 = vmatpush2.msra.mxu0 0.0
    %2225 = vmatprep.subr.mxu0 0.0
    %2226 = vmatpush2.msra.mxu0 0.0
    %2227 = vmatprep.subr.mxu0 0.0
    %2228 = vmatpush2.msra.mxu0 0.0
    %2229 = vmatprep.subr.mxu0 0.0
    %2230 = vmatpush2.msra.mxu0 0.0
    %2231 = vmatprep.subr.mxu0 0.0
    %2232 = vmatpush2.msra.mxu0 0.0
    %2233 = vmatprep.subr.mxu0 0.0
    %2234 = vmatpush2.msra.mxu0 0.0
    %2235 = vmatprep.subr.mxu0 0.0
    %2236 = vmatpush2.msra.mxu0 0.0
    %2237 = vmatprep.subr.mxu0 0.0
    %2238 = vmatpush2.msra.mxu0 0.0
    %2239 = vmatprep.mubr.f32.mxu0 0.0
    %2240 = vmatmul.mubr.f32.gmra.mxu0 %v2013
    %v2241 = vpop.f32.mrf.mxu0
    %v2242 = vadd.f32 0.0, %v2241
    %v2243 = vpop.f32.mrf.mxu0
    %v2244 = vadd.f32 0.0, %v2243
    %2245 = vdwg.mxu0
    %v2246 = vadd.f32 %v1985, %v2100
    %v2247 = vadd.f32 %v1986, %v2102
    %v2248 = vadd.f32 %v1987, %v2171
    %v2249 = vadd.f32 %v1988, %v2173
    %v2250 = vadd.f32 %v1989, %v2242
    %v2251 = vadd.f32 %v1990, %v2244
    %2252 = vrot.lane.b32.xlu0 %v184, 109
    %v2253 = vpop.permute.xlu0 %2252
    %2254 = vrot.lane.b32.xlu0 %v192, 109
    %v2255 = vpop.permute.xlu0 %2254
    %2256 = vrot.lane.b32.xlu0 %v185, 109
    %v2257 = vpop.permute.xlu0 %2256
    %2258 = vrot.lane.b32.xlu0 %v193, 109
    %v2259 = vpop.permute.xlu0 %2258
    %2260 = vrot.lane.b32.xlu0 %v186, 109
    %v2261 = vpop.permute.xlu0 %2260
    %2262 = vrot.lane.b32.xlu0 %v194, 109
    %v2263 = vpop.permute.xlu0 %2262
    %vm2264 = vcmp.lt.s32.totalorder %v211, 109
    %v2265 = vsel %vm2264, %v2261, %v2263
    %v2266 = vsel %vm2264, %v2259, %v2261
    %v2267 = vsel %vm2264, %v2257, %v2259
    %v2268 = vsel %vm2264, %v2255, %v2257
    %v2269 = vsel %vm2264, %v2253, %v2255
    %v2270 = vsel %vm2264, %v2263, %v2253
    %s2271 = scalar_lea.vmem [#allocation2], 64
    %v2272 = vld [vmem:[%s2271] sm:$0xff]
    %v2274 = vsel %vm241, %v2272, 0
    %v2277 = vsel %vm245, %v2269, 0
    %v2280 = vsel %vm245, %v2268, 0
    %v2283 = vsel %vm245, %v2267, 0
    %v2286 = vsel %vm245, %v2266, 0
    %v2289 = vsel %vm245, %v2265, 0
    %v2292 = vsel %vm245, %v2270, 0
    %2294 = vmatprep.subr.mxu0 0.0
    %2295 = vmatpush1.msra.mxu0 0.0
    %2296 = vmatprep.subr.mxu0 0.0
    %2297 = vmatpush1.msra.mxu0 0.0
    %2298 = vmatprep.subr.mxu0 0.0
    %2299 = vmatpush1.msra.mxu0 0.0
    %2300 = vmatprep.subr.mxu0 0.0
    %2301 = vmatpush1.msra.mxu0 0.0
    %2302 = vmatprep.subr.mxu0 0.0
    %2303 = vmatpush1.msra.mxu0 0.0
    %2304 = vmatprep.subr.mxu0 0.0
    %2305 = vmatpush1.msra.mxu0 0.0
    %2306 = vmatprep.subr.mxu0 0.0
    %2307 = vmatpush1.msra.mxu0 0.0
    %2308 = vmatprep.subr.mxu0 0.0
    %2309 = vmatpush1.msra.mxu0 0.0
    %2310 = vmatprep.subr.mxu0 0.0
    %2311 = vmatpush1.msra.mxu0 0.0
    %2312 = vmatprep.subr.mxu0 0.0
    %2313 = vmatpush1.msra.mxu0 0.0
    %2314 = vmatprep.subr.mxu0 0.0
    %2315 = vmatpush1.msra.mxu0 0.0
    %2316 = vmatprep.subr.mxu0 0.0
    %2317 = vmatpush1.msra.mxu0 0.0
    %2318 = vmatprep.subr.mxu0 0.0
    %2319 = vmatpush1.msra.mxu0 0.0
    %2320 = vmatprep.subr.mxu0 0.0
    %2321 = vmatpush1.msra.mxu0 0.0
    %2322 = vmatprep.subr.mxu0 0.0
    %2323 = vmatpush1.msra.mxu0 0.0
    %2324 = vmatprep.subr.mxu0 %v2280
    %2325 = vmatpush1.msra.mxu0 %v2277
    %2326 = vmatprep.subr.mxu0 0.0
    %2327 = vmatpush2.msra.mxu0 0.0
    %2328 = vmatprep.subr.mxu0 0.0
    %2329 = vmatpush2.msra.mxu0 0.0
    %2330 = vmatprep.subr.mxu0 0.0
    %2331 = vmatpush2.msra.mxu0 0.0
    %2332 = vmatprep.subr.mxu0 0.0
    %2333 = vmatpush2.msra.mxu0 0.0
    %2334 = vmatprep.subr.mxu0 0.0
    %2335 = vmatpush2.msra.mxu0 0.0
    %2336 = vmatprep.subr.mxu0 0.0
    %2337 = vmatpush2.msra.mxu0 0.0
    %2338 = vmatprep.subr.mxu0 0.0
    %2339 = vmatpush2.msra.mxu0 0.0
    %2340 = vmatprep.subr.mxu0 0.0
    %2341 = vmatpush2.msra.mxu0 0.0
    %2342 = vmatprep.subr.mxu0 0.0
    %2343 = vmatpush2.msra.mxu0 0.0
    %2344 = vmatprep.subr.mxu0 0.0
    %2345 = vmatpush2.msra.mxu0 0.0
    %2346 = vmatprep.subr.mxu0 0.0
    %2347 = vmatpush2.msra.mxu0 0.0
    %2348 = vmatprep.subr.mxu0 0.0
    %2349 = vmatpush2.msra.mxu0 0.0
    %2350 = vmatprep.subr.mxu0 0.0
    %2351 = vmatpush2.msra.mxu0 0.0
    %2352 = vmatprep.subr.mxu0 0.0
    %2353 = vmatpush2.msra.mxu0 0.0
    %2354 = vmatprep.subr.mxu0 0.0
    %2355 = vmatpush2.msra.mxu0 0.0
    %2356 = vmatprep.subr.mxu0 0.0
    %2357 = vmatpush2.msra.mxu0 0.0
    %2358 = vmatprep.mubr.f32.mxu0 0.0
    %2359 = vmatmul.mubr.f32.gmra.mxu0 %v2274
    %v2360 = vpop.f32.mrf.mxu0
    %v2361 = vadd.f32 0.0, %v2360
    %v2362 = vpop.f32.mrf.mxu0
    %v2363 = vadd.f32 0.0, %v2362
    %2364 = vdwg.mxu0
    %2365 = vmatprep.subr.mxu0 0.0
    %2366 = vmatpush1.msra.mxu0 0.0
    %2367 = vmatprep.subr.mxu0 0.0
    %2368 = vmatpush1.msra.mxu0 0.0
    %2369 = vmatprep.subr.mxu0 0.0
    %2370 = vmatpush1.msra.mxu0 0.0
    %2371 = vmatprep.subr.mxu0 0.0
    %2372 = vmatpush1.msra.mxu0 0.0
    %2373 = vmatprep.subr.mxu0 0.0
    %2374 = vmatpush1.msra.mxu0 0.0
    %2375 = vmatprep.subr.mxu0 0.0
    %2376 = vmatpush1.msra.mxu0 0.0
    %2377 = vmatprep.subr.mxu0 0.0
    %2378 = vmatpush1.msra.mxu0 0.0
    %2379 = vmatprep.subr.mxu0 0.0
    %2380 = vmatpush1.msra.mxu0 0.0
    %2381 = vmatprep.subr.mxu0 0.0
    %2382 = vmatpush1.msra.mxu0 0.0
    %2383 = vmatprep.subr.mxu0 0.0
    %2384 = vmatpush1.msra.mxu0 0.0
    %2385 = vmatprep.subr.mxu0 0.0
    %2386 = vmatpush1.msra.mxu0 0.0
    %2387 = vmatprep.subr.mxu0 0.0
    %2388 = vmatpush1.msra.mxu0 0.0
    %2389 = vmatprep.subr.mxu0 0.0
    %2390 = vmatpush1.msra.mxu0 0.0
    %2391 = vmatprep.subr.mxu0 0.0
    %2392 = vmatpush1.msra.mxu0 0.0
    %2393 = vmatprep.subr.mxu0 0.0
    %2394 = vmatpush1.msra.mxu0 0.0
    %2395 = vmatprep.subr.mxu0 %v2286
    %2396 = vmatpush1.msra.mxu0 %v2283
    %2397 = vmatprep.subr.mxu0 0.0
    %2398 = vmatpush2.msra.mxu0 0.0
    %2399 = vmatprep.subr.mxu0 0.0
    %2400 = vmatpush2.msra.mxu0 0.0
    %2401 = vmatprep.subr.mxu0 0.0
    %2402 = vmatpush2.msra.mxu0 0.0
    %2403 = vmatprep.subr.mxu0 0.0
    %2404 = vmatpush2.msra.mxu0 0.0
    %2405 = vmatprep.subr.mxu0 0.0
    %2406 = vmatpush2.msra.mxu0 0.0
    %2407 = vmatprep.subr.mxu0 0.0
    %2408 = vmatpush2.msra.mxu0 0.0
    %2409 = vmatprep.subr.mxu0 0.0
    %2410 = vmatpush2.msra.mxu0 0.0
    %2411 = vmatprep.subr.mxu0 0.0
    %2412 = vmatpush2.msra.mxu0 0.0
    %2413 = vmatprep.subr.mxu0 0.0
    %2414 = vmatpush2.msra.mxu0 0.0
    %2415 = vmatprep.subr.mxu0 0.0
    %2416 = vmatpush2.msra.mxu0 0.0
    %2417 = vmatprep.subr.mxu0 0.0
    %2418 = vmatpush2.msra.mxu0 0.0
    %2419 = vmatprep.subr.mxu0 0.0
    %2420 = vmatpush2.msra.mxu0 0.0
    %2421 = vmatprep.subr.mxu0 0.0
    %2422 = vmatpush2.msra.mxu0 0.0
    %2423 = vmatprep.subr.mxu0 0.0
    %2424 = vmatpush2.msra.mxu0 0.0
    %2425 = vmatprep.subr.mxu0 0.0
    %2426 = vmatpush2.msra.mxu0 0.0
    %2427 = vmatprep.subr.mxu0 0.0
    %2428 = vmatpush2.msra.mxu0 0.0
    %2429 = vmatprep.mubr.f32.mxu0 0.0
    %2430 = vmatmul.mubr.f32.gmra.mxu0 %v2274
    %v2431 = vpop.f32.mrf.mxu0
    %v2432 = vadd.f32 0.0, %v2431
    %v2433 = vpop.f32.mrf.mxu0
    %v2434 = vadd.f32 0.0, %v2433
    %2435 = vdwg.mxu0
    %2436 = vmatprep.subr.mxu0 0.0
    %2437 = vmatpush1.msra.mxu0 0.0
    %2438 = vmatprep.subr.mxu0 0.0
    %2439 = vmatpush1.msra.mxu0 0.0
    %2440 = vmatprep.subr.mxu0 0.0
    %2441 = vmatpush1.msra.mxu0 0.0
    %2442 = vmatprep.subr.mxu0 0.0
    %2443 = vmatpush1.msra.mxu0 0.0
    %2444 = vmatprep.subr.mxu0 0.0
    %2445 = vmatpush1.msra.mxu0 0.0
    %2446 = vmatprep.subr.mxu0 0.0
    %2447 = vmatpush1.msra.mxu0 0.0
    %2448 = vmatprep.subr.mxu0 0.0
    %2449 = vmatpush1.msra.mxu0 0.0
    %2450 = vmatprep.subr.mxu0 0.0
    %2451 = vmatpush1.msra.mxu0 0.0
    %2452 = vmatprep.subr.mxu0 0.0
    %2453 = vmatpush1.msra.mxu0 0.0
    %2454 = vmatprep.subr.mxu0 0.0
    %2455 = vmatpush1.msra.mxu0 0.0
    %2456 = vmatprep.subr.mxu0 0.0
    %2457 = vmatpush1.msra.mxu0 0.0
    %2458 = vmatprep.subr.mxu0 0.0
    %2459 = vmatpush1.msra.mxu0 0.0
    %2460 = vmatprep.subr.mxu0 0.0
    %2461 = vmatpush1.msra.mxu0 0.0
    %2462 = vmatprep.subr.mxu0 0.0
    %2463 = vmatpush1.msra.mxu0 0.0
    %2464 = vmatprep.subr.mxu0 0.0
    %2465 = vmatpush1.msra.mxu0 0.0
    %2466 = vmatprep.subr.mxu0 %v2292
    %2467 = vmatpush1.msra.mxu0 %v2289
    %2468 = vmatprep.subr.mxu0 0.0
    %2469 = vmatpush2.msra.mxu0 0.0
    %2470 = vmatprep.subr.mxu0 0.0
    %2471 = vmatpush2.msra.mxu0 0.0
    %2472 = vmatprep.subr.mxu0 0.0
    %2473 = vmatpush2.msra.mxu0 0.0
    %2474 = vmatprep.subr.mxu0 0.0
    %2475 = vmatpush2.msra.mxu0 0.0
    %2476 = vmatprep.subr.mxu0 0.0
    %2477 = vmatpush2.msra.mxu0 0.0
    %2478 = vmatprep.subr.mxu0 0.0
    %2479 = vmatpush2.msra.mxu0 0.0
    %2480 = vmatprep.subr.mxu0 0.0
    %2481 = vmatpush2.msra.mxu0 0.0
    %2482 = vmatprep.subr.mxu0 0.0
    %2483 = vmatpush2.msra.mxu0 0.0
    %2484 = vmatprep.subr.mxu0 0.0
    %2485 = vmatpush2.msra.mxu0 0.0
    %2486 = vmatprep.subr.mxu0 0.0
    %2487 = vmatpush2.msra.mxu0 0.0
    %2488 = vmatprep.subr.mxu0 0.0
    %2489 = vmatpush2.msra.mxu0 0.0
    %2490 = vmatprep.subr.mxu0 0.0
    %2491 = vmatpush2.msra.mxu0 0.0
    %2492 = vmatprep.subr.mxu0 0.0
    %2493 = vmatpush2.msra.mxu0 0.0
    %2494 = vmatprep.subr.mxu0 0.0
    %2495 = vmatpush2.msra.mxu0 0.0
    %2496 = vmatprep.subr.mxu0 0.0
    %2497 = vmatpush2.msra.mxu0 0.0
    %2498 = vmatprep.subr.mxu0 0.0
    %2499 = vmatpush2.msra.mxu0 0.0
    %2500 = vmatprep.mubr.f32.mxu0 0.0
    %2501 = vmatmul.mubr.f32.gmra.mxu0 %v2274
    %v2502 = vpop.f32.mrf.mxu0
    %v2503 = vadd.f32 0.0, %v2502
    %v2504 = vpop.f32.mrf.mxu0
    %v2505 = vadd.f32 0.0, %v2504
    %2506 = vdwg.mxu0
    %v2507 = vadd.f32 %v2246, %v2361
    %v2508 = vadd.f32 %v2247, %v2363
    %v2509 = vadd.f32 %v2248, %v2432
    %v2510 = vadd.f32 %v2249, %v2434
    %v2511 = vadd.f32 %v2250, %v2503
    %v2512 = vadd.f32 %v2251, %v2505
    %2514 = vset.pattern.permute.xlu0 0
    %2515 = vperm.xlu0 %2514, %v187
    %v2516 = vpop.permute.xlu0 %2515
    %v2518 = vadd.f32 %v2507, %v2516
    %v2519 = vadd.f32 %v2508, %v2516
    %v2520 = vadd.f32 %v2509, %v2516
    %v2521 = vadd.f32 %v2510, %v2516
    %v2522 = vadd.f32 %v2511, %v2516
    %v2523 = vadd.f32 %v2512, %v2516
    %v2524 = vmax.f32 %v2518, 0.0
    %v2525 = vmax.f32 %v2519, 0.0
    %v2526 = vmax.f32 %v2520, 0.0
    %v2527 = vmax.f32 %v2521, 0.0
    %v2528 = vmax.f32 %v2522, 0.0
    %v2529 = vmax.f32 %v2523, 0.0
    %2531 = vset.pattern.permute.xlu0 0
    %2532 = vperm.xlu0 %2531, %v188
    %v2533 = vpop.permute.xlu0 %2532
    %v2535 = vmul.f32 %v2524, %v2533
    %v2536 = vmul.f32 %v2525, %v2533
    %v2537 = vmul.f32 %v2526, %v2533
    %v2538 = vmul.f32 %v2527, %v2533
    %v2539 = vmul.f32 %v2528, %v2533
    %v2540 = vmul.f32 %v2529, %v2533
    %v2542 = vlaneseq
    %v2543 = vshrl.u32 %v2542, 7
    %v2544 = vsub.s32 0, %v2543
    %v2545 = vrot.slane %v183, %v2544
    %v2546 = vlaneseq
    %v2547 = vshrl.u32 %v2546, 7
    %v2548 = vsub.s32 1, %v2547
    %v2549 = vrot.slane %v183, %v2548
    %v2550 = vlaneseq
    %v2551 = vshrl.u32 %v2550, 7
    %v2552 = vsub.s32 2, %v2551
    %v2553 = vrot.slane %v183, %v2552
    %v2554 = vlaneseq
    %v2555 = vshrl.u32 %v2554, 7
    %v2556 = vsub.s32 3, %v2555
    %v2557 = vrot.slane %v183, %v2556
    %v2558 = vlaneseq
    %v2559 = vshrl.u32 %v2558, 7
    %v2560 = vsub.s32 4, %v2559
    %v2561 = vrot.slane %v183, %v2560
    %v2562 = vlaneseq
    %v2563 = vshrl.u32 %v2562, 7
    %v2564 = vsub.s32 5, %v2563
    %v2565 = vrot.slane %v183, %v2564
    %v2572 = vmul.f32 %v2535, %v2545
    %v2573 = vmul.f32 %v2536, %v2549
    %v2574 = vmul.f32 %v2537, %v2553
    %v2575 = vmul.f32 %v2538, %v2557
    %v2576 = vmul.f32 %v2539, %v2561
    %v2577 = vmul.f32 %v2540, %v2565
    %v2578 = vld [vmem:[#allocation10] sm:$0xff]
    %v2579 = vld [vmem:[#allocation11] sm:$0xff]
    %2580 = vrot.lane.b32.xlu0 %v2572, 19
    %v2581 = vpop.permute.xlu0 %2580
    %2582 = vrot.lane.b32.xlu0 %v2573, 19
    %v2583 = vpop.permute.xlu0 %2582
    %2584 = vrot.lane.b32.xlu0 %v2574, 19
    %v2585 = vpop.permute.xlu0 %2584
    %2586 = vrot.lane.b32.xlu0 %v2575, 19
    %v2587 = vpop.permute.xlu0 %2586
    %2588 = vrot.lane.b32.xlu0 %v2576, 19
    %v2589 = vpop.permute.xlu0 %2588
    %2590 = vrot.lane.b32.xlu0 %v2577, 19
    %v2591 = vpop.permute.xlu0 %2590
    %v2592 = vsel %vm212, %v2589, %v2591
    %v2593 = vsel %vm212, %v2587, %v2589
    %v2594 = vsel %vm212, %v2585, %v2587
    %v2595 = vsel %vm212, %v2583, %v2585
    %v2596 = vsel %vm212, %v2581, %v2583
    %v2597 = vsel %vm212, %v2591, %v2581
    %v2598 = vld [vmem:[#allocation8] sm:$0xff]
    %2599 = vrot.lane.b32.xlu0 %v2572, 18
    %v2600 = vpop.permute.xlu0 %2599
    %2601 = vrot.lane.b32.xlu0 %v2573, 18
    %v2602 = vpop.permute.xlu0 %2601
    %2603 = vrot.lane.b32.xlu0 %v2574, 18
    %v2604 = vpop.permute.xlu0 %2603
    %2605 = vrot.lane.b32.xlu0 %v2575, 18
    %v2606 = vpop.permute.xlu0 %2605
    %2607 = vrot.lane.b32.xlu0 %v2576, 18
    %v2608 = vpop.permute.xlu0 %2607
    %2609 = vrot.lane.b32.xlu0 %v2577, 18
    %v2610 = vpop.permute.xlu0 %2609
    %v2611 = vsel %vm232, %v2608, %v2610
    %v2612 = vsel %vm232, %v2606, %v2608
    %v2613 = vsel %vm232, %v2604, %v2606
    %v2614 = vsel %vm232, %v2602, %v2604
    %v2615 = vsel %vm232, %v2600, %v2602
    %v2616 = vsel %vm232, %v2610, %v2600
    %s2617 = scalar_lea.vmem [#allocation8], 8
    %v2618 = vld [vmem:[%s2617] sm:$0xff]
    %vm2619 = vcmask 64512
    %v2621 = vsel %vm2619, %v2618, 0
    %2623 = vmatprep.subr.mxu0 0.0
    %2624 = vmatpush1.msra.mxu0 0.0
    %2625 = vmatprep.subr.mxu0 0.0
    %2626 = vmatpush1.msra.mxu0 0.0
    %2627 = vmatprep.subr.mxu0 0.0
    %2628 = vmatpush1.msra.mxu0 0.0
    %2629 = vmatprep.subr.mxu0 0.0
    %2630 = vmatpush1.msra.mxu0 0.0
    %2631 = vmatprep.subr.mxu0 0.0
    %2632 = vmatpush1.msra.mxu0 0.0
    %2633 = vmatprep.subr.mxu0 0.0
    %2634 = vmatpush1.msra.mxu0 0.0
    %2635 = vmatprep.subr.mxu0 0.0
    %2636 = vmatpush1.msra.mxu0 0.0
    %2637 = vmatprep.subr.mxu0 0.0
    %2638 = vmatpush1.msra.mxu0 0.0
    %2639 = vmatprep.subr.mxu0 0.0
    %2640 = vmatpush1.msra.mxu0 0.0
    %2641 = vmatprep.subr.mxu0 0.0
    %2642 = vmatpush1.msra.mxu0 0.0
    %2643 = vmatprep.subr.mxu0 0.0
    %2644 = vmatpush1.msra.mxu0 0.0
    %2645 = vmatprep.subr.mxu0 0.0
    %2646 = vmatpush1.msra.mxu0 0.0
    %2647 = vmatprep.subr.mxu0 0.0
    %2648 = vmatpush1.msra.mxu0 0.0
    %2649 = vmatprep.subr.mxu0 0.0
    %2650 = vmatpush1.msra.mxu0 0.0
    %2651 = vmatprep.subr.mxu0 0.0
    %2652 = vmatpush1.msra.mxu0 0.0
    %2653 = vmatprep.subr.mxu0 %v2615
    %2654 = vmatpush1.msra.mxu0 %v2616
    %2655 = vmatprep.subr.mxu0 0.0
    %2656 = vmatpush2.msra.mxu0 0.0
    %2657 = vmatprep.subr.mxu0 0.0
    %2658 = vmatpush2.msra.mxu0 0.0
    %2659 = vmatprep.subr.mxu0 0.0
    %2660 = vmatpush2.msra.mxu0 0.0
    %2661 = vmatprep.subr.mxu0 0.0
    %2662 = vmatpush2.msra.mxu0 0.0
    %2663 = vmatprep.subr.mxu0 0.0
    %2664 = vmatpush2.msra.mxu0 0.0
    %2665 = vmatprep.subr.mxu0 0.0
    %2666 = vmatpush2.msra.mxu0 0.0
    %2667 = vmatprep.subr.mxu0 0.0
    %2668 = vmatpush2.msra.mxu0 0.0
    %2669 = vmatprep.subr.mxu0 0.0
    %2670 = vmatpush2.msra.mxu0 0.0
    %2671 = vmatprep.subr.mxu0 0.0
    %2672 = vmatpush2.msra.mxu0 0.0
    %2673 = vmatprep.subr.mxu0 0.0
    %2674 = vmatpush2.msra.mxu0 0.0
    %2675 = vmatprep.subr.mxu0 0.0
    %2676 = vmatpush2.msra.mxu0 0.0
    %2677 = vmatprep.subr.mxu0 0.0
    %2678 = vmatpush2.msra.mxu0 0.0
    %2679 = vmatprep.subr.mxu0 0.0
    %2680 = vmatpush2.msra.mxu0 0.0
    %2681 = vmatprep.subr.mxu0 0.0
    %2682 = vmatpush2.msra.mxu0 0.0
    %2683 = vmatprep.subr.mxu0 0.0
    %2684 = vmatpush2.msra.mxu0 0.0
    %2685 = vmatprep.subr.mxu0 0.0
    %2686 = vmatpush2.msra.mxu0 0.0
    %2687 = vmatprep.mubr.f32.mxu0 0.0
    %2688 = vmatmul.mubr.f32.gmra.mxu0 %v2621
    %v2689 = vpop.f32.mrf.mxu0
    %v2690 = vadd.f32 0.0, %v2689
    %v2691 = vpop.f32.mrf.mxu0
    %v2692 = vadd.f32 0.0, %v2691
    %2693 = vdwg.mxu0
    %2694 = vmatprep.subr.mxu0 0.0
    %2695 = vmatpush1.msra.mxu0 0.0
    %2696 = vmatprep.subr.mxu0 0.0
    %2697 = vmatpush1.msra.mxu0 0.0
    %2698 = vmatprep.subr.mxu0 0.0
    %2699 = vmatpush1.msra.mxu0 0.0
    %2700 = vmatprep.subr.mxu0 0.0
    %2701 = vmatpush1.msra.mxu0 0.0
    %2702 = vmatprep.subr.mxu0 0.0
    %2703 = vmatpush1.msra.mxu0 0.0
    %2704 = vmatprep.subr.mxu0 0.0
    %2705 = vmatpush1.msra.mxu0 0.0
    %2706 = vmatprep.subr.mxu0 0.0
    %2707 = vmatpush1.msra.mxu0 0.0
    %2708 = vmatprep.subr.mxu0 0.0
    %2709 = vmatpush1.msra.mxu0 0.0
    %2710 = vmatprep.subr.mxu0 0.0
    %2711 = vmatpush1.msra.mxu0 0.0
    %2712 = vmatprep.subr.mxu0 0.0
    %2713 = vmatpush1.msra.mxu0 0.0
    %2714 = vmatprep.subr.mxu0 0.0
    %2715 = vmatpush1.msra.mxu0 0.0
    %2716 = vmatprep.subr.mxu0 0.0
    %2717 = vmatpush1.msra.mxu0 0.0
    %2718 = vmatprep.subr.mxu0 0.0
    %2719 = vmatpush1.msra.mxu0 0.0
    %2720 = vmatprep.subr.mxu0 0.0
    %2721 = vmatpush1.msra.mxu0 0.0
    %2722 = vmatprep.subr.mxu0 0.0
    %2723 = vmatpush1.msra.mxu0 0.0
    %2724 = vmatprep.subr.mxu0 %v2613
    %2725 = vmatpush1.msra.mxu0 %v2614
    %2726 = vmatprep.subr.mxu0 0.0
    %2727 = vmatpush2.msra.mxu0 0.0
    %2728 = vmatprep.subr.mxu0 0.0
    %2729 = vmatpush2.msra.mxu0 0.0
    %2730 = vmatprep.subr.mxu0 0.0
    %2731 = vmatpush2.msra.mxu0 0.0
    %2732 = vmatprep.subr.mxu0 0.0
    %2733 = vmatpush2.msra.mxu0 0.0
    %2734 = vmatprep.subr.mxu0 0.0
    %2735 = vmatpush2.msra.mxu0 0.0
    %2736 = vmatprep.subr.mxu0 0.0
    %2737 = vmatpush2.msra.mxu0 0.0
    %2738 = vmatprep.subr.mxu0 0.0
    %2739 = vmatpush2.msra.mxu0 0.0
    %2740 = vmatprep.subr.mxu0 0.0
    %2741 = vmatpush2.msra.mxu0 0.0
    %2742 = vmatprep.subr.mxu0 0.0
    %2743 = vmatpush2.msra.mxu0 0.0
    %2744 = vmatprep.subr.mxu0 0.0
    %2745 = vmatpush2.msra.mxu0 0.0
    %2746 = vmatprep.subr.mxu0 0.0
    %2747 = vmatpush2.msra.mxu0 0.0
    %2748 = vmatprep.subr.mxu0 0.0
    %2749 = vmatpush2.msra.mxu0 0.0
    %2750 = vmatprep.subr.mxu0 0.0
    %2751 = vmatpush2.msra.mxu0 0.0
    %2752 = vmatprep.subr.mxu0 0.0
    %2753 = vmatpush2.msra.mxu0 0.0
    %2754 = vmatprep.subr.mxu0 0.0
    %2755 = vmatpush2.msra.mxu0 0.0
    %2756 = vmatprep.subr.mxu0 0.0
    %2757 = vmatpush2.msra.mxu0 0.0
    %2758 = vmatprep.mubr.f32.mxu0 0.0
    %2759 = vmatmul.mubr.f32.gmra.mxu0 %v2621
    %v2760 = vpop.f32.mrf.mxu0
    %v2761 = vadd.f32 0.0, %v2760
    %v2762 = vpop.f32.mrf.mxu0
    %v2763 = vadd.f32 0.0, %v2762
    %2764 = vdwg.mxu0
    %2765 = vmatprep.subr.mxu0 0.0
    %2766 = vmatpush1.msra.mxu0 0.0
    %2767 = vmatprep.subr.mxu0 0.0
    %2768 = vmatpush1.msra.mxu0 0.0
    %2769 = vmatprep.subr.mxu0 0.0
    %2770 = vmatpush1.msra.mxu0 0.0
    %2771 = vmatprep.subr.mxu0 0.0
    %2772 = vmatpush1.msra.mxu0 0.0
    %2773 = vmatprep.subr.mxu0 0.0
    %2774 = vmatpush1.msra.mxu0 0.0
    %2775 = vmatprep.subr.mxu0 0.0
    %2776 = vmatpush1.msra.mxu0 0.0
    %2777 = vmatprep.subr.mxu0 0.0
    %2778 = vmatpush1.msra.mxu0 0.0
    %2779 = vmatprep.subr.mxu0 0.0
    %2780 = vmatpush1.msra.mxu0 0.0
    %2781 = vmatprep.subr.mxu0 0.0
    %2782 = vmatpush1.msra.mxu0 0.0
    %2783 = vmatprep.subr.mxu0 0.0
    %2784 = vmatpush1.msra.mxu0 0.0
    %2785 = vmatprep.subr.mxu0 0.0
    %2786 = vmatpush1.msra.mxu0 0.0
    %2787 = vmatprep.subr.mxu0 0.0
    %2788 = vmatpush1.msra.mxu0 0.0
    %2789 = vmatprep.subr.mxu0 0.0
    %2790 = vmatpush1.msra.mxu0 0.0
    %2791 = vmatprep.subr.mxu0 0.0
    %2792 = vmatpush1.msra.mxu0 0.0
    %2793 = vmatprep.subr.mxu0 0.0
    %2794 = vmatpush1.msra.mxu0 0.0
    %2795 = vmatprep.subr.mxu0 %v2611
    %2796 = vmatpush1.msra.mxu0 %v2612
    %2797 = vmatprep.subr.mxu0 0.0
    %2798 = vmatpush2.msra.mxu0 0.0
    %2799 = vmatprep.subr.mxu0 0.0
    %2800 = vmatpush2.msra.mxu0 0.0
    %2801 = vmatprep.subr.mxu0 0.0
    %2802 = vmatpush2.msra.mxu0 0.0
    %2803 = vmatprep.subr.mxu0 0.0
    %2804 = vmatpush2.msra.mxu0 0.0
    %2805 = vmatprep.subr.mxu0 0.0
    %2806 = vmatpush2.msra.mxu0 0.0
    %2807 = vmatprep.subr.mxu0 0.0
    %2808 = vmatpush2.msra.mxu0 0.0
    %2809 = vmatprep.subr.mxu0 0.0
    %2810 = vmatpush2.msra.mxu0 0.0
    %2811 = vmatprep.subr.mxu0 0.0
    %2812 = vmatpush2.msra.mxu0 0.0
    %2813 = vmatprep.subr.mxu0 0.0
    %2814 = vmatpush2.msra.mxu0 0.0
    %2815 = vmatprep.subr.mxu0 0.0
    %2816 = vmatpush2.msra.mxu0 0.0
    %2817 = vmatprep.subr.mxu0 0.0
    %2818 = vmatpush2.msra.mxu0 0.0
    %2819 = vmatprep.subr.mxu0 0.0
    %2820 = vmatpush2.msra.mxu0 0.0
    %2821 = vmatprep.subr.mxu0 0.0
    %2822 = vmatpush2.msra.mxu0 0.0
    %2823 = vmatprep.subr.mxu0 0.0
    %2824 = vmatpush2.msra.mxu0 0.0
    %2825 = vmatprep.subr.mxu0 0.0
    %2826 = vmatpush2.msra.mxu0 0.0
    %2827 = vmatprep.subr.mxu0 0.0
    %2828 = vmatpush2.msra.mxu0 0.0
    %2829 = vmatprep.mubr.f32.mxu0 0.0
    %2830 = vmatmul.mubr.f32.gmra.mxu0 %v2621
    %v2831 = vpop.f32.mrf.mxu0
    %v2832 = vadd.f32 0.0, %v2831
    %v2833 = vpop.f32.mrf.mxu0
    %v2834 = vadd.f32 0.0, %v2833
    %2835 = vdwg.mxu0
    %v2837 = vsel %vm2619, %v2598, 0
    %2839 = vmatprep.subr.mxu0 0.0
    %2840 = vmatpush1.msra.mxu0 0.0
    %2841 = vmatprep.subr.mxu0 0.0
    %2842 = vmatpush1.msra.mxu0 0.0
    %2843 = vmatprep.subr.mxu0 0.0
    %2844 = vmatpush1.msra.mxu0 0.0
    %2845 = vmatprep.subr.mxu0 0.0
    %2846 = vmatpush1.msra.mxu0 0.0
    %2847 = vmatprep.subr.mxu0 0.0
    %2848 = vmatpush1.msra.mxu0 0.0
    %2849 = vmatprep.subr.mxu0 0.0
    %2850 = vmatpush1.msra.mxu0 0.0
    %2851 = vmatprep.subr.mxu0 0.0
    %2852 = vmatpush1.msra.mxu0 0.0
    %2853 = vmatprep.subr.mxu0 0.0
    %2854 = vmatpush1.msra.mxu0 0.0
    %2855 = vmatprep.subr.mxu0 0.0
    %2856 = vmatpush1.msra.mxu0 0.0
    %2857 = vmatprep.subr.mxu0 0.0
    %2858 = vmatpush1.msra.mxu0 0.0
    %2859 = vmatprep.subr.mxu0 0.0
    %2860 = vmatpush1.msra.mxu0 0.0
    %2861 = vmatprep.subr.mxu0 0.0
    %2862 = vmatpush1.msra.mxu0 0.0
    %2863 = vmatprep.subr.mxu0 0.0
    %2864 = vmatpush1.msra.mxu0 0.0
    %2865 = vmatprep.subr.mxu0 0.0
    %2866 = vmatpush1.msra.mxu0 0.0
    %2867 = vmatprep.subr.mxu0 0.0
    %2868 = vmatpush1.msra.mxu0 0.0
    %2869 = vmatprep.subr.mxu0 %v2596
    %2870 = vmatpush1.msra.mxu0 %v2597
    %2871 = vmatprep.subr.mxu0 0.0
    %2872 = vmatpush2.msra.mxu0 0.0
    %2873 = vmatprep.subr.mxu0 0.0
    %2874 = vmatpush2.msra.mxu0 0.0
    %2875 = vmatprep.subr.mxu0 0.0
    %2876 = vmatpush2.msra.mxu0 0.0
    %2877 = vmatprep.subr.mxu0 0.0
    %2878 = vmatpush2.msra.mxu0 0.0
    %2879 = vmatprep.subr.mxu0 0.0
    %2880 = vmatpush2.msra.mxu0 0.0
    %2881 = vmatprep.subr.mxu0 0.0
    %2882 = vmatpush2.msra.mxu0 0.0
    %2883 = vmatprep.subr.mxu0 0.0
    %2884 = vmatpush2.msra.mxu0 0.0
    %2885 = vmatprep.subr.mxu0 0.0
    %2886 = vmatpush2.msra.mxu0 0.0
    %2887 = vmatprep.subr.mxu0 0.0
    %2888 = vmatpush2.msra.mxu0 0.0
    %2889 = vmatprep.subr.mxu0 0.0
    %2890 = vmatpush2.msra.mxu0 0.0
    %2891 = vmatprep.subr.mxu0 0.0
    %2892 = vmatpush2.msra.mxu0 0.0
    %2893 = vmatprep.subr.mxu0 0.0
    %2894 = vmatpush2.msra.mxu0 0.0
    %2895 = vmatprep.subr.mxu0 0.0
    %2896 = vmatpush2.msra.mxu0 0.0
    %2897 = vmatprep.subr.mxu0 0.0
    %2898 = vmatpush2.msra.mxu0 0.0
    %2899 = vmatprep.subr.mxu0 0.0
    %2900 = vmatpush2.msra.mxu0 0.0
    %2901 = vmatprep.subr.mxu0 0.0
    %2902 = vmatpush2.msra.mxu0 0.0
    %2903 = vmatprep.mubr.f32.mxu0 0.0
    %2904 = vmatmul.mubr.f32.gmra.mxu0 %v2837
    %v2905 = vpop.f32.mrf.mxu0
    %v2906 = vadd.f32 %v2690, %v2905
    %v2907 = vpop.f32.mrf.mxu0
    %v2908 = vadd.f32 %v2692, %v2907
    %2909 = vdwg.mxu0
    %2910 = vmatprep.subr.mxu0 0.0
    %2911 = vmatpush1.msra.mxu0 0.0
    %2912 = vmatprep.subr.mxu0 0.0
    %2913 = vmatpush1.msra.mxu0 0.0
    %2914 = vmatprep.subr.mxu0 0.0
    %2915 = vmatpush1.msra.mxu0 0.0
    %2916 = vmatprep.subr.mxu0 0.0
    %2917 = vmatpush1.msra.mxu0 0.0
    %2918 = vmatprep.subr.mxu0 0.0
    %2919 = vmatpush1.msra.mxu0 0.0
    %2920 = vmatprep.subr.mxu0 0.0
    %2921 = vmatpush1.msra.mxu0 0.0
    %2922 = vmatprep.subr.mxu0 0.0
    %2923 = vmatpush1.msra.mxu0 0.0
    %2924 = vmatprep.subr.mxu0 0.0
    %2925 = vmatpush1.msra.mxu0 0.0
    %2926 = vmatprep.subr.mxu0 0.0
    %2927 = vmatpush1.msra.mxu0 0.0
    %2928 = vmatprep.subr.mxu0 0.0
    %2929 = vmatpush1.msra.mxu0 0.0
    %2930 = vmatprep.subr.mxu0 0.0
    %2931 = vmatpush1.msra.mxu0 0.0
    %2932 = vmatprep.subr.mxu0 0.0
    %2933 = vmatpush1.msra.mxu0 0.0
    %2934 = vmatprep.subr.mxu0 0.0
    %2935 = vmatpush1.msra.mxu0 0.0
    %2936 = vmatprep.subr.mxu0 0.0
    %2937 = vmatpush1.msra.mxu0 0.0
    %2938 = vmatprep.subr.mxu0 0.0
    %2939 = vmatpush1.msra.mxu0 0.0
    %2940 = vmatprep.subr.mxu0 %v2594
    %2941 = vmatpush1.msra.mxu0 %v2595
    %2942 = vmatprep.subr.mxu0 0.0
    %2943 = vmatpush2.msra.mxu0 0.0
    %2944 = vmatprep.subr.mxu0 0.0
    %2945 = vmatpush2.msra.mxu0 0.0
    %2946 = vmatprep.subr.mxu0 0.0
    %2947 = vmatpush2.msra.mxu0 0.0
    %2948 = vmatprep.subr.mxu0 0.0
    %2949 = vmatpush2.msra.mxu0 0.0
    %2950 = vmatprep.subr.mxu0 0.0
    %2951 = vmatpush2.msra.mxu0 0.0
    %2952 = vmatprep.subr.mxu0 0.0
    %2953 = vmatpush2.msra.mxu0 0.0
    %2954 = vmatprep.subr.mxu0 0.0
    %2955 = vmatpush2.msra.mxu0 0.0
    %2956 = vmatprep.subr.mxu0 0.0
    %2957 = vmatpush2.msra.mxu0 0.0
    %2958 = vmatprep.subr.mxu0 0.0
    %2959 = vmatpush2.msra.mxu0 0.0
    %2960 = vmatprep.subr.mxu0 0.0
    %2961 = vmatpush2.msra.mxu0 0.0
    %2962 = vmatprep.subr.mxu0 0.0
    %2963 = vmatpush2.msra.mxu0 0.0
    %2964 = vmatprep.subr.mxu0 0.0
    %2965 = vmatpush2.msra.mxu0 0.0
    %2966 = vmatprep.subr.mxu0 0.0
    %2967 = vmatpush2.msra.mxu0 0.0
    %2968 = vmatprep.subr.mxu0 0.0
    %2969 = vmatpush2.msra.mxu0 0.0
    %2970 = vmatprep.subr.mxu0 0.0
    %2971 = vmatpush2.msra.mxu0 0.0
    %2972 = vmatprep.subr.mxu0 0.0
    %2973 = vmatpush2.msra.mxu0 0.0
    %2974 = vmatprep.mubr.f32.mxu0 0.0
    %2975 = vmatmul.mubr.f32.gmra.mxu0 %v2837
    %v2976 = vpop.f32.mrf.mxu0
    %v2977 = vadd.f32 %v2761, %v2976
    %v2978 = vpop.f32.mrf.mxu0
    %v2979 = vadd.f32 %v2763, %v2978
    %2980 = vdwg.mxu0
    %2981 = vmatprep.subr.mxu0 0.0
    %2982 = vmatpush1.msra.mxu0 0.0
    %2983 = vmatprep.subr.mxu0 0.0
    %2984 = vmatpush1.msra.mxu0 0.0
    %2985 = vmatprep.subr.mxu0 0.0
    %2986 = vmatpush1.msra.mxu0 0.0
    %2987 = vmatprep.subr.mxu0 0.0
    %2988 = vmatpush1.msra.mxu0 0.0
    %2989 = vmatprep.subr.mxu0 0.0
    %2990 = vmatpush1.msra.mxu0 0.0
    %2991 = vmatprep.subr.mxu0 0.0
    %2992 = vmatpush1.msra.mxu0 0.0
    %2993 = vmatprep.subr.mxu0 0.0
    %2994 = vmatpush1.msra.mxu0 0.0
    %2995 = vmatprep.subr.mxu0 0.0
    %2996 = vmatpush1.msra.mxu0 0.0
    %2997 = vmatprep.subr.mxu0 0.0
    %2998 = vmatpush1.msra.mxu0 0.0
    %2999 = vmatprep.subr.mxu0 0.0
    %3000 = vmatpush1.msra.mxu0 0.0
    %3001 = vmatprep.subr.mxu0 0.0
    %3002 = vmatpush1.msra.mxu0 0.0
    %3003 = vmatprep.subr.mxu0 0.0
    %3004 = vmatpush1.msra.mxu0 0.0
    %3005 = vmatprep.subr.mxu0 0.0
    %3006 = vmatpush1.msra.mxu0 0.0
    %3007 = vmatprep.subr.mxu0 0.0
    %3008 = vmatpush1.msra.mxu0 0.0
    %3009 = vmatprep.subr.mxu0 0.0
    %3010 = vmatpush1.msra.mxu0 0.0
    %3011 = vmatprep.subr.mxu0 %v2592
    %3012 = vmatpush1.msra.mxu0 %v2593
    %3013 = vmatprep.subr.mxu0 0.0
    %3014 = vmatpush2.msra.mxu0 0.0
    %3015 = vmatprep.subr.mxu0 0.0
    %3016 = vmatpush2.msra.mxu0 0.0
    %3017 = vmatprep.subr.mxu0 0.0
    %3018 = vmatpush2.msra.mxu0 0.0
    %3019 = vmatprep.subr.mxu0 0.0
    %3020 = vmatpush2.msra.mxu0 0.0
    %3021 = vmatprep.subr.mxu0 0.0
    %3022 = vmatpush2.msra.mxu0 0.0
    %3023 = vmatprep.subr.mxu0 0.0
    %3024 = vmatpush2.msra.mxu0 0.0
    %3025 = vmatprep.subr.mxu0 0.0
    %3026 = vmatpush2.msra.mxu0 0.0
    %3027 = vmatprep.subr.mxu0 0.0
    %3028 = vmatpush2.msra.mxu0 0.0
    %3029 = vmatprep.subr.mxu0 0.0
    %3030 = vmatpush2.msra.mxu0 0.0
    %3031 = vmatprep.subr.mxu0 0.0
    %3032 = vmatpush2.msra.mxu0 0.0
    %3033 = vmatprep.subr.mxu0 0.0
    %3034 = vmatpush2.msra.mxu0 0.0
    %3035 = vmatprep.subr.mxu0 0.0
    %3036 = vmatpush2.msra.mxu0 0.0
    %3037 = vmatprep.subr.mxu0 0.0
    %3038 = vmatpush2.msra.mxu0 0.0
    %3039 = vmatprep.subr.mxu0 0.0
    %3040 = vmatpush2.msra.mxu0 0.0
    %3041 = vmatprep.subr.mxu0 0.0
    %3042 = vmatpush2.msra.mxu0 0.0
    %3043 = vmatprep.subr.mxu0 0.0
    %3044 = vmatpush2.msra.mxu0 0.0
    %3045 = vmatprep.mubr.f32.mxu0 0.0
    %3046 = vmatmul.mubr.f32.gmra.mxu0 %v2837
    %v3047 = vpop.f32.mrf.mxu0
    %v3048 = vadd.f32 %v2832, %v3047
    %v3049 = vpop.f32.mrf.mxu0
    %v3050 = vadd.f32 %v2834, %v3049
    %3051 = vdwg.mxu0
    %3052 = vrot.lane.b32.xlu0 %v2572, 17
    %v3053 = vpop.permute.xlu0 %3052
    %3054 = vrot.lane.b32.xlu0 %v2573, 17
    %v3055 = vpop.permute.xlu0 %3054
    %3056 = vrot.lane.b32.xlu0 %v2574, 17
    %v3057 = vpop.permute.xlu0 %3056
    %3058 = vrot.lane.b32.xlu0 %v2575, 17
    %v3059 = vpop.permute.xlu0 %3058
    %3060 = vrot.lane.b32.xlu0 %v2576, 17
    %v3061 = vpop.permute.xlu0 %3060
    %3062 = vrot.lane.b32.xlu0 %v2577, 17
    %v3063 = vpop.permute.xlu0 %3062
    %v3064 = vsel %vm723, %v3061, %v3063
    %v3065 = vsel %vm723, %v3059, %v3061
    %v3066 = vsel %vm723, %v3057, %v3059
    %v3067 = vsel %vm723, %v3055, %v3057
    %v3068 = vsel %vm723, %v3053, %v3055
    %v3069 = vsel %vm723, %v3063, %v3053
    %s3070 = scalar_lea.vmem [#allocation8], 16
    %v3071 = vld [vmem:[%s3070] sm:$0xff]
    %v3073 = vsel %vm2619, %v3071, 0
    %3075 = vmatprep.subr.mxu0 0.0
    %3076 = vmatpush1.msra.mxu0 0.0
    %3077 = vmatprep.subr.mxu0 0.0
    %3078 = vmatpush1.msra.mxu0 0.0
    %3079 = vmatprep.subr.mxu0 0.0
    %3080 = vmatpush1.msra.mxu0 0.0
    %3081 = vmatprep.subr.mxu0 0.0
    %3082 = vmatpush1.msra.mxu0 0.0
    %3083 = vmatprep.subr.mxu0 0.0
    %3084 = vmatpush1.msra.mxu0 0.0
    %3085 = vmatprep.subr.mxu0 0.0
    %3086 = vmatpush1.msra.mxu0 0.0
    %3087 = vmatprep.subr.mxu0 0.0
    %3088 = vmatpush1.msra.mxu0 0.0
    %3089 = vmatprep.subr.mxu0 0.0
    %3090 = vmatpush1.msra.mxu0 0.0
    %3091 = vmatprep.subr.mxu0 0.0
    %3092 = vmatpush1.msra.mxu0 0.0
    %3093 = vmatprep.subr.mxu0 0.0
    %3094 = vmatpush1.msra.mxu0 0.0
    %3095 = vmatprep.subr.mxu0 0.0
    %3096 = vmatpush1.msra.mxu0 0.0
    %3097 = vmatprep.subr.mxu0 0.0
    %3098 = vmatpush1.msra.mxu0 0.0
    %3099 = vmatprep.subr.mxu0 0.0
    %3100 = vmatpush1.msra.mxu0 0.0
    %3101 = vmatprep.subr.mxu0 0.0
    %3102 = vmatpush1.msra.mxu0 0.0
    %3103 = vmatprep.subr.mxu0 0.0
    %3104 = vmatpush1.msra.mxu0 0.0
    %3105 = vmatprep.subr.mxu0 %v3068
    %3106 = vmatpush1.msra.mxu0 %v3069
    %3107 = vmatprep.subr.mxu0 0.0
    %3108 = vmatpush2.msra.mxu0 0.0
    %3109 = vmatprep.subr.mxu0 0.0
    %3110 = vmatpush2.msra.mxu0 0.0
    %3111 = vmatprep.subr.mxu0 0.0
    %3112 = vmatpush2.msra.mxu0 0.0
    %3113 = vmatprep.subr.mxu0 0.0
    %3114 = vmatpush2.msra.mxu0 0.0
    %3115 = vmatprep.subr.mxu0 0.0
    %3116 = vmatpush2.msra.mxu0 0.0
    %3117 = vmatprep.subr.mxu0 0.0
    %3118 = vmatpush2.msra.mxu0 0.0
    %3119 = vmatprep.subr.mxu0 0.0
    %3120 = vmatpush2.msra.mxu0 0.0
    %3121 = vmatprep.subr.mxu0 0.0
    %3122 = vmatpush2.msra.mxu0 0.0
    %3123 = vmatprep.subr.mxu0 0.0
    %3124 = vmatpush2.msra.mxu0 0.0
    %3125 = vmatprep.subr.mxu0 0.0
    %3126 = vmatpush2.msra.mxu0 0.0
    %3127 = vmatprep.subr.mxu0 0.0
    %3128 = vmatpush2.msra.mxu0 0.0
    %3129 = vmatprep.subr.mxu0 0.0
    %3130 = vmatpush2.msra.mxu0 0.0
    %3131 = vmatprep.subr.mxu0 0.0
    %3132 = vmatpush2.msra.mxu0 0.0
    %3133 = vmatprep.subr.mxu0 0.0
    %3134 = vmatpush2.msra.mxu0 0.0
    %3135 = vmatprep.subr.mxu0 0.0
    %3136 = vmatpush2.msra.mxu0 0.0
    %3137 = vmatprep.subr.mxu0 0.0
    %3138 = vmatpush2.msra.mxu0 0.0
    %3139 = vmatprep.mubr.f32.mxu0 0.0
    %3140 = vmatmul.mubr.f32.gmra.mxu0 %v3073
    %v3141 = vpop.f32.mrf.mxu0
    %v3142 = vadd.f32 0.0, %v3141
    %v3143 = vpop.f32.mrf.mxu0
    %v3144 = vadd.f32 0.0, %v3143
    %3145 = vdwg.mxu0
    %3146 = vmatprep.subr.mxu0 0.0
    %3147 = vmatpush1.msra.mxu0 0.0
    %3148 = vmatprep.subr.mxu0 0.0
    %3149 = vmatpush1.msra.mxu0 0.0
    %3150 = vmatprep.subr.mxu0 0.0
    %3151 = vmatpush1.msra.mxu0 0.0
    %3152 = vmatprep.subr.mxu0 0.0
    %3153 = vmatpush1.msra.mxu0 0.0
    %3154 = vmatprep.subr.mxu0 0.0
    %3155 = vmatpush1.msra.mxu0 0.0
    %3156 = vmatprep.subr.mxu0 0.0
    %3157 = vmatpush1.msra.mxu0 0.0
    %3158 = vmatprep.subr.mxu0 0.0
    %3159 = vmatpush1.msra.mxu0 0.0
    %3160 = vmatprep.subr.mxu0 0.0
    %3161 = vmatpush1.msra.mxu0 0.0
    %3162 = vmatprep.subr.mxu0 0.0
    %3163 = vmatpush1.msra.mxu0 0.0
    %3164 = vmatprep.subr.mxu0 0.0
    %3165 = vmatpush1.msra.mxu0 0.0
    %3166 = vmatprep.subr.mxu0 0.0
    %3167 = vmatpush1.msra.mxu0 0.0
    %3168 = vmatprep.subr.mxu0 0.0
    %3169 = vmatpush1.msra.mxu0 0.0
    %3170 = vmatprep.subr.mxu0 0.0
    %3171 = vmatpush1.msra.mxu0 0.0
    %3172 = vmatprep.subr.mxu0 0.0
    %3173 = vmatpush1.msra.mxu0 0.0
    %3174 = vmatprep.subr.mxu0 0.0
    %3175 = vmatpush1.msra.mxu0 0.0
    %3176 = vmatprep.subr.mxu0 %v3066
    %3177 = vmatpush1.msra.mxu0 %v3067
    %3178 = vmatprep.subr.mxu0 0.0
    %3179 = vmatpush2.msra.mxu0 0.0
    %3180 = vmatprep.subr.mxu0 0.0
    %3181 = vmatpush2.msra.mxu0 0.0
    %3182 = vmatprep.subr.mxu0 0.0
    %3183 = vmatpush2.msra.mxu0 0.0
    %3184 = vmatprep.subr.mxu0 0.0
    %3185 = vmatpush2.msra.mxu0 0.0
    %3186 = vmatprep.subr.mxu0 0.0
    %3187 = vmatpush2.msra.mxu0 0.0
    %3188 = vmatprep.subr.mxu0 0.0
    %3189 = vmatpush2.msra.mxu0 0.0
    %3190 = vmatprep.subr.mxu0 0.0
    %3191 = vmatpush2.msra.mxu0 0.0
    %3192 = vmatprep.subr.mxu0 0.0
    %3193 = vmatpush2.msra.mxu0 0.0
    %3194 = vmatprep.subr.mxu0 0.0
    %3195 = vmatpush2.msra.mxu0 0.0
    %3196 = vmatprep.subr.mxu0 0.0
    %3197 = vmatpush2.msra.mxu0 0.0
    %3198 = vmatprep.subr.mxu0 0.0
    %3199 = vmatpush2.msra.mxu0 0.0
    %3200 = vmatprep.subr.mxu0 0.0
    %3201 = vmatpush2.msra.mxu0 0.0
    %3202 = vmatprep.subr.mxu0 0.0
    %3203 = vmatpush2.msra.mxu0 0.0
    %3204 = vmatprep.subr.mxu0 0.0
    %3205 = vmatpush2.msra.mxu0 0.0
    %3206 = vmatprep.subr.mxu0 0.0
    %3207 = vmatpush2.msra.mxu0 0.0
    %3208 = vmatprep.subr.mxu0 0.0
    %3209 = vmatpush2.msra.mxu0 0.0
    %3210 = vmatprep.mubr.f32.mxu0 0.0
    %3211 = vmatmul.mubr.f32.gmra.mxu0 %v3073
    %v3212 = vpop.f32.mrf.mxu0
    %v3213 = vadd.f32 0.0, %v3212
    %v3214 = vpop.f32.mrf.mxu0
    %v3215 = vadd.f32 0.0, %v3214
    %3216 = vdwg.mxu0
    %3217 = vmatprep.subr.mxu0 0.0
    %3218 = vmatpush1.msra.mxu0 0.0
    %3219 = vmatprep.subr.mxu0 0.0
    %3220 = vmatpush1.msra.mxu0 0.0
    %3221 = vmatprep.subr.mxu0 0.0
    %3222 = vmatpush1.msra.mxu0 0.0
    %3223 = vmatprep.subr.mxu0 0.0
    %3224 = vmatpush1.msra.mxu0 0.0
    %3225 = vmatprep.subr.mxu0 0.0
    %3226 = vmatpush1.msra.mxu0 0.0
    %3227 = vmatprep.subr.mxu0 0.0
    %3228 = vmatpush1.msra.mxu0 0.0
    %3229 = vmatprep.subr.mxu0 0.0
    %3230 = vmatpush1.msra.mxu0 0.0
    %3231 = vmatprep.subr.mxu0 0.0
    %3232 = vmatpush1.msra.mxu0 0.0
    %3233 = vmatprep.subr.mxu0 0.0
    %3234 = vmatpush1.msra.mxu0 0.0
    %3235 = vmatprep.subr.mxu0 0.0
    %3236 = vmatpush1.msra.mxu0 0.0
    %3237 = vmatprep.subr.mxu0 0.0
    %3238 = vmatpush1.msra.mxu0 0.0
    %3239 = vmatprep.subr.mxu0 0.0
    %3240 = vmatpush1.msra.mxu0 0.0
    %3241 = vmatprep.subr.mxu0 0.0
    %3242 = vmatpush1.msra.mxu0 0.0
    %3243 = vmatprep.subr.mxu0 0.0
    %3244 = vmatpush1.msra.mxu0 0.0
    %3245 = vmatprep.subr.mxu0 0.0
    %3246 = vmatpush1.msra.mxu0 0.0
    %3247 = vmatprep.subr.mxu0 %v3064
    %3248 = vmatpush1.msra.mxu0 %v3065
    %3249 = vmatprep.subr.mxu0 0.0
    %3250 = vmatpush2.msra.mxu0 0.0
    %3251 = vmatprep.subr.mxu0 0.0
    %3252 = vmatpush2.msra.mxu0 0.0
    %3253 = vmatprep.subr.mxu0 0.0
    %3254 = vmatpush2.msra.mxu0 0.0
    %3255 = vmatprep.subr.mxu0 0.0
    %3256 = vmatpush2.msra.mxu0 0.0
    %3257 = vmatprep.subr.mxu0 0.0
    %3258 = vmatpush2.msra.mxu0 0.0
    %3259 = vmatprep.subr.mxu0 0.0
    %3260 = vmatpush2.msra.mxu0 0.0
    %3261 = vmatprep.subr.mxu0 0.0
    %3262 = vmatpush2.msra.mxu0 0.0
    %3263 = vmatprep.subr.mxu0 0.0
    %3264 = vmatpush2.msra.mxu0 0.0
    %3265 = vmatprep.subr.mxu0 0.0
    %3266 = vmatpush2.msra.mxu0 0.0
    %3267 = vmatprep.subr.mxu0 0.0
    %3268 = vmatpush2.msra.mxu0 0.0
    %3269 = vmatprep.subr.mxu0 0.0
    %3270 = vmatpush2.msra.mxu0 0.0
    %3271 = vmatprep.subr.mxu0 0.0
    %3272 = vmatpush2.msra.mxu0 0.0
    %3273 = vmatprep.subr.mxu0 0.0
    %3274 = vmatpush2.msra.mxu0 0.0
    %3275 = vmatprep.subr.mxu0 0.0
    %3276 = vmatpush2.msra.mxu0 0.0
    %3277 = vmatprep.subr.mxu0 0.0
    %3278 = vmatpush2.msra.mxu0 0.0
    %3279 = vmatprep.subr.mxu0 0.0
    %3280 = vmatpush2.msra.mxu0 0.0
    %3281 = vmatprep.mubr.f32.mxu0 0.0
    %3282 = vmatmul.mubr.f32.gmra.mxu0 %v3073
    %v3283 = vpop.f32.mrf.mxu0
    %v3284 = vadd.f32 0.0, %v3283
    %v3285 = vpop.f32.mrf.mxu0
    %v3286 = vadd.f32 0.0, %v3285
    %3287 = vdwg.mxu0
    %v3288 = vadd.f32 %v2906, %v3142
    %v3289 = vadd.f32 %v2908, %v3144
    %v3290 = vadd.f32 %v2977, %v3213
    %v3291 = vadd.f32 %v2979, %v3215
    %v3292 = vadd.f32 %v3048, %v3284
    %v3293 = vadd.f32 %v3050, %v3286
    %3294 = vrot.lane.b32.xlu0 %v2572, 1
    %v3295 = vpop.permute.xlu0 %3294
    %3296 = vrot.lane.b32.xlu0 %v2573, 1
    %v3297 = vpop.permute.xlu0 %3296
    %3298 = vrot.lane.b32.xlu0 %v2574, 1
    %v3299 = vpop.permute.xlu0 %3298
    %3300 = vrot.lane.b32.xlu0 %v2575, 1
    %v3301 = vpop.permute.xlu0 %3300
    %3302 = vrot.lane.b32.xlu0 %v2576, 1
    %v3303 = vpop.permute.xlu0 %3302
    %3304 = vrot.lane.b32.xlu0 %v2577, 1
    %v3305 = vpop.permute.xlu0 %3304
    %v3306 = vsel %vm984, %v3303, %v3305
    %v3307 = vsel %vm984, %v3301, %v3303
    %v3308 = vsel %vm984, %v3299, %v3301
    %v3309 = vsel %vm984, %v3297, %v3299
    %v3310 = vsel %vm984, %v3295, %v3297
    %v3311 = vsel %vm984, %v3305, %v3295
    %s3312 = scalar_lea.vmem [#allocation8], 24
    %v3313 = vld [vmem:[%s3312] sm:$0xff]
    %v3315 = vsel %vm2619, %v3313, 0
    %3317 = vmatprep.subr.mxu0 0.0
    %3318 = vmatpush1.msra.mxu0 0.0
    %3319 = vmatprep.subr.mxu0 0.0
    %3320 = vmatpush1.msra.mxu0 0.0
    %3321 = vmatprep.subr.mxu0 0.0
    %3322 = vmatpush1.msra.mxu0 0.0
    %3323 = vmatprep.subr.mxu0 0.0
    %3324 = vmatpush1.msra.mxu0 0.0
    %3325 = vmatprep.subr.mxu0 0.0
    %3326 = vmatpush1.msra.mxu0 0.0
    %3327 = vmatprep.subr.mxu0 0.0
    %3328 = vmatpush1.msra.mxu0 0.0
    %3329 = vmatprep.subr.mxu0 0.0
    %3330 = vmatpush1.msra.mxu0 0.0
    %3331 = vmatprep.subr.mxu0 0.0
    %3332 = vmatpush1.msra.mxu0 0.0
    %3333 = vmatprep.subr.mxu0 0.0
    %3334 = vmatpush1.msra.mxu0 0.0
    %3335 = vmatprep.subr.mxu0 0.0
    %3336 = vmatpush1.msra.mxu0 0.0
    %3337 = vmatprep.subr.mxu0 0.0
    %3338 = vmatpush1.msra.mxu0 0.0
    %3339 = vmatprep.subr.mxu0 0.0
    %3340 = vmatpush1.msra.mxu0 0.0
    %3341 = vmatprep.subr.mxu0 0.0
    %3342 = vmatpush1.msra.mxu0 0.0
    %3343 = vmatprep.subr.mxu0 0.0
    %3344 = vmatpush1.msra.mxu0 0.0
    %3345 = vmatprep.subr.mxu0 0.0
    %3346 = vmatpush1.msra.mxu0 0.0
    %3347 = vmatprep.subr.mxu0 %v3310
    %3348 = vmatpush1.msra.mxu0 %v3311
    %3349 = vmatprep.subr.mxu0 0.0
    %3350 = vmatpush2.msra.mxu0 0.0
    %3351 = vmatprep.subr.mxu0 0.0
    %3352 = vmatpush2.msra.mxu0 0.0
    %3353 = vmatprep.subr.mxu0 0.0
    %3354 = vmatpush2.msra.mxu0 0.0
    %3355 = vmatprep.subr.mxu0 0.0
    %3356 = vmatpush2.msra.mxu0 0.0
    %3357 = vmatprep.subr.mxu0 0.0
    %3358 = vmatpush2.msra.mxu0 0.0
    %3359 = vmatprep.subr.mxu0 0.0
    %3360 = vmatpush2.msra.mxu0 0.0
    %3361 = vmatprep.subr.mxu0 0.0
    %3362 = vmatpush2.msra.mxu0 0.0
    %3363 = vmatprep.subr.mxu0 0.0
    %3364 = vmatpush2.msra.mxu0 0.0
    %3365 = vmatprep.subr.mxu0 0.0
    %3366 = vmatpush2.msra.mxu0 0.0
    %3367 = vmatprep.subr.mxu0 0.0
    %3368 = vmatpush2.msra.mxu0 0.0
    %3369 = vmatprep.subr.mxu0 0.0
    %3370 = vmatpush2.msra.mxu0 0.0
    %3371 = vmatprep.subr.mxu0 0.0
    %3372 = vmatpush2.msra.mxu0 0.0
    %3373 = vmatprep.subr.mxu0 0.0
    %3374 = vmatpush2.msra.mxu0 0.0
    %3375 = vmatprep.subr.mxu0 0.0
    %3376 = vmatpush2.msra.mxu0 0.0
    %3377 = vmatprep.subr.mxu0 0.0
    %3378 = vmatpush2.msra.mxu0 0.0
    %3379 = vmatprep.subr.mxu0 0.0
    %3380 = vmatpush2.msra.mxu0 0.0
    %3381 = vmatprep.mubr.f32.mxu0 0.0
    %3382 = vmatmul.mubr.f32.gmra.mxu0 %v3315
    %v3383 = vpop.f32.mrf.mxu0
    %v3384 = vadd.f32 0.0, %v3383
    %v3385 = vpop.f32.mrf.mxu0
    %v3386 = vadd.f32 0.0, %v3385
    %3387 = vdwg.mxu0
    %3388 = vmatprep.subr.mxu0 0.0
    %3389 = vmatpush1.msra.mxu0 0.0
    %3390 = vmatprep.subr.mxu0 0.0
    %3391 = vmatpush1.msra.mxu0 0.0
    %3392 = vmatprep.subr.mxu0 0.0
    %3393 = vmatpush1.msra.mxu0 0.0
    %3394 = vmatprep.subr.mxu0 0.0
    %3395 = vmatpush1.msra.mxu0 0.0
    %3396 = vmatprep.subr.mxu0 0.0
    %3397 = vmatpush1.msra.mxu0 0.0
    %3398 = vmatprep.subr.mxu0 0.0
    %3399 = vmatpush1.msra.mxu0 0.0
    %3400 = vmatprep.subr.mxu0 0.0
    %3401 = vmatpush1.msra.mxu0 0.0
    %3402 = vmatprep.subr.mxu0 0.0
    %3403 = vmatpush1.msra.mxu0 0.0
    %3404 = vmatprep.subr.mxu0 0.0
    %3405 = vmatpush1.msra.mxu0 0.0
    %3406 = vmatprep.subr.mxu0 0.0
    %3407 = vmatpush1.msra.mxu0 0.0
    %3408 = vmatprep.subr.mxu0 0.0
    %3409 = vmatpush1.msra.mxu0 0.0
    %3410 = vmatprep.subr.mxu0 0.0
    %3411 = vmatpush1.msra.mxu0 0.0
    %3412 = vmatprep.subr.mxu0 0.0
    %3413 = vmatpush1.msra.mxu0 0.0
    %3414 = vmatprep.subr.mxu0 0.0
    %3415 = vmatpush1.msra.mxu0 0.0
    %3416 = vmatprep.subr.mxu0 0.0
    %3417 = vmatpush1.msra.mxu0 0.0
    %3418 = vmatprep.subr.mxu0 %v3308
    %3419 = vmatpush1.msra.mxu0 %v3309
    %3420 = vmatprep.subr.mxu0 0.0
    %3421 = vmatpush2.msra.mxu0 0.0
    %3422 = vmatprep.subr.mxu0 0.0
    %3423 = vmatpush2.msra.mxu0 0.0
    %3424 = vmatprep.subr.mxu0 0.0
    %3425 = vmatpush2.msra.mxu0 0.0
    %3426 = vmatprep.subr.mxu0 0.0
    %3427 = vmatpush2.msra.mxu0 0.0
    %3428 = vmatprep.subr.mxu0 0.0
    %3429 = vmatpush2.msra.mxu0 0.0
    %3430 = vmatprep.subr.mxu0 0.0
    %3431 = vmatpush2.msra.mxu0 0.0
    %3432 = vmatprep.subr.mxu0 0.0
    %3433 = vmatpush2.msra.mxu0 0.0
    %3434 = vmatprep.subr.mxu0 0.0
    %3435 = vmatpush2.msra.mxu0 0.0
    %3436 = vmatprep.subr.mxu0 0.0
    %3437 = vmatpush2.msra.mxu0 0.0
    %3438 = vmatprep.subr.mxu0 0.0
    %3439 = vmatpush2.msra.mxu0 0.0
    %3440 = vmatprep.subr.mxu0 0.0
    %3441 = vmatpush2.msra.mxu0 0.0
    %3442 = vmatprep.subr.mxu0 0.0
    %3443 = vmatpush2.msra.mxu0 0.0
    %3444 = vmatprep.subr.mxu0 0.0
    %3445 = vmatpush2.msra.mxu0 0.0
    %3446 = vmatprep.subr.mxu0 0.0
    %3447 = vmatpush2.msra.mxu0 0.0
    %3448 = vmatprep.subr.mxu0 0.0
    %3449 = vmatpush2.msra.mxu0 0.0
    %3450 = vmatprep.subr.mxu0 0.0
    %3451 = vmatpush2.msra.mxu0 0.0
    %3452 = vmatprep.mubr.f32.mxu0 0.0
    %3453 = vmatmul.mubr.f32.gmra.mxu0 %v3315
    %v3454 = vpop.f32.mrf.mxu0
    %v3455 = vadd.f32 0.0, %v3454
    %v3456 = vpop.f32.mrf.mxu0
    %v3457 = vadd.f32 0.0, %v3456
    %3458 = vdwg.mxu0
    %3459 = vmatprep.subr.mxu0 0.0
    %3460 = vmatpush1.msra.mxu0 0.0
    %3461 = vmatprep.subr.mxu0 0.0
    %3462 = vmatpush1.msra.mxu0 0.0
    %3463 = vmatprep.subr.mxu0 0.0
    %3464 = vmatpush1.msra.mxu0 0.0
    %3465 = vmatprep.subr.mxu0 0.0
    %3466 = vmatpush1.msra.mxu0 0.0
    %3467 = vmatprep.subr.mxu0 0.0
    %3468 = vmatpush1.msra.mxu0 0.0
    %3469 = vmatprep.subr.mxu0 0.0
    %3470 = vmatpush1.msra.mxu0 0.0
    %3471 = vmatprep.subr.mxu0 0.0
    %3472 = vmatpush1.msra.mxu0 0.0
    %3473 = vmatprep.subr.mxu0 0.0
    %3474 = vmatpush1.msra.mxu0 0.0
    %3475 = vmatprep.subr.mxu0 0.0
    %3476 = vmatpush1.msra.mxu0 0.0
    %3477 = vmatprep.subr.mxu0 0.0
    %3478 = vmatpush1.msra.mxu0 0.0
    %3479 = vmatprep.subr.mxu0 0.0
    %3480 = vmatpush1.msra.mxu0 0.0
    %3481 = vmatprep.subr.mxu0 0.0
    %3482 = vmatpush1.msra.mxu0 0.0
    %3483 = vmatprep.subr.mxu0 0.0
    %3484 = vmatpush1.msra.mxu0 0.0
    %3485 = vmatprep.subr.mxu0 0.0
    %3486 = vmatpush1.msra.mxu0 0.0
    %3487 = vmatprep.subr.mxu0 0.0
    %3488 = vmatpush1.msra.mxu0 0.0
    %3489 = vmatprep.subr.mxu0 %v3306
    %3490 = vmatpush1.msra.mxu0 %v3307
    %3491 = vmatprep.subr.mxu0 0.0
    %3492 = vmatpush2.msra.mxu0 0.0
    %3493 = vmatprep.subr.mxu0 0.0
    %3494 = vmatpush2.msra.mxu0 0.0
    %3495 = vmatprep.subr.mxu0 0.0
    %3496 = vmatpush2.msra.mxu0 0.0
    %3497 = vmatprep.subr.mxu0 0.0
    %3498 = vmatpush2.msra.mxu0 0.0
    %3499 = vmatprep.subr.mxu0 0.0
    %3500 = vmatpush2.msra.mxu0 0.0
    %3501 = vmatprep.subr.mxu0 0.0
    %3502 = vmatpush2.msra.mxu0 0.0
    %3503 = vmatprep.subr.mxu0 0.0
    %3504 = vmatpush2.msra.mxu0 0.0
    %3505 = vmatprep.subr.mxu0 0.0
    %3506 = vmatpush2.msra.mxu0 0.0
    %3507 = vmatprep.subr.mxu0 0.0
    %3508 = vmatpush2.msra.mxu0 0.0
    %3509 = vmatprep.subr.mxu0 0.0
    %3510 = vmatpush2.msra.mxu0 0.0
    %3511 = vmatprep.subr.mxu0 0.0
    %3512 = vmatpush2.msra.mxu0 0.0
    %3513 = vmatprep.subr.mxu0 0.0
    %3514 = vmatpush2.msra.mxu0 0.0
    %3515 = vmatprep.subr.mxu0 0.0
    %3516 = vmatpush2.msra.mxu0 0.0
    %3517 = vmatprep.subr.mxu0 0.0
    %3518 = vmatpush2.msra.mxu0 0.0
    %3519 = vmatprep.subr.mxu0 0.0
    %3520 = vmatpush2.msra.mxu0 0.0
    %3521 = vmatprep.subr.mxu0 0.0
    %3522 = vmatpush2.msra.mxu0 0.0
    %3523 = vmatprep.mubr.f32.mxu0 0.0
    %3524 = vmatmul.mubr.f32.gmra.mxu0 %v3315
    %v3525 = vpop.f32.mrf.mxu0
    %v3526 = vadd.f32 0.0, %v3525
    %v3527 = vpop.f32.mrf.mxu0
    %v3528 = vadd.f32 0.0, %v3527
    %3529 = vdwg.mxu0
    %v3530 = vadd.f32 %v3288, %v3384
    %v3531 = vadd.f32 %v3289, %v3386
    %v3532 = vadd.f32 %v3290, %v3455
    %v3533 = vadd.f32 %v3291, %v3457
    %v3534 = vadd.f32 %v3292, %v3526
    %v3535 = vadd.f32 %v3293, %v3528
    %s3536 = scalar_lea.vmem [#allocation8], 32
    %v3537 = vld [vmem:[%s3536] sm:$0xff]
    %v3539 = vsel %vm2619, %v3537, 0
    %3541 = vmatprep.subr.mxu0 0.0
    %3542 = vmatpush1.msra.mxu0 0.0
    %3543 = vmatprep.subr.mxu0 0.0
    %3544 = vmatpush1.msra.mxu0 0.0
    %3545 = vmatprep.subr.mxu0 0.0
    %3546 = vmatpush1.msra.mxu0 0.0
    %3547 = vmatprep.subr.mxu0 0.0
    %3548 = vmatpush1.msra.mxu0 0.0
    %3549 = vmatprep.subr.mxu0 0.0
    %3550 = vmatpush1.msra.mxu0 0.0
    %3551 = vmatprep.subr.mxu0 0.0
    %3552 = vmatpush1.msra.mxu0 0.0
    %3553 = vmatprep.subr.mxu0 0.0
    %3554 = vmatpush1.msra.mxu0 0.0
    %3555 = vmatprep.subr.mxu0 0.0
    %3556 = vmatpush1.msra.mxu0 0.0
    %3557 = vmatprep.subr.mxu0 0.0
    %3558 = vmatpush1.msra.mxu0 0.0
    %3559 = vmatprep.subr.mxu0 0.0
    %3560 = vmatpush1.msra.mxu0 0.0
    %3561 = vmatprep.subr.mxu0 0.0
    %3562 = vmatpush1.msra.mxu0 0.0
    %3563 = vmatprep.subr.mxu0 0.0
    %3564 = vmatpush1.msra.mxu0 0.0
    %3565 = vmatprep.subr.mxu0 0.0
    %3566 = vmatpush1.msra.mxu0 0.0
    %3567 = vmatprep.subr.mxu0 0.0
    %3568 = vmatpush1.msra.mxu0 0.0
    %3569 = vmatprep.subr.mxu0 0.0
    %3570 = vmatpush1.msra.mxu0 0.0
    %3571 = vmatprep.subr.mxu0 %v2573
    %3572 = vmatpush1.msra.mxu0 %v2572
    %3573 = vmatprep.subr.mxu0 0.0
    %3574 = vmatpush2.msra.mxu0 0.0
    %3575 = vmatprep.subr.mxu0 0.0
    %3576 = vmatpush2.msra.mxu0 0.0
    %3577 = vmatprep.subr.mxu0 0.0
    %3578 = vmatpush2.msra.mxu0 0.0
    %3579 = vmatprep.subr.mxu0 0.0
    %3580 = vmatpush2.msra.mxu0 0.0
    %3581 = vmatprep.subr.mxu0 0.0
    %3582 = vmatpush2.msra.mxu0 0.0
    %3583 = vmatprep.subr.mxu0 0.0
    %3584 = vmatpush2.msra.mxu0 0.0
    %3585 = vmatprep.subr.mxu0 0.0
    %3586 = vmatpush2.msra.mxu0 0.0
    %3587 = vmatprep.subr.mxu0 0.0
    %3588 = vmatpush2.msra.mxu0 0.0
    %3589 = vmatprep.subr.mxu0 0.0
    %3590 = vmatpush2.msra.mxu0 0.0
    %3591 = vmatprep.subr.mxu0 0.0
    %3592 = vmatpush2.msra.mxu0 0.0
    %3593 = vmatprep.subr.mxu0 0.0
    %3594 = vmatpush2.msra.mxu0 0.0
    %3595 = vmatprep.subr.mxu0 0.0
    %3596 = vmatpush2.msra.mxu0 0.0
    %3597 = vmatprep.subr.mxu0 0.0
    %3598 = vmatpush2.msra.mxu0 0.0
    %3599 = vmatprep.subr.mxu0 0.0
    %3600 = vmatpush2.msra.mxu0 0.0
    %3601 = vmatprep.subr.mxu0 0.0
    %3602 = vmatpush2.msra.mxu0 0.0
    %3603 = vmatprep.subr.mxu0 0.0
    %3604 = vmatpush2.msra.mxu0 0.0
    %3605 = vmatprep.mubr.f32.mxu0 0.0
    %3606 = vmatmul.mubr.f32.gmra.mxu0 %v3539
    %v3607 = vpop.f32.mrf.mxu0
    %v3608 = vadd.f32 0.0, %v3607
    %v3609 = vpop.f32.mrf.mxu0
    %v3610 = vadd.f32 0.0, %v3609
    %3611 = vdwg.mxu0
    %3612 = vmatprep.subr.mxu0 0.0
    %3613 = vmatpush1.msra.mxu0 0.0
    %3614 = vmatprep.subr.mxu0 0.0
    %3615 = vmatpush1.msra.mxu0 0.0
    %3616 = vmatprep.subr.mxu0 0.0
    %3617 = vmatpush1.msra.mxu0 0.0
    %3618 = vmatprep.subr.mxu0 0.0
    %3619 = vmatpush1.msra.mxu0 0.0
    %3620 = vmatprep.subr.mxu0 0.0
    %3621 = vmatpush1.msra.mxu0 0.0
    %3622 = vmatprep.subr.mxu0 0.0
    %3623 = vmatpush1.msra.mxu0 0.0
    %3624 = vmatprep.subr.mxu0 0.0
    %3625 = vmatpush1.msra.mxu0 0.0
    %3626 = vmatprep.subr.mxu0 0.0
    %3627 = vmatpush1.msra.mxu0 0.0
    %3628 = vmatprep.subr.mxu0 0.0
    %3629 = vmatpush1.msra.mxu0 0.0
    %3630 = vmatprep.subr.mxu0 0.0
    %3631 = vmatpush1.msra.mxu0 0.0
    %3632 = vmatprep.subr.mxu0 0.0
    %3633 = vmatpush1.msra.mxu0 0.0
    %3634 = vmatprep.subr.mxu0 0.0
    %3635 = vmatpush1.msra.mxu0 0.0
    %3636 = vmatprep.subr.mxu0 0.0
    %3637 = vmatpush1.msra.mxu0 0.0
    %3638 = vmatprep.subr.mxu0 0.0
    %3639 = vmatpush1.msra.mxu0 0.0
    %3640 = vmatprep.subr.mxu0 0.0
    %3641 = vmatpush1.msra.mxu0 0.0
    %3642 = vmatprep.subr.mxu0 %v2575
    %3643 = vmatpush1.msra.mxu0 %v2574
    %3644 = vmatprep.subr.mxu0 0.0
    %3645 = vmatpush2.msra.mxu0 0.0
    %3646 = vmatprep.subr.mxu0 0.0
    %3647 = vmatpush2.msra.mxu0 0.0
    %3648 = vmatprep.subr.mxu0 0.0
    %3649 = vmatpush2.msra.mxu0 0.0
    %3650 = vmatprep.subr.mxu0 0.0
    %3651 = vmatpush2.msra.mxu0 0.0
    %3652 = vmatprep.subr.mxu0 0.0
    %3653 = vmatpush2.msra.mxu0 0.0
    %3654 = vmatprep.subr.mxu0 0.0
    %3655 = vmatpush2.msra.mxu0 0.0
    %3656 = vmatprep.subr.mxu0 0.0
    %3657 = vmatpush2.msra.mxu0 0.0
    %3658 = vmatprep.subr.mxu0 0.0
    %3659 = vmatpush2.msra.mxu0 0.0
    %3660 = vmatprep.subr.mxu0 0.0
    %3661 = vmatpush2.msra.mxu0 0.0
    %3662 = vmatprep.subr.mxu0 0.0
    %3663 = vmatpush2.msra.mxu0 0.0
    %3664 = vmatprep.subr.mxu0 0.0
    %3665 = vmatpush2.msra.mxu0 0.0
    %3666 = vmatprep.subr.mxu0 0.0
    %3667 = vmatpush2.msra.mxu0 0.0
    %3668 = vmatprep.subr.mxu0 0.0
    %3669 = vmatpush2.msra.mxu0 0.0
    %3670 = vmatprep.subr.mxu0 0.0
    %3671 = vmatpush2.msra.mxu0 0.0
    %3672 = vmatprep.subr.mxu0 0.0
    %3673 = vmatpush2.msra.mxu0 0.0
    %3674 = vmatprep.subr.mxu0 0.0
    %3675 = vmatpush2.msra.mxu0 0.0
    %3676 = vmatprep.mubr.f32.mxu0 0.0
    %3677 = vmatmul.mubr.f32.gmra.mxu0 %v3539
    %v3678 = vpop.f32.mrf.mxu0
    %v3679 = vadd.f32 0.0, %v3678
    %v3680 = vpop.f32.mrf.mxu0
    %v3681 = vadd.f32 0.0, %v3680
    %3682 = vdwg.mxu0
    %3683 = vmatprep.subr.mxu0 0.0
    %3684 = vmatpush1.msra.mxu0 0.0
    %3685 = vmatprep.subr.mxu0 0.0
    %3686 = vmatpush1.msra.mxu0 0.0
    %3687 = vmatprep.subr.mxu0 0.0
    %3688 = vmatpush1.msra.mxu0 0.0
    %3689 = vmatprep.subr.mxu0 0.0
    %3690 = vmatpush1.msra.mxu0 0.0
    %3691 = vmatprep.subr.mxu0 0.0
    %3692 = vmatpush1.msra.mxu0 0.0
    %3693 = vmatprep.subr.mxu0 0.0
    %3694 = vmatpush1.msra.mxu0 0.0
    %3695 = vmatprep.subr.mxu0 0.0
    %3696 = vmatpush1.msra.mxu0 0.0
    %3697 = vmatprep.subr.mxu0 0.0
    %3698 = vmatpush1.msra.mxu0 0.0
    %3699 = vmatprep.subr.mxu0 0.0
    %3700 = vmatpush1.msra.mxu0 0.0
    %3701 = vmatprep.subr.mxu0 0.0
    %3702 = vmatpush1.msra.mxu0 0.0
    %3703 = vmatprep.subr.mxu0 0.0
    %3704 = vmatpush1.msra.mxu0 0.0
    %3705 = vmatprep.subr.mxu0 0.0
    %3706 = vmatpush1.msra.mxu0 0.0
    %3707 = vmatprep.subr.mxu0 0.0
    %3708 = vmatpush1.msra.mxu0 0.0
    %3709 = vmatprep.subr.mxu0 0.0
    %3710 = vmatpush1.msra.mxu0 0.0
    %3711 = vmatprep.subr.mxu0 0.0
    %3712 = vmatpush1.msra.mxu0 0.0
    %3713 = vmatprep.subr.mxu0 %v2577
    %3714 = vmatpush1.msra.mxu0 %v2576
    %3715 = vmatprep.subr.mxu0 0.0
    %3716 = vmatpush2.msra.mxu0 0.0
    %3717 = vmatprep.subr.mxu0 0.0
    %3718 = vmatpush2.msra.mxu0 0.0
    %3719 = vmatprep.subr.mxu0 0.0
    %3720 = vmatpush2.msra.mxu0 0.0
    %3721 = vmatprep.subr.mxu0 0.0
    %3722 = vmatpush2.msra.mxu0 0.0
    %3723 = vmatprep.subr.mxu0 0.0
    %3724 = vmatpush2.msra.mxu0 0.0
    %3725 = vmatprep.subr.mxu0 0.0
    %3726 = vmatpush2.msra.mxu0 0.0
    %3727 = vmatprep.subr.mxu0 0.0
    %3728 = vmatpush2.msra.mxu0 0.0
    %3729 = vmatprep.subr.mxu0 0.0
    %3730 = vmatpush2.msra.mxu0 0.0
    %3731 = vmatprep.subr.mxu0 0.0
    %3732 = vmatpush2.msra.mxu0 0.0
    %3733 = vmatprep.subr.mxu0 0.0
    %3734 = vmatpush2.msra.mxu0 0.0
    %3735 = vmatprep.subr.mxu0 0.0
    %3736 = vmatpush2.msra.mxu0 0.0
    %3737 = vmatprep.subr.mxu0 0.0
    %3738 = vmatpush2.msra.mxu0 0.0
    %3739 = vmatprep.subr.mxu0 0.0
    %3740 = vmatpush2.msra.mxu0 0.0
    %3741 = vmatprep.subr.mxu0 0.0
    %3742 = vmatpush2.msra.mxu0 0.0
    %3743 = vmatprep.subr.mxu0 0.0
    %3744 = vmatpush2.msra.mxu0 0.0
    %3745 = vmatprep.subr.mxu0 0.0
    %3746 = vmatpush2.msra.mxu0 0.0
    %3747 = vmatprep.mubr.f32.mxu0 0.0
    %3748 = vmatmul.mubr.f32.gmra.mxu0 %v3539
    %v3749 = vpop.f32.mrf.mxu0
    %v3750 = vadd.f32 0.0, %v3749
    %v3751 = vpop.f32.mrf.mxu0
    %v3752 = vadd.f32 0.0, %v3751
    %3753 = vdwg.mxu0
    %v3754 = vadd.f32 %v3530, %v3608
    %v3755 = vadd.f32 %v3531, %v3610
    %v3756 = vadd.f32 %v3532, %v3679
    %v3757 = vadd.f32 %v3533, %v3681
    %v3758 = vadd.f32 %v3534, %v3750
    %v3759 = vadd.f32 %v3535, %v3752
    %3760 = vrot.lane.b32.xlu0 %v2572, 127
    %v3761 = vpop.permute.xlu0 %3760
    %3762 = vrot.lane.b32.xlu0 %v2573, 127
    %v3763 = vpop.permute.xlu0 %3762
    %3764 = vrot.lane.b32.xlu0 %v2574, 127
    %v3765 = vpop.permute.xlu0 %3764
    %3766 = vrot.lane.b32.xlu0 %v2575, 127
    %v3767 = vpop.permute.xlu0 %3766
    %3768 = vrot.lane.b32.xlu0 %v2576, 127
    %v3769 = vpop.permute.xlu0 %3768
    %3770 = vrot.lane.b32.xlu0 %v2577, 127
    %v3771 = vpop.permute.xlu0 %3770
    %v3772 = vsel %vm1481, %v3769, %v3771
    %v3773 = vsel %vm1481, %v3767, %v3769
    %v3774 = vsel %vm1481, %v3765, %v3767
    %v3775 = vsel %vm1481, %v3763, %v3765
    %v3776 = vsel %vm1481, %v3761, %v3763
    %v3777 = vsel %vm1481, %v3771, %v3761
    %s3778 = scalar_lea.vmem [#allocation8], 40
    %v3779 = vld [vmem:[%s3778] sm:$0xff]
    %v3781 = vsel %vm2619, %v3779, 0
    %3783 = vmatprep.subr.mxu0 0.0
    %3784 = vmatpush1.msra.mxu0 0.0
    %3785 = vmatprep.subr.mxu0 0.0
    %3786 = vmatpush1.msra.mxu0 0.0
    %3787 = vmatprep.subr.mxu0 0.0
    %3788 = vmatpush1.msra.mxu0 0.0
    %3789 = vmatprep.subr.mxu0 0.0
    %3790 = vmatpush1.msra.mxu0 0.0
    %3791 = vmatprep.subr.mxu0 0.0
    %3792 = vmatpush1.msra.mxu0 0.0
    %3793 = vmatprep.subr.mxu0 0.0
    %3794 = vmatpush1.msra.mxu0 0.0
    %3795 = vmatprep.subr.mxu0 0.0
    %3796 = vmatpush1.msra.mxu0 0.0
    %3797 = vmatprep.subr.mxu0 0.0
    %3798 = vmatpush1.msra.mxu0 0.0
    %3799 = vmatprep.subr.mxu0 0.0
    %3800 = vmatpush1.msra.mxu0 0.0
    %3801 = vmatprep.subr.mxu0 0.0
    %3802 = vmatpush1.msra.mxu0 0.0
    %3803 = vmatprep.subr.mxu0 0.0
    %3804 = vmatpush1.msra.mxu0 0.0
    %3805 = vmatprep.subr.mxu0 0.0
    %3806 = vmatpush1.msra.mxu0 0.0
    %3807 = vmatprep.subr.mxu0 0.0
    %3808 = vmatpush1.msra.mxu0 0.0
    %3809 = vmatprep.subr.mxu0 0.0
    %3810 = vmatpush1.msra.mxu0 0.0
    %3811 = vmatprep.subr.mxu0 0.0
    %3812 = vmatpush1.msra.mxu0 0.0
    %3813 = vmatprep.subr.mxu0 %v3775
    %3814 = vmatpush1.msra.mxu0 %v3776
    %3815 = vmatprep.subr.mxu0 0.0
    %3816 = vmatpush2.msra.mxu0 0.0
    %3817 = vmatprep.subr.mxu0 0.0
    %3818 = vmatpush2.msra.mxu0 0.0
    %3819 = vmatprep.subr.mxu0 0.0
    %3820 = vmatpush2.msra.mxu0 0.0
    %3821 = vmatprep.subr.mxu0 0.0
    %3822 = vmatpush2.msra.mxu0 0.0
    %3823 = vmatprep.subr.mxu0 0.0
    %3824 = vmatpush2.msra.mxu0 0.0
    %3825 = vmatprep.subr.mxu0 0.0
    %3826 = vmatpush2.msra.mxu0 0.0
    %3827 = vmatprep.subr.mxu0 0.0
    %3828 = vmatpush2.msra.mxu0 0.0
    %3829 = vmatprep.subr.mxu0 0.0
    %3830 = vmatpush2.msra.mxu0 0.0
    %3831 = vmatprep.subr.mxu0 0.0
    %3832 = vmatpush2.msra.mxu0 0.0
    %3833 = vmatprep.subr.mxu0 0.0
    %3834 = vmatpush2.msra.mxu0 0.0
    %3835 = vmatprep.subr.mxu0 0.0
    %3836 = vmatpush2.msra.mxu0 0.0
    %3837 = vmatprep.subr.mxu0 0.0
    %3838 = vmatpush2.msra.mxu0 0.0
    %3839 = vmatprep.subr.mxu0 0.0
    %3840 = vmatpush2.msra.mxu0 0.0
    %3841 = vmatprep.subr.mxu0 0.0
    %3842 = vmatpush2.msra.mxu0 0.0
    %3843 = vmatprep.subr.mxu0 0.0
    %3844 = vmatpush2.msra.mxu0 0.0
    %3845 = vmatprep.subr.mxu0 0.0
    %3846 = vmatpush2.msra.mxu0 0.0
    %3847 = vmatprep.mubr.f32.mxu0 0.0
    %3848 = vmatmul.mubr.f32.gmra.mxu0 %v3781
    %v3849 = vpop.f32.mrf.mxu0
    %v3850 = vadd.f32 0.0, %v3849
    %v3851 = vpop.f32.mrf.mxu0
    %v3852 = vadd.f32 0.0, %v3851
    %3853 = vdwg.mxu0
    %3854 = vmatprep.subr.mxu0 0.0
    %3855 = vmatpush1.msra.mxu0 0.0
    %3856 = vmatprep.subr.mxu0 0.0
    %3857 = vmatpush1.msra.mxu0 0.0
    %3858 = vmatprep.subr.mxu0 0.0
    %3859 = vmatpush1.msra.mxu0 0.0
    %3860 = vmatprep.subr.mxu0 0.0
    %3861 = vmatpush1.msra.mxu0 0.0
    %3862 = vmatprep.subr.mxu0 0.0
    %3863 = vmatpush1.msra.mxu0 0.0
    %3864 = vmatprep.subr.mxu0 0.0
    %3865 = vmatpush1.msra.mxu0 0.0
    %3866 = vmatprep.subr.mxu0 0.0
    %3867 = vmatpush1.msra.mxu0 0.0
    %3868 = vmatprep.subr.mxu0 0.0
    %3869 = vmatpush1.msra.mxu0 0.0
    %3870 = vmatprep.subr.mxu0 0.0
    %3871 = vmatpush1.msra.mxu0 0.0
    %3872 = vmatprep.subr.mxu0 0.0
    %3873 = vmatpush1.msra.mxu0 0.0
    %3874 = vmatprep.subr.mxu0 0.0
    %3875 = vmatpush1.msra.mxu0 0.0
    %3876 = vmatprep.subr.mxu0 0.0
    %3877 = vmatpush1.msra.mxu0 0.0
    %3878 = vmatprep.subr.mxu0 0.0
    %3879 = vmatpush1.msra.mxu0 0.0
    %3880 = vmatprep.subr.mxu0 0.0
    %3881 = vmatpush1.msra.mxu0 0.0
    %3882 = vmatprep.subr.mxu0 0.0
    %3883 = vmatpush1.msra.mxu0 0.0
    %3884 = vmatprep.subr.mxu0 %v3773
    %3885 = vmatpush1.msra.mxu0 %v3774
    %3886 = vmatprep.subr.mxu0 0.0
    %3887 = vmatpush2.msra.mxu0 0.0
    %3888 = vmatprep.subr.mxu0 0.0
    %3889 = vmatpush2.msra.mxu0 0.0
    %3890 = vmatprep.subr.mxu0 0.0
    %3891 = vmatpush2.msra.mxu0 0.0
    %3892 = vmatprep.subr.mxu0 0.0
    %3893 = vmatpush2.msra.mxu0 0.0
    %3894 = vmatprep.subr.mxu0 0.0
    %3895 = vmatpush2.msra.mxu0 0.0
    %3896 = vmatprep.subr.mxu0 0.0
    %3897 = vmatpush2.msra.mxu0 0.0
    %3898 = vmatprep.subr.mxu0 0.0
    %3899 = vmatpush2.msra.mxu0 0.0
    %3900 = vmatprep.subr.mxu0 0.0
    %3901 = vmatpush2.msra.mxu0 0.0
    %3902 = vmatprep.subr.mxu0 0.0
    %3903 = vmatpush2.msra.mxu0 0.0
    %3904 = vmatprep.subr.mxu0 0.0
    %3905 = vmatpush2.msra.mxu0 0.0
    %3906 = vmatprep.subr.mxu0 0.0
    %3907 = vmatpush2.msra.mxu0 0.0
    %3908 = vmatprep.subr.mxu0 0.0
    %3909 = vmatpush2.msra.mxu0 0.0
    %3910 = vmatprep.subr.mxu0 0.0
    %3911 = vmatpush2.msra.mxu0 0.0
    %3912 = vmatprep.subr.mxu0 0.0
    %3913 = vmatpush2.msra.mxu0 0.0
    %3914 = vmatprep.subr.mxu0 0.0
    %3915 = vmatpush2.msra.mxu0 0.0
    %3916 = vmatprep.subr.mxu0 0.0
    %3917 = vmatpush2.msra.mxu0 0.0
    %3918 = vmatprep.mubr.f32.mxu0 0.0
    %3919 = vmatmul.mubr.f32.gmra.mxu0 %v3781
    %v3920 = vpop.f32.mrf.mxu0
    %v3921 = vadd.f32 0.0, %v3920
    %v3922 = vpop.f32.mrf.mxu0
    %v3923 = vadd.f32 0.0, %v3922
    %3924 = vdwg.mxu0
    %3925 = vmatprep.subr.mxu0 0.0
    %3926 = vmatpush1.msra.mxu0 0.0
    %3927 = vmatprep.subr.mxu0 0.0
    %3928 = vmatpush1.msra.mxu0 0.0
    %3929 = vmatprep.subr.mxu0 0.0
    %3930 = vmatpush1.msra.mxu0 0.0
    %3931 = vmatprep.subr.mxu0 0.0
    %3932 = vmatpush1.msra.mxu0 0.0
    %3933 = vmatprep.subr.mxu0 0.0
    %3934 = vmatpush1.msra.mxu0 0.0
    %3935 = vmatprep.subr.mxu0 0.0
    %3936 = vmatpush1.msra.mxu0 0.0
    %3937 = vmatprep.subr.mxu0 0.0
    %3938 = vmatpush1.msra.mxu0 0.0
    %3939 = vmatprep.subr.mxu0 0.0
    %3940 = vmatpush1.msra.mxu0 0.0
    %3941 = vmatprep.subr.mxu0 0.0
    %3942 = vmatpush1.msra.mxu0 0.0
    %3943 = vmatprep.subr.mxu0 0.0
    %3944 = vmatpush1.msra.mxu0 0.0
    %3945 = vmatprep.subr.mxu0 0.0
    %3946 = vmatpush1.msra.mxu0 0.0
    %3947 = vmatprep.subr.mxu0 0.0
    %3948 = vmatpush1.msra.mxu0 0.0
    %3949 = vmatprep.subr.mxu0 0.0
    %3950 = vmatpush1.msra.mxu0 0.0
    %3951 = vmatprep.subr.mxu0 0.0
    %3952 = vmatpush1.msra.mxu0 0.0
    %3953 = vmatprep.subr.mxu0 0.0
    %3954 = vmatpush1.msra.mxu0 0.0
    %3955 = vmatprep.subr.mxu0 %v3777
    %3956 = vmatpush1.msra.mxu0 %v3772
    %3957 = vmatprep.subr.mxu0 0.0
    %3958 = vmatpush2.msra.mxu0 0.0
    %3959 = vmatprep.subr.mxu0 0.0
    %3960 = vmatpush2.msra.mxu0 0.0
    %3961 = vmatprep.subr.mxu0 0.0
    %3962 = vmatpush2.msra.mxu0 0.0
    %3963 = vmatprep.subr.mxu0 0.0
    %3964 = vmatpush2.msra.mxu0 0.0
    %3965 = vmatprep.subr.mxu0 0.0
    %3966 = vmatpush2.msra.mxu0 0.0
    %3967 = vmatprep.subr.mxu0 0.0
    %3968 = vmatpush2.msra.mxu0 0.0
    %3969 = vmatprep.subr.mxu0 0.0
    %3970 = vmatpush2.msra.mxu0 0.0
    %3971 = vmatprep.subr.mxu0 0.0
    %3972 = vmatpush2.msra.mxu0 0.0
    %3973 = vmatprep.subr.mxu0 0.0
    %3974 = vmatpush2.msra.mxu0 0.0
    %3975 = vmatprep.subr.mxu0 0.0
    %3976 = vmatpush2.msra.mxu0 0.0
    %3977 = vmatprep.subr.mxu0 0.0
    %3978 = vmatpush2.msra.mxu0 0.0
    %3979 = vmatprep.subr.mxu0 0.0
    %3980 = vmatpush2.msra.mxu0 0.0
    %3981 = vmatprep.subr.mxu0 0.0
    %3982 = vmatpush2.msra.mxu0 0.0
    %3983 = vmatprep.subr.mxu0 0.0
    %3984 = vmatpush2.msra.mxu0 0.0
    %3985 = vmatprep.subr.mxu0 0.0
    %3986 = vmatpush2.msra.mxu0 0.0
    %3987 = vmatprep.subr.mxu0 0.0
    %3988 = vmatpush2.msra.mxu0 0.0
    %3989 = vmatprep.mubr.f32.mxu0 0.0
    %3990 = vmatmul.mubr.f32.gmra.mxu0 %v3781
    %v3991 = vpop.f32.mrf.mxu0
    %v3992 = vadd.f32 0.0, %v3991
    %v3993 = vpop.f32.mrf.mxu0
    %v3994 = vadd.f32 0.0, %v3993
    %3995 = vdwg.mxu0
    %v3996 = vadd.f32 %v3754, %v3850
    %v3997 = vadd.f32 %v3755, %v3852
    %v3998 = vadd.f32 %v3756, %v3921
    %v3999 = vadd.f32 %v3757, %v3923
    %v4000 = vadd.f32 %v3758, %v3992
    %v4001 = vadd.f32 %v3759, %v3994
    %4002 = vrot.lane.b32.xlu0 %v2572, 111
    %v4003 = vpop.permute.xlu0 %4002
    %4004 = vrot.lane.b32.xlu0 %v2573, 111
    %v4005 = vpop.permute.xlu0 %4004
    %4006 = vrot.lane.b32.xlu0 %v2574, 111
    %v4007 = vpop.permute.xlu0 %4006
    %4008 = vrot.lane.b32.xlu0 %v2575, 111
    %v4009 = vpop.permute.xlu0 %4008
    %4010 = vrot.lane.b32.xlu0 %v2576, 111
    %v4011 = vpop.permute.xlu0 %4010
    %4012 = vrot.lane.b32.xlu0 %v2577, 111
    %v4013 = vpop.permute.xlu0 %4012
    %v4014 = vsel %vm1742, %v4011, %v4013
    %v4015 = vsel %vm1742, %v4009, %v4011
    %v4016 = vsel %vm1742, %v4007, %v4009
    %v4017 = vsel %vm1742, %v4005, %v4007
    %v4018 = vsel %vm1742, %v4003, %v4005
    %v4019 = vsel %vm1742, %v4013, %v4003
    %s4020 = scalar_lea.vmem [#allocation8], 48
    %v4021 = vld [vmem:[%s4020] sm:$0xff]
    %v4023 = vsel %vm2619, %v4021, 0
    %4025 = vmatprep.subr.mxu0 0.0
    %4026 = vmatpush1.msra.mxu0 0.0
    %4027 = vmatprep.subr.mxu0 0.0
    %4028 = vmatpush1.msra.mxu0 0.0
    %4029 = vmatprep.subr.mxu0 0.0
    %4030 = vmatpush1.msra.mxu0 0.0
    %4031 = vmatprep.subr.mxu0 0.0
    %4032 = vmatpush1.msra.mxu0 0.0
    %4033 = vmatprep.subr.mxu0 0.0
    %4034 = vmatpush1.msra.mxu0 0.0
    %4035 = vmatprep.subr.mxu0 0.0
    %4036 = vmatpush1.msra.mxu0 0.0
    %4037 = vmatprep.subr.mxu0 0.0
    %4038 = vmatpush1.msra.mxu0 0.0
    %4039 = vmatprep.subr.mxu0 0.0
    %4040 = vmatpush1.msra.mxu0 0.0
    %4041 = vmatprep.subr.mxu0 0.0
    %4042 = vmatpush1.msra.mxu0 0.0
    %4043 = vmatprep.subr.mxu0 0.0
    %4044 = vmatpush1.msra.mxu0 0.0
    %4045 = vmatprep.subr.mxu0 0.0
    %4046 = vmatpush1.msra.mxu0 0.0
    %4047 = vmatprep.subr.mxu0 0.0
    %4048 = vmatpush1.msra.mxu0 0.0
    %4049 = vmatprep.subr.mxu0 0.0
    %4050 = vmatpush1.msra.mxu0 0.0
    %4051 = vmatprep.subr.mxu0 0.0
    %4052 = vmatpush1.msra.mxu0 0.0
    %4053 = vmatprep.subr.mxu0 0.0
    %4054 = vmatpush1.msra.mxu0 0.0
    %4055 = vmatprep.subr.mxu0 %v4017
    %4056 = vmatpush1.msra.mxu0 %v4018
    %4057 = vmatprep.subr.mxu0 0.0
    %4058 = vmatpush2.msra.mxu0 0.0
    %4059 = vmatprep.subr.mxu0 0.0
    %4060 = vmatpush2.msra.mxu0 0.0
    %4061 = vmatprep.subr.mxu0 0.0
    %4062 = vmatpush2.msra.mxu0 0.0
    %4063 = vmatprep.subr.mxu0 0.0
    %4064 = vmatpush2.msra.mxu0 0.0
    %4065 = vmatprep.subr.mxu0 0.0
    %4066 = vmatpush2.msra.mxu0 0.0
    %4067 = vmatprep.subr.mxu0 0.0
    %4068 = vmatpush2.msra.mxu0 0.0
    %4069 = vmatprep.subr.mxu0 0.0
    %4070 = vmatpush2.msra.mxu0 0.0
    %4071 = vmatprep.subr.mxu0 0.0
    %4072 = vmatpush2.msra.mxu0 0.0
    %4073 = vmatprep.subr.mxu0 0.0
    %4074 = vmatpush2.msra.mxu0 0.0
    %4075 = vmatprep.subr.mxu0 0.0
    %4076 = vmatpush2.msra.mxu0 0.0
    %4077 = vmatprep.subr.mxu0 0.0
    %4078 = vmatpush2.msra.mxu0 0.0
    %4079 = vmatprep.subr.mxu0 0.0
    %4080 = vmatpush2.msra.mxu0 0.0
    %4081 = vmatprep.subr.mxu0 0.0
    %4082 = vmatpush2.msra.mxu0 0.0
    %4083 = vmatprep.subr.mxu0 0.0
    %4084 = vmatpush2.msra.mxu0 0.0
    %4085 = vmatprep.subr.mxu0 0.0
    %4086 = vmatpush2.msra.mxu0 0.0
    %4087 = vmatprep.subr.mxu0 0.0
    %4088 = vmatpush2.msra.mxu0 0.0
    %4089 = vmatprep.mubr.f32.mxu0 0.0
    %4090 = vmatmul.mubr.f32.gmra.mxu0 %v4023
    %v4091 = vpop.f32.mrf.mxu0
    %v4092 = vadd.f32 0.0, %v4091
    %v4093 = vpop.f32.mrf.mxu0
    %v4094 = vadd.f32 0.0, %v4093
    %4095 = vdwg.mxu0
    %4096 = vmatprep.subr.mxu0 0.0
    %4097 = vmatpush1.msra.mxu0 0.0
    %4098 = vmatprep.subr.mxu0 0.0
    %4099 = vmatpush1.msra.mxu0 0.0
    %4100 = vmatprep.subr.mxu0 0.0
    %4101 = vmatpush1.msra.mxu0 0.0
    %4102 = vmatprep.subr.mxu0 0.0
    %4103 = vmatpush1.msra.mxu0 0.0
    %4104 = vmatprep.subr.mxu0 0.0
    %4105 = vmatpush1.msra.mxu0 0.0
    %4106 = vmatprep.subr.mxu0 0.0
    %4107 = vmatpush1.msra.mxu0 0.0
    %4108 = vmatprep.subr.mxu0 0.0
    %4109 = vmatpush1.msra.mxu0 0.0
    %4110 = vmatprep.subr.mxu0 0.0
    %4111 = vmatpush1.msra.mxu0 0.0
    %4112 = vmatprep.subr.mxu0 0.0
    %4113 = vmatpush1.msra.mxu0 0.0
    %4114 = vmatprep.subr.mxu0 0.0
    %4115 = vmatpush1.msra.mxu0 0.0
    %4116 = vmatprep.subr.mxu0 0.0
    %4117 = vmatpush1.msra.mxu0 0.0
    %4118 = vmatprep.subr.mxu0 0.0
    %4119 = vmatpush1.msra.mxu0 0.0
    %4120 = vmatprep.subr.mxu0 0.0
    %4121 = vmatpush1.msra.mxu0 0.0
    %4122 = vmatprep.subr.mxu0 0.0
    %4123 = vmatpush1.msra.mxu0 0.0
    %4124 = vmatprep.subr.mxu0 0.0
    %4125 = vmatpush1.msra.mxu0 0.0
    %4126 = vmatprep.subr.mxu0 %v4015
    %4127 = vmatpush1.msra.mxu0 %v4016
    %4128 = vmatprep.subr.mxu0 0.0
    %4129 = vmatpush2.msra.mxu0 0.0
    %4130 = vmatprep.subr.mxu0 0.0
    %4131 = vmatpush2.msra.mxu0 0.0
    %4132 = vmatprep.subr.mxu0 0.0
    %4133 = vmatpush2.msra.mxu0 0.0
    %4134 = vmatprep.subr.mxu0 0.0
    %4135 = vmatpush2.msra.mxu0 0.0
    %4136 = vmatprep.subr.mxu0 0.0
    %4137 = vmatpush2.msra.mxu0 0.0
    %4138 = vmatprep.subr.mxu0 0.0
    %4139 = vmatpush2.msra.mxu0 0.0
    %4140 = vmatprep.subr.mxu0 0.0
    %4141 = vmatpush2.msra.mxu0 0.0
    %4142 = vmatprep.subr.mxu0 0.0
    %4143 = vmatpush2.msra.mxu0 0.0
    %4144 = vmatprep.subr.mxu0 0.0
    %4145 = vmatpush2.msra.mxu0 0.0
    %4146 = vmatprep.subr.mxu0 0.0
    %4147 = vmatpush2.msra.mxu0 0.0
    %4148 = vmatprep.subr.mxu0 0.0
    %4149 = vmatpush2.msra.mxu0 0.0
    %4150 = vmatprep.subr.mxu0 0.0
    %4151 = vmatpush2.msra.mxu0 0.0
    %4152 = vmatprep.subr.mxu0 0.0
    %4153 = vmatpush2.msra.mxu0 0.0
    %4154 = vmatprep.subr.mxu0 0.0
    %4155 = vmatpush2.msra.mxu0 0.0
    %4156 = vmatprep.subr.mxu0 0.0
    %4157 = vmatpush2.msra.mxu0 0.0
    %4158 = vmatprep.subr.mxu0 0.0
    %4159 = vmatpush2.msra.mxu0 0.0
    %4160 = vmatprep.mubr.f32.mxu0 0.0
    %4161 = vmatmul.mubr.f32.gmra.mxu0 %v4023
    %v4162 = vpop.f32.mrf.mxu0
    %v4163 = vadd.f32 0.0, %v4162
    %v4164 = vpop.f32.mrf.mxu0
    %v4165 = vadd.f32 0.0, %v4164
    %4166 = vdwg.mxu0
    %4167 = vmatprep.subr.mxu0 0.0
    %4168 = vmatpush1.msra.mxu0 0.0
    %4169 = vmatprep.subr.mxu0 0.0
    %4170 = vmatpush1.msra.mxu0 0.0
    %4171 = vmatprep.subr.mxu0 0.0
    %4172 = vmatpush1.msra.mxu0 0.0
    %4173 = vmatprep.subr.mxu0 0.0
    %4174 = vmatpush1.msra.mxu0 0.0
    %4175 = vmatprep.subr.mxu0 0.0
    %4176 = vmatpush1.msra.mxu0 0.0
    %4177 = vmatprep.subr.mxu0 0.0
    %4178 = vmatpush1.msra.mxu0 0.0
    %4179 = vmatprep.subr.mxu0 0.0
    %4180 = vmatpush1.msra.mxu0 0.0
    %4181 = vmatprep.subr.mxu0 0.0
    %4182 = vmatpush1.msra.mxu0 0.0
    %4183 = vmatprep.subr.mxu0 0.0
    %4184 = vmatpush1.msra.mxu0 0.0
    %4185 = vmatprep.subr.mxu0 0.0
    %4186 = vmatpush1.msra.mxu0 0.0
    %4187 = vmatprep.subr.mxu0 0.0
    %4188 = vmatpush1.msra.mxu0 0.0
    %4189 = vmatprep.subr.mxu0 0.0
    %4190 = vmatpush1.msra.mxu0 0.0
    %4191 = vmatprep.subr.mxu0 0.0
    %4192 = vmatpush1.msra.mxu0 0.0
    %4193 = vmatprep.subr.mxu0 0.0
    %4194 = vmatpush1.msra.mxu0 0.0
    %4195 = vmatprep.subr.mxu0 0.0
    %4196 = vmatpush1.msra.mxu0 0.0
    %4197 = vmatprep.subr.mxu0 %v4019
    %4198 = vmatpush1.msra.mxu0 %v4014
    %4199 = vmatprep.subr.mxu0 0.0
    %4200 = vmatpush2.msra.mxu0 0.0
    %4201 = vmatprep.subr.mxu0 0.0
    %4202 = vmatpush2.msra.mxu0 0.0
    %4203 = vmatprep.subr.mxu0 0.0
    %4204 = vmatpush2.msra.mxu0 0.0
    %4205 = vmatprep.subr.mxu0 0.0
    %4206 = vmatpush2.msra.mxu0 0.0
    %4207 = vmatprep.subr.mxu0 0.0
    %4208 = vmatpush2.msra.mxu0 0.0
    %4209 = vmatprep.subr.mxu0 0.0
    %4210 = vmatpush2.msra.mxu0 0.0
    %4211 = vmatprep.subr.mxu0 0.0
    %4212 = vmatpush2.msra.mxu0 0.0
    %4213 = vmatprep.subr.mxu0 0.0
    %4214 = vmatpush2.msra.mxu0 0.0
    %4215 = vmatprep.subr.mxu0 0.0
    %4216 = vmatpush2.msra.mxu0 0.0
    %4217 = vmatprep.subr.mxu0 0.0
    %4218 = vmatpush2.msra.mxu0 0.0
    %4219 = vmatprep.subr.mxu0 0.0
    %4220 = vmatpush2.msra.mxu0 0.0
    %4221 = vmatprep.subr.mxu0 0.0
    %4222 = vmatpush2.msra.mxu0 0.0
    %4223 = vmatprep.subr.mxu0 0.0
    %4224 = vmatpush2.msra.mxu0 0.0
    %4225 = vmatprep.subr.mxu0 0.0
    %4226 = vmatpush2.msra.mxu0 0.0
    %4227 = vmatprep.subr.mxu0 0.0
    %4228 = vmatpush2.msra.mxu0 0.0
    %4229 = vmatprep.subr.mxu0 0.0
    %4230 = vmatpush2.msra.mxu0 0.0
    %4231 = vmatprep.mubr.f32.mxu0 0.0
    %4232 = vmatmul.mubr.f32.gmra.mxu0 %v4023
    %v4233 = vpop.f32.mrf.mxu0
    %v4234 = vadd.f32 0.0, %v4233
    %v4235 = vpop.f32.mrf.mxu0
    %v4236 = vadd.f32 0.0, %v4235
    %4237 = vdwg.mxu0
    %v4238 = vadd.f32 %v3996, %v4092
    %v4239 = vadd.f32 %v3997, %v4094
    %v4240 = vadd.f32 %v3998, %v4163
    %v4241 = vadd.f32 %v3999, %v4165
    %v4242 = vadd.f32 %v4000, %v4234
    %v4243 = vadd.f32 %v4001, %v4236
    %4244 = vrot.lane.b32.xlu0 %v2572, 110
    %v4245 = vpop.permute.xlu0 %4244
    %4246 = vrot.lane.b32.xlu0 %v2573, 110
    %v4247 = vpop.permute.xlu0 %4246
    %4248 = vrot.lane.b32.xlu0 %v2574, 110
    %v4249 = vpop.permute.xlu0 %4248
    %4250 = vrot.lane.b32.xlu0 %v2575, 110
    %v4251 = vpop.permute.xlu0 %4250
    %4252 = vrot.lane.b32.xlu0 %v2576, 110
    %v4253 = vpop.permute.xlu0 %4252
    %4254 = vrot.lane.b32.xlu0 %v2577, 110
    %v4255 = vpop.permute.xlu0 %4254
    %v4256 = vsel %vm2003, %v4253, %v4255
    %v4257 = vsel %vm2003, %v4251, %v4253
    %v4258 = vsel %vm2003, %v4249, %v4251
    %v4259 = vsel %vm2003, %v4247, %v4249
    %v4260 = vsel %vm2003, %v4245, %v4247
    %v4261 = vsel %vm2003, %v4255, %v4245
    %s4262 = scalar_lea.vmem [#allocation8], 56
    %v4263 = vld [vmem:[%s4262] sm:$0xff]
    %v4265 = vsel %vm2619, %v4263, 0
    %4267 = vmatprep.subr.mxu0 0.0
    %4268 = vmatpush1.msra.mxu0 0.0
    %4269 = vmatprep.subr.mxu0 0.0
    %4270 = vmatpush1.msra.mxu0 0.0
    %4271 = vmatprep.subr.mxu0 0.0
    %4272 = vmatpush1.msra.mxu0 0.0
    %4273 = vmatprep.subr.mxu0 0.0
    %4274 = vmatpush1.msra.mxu0 0.0
    %4275 = vmatprep.subr.mxu0 0.0
    %4276 = vmatpush1.msra.mxu0 0.0
    %4277 = vmatprep.subr.mxu0 0.0
    %4278 = vmatpush1.msra.mxu0 0.0
    %4279 = vmatprep.subr.mxu0 0.0
    %4280 = vmatpush1.msra.mxu0 0.0
    %4281 = vmatprep.subr.mxu0 0.0
    %4282 = vmatpush1.msra.mxu0 0.0
    %4283 = vmatprep.subr.mxu0 0.0
    %4284 = vmatpush1.msra.mxu0 0.0
    %4285 = vmatprep.subr.mxu0 0.0
    %4286 = vmatpush1.msra.mxu0 0.0
    %4287 = vmatprep.subr.mxu0 0.0
    %4288 = vmatpush1.msra.mxu0 0.0
    %4289 = vmatprep.subr.mxu0 0.0
    %4290 = vmatpush1.msra.mxu0 0.0
    %4291 = vmatprep.subr.mxu0 0.0
    %4292 = vmatpush1.msra.mxu0 0.0
    %4293 = vmatprep.subr.mxu0 0.0
    %4294 = vmatpush1.msra.mxu0 0.0
    %4295 = vmatprep.subr.mxu0 0.0
    %4296 = vmatpush1.msra.mxu0 0.0
    %4297 = vmatprep.subr.mxu0 %v4259
    %4298 = vmatpush1.msra.mxu0 %v4260
    %4299 = vmatprep.subr.mxu0 0.0
    %4300 = vmatpush2.msra.mxu0 0.0
    %4301 = vmatprep.subr.mxu0 0.0
    %4302 = vmatpush2.msra.mxu0 0.0
    %4303 = vmatprep.subr.mxu0 0.0
    %4304 = vmatpush2.msra.mxu0 0.0
    %4305 = vmatprep.subr.mxu0 0.0
    %4306 = vmatpush2.msra.mxu0 0.0
    %4307 = vmatprep.subr.mxu0 0.0
    %4308 = vmatpush2.msra.mxu0 0.0
    %4309 = vmatprep.subr.mxu0 0.0
    %4310 = vmatpush2.msra.mxu0 0.0
    %4311 = vmatprep.subr.mxu0 0.0
    %4312 = vmatpush2.msra.mxu0 0.0
    %4313 = vmatprep.subr.mxu0 0.0
    %4314 = vmatpush2.msra.mxu0 0.0
    %4315 = vmatprep.subr.mxu0 0.0
    %4316 = vmatpush2.msra.mxu0 0.0
    %4317 = vmatprep.subr.mxu0 0.0
    %4318 = vmatpush2.msra.mxu0 0.0
    %4319 = vmatprep.subr.mxu0 0.0
    %4320 = vmatpush2.msra.mxu0 0.0
    %4321 = vmatprep.subr.mxu0 0.0
    %4322 = vmatpush2.msra.mxu0 0.0
    %4323 = vmatprep.subr.mxu0 0.0
    %4324 = vmatpush2.msra.mxu0 0.0
    %4325 = vmatprep.subr.mxu0 0.0
    %4326 = vmatpush2.msra.mxu0 0.0
    %4327 = vmatprep.subr.mxu0 0.0
    %4328 = vmatpush2.msra.mxu0 0.0
    %4329 = vmatprep.subr.mxu0 0.0
    %4330 = vmatpush2.msra.mxu0 0.0
    %4331 = vmatprep.mubr.f32.mxu0 0.0
    %4332 = vmatmul.mubr.f32.gmra.mxu0 %v4265
    %v4333 = vpop.f32.mrf.mxu0
    %v4334 = vadd.f32 0.0, %v4333
    %v4335 = vpop.f32.mrf.mxu0
    %v4336 = vadd.f32 0.0, %v4335
    %4337 = vdwg.mxu0
    %4338 = vmatprep.subr.mxu0 0.0
    %4339 = vmatpush1.msra.mxu0 0.0
    %4340 = vmatprep.subr.mxu0 0.0
    %4341 = vmatpush1.msra.mxu0 0.0
    %4342 = vmatprep.subr.mxu0 0.0
    %4343 = vmatpush1.msra.mxu0 0.0
    %4344 = vmatprep.subr.mxu0 0.0
    %4345 = vmatpush1.msra.mxu0 0.0
    %4346 = vmatprep.subr.mxu0 0.0
    %4347 = vmatpush1.msra.mxu0 0.0
    %4348 = vmatprep.subr.mxu0 0.0
    %4349 = vmatpush1.msra.mxu0 0.0
    %4350 = vmatprep.subr.mxu0 0.0
    %4351 = vmatpush1.msra.mxu0 0.0
    %4352 = vmatprep.subr.mxu0 0.0
    %4353 = vmatpush1.msra.mxu0 0.0
    %4354 = vmatprep.subr.mxu0 0.0
    %4355 = vmatpush1.msra.mxu0 0.0
    %4356 = vmatprep.subr.mxu0 0.0
    %4357 = vmatpush1.msra.mxu0 0.0
    %4358 = vmatprep.subr.mxu0 0.0
    %4359 = vmatpush1.msra.mxu0 0.0
    %4360 = vmatprep.subr.mxu0 0.0
    %4361 = vmatpush1.msra.mxu0 0.0
    %4362 = vmatprep.subr.mxu0 0.0
    %4363 = vmatpush1.msra.mxu0 0.0
    %4364 = vmatprep.subr.mxu0 0.0
    %4365 = vmatpush1.msra.mxu0 0.0
    %4366 = vmatprep.subr.mxu0 0.0
    %4367 = vmatpush1.msra.mxu0 0.0
    %4368 = vmatprep.subr.mxu0 %v4257
    %4369 = vmatpush1.msra.mxu0 %v4258
    %4370 = vmatprep.subr.mxu0 0.0
    %4371 = vmatpush2.msra.mxu0 0.0
    %4372 = vmatprep.subr.mxu0 0.0
    %4373 = vmatpush2.msra.mxu0 0.0
    %4374 = vmatprep.subr.mxu0 0.0
    %4375 = vmatpush2.msra.mxu0 0.0
    %4376 = vmatprep.subr.mxu0 0.0
    %4377 = vmatpush2.msra.mxu0 0.0
    %4378 = vmatprep.subr.mxu0 0.0
    %4379 = vmatpush2.msra.mxu0 0.0
    %4380 = vmatprep.subr.mxu0 0.0
    %4381 = vmatpush2.msra.mxu0 0.0
    %4382 = vmatprep.subr.mxu0 0.0
    %4383 = vmatpush2.msra.mxu0 0.0
    %4384 = vmatprep.subr.mxu0 0.0
    %4385 = vmatpush2.msra.mxu0 0.0
    %4386 = vmatprep.subr.mxu0 0.0
    %4387 = vmatpush2.msra.mxu0 0.0
    %4388 = vmatprep.subr.mxu0 0.0
    %4389 = vmatpush2.msra.mxu0 0.0
    %4390 = vmatprep.subr.mxu0 0.0
    %4391 = vmatpush2.msra.mxu0 0.0
    %4392 = vmatprep.subr.mxu0 0.0
    %4393 = vmatpush2.msra.mxu0 0.0
    %4394 = vmatprep.subr.mxu0 0.0
    %4395 = vmatpush2.msra.mxu0 0.0
    %4396 = vmatprep.subr.mxu0 0.0
    %4397 = vmatpush2.msra.mxu0 0.0
    %4398 = vmatprep.subr.mxu0 0.0
    %4399 = vmatpush2.msra.mxu0 0.0
    %4400 = vmatprep.subr.mxu0 0.0
    %4401 = vmatpush2.msra.mxu0 0.0
    %4402 = vmatprep.mubr.f32.mxu0 0.0
    %4403 = vmatmul.mubr.f32.gmra.mxu0 %v4265
    %v4404 = vpop.f32.mrf.mxu0
    %v4405 = vadd.f32 0.0, %v4404
    %v4406 = vpop.f32.mrf.mxu0
    %v4407 = vadd.f32 0.0, %v4406
    %4408 = vdwg.mxu0
    %4409 = vmatprep.subr.mxu0 0.0
    %4410 = vmatpush1.msra.mxu0 0.0
    %4411 = vmatprep.subr.mxu0 0.0
    %4412 = vmatpush1.msra.mxu0 0.0
    %4413 = vmatprep.subr.mxu0 0.0
    %4414 = vmatpush1.msra.mxu0 0.0
    %4415 = vmatprep.subr.mxu0 0.0
    %4416 = vmatpush1.msra.mxu0 0.0
    %4417 = vmatprep.subr.mxu0 0.0
    %4418 = vmatpush1.msra.mxu0 0.0
    %4419 = vmatprep.subr.mxu0 0.0
    %4420 = vmatpush1.msra.mxu0 0.0
    %4421 = vmatprep.subr.mxu0 0.0
    %4422 = vmatpush1.msra.mxu0 0.0
    %4423 = vmatprep.subr.mxu0 0.0
    %4424 = vmatpush1.msra.mxu0 0.0
    %4425 = vmatprep.subr.mxu0 0.0
    %4426 = vmatpush1.msra.mxu0 0.0
    %4427 = vmatprep.subr.mxu0 0.0
    %4428 = vmatpush1.msra.mxu0 0.0
    %4429 = vmatprep.subr.mxu0 0.0
    %4430 = vmatpush1.msra.mxu0 0.0
    %4431 = vmatprep.subr.mxu0 0.0
    %4432 = vmatpush1.msra.mxu0 0.0
    %4433 = vmatprep.subr.mxu0 0.0
    %4434 = vmatpush1.msra.mxu0 0.0
    %4435 = vmatprep.subr.mxu0 0.0
    %4436 = vmatpush1.msra.mxu0 0.0
    %4437 = vmatprep.subr.mxu0 0.0
    %4438 = vmatpush1.msra.mxu0 0.0
    %4439 = vmatprep.subr.mxu0 %v4261
    %4440 = vmatpush1.msra.mxu0 %v4256
    %4441 = vmatprep.subr.mxu0 0.0
    %4442 = vmatpush2.msra.mxu0 0.0
    %4443 = vmatprep.subr.mxu0 0.0
    %4444 = vmatpush2.msra.mxu0 0.0
    %4445 = vmatprep.subr.mxu0 0.0
    %4446 = vmatpush2.msra.mxu0 0.0
    %4447 = vmatprep.subr.mxu0 0.0
    %4448 = vmatpush2.msra.mxu0 0.0
    %4449 = vmatprep.subr.mxu0 0.0
    %4450 = vmatpush2.msra.mxu0 0.0
    %4451 = vmatprep.subr.mxu0 0.0
    %4452 = vmatpush2.msra.mxu0 0.0
    %4453 = vmatprep.subr.mxu0 0.0
    %4454 = vmatpush2.msra.mxu0 0.0
    %4455 = vmatprep.subr.mxu0 0.0
    %4456 = vmatpush2.msra.mxu0 0.0
    %4457 = vmatprep.subr.mxu0 0.0
    %4458 = vmatpush2.msra.mxu0 0.0
    %4459 = vmatprep.subr.mxu0 0.0
    %4460 = vmatpush2.msra.mxu0 0.0
    %4461 = vmatprep.subr.mxu0 0.0
    %4462 = vmatpush2.msra.mxu0 0.0
    %4463 = vmatprep.subr.mxu0 0.0
    %4464 = vmatpush2.msra.mxu0 0.0
    %4465 = vmatprep.subr.mxu0 0.0
    %4466 = vmatpush2.msra.mxu0 0.0
    %4467 = vmatprep.subr.mxu0 0.0
    %4468 = vmatpush2.msra.mxu0 0.0
    %4469 = vmatprep.subr.mxu0 0.0
    %4470 = vmatpush2.msra.mxu0 0.0
    %4471 = vmatprep.subr.mxu0 0.0
    %4472 = vmatpush2.msra.mxu0 0.0
    %4473 = vmatprep.mubr.f32.mxu0 0.0
    %4474 = vmatmul.mubr.f32.gmra.mxu0 %v4265
    %v4475 = vpop.f32.mrf.mxu0
    %v4476 = vadd.f32 0.0, %v4475
    %v4477 = vpop.f32.mrf.mxu0
    %v4478 = vadd.f32 0.0, %v4477
    %4479 = vdwg.mxu0
    %v4480 = vadd.f32 %v4238, %v4334
    %v4481 = vadd.f32 %v4239, %v4336
    %v4482 = vadd.f32 %v4240, %v4405
    %v4483 = vadd.f32 %v4241, %v4407
    %v4484 = vadd.f32 %v4242, %v4476
    %v4485 = vadd.f32 %v4243, %v4478
    %4486 = vrot.lane.b32.xlu0 %v2572, 109
    %v4487 = vpop.permute.xlu0 %4486
    %4488 = vrot.lane.b32.xlu0 %v2573, 109
    %v4489 = vpop.permute.xlu0 %4488
    %4490 = vrot.lane.b32.xlu0 %v2574, 109
    %v4491 = vpop.permute.xlu0 %4490
    %4492 = vrot.lane.b32.xlu0 %v2575, 109
    %v4493 = vpop.permute.xlu0 %4492
    %4494 = vrot.lane.b32.xlu0 %v2576, 109
    %v4495 = vpop.permute.xlu0 %4494
    %4496 = vrot.lane.b32.xlu0 %v2577, 109
    %v4497 = vpop.permute.xlu0 %4496
    %v4498 = vsel %vm2264, %v4495, %v4497
    %v4499 = vsel %vm2264, %v4493, %v4495
    %v4500 = vsel %vm2264, %v4491, %v4493
    %v4501 = vsel %vm2264, %v4489, %v4491
    %v4502 = vsel %vm2264, %v4487, %v4489
    %v4503 = vsel %vm2264, %v4497, %v4487
    %s4504 = scalar_lea.vmem [#allocation8], 64
    %v4505 = vld [vmem:[%s4504] sm:$0xff]
    %v4507 = vsel %vm2619, %v4505, 0
    %4509 = vmatprep.subr.mxu0 0.0
    %4510 = vmatpush1.msra.mxu0 0.0
    %4511 = vmatprep.subr.mxu0 0.0
    %4512 = vmatpush1.msra.mxu0 0.0
    %4513 = vmatprep.subr.mxu0 0.0
    %4514 = vmatpush1.msra.mxu0 0.0
    %4515 = vmatprep.subr.mxu0 0.0
    %4516 = vmatpush1.msra.mxu0 0.0
    %4517 = vmatprep.subr.mxu0 0.0
    %4518 = vmatpush1.msra.mxu0 0.0
    %4519 = vmatprep.subr.mxu0 0.0
    %4520 = vmatpush1.msra.mxu0 0.0
    %4521 = vmatprep.subr.mxu0 0.0
    %4522 = vmatpush1.msra.mxu0 0.0
    %4523 = vmatprep.subr.mxu0 0.0
    %4524 = vmatpush1.msra.mxu0 0.0
    %4525 = vmatprep.subr.mxu0 0.0
    %4526 = vmatpush1.msra.mxu0 0.0
    %4527 = vmatprep.subr.mxu0 0.0
    %4528 = vmatpush1.msra.mxu0 0.0
    %4529 = vmatprep.subr.mxu0 0.0
    %4530 = vmatpush1.msra.mxu0 0.0
    %4531 = vmatprep.subr.mxu0 0.0
    %4532 = vmatpush1.msra.mxu0 0.0
    %4533 = vmatprep.subr.mxu0 0.0
    %4534 = vmatpush1.msra.mxu0 0.0
    %4535 = vmatprep.subr.mxu0 0.0
    %4536 = vmatpush1.msra.mxu0 0.0
    %4537 = vmatprep.subr.mxu0 0.0
    %4538 = vmatpush1.msra.mxu0 0.0
    %4539 = vmatprep.subr.mxu0 %v4501
    %4540 = vmatpush1.msra.mxu0 %v4502
    %4541 = vmatprep.subr.mxu0 0.0
    %4542 = vmatpush2.msra.mxu0 0.0
    %4543 = vmatprep.subr.mxu0 0.0
    %4544 = vmatpush2.msra.mxu0 0.0
    %4545 = vmatprep.subr.mxu0 0.0
    %4546 = vmatpush2.msra.mxu0 0.0
    %4547 = vmatprep.subr.mxu0 0.0
    %4548 = vmatpush2.msra.mxu0 0.0
    %4549 = vmatprep.subr.mxu0 0.0
    %4550 = vmatpush2.msra.mxu0 0.0
    %4551 = vmatprep.subr.mxu0 0.0
    %4552 = vmatpush2.msra.mxu0 0.0
    %4553 = vmatprep.subr.mxu0 0.0
    %4554 = vmatpush2.msra.mxu0 0.0
    %4555 = vmatprep.subr.mxu0 0.0
    %4556 = vmatpush2.msra.mxu0 0.0
    %4557 = vmatprep.subr.mxu0 0.0
    %4558 = vmatpush2.msra.mxu0 0.0
    %4559 = vmatprep.subr.mxu0 0.0
    %4560 = vmatpush2.msra.mxu0 0.0
    %4561 = vmatprep.subr.mxu0 0.0
    %4562 = vmatpush2.msra.mxu0 0.0
    %4563 = vmatprep.subr.mxu0 0.0
    %4564 = vmatpush2.msra.mxu0 0.0
    %4565 = vmatprep.subr.mxu0 0.0
    %4566 = vmatpush2.msra.mxu0 0.0
    %4567 = vmatprep.subr.mxu0 0.0
    %4568 = vmatpush2.msra.mxu0 0.0
    %4569 = vmatprep.subr.mxu0 0.0
    %4570 = vmatpush2.msra.mxu0 0.0
    %4571 = vmatprep.subr.mxu0 0.0
    %4572 = vmatpush2.msra.mxu0 0.0
    %4573 = vmatprep.mubr.f32.mxu0 0.0
    %4574 = vmatmul.mubr.f32.gmra.mxu0 %v4507
    %v4575 = vpop.f32.mrf.mxu0
    %v4576 = vadd.f32 0.0, %v4575
    %v4577 = vpop.f32.mrf.mxu0
    %v4578 = vadd.f32 0.0, %v4577
    %4579 = vdwg.mxu0
    %4580 = vmatprep.subr.mxu0 0.0
    %4581 = vmatpush1.msra.mxu0 0.0
    %4582 = vmatprep.subr.mxu0 0.0
    %4583 = vmatpush1.msra.mxu0 0.0
    %4584 = vmatprep.subr.mxu0 0.0
    %4585 = vmatpush1.msra.mxu0 0.0
    %4586 = vmatprep.subr.mxu0 0.0
    %4587 = vmatpush1.msra.mxu0 0.0
    %4588 = vmatprep.subr.mxu0 0.0
    %4589 = vmatpush1.msra.mxu0 0.0
    %4590 = vmatprep.subr.mxu0 0.0
    %4591 = vmatpush1.msra.mxu0 0.0
    %4592 = vmatprep.subr.mxu0 0.0
    %4593 = vmatpush1.msra.mxu0 0.0
    %4594 = vmatprep.subr.mxu0 0.0
    %4595 = vmatpush1.msra.mxu0 0.0
    %4596 = vmatprep.subr.mxu0 0.0
    %4597 = vmatpush1.msra.mxu0 0.0
    %4598 = vmatprep.subr.mxu0 0.0
    %4599 = vmatpush1.msra.mxu0 0.0
    %4600 = vmatprep.subr.mxu0 0.0
    %4601 = vmatpush1.msra.mxu0 0.0
    %4602 = vmatprep.subr.mxu0 0.0
    %4603 = vmatpush1.msra.mxu0 0.0
    %4604 = vmatprep.subr.mxu0 0.0
    %4605 = vmatpush1.msra.mxu0 0.0
    %4606 = vmatprep.subr.mxu0 0.0
    %4607 = vmatpush1.msra.mxu0 0.0
    %4608 = vmatprep.subr.mxu0 0.0
    %4609 = vmatpush1.msra.mxu0 0.0
    %4610 = vmatprep.subr.mxu0 %v4499
    %4611 = vmatpush1.msra.mxu0 %v4500
    %4612 = vmatprep.subr.mxu0 0.0
    %4613 = vmatpush2.msra.mxu0 0.0
    %4614 = vmatprep.subr.mxu0 0.0
    %4615 = vmatpush2.msra.mxu0 0.0
    %4616 = vmatprep.subr.mxu0 0.0
    %4617 = vmatpush2.msra.mxu0 0.0
    %4618 = vmatprep.subr.mxu0 0.0
    %4619 = vmatpush2.msra.mxu0 0.0
    %4620 = vmatprep.subr.mxu0 0.0
    %4621 = vmatpush2.msra.mxu0 0.0
    %4622 = vmatprep.subr.mxu0 0.0
    %4623 = vmatpush2.msra.mxu0 0.0
    %4624 = vmatprep.subr.mxu0 0.0
    %4625 = vmatpush2.msra.mxu0 0.0
    %4626 = vmatprep.subr.mxu0 0.0
    %4627 = vmatpush2.msra.mxu0 0.0
    %4628 = vmatprep.subr.mxu0 0.0
    %4629 = vmatpush2.msra.mxu0 0.0
    %4630 = vmatprep.subr.mxu0 0.0
    %4631 = vmatpush2.msra.mxu0 0.0
    %4632 = vmatprep.subr.mxu0 0.0
    %4633 = vmatpush2.msra.mxu0 0.0
    %4634 = vmatprep.subr.mxu0 0.0
    %4635 = vmatpush2.msra.mxu0 0.0
    %4636 = vmatprep.subr.mxu0 0.0
    %4637 = vmatpush2.msra.mxu0 0.0
    %4638 = vmatprep.subr.mxu0 0.0
    %4639 = vmatpush2.msra.mxu0 0.0
    %4640 = vmatprep.subr.mxu0 0.0
    %4641 = vmatpush2.msra.mxu0 0.0
    %4642 = vmatprep.subr.mxu0 0.0
    %4643 = vmatpush2.msra.mxu0 0.0
    %4644 = vmatprep.mubr.f32.mxu0 0.0
    %4645 = vmatmul.mubr.f32.gmra.mxu0 %v4507
    %v4646 = vpop.f32.mrf.mxu0
    %v4647 = vadd.f32 0.0, %v4646
    %v4648 = vpop.f32.mrf.mxu0
    %v4649 = vadd.f32 0.0, %v4648
    %4650 = vdwg.mxu0
    %4651 = vmatprep.subr.mxu0 0.0
    %4652 = vmatpush1.msra.mxu0 0.0
    %4653 = vmatprep.subr.mxu0 0.0
    %4654 = vmatpush1.msra.mxu0 0.0
    %4655 = vmatprep.subr.mxu0 0.0
    %4656 = vmatpush1.msra.mxu0 0.0
    %4657 = vmatprep.subr.mxu0 0.0
    %4658 = vmatpush1.msra.mxu0 0.0
    %4659 = vmatprep.subr.mxu0 0.0
    %4660 = vmatpush1.msra.mxu0 0.0
    %4661 = vmatprep.subr.mxu0 0.0
    %4662 = vmatpush1.msra.mxu0 0.0
    %4663 = vmatprep.subr.mxu0 0.0
    %4664 = vmatpush1.msra.mxu0 0.0
    %4665 = vmatprep.subr.mxu0 0.0
    %4666 = vmatpush1.msra.mxu0 0.0
    %4667 = vmatprep.subr.mxu0 0.0
    %4668 = vmatpush1.msra.mxu0 0.0
    %4669 = vmatprep.subr.mxu0 0.0
    %4670 = vmatpush1.msra.mxu0 0.0
    %4671 = vmatprep.subr.mxu0 0.0
    %4672 = vmatpush1.msra.mxu0 0.0
    %4673 = vmatprep.subr.mxu0 0.0
    %4674 = vmatpush1.msra.mxu0 0.0
    %4675 = vmatprep.subr.mxu0 0.0
    %4676 = vmatpush1.msra.mxu0 0.0
    %4677 = vmatprep.subr.mxu0 0.0
    %4678 = vmatpush1.msra.mxu0 0.0
    %4679 = vmatprep.subr.mxu0 0.0
    %4680 = vmatpush1.msra.mxu0 0.0
    %4681 = vmatprep.subr.mxu0 %v4503
    %4682 = vmatpush1.msra.mxu0 %v4498
    %4683 = vmatprep.subr.mxu0 0.0
    %4684 = vmatpush2.msra.mxu0 0.0
    %4685 = vmatprep.subr.mxu0 0.0
    %4686 = vmatpush2.msra.mxu0 0.0
    %4687 = vmatprep.subr.mxu0 0.0
    %4688 = vmatpush2.msra.mxu0 0.0
    %4689 = vmatprep.subr.mxu0 0.0
    %4690 = vmatpush2.msra.mxu0 0.0
    %4691 = vmatprep.subr.mxu0 0.0
    %4692 = vmatpush2.msra.mxu0 0.0
    %4693 = vmatprep.subr.mxu0 0.0
    %4694 = vmatpush2.msra.mxu0 0.0
    %4695 = vmatprep.subr.mxu0 0.0
    %4696 = vmatpush2.msra.mxu0 0.0
    %4697 = vmatprep.subr.mxu0 0.0
    %4698 = vmatpush2.msra.mxu0 0.0
    %4699 = vmatprep.subr.mxu0 0.0
    %4700 = vmatpush2.msra.mxu0 0.0
    %4701 = vmatprep.subr.mxu0 0.0
    %4702 = vmatpush2.msra.mxu0 0.0
    %4703 = vmatprep.subr.mxu0 0.0
    %4704 = vmatpush2.msra.mxu0 0.0
    %4705 = vmatprep.subr.mxu0 0.0
    %4706 = vmatpush2.msra.mxu0 0.0
    %4707 = vmatprep.subr.mxu0 0.0
    %4708 = vmatpush2.msra.mxu0 0.0
    %4709 = vmatprep.subr.mxu0 0.0
    %4710 = vmatpush2.msra.mxu0 0.0
    %4711 = vmatprep.subr.mxu0 0.0
    %4712 = vmatpush2.msra.mxu0 0.0
    %4713 = vmatprep.subr.mxu0 0.0
    %4714 = vmatpush2.msra.mxu0 0.0
    %4715 = vmatprep.mubr.f32.mxu0 0.0
    %4716 = vmatmul.mubr.f32.gmra.mxu0 %v4507
    %v4717 = vpop.f32.mrf.mxu0
    %v4718 = vadd.f32 0.0, %v4717
    %v4719 = vpop.f32.mrf.mxu0
    %v4720 = vadd.f32 0.0, %v4719
    %4721 = vdwg.mxu0
    %v4722 = vadd.f32 %v4480, %v4576
    %v4723 = vadd.f32 %v4481, %v4578
    %v4724 = vadd.f32 %v4482, %v4647
    %v4725 = vadd.f32 %v4483, %v4649
    %v4726 = vadd.f32 %v4484, %v4718
    %v4727 = vadd.f32 %v4485, %v4720
    %4729 = vset.pattern.permute.xlu0 0
    %4730 = vperm.xlu0 %4729, %v2578
    %v4731 = vpop.permute.xlu0 %4730
    %v4733 = vadd.f32 %v4722, %v4731
    %v4734 = vadd.f32 %v4723, %v4731
    %v4735 = vadd.f32 %v4724, %v4731
    %v4736 = vadd.f32 %v4725, %v4731
    %v4737 = vadd.f32 %v4726, %v4731
    %v4738 = vadd.f32 %v4727, %v4731
    %v4739 = vmax.f32 %v4733, 0.0
    %v4740 = vmax.f32 %v4734, 0.0
    %v4741 = vmax.f32 %v4735, 0.0
    %v4742 = vmax.f32 %v4736, 0.0
    %v4743 = vmax.f32 %v4737, 0.0
    %v4744 = vmax.f32 %v4738, 0.0
    %4746 = vset.pattern.permute.xlu0 0
    %4747 = vperm.xlu0 %4746, %v2579
    %v4748 = vpop.permute.xlu0 %4747
    %v4750 = vmul.f32 %v4739, %v4748
    %v4751 = vmul.f32 %v4740, %v4748
    %v4752 = vmul.f32 %v4741, %v4748
    %v4753 = vmul.f32 %v4742, %v4748
    %v4754 = vmul.f32 %v4743, %v4748
    %v4755 = vmul.f32 %v4744, %v4748
    %v4756 = vmul.f32 %v4750, %v2545
    %v4757 = vmul.f32 %v4751, %v2549
    %v4758 = vmul.f32 %v4752, %v2553
    %v4759 = vmul.f32 %v4753, %v2557
    %v4760 = vmul.f32 %v4754, %v2561
    %v4761 = vmul.f32 %v4755, %v2565
    %v4762 = vld [vmem:[%s8] sm:$0xff]
    %v4763 = vld [vmem:[%s8 + $0x8] sm:$0xff]
    %v4764 = vld [vmem:[%s8 + $0x10] sm:$0xff]
    %v4765 = vld [vmem:[%s8 + $0x18] sm:$0xff]
    %v4766 = vld [vmem:[%s8 + $0x20] sm:$0xff]
    %v4767 = vld [vmem:[%s8 + $0x28] sm:$0xff]
    %v4768 = vmul.f32 %v4756, %v4762
    %v4769 = vmul.f32 %v4757, %v4763
    %v4770 = vmul.f32 %v4758, %v4764
    %v4771 = vmul.f32 %v4759, %v4765
    %v4772 = vmul.f32 %v4760, %v4766
    %v4773 = vmul.f32 %v4761, %v4767
    %v4774 = vld [vmem:[#allocation14] sm:$0x1]
    %v4775 = vld [vmem:[#allocation13] sm:$0xff]
    %v4776 = vld [vmem:[#allocation13 + $0x8] sm:$0xff]
    %v4777 = vld [vmem:[#allocation13 + $0x10] sm:$0xff]
    %v4778 = vld [vmem:[#allocation13 + $0x18] sm:$0xff]
    %v4779 = vld [vmem:[#allocation13 + $0x20] sm:$0xff]
    %v4780 = vld [vmem:[#allocation13 + $0x28] sm:$0xff]
    %v4781 = vld [vmem:[#allocation13 + $0x30] sm:$0xff]
    %v4782 = vld [vmem:[#allocation13 + $0x38] sm:$0xff]
    %v4783 = vld [vmem:[#allocation13 + $0x40] sm:$0xff]
    %v4784 = vld [vmem:[#allocation13 + $0x48] sm:$0xff]
    %v4785 = vld [vmem:[#allocation13 + $0x50] sm:$0xff]
    %v4786 = vld [vmem:[#allocation13 + $0x58] sm:$0xff]
    %v4787 = vld [vmem:[#allocation13 + $0x60] sm:$0xff]
    %v4788 = vld [vmem:[#allocation13 + $0x68] sm:$0xff]
    %v4789 = vld [vmem:[#allocation13 + $0x70] sm:$0xff]
    %v4790 = vld [vmem:[#allocation13 + $0x78] sm:$0xff]
    %v4791 = vld [vmem:[#allocation13 + $0x80] sm:$0xff]
    %v4792 = vld [vmem:[#allocation13 + $0x88] sm:$0xff]
    %v4793 = vld [vmem:[#allocation13 + $0x90] sm:$0xff]
    %v4794 = vld [vmem:[#allocation13 + $0x98] sm:$0xff]
    %v4795 = vld [vmem:[#allocation13 + $0xa0] sm:$0xff]
    %v4796 = vld [vmem:[#allocation13 + $0xa8] sm:$0xff]
    %v4797 = vld [vmem:[#allocation13 + $0xb0] sm:$0xff]
    %v4798 = vld [vmem:[#allocation13 + $0xb8] sm:$0xff]
    %v4799 = vld [vmem:[#allocation13 + $0xc0] sm:$0xff]
    %v4800 = vld [vmem:[#allocation13 + $0xc8] sm:$0xff]
    %v4801 = vld [vmem:[#allocation13 + $0xd0] sm:$0xff]
    %v4802 = vld [vmem:[#allocation13 + $0xd8] sm:$0xff]
    %v4803 = vld [vmem:[#allocation13 + $0xe0] sm:$0xff]
    %v4804 = vld [vmem:[#allocation13 + $0xe8] sm:$0xff]
    %v4805 = vld [vmem:[#allocation13 + $0xf0] sm:$0xff]
    %v4806 = vld [vmem:[#allocation13 + $0xf8] sm:$0xff]
    %v4807 = vld [vmem:[#allocation13 + $0x100] sm:$0xff]
    %v4808 = vld [vmem:[#allocation13 + $0x108] sm:$0xff]
    %v4809 = vld [vmem:[#allocation13 + $0x110] sm:$0xff]
    %v4810 = vld [vmem:[#allocation13 + $0x118] sm:$0xff]
    %v4811 = vld [vmem:[#allocation13 + $0x120] sm:$0xff]
    %v4812 = vld [vmem:[#allocation13 + $0x128] sm:$0xff]
    %v4813 = vld [vmem:[#allocation13 + $0x130] sm:$0xff]
    %v4814 = vld [vmem:[#allocation13 + $0x138] sm:$0xff]
    %v4815 = vld [vmem:[#allocation13 + $0x140] sm:$0xff]
    %v4816 = vld [vmem:[#allocation13 + $0x148] sm:$0xff]
    %v4817 = vld [vmem:[#allocation13 + $0x150] sm:$0xff]
    %v4818 = vld [vmem:[#allocation13 + $0x158] sm:$0xff]
    %v4819 = vld [vmem:[#allocation13 + $0x160] sm:$0xff]
    %v4820 = vld [vmem:[#allocation13 + $0x168] sm:$0xff]
    %v4821 = vld [vmem:[#allocation13 + $0x170] sm:$0xff]
    %v4822 = vld [vmem:[#allocation13 + $0x178] sm:$0xff]
    %4823 = vmatprep.subr.mxu0 0.0
    %4824 = vmatpush1.msra.mxu0 %v4790
    %4825 = vmatprep.subr.mxu0 0.0
    %4826 = vmatpush1.msra.mxu0 %v4789
    %4827 = vmatprep.subr.mxu0 0.0
    %4828 = vmatpush1.msra.mxu0 %v4788
    %4829 = vmatprep.subr.mxu0 0.0
    %4830 = vmatpush1.msra.mxu0 %v4787
    %4831 = vmatprep.subr.mxu0 0.0
    %4832 = vmatpush1.msra.mxu0 %v4786
    %4833 = vmatprep.subr.mxu0 0.0
    %4834 = vmatpush1.msra.mxu0 %v4785
    %4835 = vmatprep.subr.mxu0 0.0
    %4836 = vmatpush1.msra.mxu0 %v4784
    %4837 = vmatprep.subr.mxu0 0.0
    %4838 = vmatpush1.msra.mxu0 %v4783
    %4839 = vmatprep.subr.mxu0 0.0
    %4840 = vmatpush1.msra.mxu0 %v4782
    %4841 = vmatprep.subr.mxu0 0.0
    %4842 = vmatpush1.msra.mxu0 %v4781
    %4843 = vmatprep.subr.mxu0 0.0
    %4844 = vmatpush1.msra.mxu0 %v4780
    %4845 = vmatprep.subr.mxu0 0.0
    %4846 = vmatpush1.msra.mxu0 %v4779
    %4847 = vmatprep.subr.mxu0 0.0
    %4848 = vmatpush1.msra.mxu0 %v4778
    %4849 = vmatprep.subr.mxu0 0.0
    %4850 = vmatpush1.msra.mxu0 %v4777
    %4851 = vmatprep.subr.mxu0 0.0
    %4852 = vmatpush1.msra.mxu0 %v4776
    %4853 = vmatprep.subr.mxu0 0.0
    %4854 = vmatpush1.msra.mxu0 %v4775
    %4855 = vmatprep.subr.mxu0 0.0
    %4856 = vmatpush2.msra.mxu0 %v4806
    %4857 = vmatprep.subr.mxu0 0.0
    %4858 = vmatpush2.msra.mxu0 %v4805
    %4859 = vmatprep.subr.mxu0 0.0
    %4860 = vmatpush2.msra.mxu0 %v4804
    %4861 = vmatprep.subr.mxu0 0.0
    %4862 = vmatpush2.msra.mxu0 %v4803
    %4863 = vmatprep.subr.mxu0 0.0
    %4864 = vmatpush2.msra.mxu0 %v4802
    %4865 = vmatprep.subr.mxu0 0.0
    %4866 = vmatpush2.msra.mxu0 %v4801
    %4867 = vmatprep.subr.mxu0 0.0
    %4868 = vmatpush2.msra.mxu0 %v4800
    %4869 = vmatprep.subr.mxu0 0.0
    %4870 = vmatpush2.msra.mxu0 %v4799
    %4871 = vmatprep.subr.mxu0 0.0
    %4872 = vmatpush2.msra.mxu0 %v4798
    %4873 = vmatprep.subr.mxu0 0.0
    %4874 = vmatpush2.msra.mxu0 %v4797
    %4875 = vmatprep.subr.mxu0 0.0
    %4876 = vmatpush2.msra.mxu0 %v4796
    %4877 = vmatprep.subr.mxu0 0.0
    %4878 = vmatpush2.msra.mxu0 %v4795
    %4879 = vmatprep.subr.mxu0 0.0
    %4880 = vmatpush2.msra.mxu0 %v4794
    %4881 = vmatprep.subr.mxu0 0.0
    %4882 = vmatpush2.msra.mxu0 %v4793
    %4883 = vmatprep.subr.mxu0 0.0
    %4884 = vmatpush2.msra.mxu0 %v4792
    %4885 = vmatprep.subr.mxu0 0.0
    %4886 = vmatpush2.msra.mxu0 %v4791
    %4887 = vmatprep.mubr.f32.mxu0 %v4769
    %4888 = vmatmul.mubr.f32.gmra.mxu0 %v4768
    %v4889 = vpop.f32.mrf.mxu0
    %v4890 = vadd.f32 0.0, %v4889
    %v4891 = vpop.f32.mrf.mxu0
    %4892 = vdwg.mxu0
    %4893 = vmatprep.subr.mxu0 0.0
    %4894 = vmatpush1.msra.mxu0 %v4822
    %4895 = vmatprep.subr.mxu0 0.0
    %4896 = vmatpush1.msra.mxu0 %v4821
    %4897 = vmatprep.subr.mxu0 0.0
    %4898 = vmatpush1.msra.mxu0 %v4820
    %4899 = vmatprep.subr.mxu0 0.0
    %4900 = vmatpush1.msra.mxu0 %v4819
    %4901 = vmatprep.subr.mxu0 0.0
    %4902 = vmatpush1.msra.mxu0 %v4818
    %4903 = vmatprep.subr.mxu0 0.0
    %4904 = vmatpush1.msra.mxu0 %v4817
    %4905 = vmatprep.subr.mxu0 0.0
    %4906 = vmatpush1.msra.mxu0 %v4816
    %4907 = vmatprep.subr.mxu0 0.0
    %4908 = vmatpush1.msra.mxu0 %v4815
    %4909 = vmatprep.subr.mxu0 0.0
    %4910 = vmatpush1.msra.mxu0 %v4814
    %4911 = vmatprep.subr.mxu0 0.0
    %4912 = vmatpush1.msra.mxu0 %v4813
    %4913 = vmatprep.subr.mxu0 0.0
    %4914 = vmatpush1.msra.mxu0 %v4812
    %4915 = vmatprep.subr.mxu0 0.0
    %4916 = vmatpush1.msra.mxu0 %v4811
    %4917 = vmatprep.subr.mxu0 0.0
    %4918 = vmatpush1.msra.mxu0 %v4810
    %4919 = vmatprep.subr.mxu0 0.0
    %4920 = vmatpush1.msra.mxu0 %v4809
    %4921 = vmatprep.subr.mxu0 0.0
    %4922 = vmatpush1.msra.mxu0 %v4808
    %4923 = vmatprep.subr.mxu0 0.0
    %4924 = vmatpush1.msra.mxu0 %v4807
    %4925 = vmatprep.subr.mxu0 0.0
    %4926 = vmatpush2.msra.mxu0 0.0
    %4927 = vmatprep.subr.mxu0 0.0
    %4928 = vmatpush2.msra.mxu0 0.0
    %4929 = vmatprep.subr.mxu0 0.0
    %4930 = vmatpush2.msra.mxu0 0.0
    %4931 = vmatprep.subr.mxu0 0.0
    %4932 = vmatpush2.msra.mxu0 0.0
    %4933 = vmatprep.subr.mxu0 0.0
    %4934 = vmatpush2.msra.mxu0 0.0
    %4935 = vmatprep.subr.mxu0 0.0
    %4936 = vmatpush2.msra.mxu0 0.0
    %4937 = vmatprep.subr.mxu0 0.0
    %4938 = vmatpush2.msra.mxu0 0.0
    %4939 = vmatprep.subr.mxu0 0.0
    %4940 = vmatpush2.msra.mxu0 0.0
    %4941 = vmatprep.subr.mxu0 0.0
    %4942 = vmatpush2.msra.mxu0 0.0
    %4943 = vmatprep.subr.mxu0 0.0
    %4944 = vmatpush2.msra.mxu0 0.0
    %4945 = vmatprep.subr.mxu0 0.0
    %4946 = vmatpush2.msra.mxu0 0.0
    %4947 = vmatprep.subr.mxu0 0.0
    %4948 = vmatpush2.msra.mxu0 0.0
    %4949 = vmatprep.subr.mxu0 0.0
    %4950 = vmatpush2.msra.mxu0 0.0
    %4951 = vmatprep.subr.mxu0 0.0
    %4952 = vmatpush2.msra.mxu0 0.0
    %4953 = vmatprep.subr.mxu0 0.0
    %4954 = vmatpush2.msra.mxu0 0.0
    %4955 = vmatprep.subr.mxu0 0.0
    %4956 = vmatpush2.msra.mxu0 0.0
    %4957 = vmatprep.mubr.f32.mxu0 0.0
    %4958 = vmatmul.mubr.f32.gmra.mxu0 %v4770
    %v4959 = vpop.f32.mrf.mxu0
    %v4960 = vadd.f32 %v4890, %v4959
    %v4961 = vpop.f32.mrf.mxu0
    %4962 = vdwg.mxu0
    %v4963 = vadd.f32 %v4774, %v4960
    %4964 = vmatprep.subr.mxu0 0.0
    %4965 = vmatpush1.msra.mxu0 %v4790
    %4966 = vmatprep.subr.mxu0 0.0
    %4967 = vmatpush1.msra.mxu0 %v4789
    %4968 = vmatprep.subr.mxu0 0.0
    %4969 = vmatpush1.msra.mxu0 %v4788
    %4970 = vmatprep.subr.mxu0 0.0
    %4971 = vmatpush1.msra.mxu0 %v4787
    %4972 = vmatprep.subr.mxu0 0.0
    %4973 = vmatpush1.msra.mxu0 %v4786
    %4974 = vmatprep.subr.mxu0 0.0
    %4975 = vmatpush1.msra.mxu0 %v4785
    %4976 = vmatprep.subr.mxu0 0.0
    %4977 = vmatpush1.msra.mxu0 %v4784
    %4978 = vmatprep.subr.mxu0 0.0
    %4979 = vmatpush1.msra.mxu0 %v4783
    %4980 = vmatprep.subr.mxu0 0.0
    %4981 = vmatpush1.msra.mxu0 %v4782
    %4982 = vmatprep.subr.mxu0 0.0
    %4983 = vmatpush1.msra.mxu0 %v4781
    %4984 = vmatprep.subr.mxu0 0.0
    %4985 = vmatpush1.msra.mxu0 %v4780
    %4986 = vmatprep.subr.mxu0 0.0
    %4987 = vmatpush1.msra.mxu0 %v4779
    %4988 = vmatprep.subr.mxu0 0.0
    %4989 = vmatpush1.msra.mxu0 %v4778
    %4990 = vmatprep.subr.mxu0 0.0
    %4991 = vmatpush1.msra.mxu0 %v4777
    %4992 = vmatprep.subr.mxu0 0.0
    %4993 = vmatpush1.msra.mxu0 %v4776
    %4994 = vmatprep.subr.mxu0 0.0
    %4995 = vmatpush1.msra.mxu0 %v4775
    %4996 = vmatprep.subr.mxu0 0.0
    %4997 = vmatpush2.msra.mxu0 %v4806
    %4998 = vmatprep.subr.mxu0 0.0
    %4999 = vmatpush2.msra.mxu0 %v4805
    %5000 = vmatprep.subr.mxu0 0.0
    %5001 = vmatpush2.msra.mxu0 %v4804
    %5002 = vmatprep.subr.mxu0 0.0
    %5003 = vmatpush2.msra.mxu0 %v4803
    %5004 = vmatprep.subr.mxu0 0.0
    %5005 = vmatpush2.msra.mxu0 %v4802
    %5006 = vmatprep.subr.mxu0 0.0
    %5007 = vmatpush2.msra.mxu0 %v4801
    %5008 = vmatprep.subr.mxu0 0.0
    %5009 = vmatpush2.msra.mxu0 %v4800
    %5010 = vmatprep.subr.mxu0 0.0
    %5011 = vmatpush2.msra.mxu0 %v4799
    %5012 = vmatprep.subr.mxu0 0.0
    %5013 = vmatpush2.msra.mxu0 %v4798
    %5014 = vmatprep.subr.mxu0 0.0
    %5015 = vmatpush2.msra.mxu0 %v4797
    %5016 = vmatprep.subr.mxu0 0.0
    %5017 = vmatpush2.msra.mxu0 %v4796
    %5018 = vmatprep.subr.mxu0 0.0
    %5019 = vmatpush2.msra.mxu0 %v4795
    %5020 = vmatprep.subr.mxu0 0.0
    %5021 = vmatpush2.msra.mxu0 %v4794
    %5022 = vmatprep.subr.mxu0 0.0
    %5023 = vmatpush2.msra.mxu0 %v4793
    %5024 = vmatprep.subr.mxu0 0.0
    %5025 = vmatpush2.msra.mxu0 %v4792
    %5026 = vmatprep.subr.mxu0 0.0
    %5027 = vmatpush2.msra.mxu0 %v4791
    %5028 = vmatprep.mubr.f32.mxu0 %v4772
    %5029 = vmatmul.mubr.f32.gmra.mxu0 %v4771
    %v5030 = vpop.f32.mrf.mxu0
    %v5031 = vadd.f32 0.0, %v5030
    %v5032 = vpop.f32.mrf.mxu0
    %5033 = vdwg.mxu0
    %5034 = vmatprep.subr.mxu0 0.0
    %5035 = vmatpush1.msra.mxu0 %v4822
    %5036 = vmatprep.subr.mxu0 0.0
    %5037 = vmatpush1.msra.mxu0 %v4821
    %5038 = vmatprep.subr.mxu0 0.0
    %5039 = vmatpush1.msra.mxu0 %v4820
    %5040 = vmatprep.subr.mxu0 0.0
    %5041 = vmatpush1.msra.mxu0 %v4819
    %5042 = vmatprep.subr.mxu0 0.0
    %5043 = vmatpush1.msra.mxu0 %v4818
    %5044 = vmatprep.subr.mxu0 0.0
    %5045 = vmatpush1.msra.mxu0 %v4817
    %5046 = vmatprep.subr.mxu0 0.0
    %5047 = vmatpush1.msra.mxu0 %v4816
    %5048 = vmatprep.subr.mxu0 0.0
    %5049 = vmatpush1.msra.mxu0 %v4815
    %5050 = vmatprep.subr.mxu0 0.0
    %5051 = vmatpush1.msra.mxu0 %v4814
    %5052 = vmatprep.subr.mxu0 0.0
    %5053 = vmatpush1.msra.mxu0 %v4813
    %5054 = vmatprep.subr.mxu0 0.0
    %5055 = vmatpush1.msra.mxu0 %v4812
    %5056 = vmatprep.subr.mxu0 0.0
    %5057 = vmatpush1.msra.mxu0 %v4811
    %5058 = vmatprep.subr.mxu0 0.0
    %5059 = vmatpush1.msra.mxu0 %v4810
    %5060 = vmatprep.subr.mxu0 0.0
    %5061 = vmatpush1.msra.mxu0 %v4809
    %5062 = vmatprep.subr.mxu0 0.0
    %5063 = vmatpush1.msra.mxu0 %v4808
    %5064 = vmatprep.subr.mxu0 0.0
    %5065 = vmatpush1.msra.mxu0 %v4807
    %5066 = vmatprep.subr.mxu0 0.0
    %5067 = vmatpush2.msra.mxu0 0.0
    %5068 = vmatprep.subr.mxu0 0.0
    %5069 = vmatpush2.msra.mxu0 0.0
    %5070 = vmatprep.subr.mxu0 0.0
    %5071 = vmatpush2.msra.mxu0 0.0
    %5072 = vmatprep.subr.mxu0 0.0
    %5073 = vmatpush2.msra.mxu0 0.0
    %5074 = vmatprep.subr.mxu0 0.0
    %5075 = vmatpush2.msra.mxu0 0.0
    %5076 = vmatprep.subr.mxu0 0.0
    %5077 = vmatpush2.msra.mxu0 0.0
    %5078 = vmatprep.subr.mxu0 0.0
    %5079 = vmatpush2.msra.mxu0 0.0
    %5080 = vmatprep.subr.mxu0 0.0
    %5081 = vmatpush2.msra.mxu0 0.0
    %5082 = vmatprep.subr.mxu0 0.0
    %5083 = vmatpush2.msra.mxu0 0.0
    %5084 = vmatprep.subr.mxu0 0.0
    %5085 = vmatpush2.msra.mxu0 0.0
    %5086 = vmatprep.subr.mxu0 0.0
    %5087 = vmatpush2.msra.mxu0 0.0
    %5088 = vmatprep.subr.mxu0 0.0
    %5089 = vmatpush2.msra.mxu0 0.0
    %5090 = vmatprep.subr.mxu0 0.0
    %5091 = vmatpush2.msra.mxu0 0.0
    %5092 = vmatprep.subr.mxu0 0.0
    %5093 = vmatpush2.msra.mxu0 0.0
    %5094 = vmatprep.subr.mxu0 0.0
    %5095 = vmatpush2.msra.mxu0 0.0
    %5096 = vmatprep.subr.mxu0 0.0
    %5097 = vmatpush2.msra.mxu0 0.0
    %5098 = vmatprep.mubr.f32.mxu0 0.0
    %5099 = vmatmul.mubr.f32.gmra.mxu0 %v4773
    %v5100 = vpop.f32.mrf.mxu0
    %v5101 = vadd.f32 %v5031, %v5100
    %v5102 = vpop.f32.mrf.mxu0
    %5103 = vdwg.mxu0
    %v5104 = vadd.f32 %v4774, %v5101
    %s5105 = scalar_lea.vmem [#allocation13], 384
    %v5106 = vld [vmem:[%s5105] sm:$0xff]
    %v5107 = vld [vmem:[%s5105 + $0x8] sm:$0xff]
    %v5108 = vld [vmem:[%s5105 + $0x10] sm:$0xff]
    %v5109 = vld [vmem:[%s5105 + $0x18] sm:$0xff]
    %v5110 = vld [vmem:[%s5105 + $0x20] sm:$0xff]
    %v5111 = vld [vmem:[%s5105 + $0x28] sm:$0xff]
    %v5112 = vld [vmem:[%s5105 + $0x30] sm:$0xff]
    %v5113 = vld [vmem:[%s5105 + $0x38] sm:$0xff]
    %v5114 = vld [vmem:[%s5105 + $0x40] sm:$0xff]
    %v5115 = vld [vmem:[%s5105 + $0x48] sm:$0xff]
    %v5116 = vld [vmem:[%s5105 + $0x50] sm:$0xff]
    %v5117 = vld [vmem:[%s5105 + $0x58] sm:$0xff]
    %v5118 = vld [vmem:[%s5105 + $0x60] sm:$0xff]
    %v5119 = vld [vmem:[%s5105 + $0x68] sm:$0xff]
    %v5120 = vld [vmem:[%s5105 + $0x70] sm:$0xff]
    %v5121 = vld [vmem:[%s5105 + $0x78] sm:$0xff]
    %v5122 = vld [vmem:[%s5105 + $0x80] sm:$0xff]
    %v5123 = vld [vmem:[%s5105 + $0x88] sm:$0xff]
    %v5124 = vld [vmem:[%s5105 + $0x90] sm:$0xff]
    %v5125 = vld [vmem:[%s5105 + $0x98] sm:$0xff]
    %v5126 = vld [vmem:[%s5105 + $0xa0] sm:$0xff]
    %v5127 = vld [vmem:[%s5105 + $0xa8] sm:$0xff]
    %v5128 = vld [vmem:[%s5105 + $0xb0] sm:$0xff]
    %v5129 = vld [vmem:[%s5105 + $0xb8] sm:$0xff]
    %v5130 = vld [vmem:[%s5105 + $0xc0] sm:$0xff]
    %v5131 = vld [vmem:[%s5105 + $0xc8] sm:$0xff]
    %v5132 = vld [vmem:[%s5105 + $0xd0] sm:$0xff]
    %v5133 = vld [vmem:[%s5105 + $0xd8] sm:$0xff]
    %v5134 = vld [vmem:[%s5105 + $0xe0] sm:$0xff]
    %v5135 = vld [vmem:[%s5105 + $0xe8] sm:$0xff]
    %v5136 = vld [vmem:[%s5105 + $0xf0] sm:$0xff]
    %v5137 = vld [vmem:[%s5105 + $0xf8] sm:$0xff]
    %v5138 = vld [vmem:[%s5105 + $0x100] sm:$0xff]
    %v5139 = vld [vmem:[%s5105 + $0x108] sm:$0xff]
    %v5140 = vld [vmem:[%s5105 + $0x110] sm:$0xff]
    %v5141 = vld [vmem:[%s5105 + $0x118] sm:$0xff]
    %v5142 = vld [vmem:[%s5105 + $0x120] sm:$0xff]
    %v5143 = vld [vmem:[%s5105 + $0x128] sm:$0xff]
    %v5144 = vld [vmem:[%s5105 + $0x130] sm:$0xff]
    %v5145 = vld [vmem:[%s5105 + $0x138] sm:$0xff]
    %v5146 = vld [vmem:[%s5105 + $0x140] sm:$0xff]
    %v5147 = vld [vmem:[%s5105 + $0x148] sm:$0xff]
    %v5148 = vld [vmem:[%s5105 + $0x150] sm:$0xff]
    %v5149 = vld [vmem:[%s5105 + $0x158] sm:$0xff]
    %v5150 = vld [vmem:[%s5105 + $0x160] sm:$0xff]
    %v5151 = vld [vmem:[%s5105 + $0x168] sm:$0xff]
    %v5152 = vld [vmem:[%s5105 + $0x170] sm:$0xff]
    %v5153 = vld [vmem:[%s5105 + $0x178] sm:$0xff]
    %v5157 = vrot.slane %v4768, 1
    %v5158 = vrot.slane %v4769, 1
    %v5159 = vrot.slane %v4770, 1
    %5163 = vmatprep.subr.mxu0 0.0
    %5164 = vmatpush1.msra.mxu0 %v5121
    %5165 = vmatprep.subr.mxu0 0.0
    %5166 = vmatpush1.msra.mxu0 %v5120
    %5167 = vmatprep.subr.mxu0 0.0
    %5168 = vmatpush1.msra.mxu0 %v5119
    %5169 = vmatprep.subr.mxu0 0.0
    %5170 = vmatpush1.msra.mxu0 %v5118
    %5171 = vmatprep.subr.mxu0 0.0
    %5172 = vmatpush1.msra.mxu0 %v5117
    %5173 = vmatprep.subr.mxu0 0.0
    %5174 = vmatpush1.msra.mxu0 %v5116
    %5175 = vmatprep.subr.mxu0 0.0
    %5176 = vmatpush1.msra.mxu0 %v5115
    %5177 = vmatprep.subr.mxu0 0.0
    %5178 = vmatpush1.msra.mxu0 %v5114
    %5179 = vmatprep.subr.mxu0 0.0
    %5180 = vmatpush1.msra.mxu0 %v5113
    %5181 = vmatprep.subr.mxu0 0.0
    %5182 = vmatpush1.msra.mxu0 %v5112
    %5183 = vmatprep.subr.mxu0 0.0
    %5184 = vmatpush1.msra.mxu0 %v5111
    %5185 = vmatprep.subr.mxu0 0.0
    %5186 = vmatpush1.msra.mxu0 %v5110
    %5187 = vmatprep.subr.mxu0 0.0
    %5188 = vmatpush1.msra.mxu0 %v5109
    %5189 = vmatprep.subr.mxu0 0.0
    %5190 = vmatpush1.msra.mxu0 %v5108
    %5191 = vmatprep.subr.mxu0 0.0
    %5192 = vmatpush1.msra.mxu0 %v5107
    %5193 = vmatprep.subr.mxu0 0.0
    %5194 = vmatpush1.msra.mxu0 %v5106
    %5195 = vmatprep.subr.mxu0 0.0
    %5196 = vmatpush2.msra.mxu0 %v5137
    %5197 = vmatprep.subr.mxu0 0.0
    %5198 = vmatpush2.msra.mxu0 %v5136
    %5199 = vmatprep.subr.mxu0 0.0
    %5200 = vmatpush2.msra.mxu0 %v5135
    %5201 = vmatprep.subr.mxu0 0.0
    %5202 = vmatpush2.msra.mxu0 %v5134
    %5203 = vmatprep.subr.mxu0 0.0
    %5204 = vmatpush2.msra.mxu0 %v5133
    %5205 = vmatprep.subr.mxu0 0.0
    %5206 = vmatpush2.msra.mxu0 %v5132
    %5207 = vmatprep.subr.mxu0 0.0
    %5208 = vmatpush2.msra.mxu0 %v5131
    %5209 = vmatprep.subr.mxu0 0.0
    %5210 = vmatpush2.msra.mxu0 %v5130
    %5211 = vmatprep.subr.mxu0 0.0
    %5212 = vmatpush2.msra.mxu0 %v5129
    %5213 = vmatprep.subr.mxu0 0.0
    %5214 = vmatpush2.msra.mxu0 %v5128
    %5215 = vmatprep.subr.mxu0 0.0
    %5216 = vmatpush2.msra.mxu0 %v5127
    %5217 = vmatprep.subr.mxu0 0.0
    %5218 = vmatpush2.msra.mxu0 %v5126
    %5219 = vmatprep.subr.mxu0 0.0
    %5220 = vmatpush2.msra.mxu0 %v5125
    %5221 = vmatprep.subr.mxu0 0.0
    %5222 = vmatpush2.msra.mxu0 %v5124
    %5223 = vmatprep.subr.mxu0 0.0
    %5224 = vmatpush2.msra.mxu0 %v5123
    %5225 = vmatprep.subr.mxu0 0.0
    %5226 = vmatpush2.msra.mxu0 %v5122
    %5227 = vmatprep.mubr.f32.mxu0 %v5158
    %5228 = vmatmul.mubr.f32.gmra.mxu0 %v5157
    %v5229 = vpop.f32.mrf.mxu0
    %v5230 = vadd.f32 0.0, %v5229
    %v5231 = vpop.f32.mrf.mxu0
    %5232 = vdwg.mxu0
    %5233 = vmatprep.subr.mxu0 0.0
    %5234 = vmatpush1.msra.mxu0 %v5153
    %5235 = vmatprep.subr.mxu0 0.0
    %5236 = vmatpush1.msra.mxu0 %v5152
    %5237 = vmatprep.subr.mxu0 0.0
    %5238 = vmatpush1.msra.mxu0 %v5151
    %5239 = vmatprep.subr.mxu0 0.0
    %5240 = vmatpush1.msra.mxu0 %v5150
    %5241 = vmatprep.subr.mxu0 0.0
    %5242 = vmatpush1.msra.mxu0 %v5149
    %5243 = vmatprep.subr.mxu0 0.0
    %5244 = vmatpush1.msra.mxu0 %v5148
    %5245 = vmatprep.subr.mxu0 0.0
    %5246 = vmatpush1.msra.mxu0 %v5147
    %5247 = vmatprep.subr.mxu0 0.0
    %5248 = vmatpush1.msra.mxu0 %v5146
    %5249 = vmatprep.subr.mxu0 0.0
    %5250 = vmatpush1.msra.mxu0 %v5145
    %5251 = vmatprep.subr.mxu0 0.0
    %5252 = vmatpush1.msra.mxu0 %v5144
    %5253 = vmatprep.subr.mxu0 0.0
    %5254 = vmatpush1.msra.mxu0 %v5143
    %5255 = vmatprep.subr.mxu0 0.0
    %5256 = vmatpush1.msra.mxu0 %v5142
    %5257 = vmatprep.subr.mxu0 0.0
    %5258 = vmatpush1.msra.mxu0 %v5141
    %5259 = vmatprep.subr.mxu0 0.0
    %5260 = vmatpush1.msra.mxu0 %v5140
    %5261 = vmatprep.subr.mxu0 0.0
    %5262 = vmatpush1.msra.mxu0 %v5139
    %5263 = vmatprep.subr.mxu0 0.0
    %5264 = vmatpush1.msra.mxu0 %v5138
    %5265 = vmatprep.subr.mxu0 0.0
    %5266 = vmatpush2.msra.mxu0 0.0
    %5267 = vmatprep.subr.mxu0 0.0
    %5268 = vmatpush2.msra.mxu0 0.0
    %5269 = vmatprep.subr.mxu0 0.0
    %5270 = vmatpush2.msra.mxu0 0.0
    %5271 = vmatprep.subr.mxu0 0.0
    %5272 = vmatpush2.msra.mxu0 0.0
    %5273 = vmatprep.subr.mxu0 0.0
    %5274 = vmatpush2.msra.mxu0 0.0
    %5275 = vmatprep.subr.mxu0 0.0
    %5276 = vmatpush2.msra.mxu0 0.0
    %5277 = vmatprep.subr.mxu0 0.0
    %5278 = vmatpush2.msra.mxu0 0.0
    %5279 = vmatprep.subr.mxu0 0.0
    %5280 = vmatpush2.msra.mxu0 0.0
    %5281 = vmatprep.subr.mxu0 0.0
    %5282 = vmatpush2.msra.mxu0 0.0
    %5283 = vmatprep.subr.mxu0 0.0
    %5284 = vmatpush2.msra.mxu0 0.0
    %5285 = vmatprep.subr.mxu0 0.0
    %5286 = vmatpush2.msra.mxu0 0.0
    %5287 = vmatprep.subr.mxu0 0.0
    %5288 = vmatpush2.msra.mxu0 0.0
    %5289 = vmatprep.subr.mxu0 0.0
    %5290 = vmatpush2.msra.mxu0 0.0
    %5291 = vmatprep.subr.mxu0 0.0
    %5292 = vmatpush2.msra.mxu0 0.0
    %5293 = vmatprep.subr.mxu0 0.0
    %5294 = vmatpush2.msra.mxu0 0.0
    %5295 = vmatprep.subr.mxu0 0.0
    %5296 = vmatpush2.msra.mxu0 0.0
    %5297 = vmatprep.mubr.f32.mxu0 0.0
    %5298 = vmatmul.mubr.f32.gmra.mxu0 %v5159
    %v5299 = vpop.f32.mrf.mxu0
    %v5300 = vadd.f32 %v5230, %v5299
    %v5301 = vpop.f32.mrf.mxu0
    %5302 = vdwg.mxu0
    %v5303 = vadd.f32 %v4963, %v5300
    %v5307 = vrot.slane %v4771, 1
    %v5308 = vrot.slane %v4772, 1
    %v5309 = vrot.slane %v4773, 1
    %5313 = vmatprep.subr.mxu0 0.0
    %5314 = vmatpush1.msra.mxu0 %v5121
    %5315 = vmatprep.subr.mxu0 0.0
    %5316 = vmatpush1.msra.mxu0 %v5120
    %5317 = vmatprep.subr.mxu0 0.0
    %5318 = vmatpush1.msra.mxu0 %v5119
    %5319 = vmatprep.subr.mxu0 0.0
    %5320 = vmatpush1.msra.mxu0 %v5118
    %5321 = vmatprep.subr.mxu0 0.0
    %5322 = vmatpush1.msra.mxu0 %v5117
    %5323 = vmatprep.subr.mxu0 0.0
    %5324 = vmatpush1.msra.mxu0 %v5116
    %5325 = vmatprep.subr.mxu0 0.0
    %5326 = vmatpush1.msra.mxu0 %v5115
    %5327 = vmatprep.subr.mxu0 0.0
    %5328 = vmatpush1.msra.mxu0 %v5114
    %5329 = vmatprep.subr.mxu0 0.0
    %5330 = vmatpush1.msra.mxu0 %v5113
    %5331 = vmatprep.subr.mxu0 0.0
    %5332 = vmatpush1.msra.mxu0 %v5112
    %5333 = vmatprep.subr.mxu0 0.0
    %5334 = vmatpush1.msra.mxu0 %v5111
    %5335 = vmatprep.subr.mxu0 0.0
    %5336 = vmatpush1.msra.mxu0 %v5110
    %5337 = vmatprep.subr.mxu0 0.0
    %5338 = vmatpush1.msra.mxu0 %v5109
    %5339 = vmatprep.subr.mxu0 0.0
    %5340 = vmatpush1.msra.mxu0 %v5108
    %5341 = vmatprep.subr.mxu0 0.0
    %5342 = vmatpush1.msra.mxu0 %v5107
    %5343 = vmatprep.subr.mxu0 0.0
    %5344 = vmatpush1.msra.mxu0 %v5106
    %5345 = vmatprep.subr.mxu0 0.0
    %5346 = vmatpush2.msra.mxu0 %v5137
    %5347 = vmatprep.subr.mxu0 0.0
    %5348 = vmatpush2.msra.mxu0 %v5136
    %5349 = vmatprep.subr.mxu0 0.0
    %5350 = vmatpush2.msra.mxu0 %v5135
    %5351 = vmatprep.subr.mxu0 0.0
    %5352 = vmatpush2.msra.mxu0 %v5134
    %5353 = vmatprep.subr.mxu0 0.0
    %5354 = vmatpush2.msra.mxu0 %v5133
    %5355 = vmatprep.subr.mxu0 0.0
    %5356 = vmatpush2.msra.mxu0 %v5132
    %5357 = vmatprep.subr.mxu0 0.0
    %5358 = vmatpush2.msra.mxu0 %v5131
    %5359 = vmatprep.subr.mxu0 0.0
    %5360 = vmatpush2.msra.mxu0 %v5130
    %5361 = vmatprep.subr.mxu0 0.0
    %5362 = vmatpush2.msra.mxu0 %v5129
    %5363 = vmatprep.subr.mxu0 0.0
    %5364 = vmatpush2.msra.mxu0 %v5128
    %5365 = vmatprep.subr.mxu0 0.0
    %5366 = vmatpush2.msra.mxu0 %v5127
    %5367 = vmatprep.subr.mxu0 0.0
    %5368 = vmatpush2.msra.mxu0 %v5126
    %5369 = vmatprep.subr.mxu0 0.0
    %5370 = vmatpush2.msra.mxu0 %v5125
    %5371 = vmatprep.subr.mxu0 0.0
    %5372 = vmatpush2.msra.mxu0 %v5124
    %5373 = vmatprep.subr.mxu0 0.0
    %5374 = vmatpush2.msra.mxu0 %v5123
    %5375 = vmatprep.subr.mxu0 0.0
    %5376 = vmatpush2.msra.mxu0 %v5122
    %5377 = vmatprep.mubr.f32.mxu0 %v5308
    %5378 = vmatmul.mubr.f32.gmra.mxu0 %v5307
    %v5379 = vpop.f32.mrf.mxu0
    %v5380 = vadd.f32 0.0, %v5379
    %v5381 = vpop.f32.mrf.mxu0
    %5382 = vdwg.mxu0
    %5383 = vmatprep.subr.mxu0 0.0
    %5384 = vmatpush1.msra.mxu0 %v5153
    %5385 = vmatprep.subr.mxu0 0.0
    %5386 = vmatpush1.msra.mxu0 %v5152
    %5387 = vmatprep.subr.mxu0 0.0
    %5388 = vmatpush1.msra.mxu0 %v5151
    %5389 = vmatprep.subr.mxu0 0.0
    %5390 = vmatpush1.msra.mxu0 %v5150
    %5391 = vmatprep.subr.mxu0 0.0
    %5392 = vmatpush1.msra.mxu0 %v5149
    %5393 = vmatprep.subr.mxu0 0.0
    %5394 = vmatpush1.msra.mxu0 %v5148
    %5395 = vmatprep.subr.mxu0 0.0
    %5396 = vmatpush1.msra.mxu0 %v5147
    %5397 = vmatprep.subr.mxu0 0.0
    %5398 = vmatpush1.msra.mxu0 %v5146
    %5399 = vmatprep.subr.mxu0 0.0
    %5400 = vmatpush1.msra.mxu0 %v5145
    %5401 = vmatprep.subr.mxu0 0.0
    %5402 = vmatpush1.msra.mxu0 %v5144
    %5403 = vmatprep.subr.mxu0 0.0
    %5404 = vmatpush1.msra.mxu0 %v5143
    %5405 = vmatprep.subr.mxu0 0.0
    %5406 = vmatpush1.msra.mxu0 %v5142
    %5407 = vmatprep.subr.mxu0 0.0
    %5408 = vmatpush1.msra.mxu0 %v5141
    %5409 = vmatprep.subr.mxu0 0.0
    %5410 = vmatpush1.msra.mxu0 %v5140
    %5411 = vmatprep.subr.mxu0 0.0
    %5412 = vmatpush1.msra.mxu0 %v5139
    %5413 = vmatprep.subr.mxu0 0.0
    %5414 = vmatpush1.msra.mxu0 %v5138
    %5415 = vmatprep.subr.mxu0 0.0
    %5416 = vmatpush2.msra.mxu0 0.0
    %5417 = vmatprep.subr.mxu0 0.0
    %5418 = vmatpush2.msra.mxu0 0.0
    %5419 = vmatprep.subr.mxu0 0.0
    %5420 = vmatpush2.msra.mxu0 0.0
    %5421 = vmatprep.subr.mxu0 0.0
    %5422 = vmatpush2.msra.mxu0 0.0
    %5423 = vmatprep.subr.mxu0 0.0
    %5424 = vmatpush2.msra.mxu0 0.0
    %5425 = vmatprep.subr.mxu0 0.0
    %5426 = vmatpush2.msra.mxu0 0.0
    %5427 = vmatprep.subr.mxu0 0.0
    %5428 = vmatpush2.msra.mxu0 0.0
    %5429 = vmatprep.subr.mxu0 0.0
    %5430 = vmatpush2.msra.mxu0 0.0
    %5431 = vmatprep.subr.mxu0 0.0
    %5432 = vmatpush2.msra.mxu0 0.0
    %5433 = vmatprep.subr.mxu0 0.0
    %5434 = vmatpush2.msra.mxu0 0.0
    %5435 = vmatprep.subr.mxu0 0.0
    %5436 = vmatpush2.msra.mxu0 0.0
    %5437 = vmatprep.subr.mxu0 0.0
    %5438 = vmatpush2.msra.mxu0 0.0
    %5439 = vmatprep.subr.mxu0 0.0
    %5440 = vmatpush2.msra.mxu0 0.0
    %5441 = vmatprep.subr.mxu0 0.0
    %5442 = vmatpush2.msra.mxu0 0.0
    %5443 = vmatprep.subr.mxu0 0.0
    %5444 = vmatpush2.msra.mxu0 0.0
    %5445 = vmatprep.subr.mxu0 0.0
    %5446 = vmatpush2.msra.mxu0 0.0
    %5447 = vmatprep.mubr.f32.mxu0 0.0
    %5448 = vmatmul.mubr.f32.gmra.mxu0 %v5309
    %v5449 = vpop.f32.mrf.mxu0
    %v5450 = vadd.f32 %v5380, %v5449
    %v5451 = vpop.f32.mrf.mxu0
    %5452 = vdwg.mxu0
    %v5453 = vadd.f32 %v5104, %v5450
    %s5454 = scalar_lea.vmem [#allocation13], 768
    %v5455 = vld [vmem:[%s5454] sm:$0xff]
    %v5456 = vld [vmem:[%s5454 + $0x8] sm:$0xff]
    %v5457 = vld [vmem:[%s5454 + $0x10] sm:$0xff]
    %v5458 = vld [vmem:[%s5454 + $0x18] sm:$0xff]
    %v5459 = vld [vmem:[%s5454 + $0x20] sm:$0xff]
    %v5460 = vld [vmem:[%s5454 + $0x28] sm:$0xff]
    %v5461 = vld [vmem:[%s5454 + $0x30] sm:$0xff]
    %v5462 = vld [vmem:[%s5454 + $0x38] sm:$0xff]
    %v5463 = vld [vmem:[%s5454 + $0x40] sm:$0xff]
    %v5464 = vld [vmem:[%s5454 + $0x48] sm:$0xff]
    %v5465 = vld [vmem:[%s5454 + $0x50] sm:$0xff]
    %v5466 = vld [vmem:[%s5454 + $0x58] sm:$0xff]
    %v5467 = vld [vmem:[%s5454 + $0x60] sm:$0xff]
    %v5468 = vld [vmem:[%s5454 + $0x68] sm:$0xff]
    %v5469 = vld [vmem:[%s5454 + $0x70] sm:$0xff]
    %v5470 = vld [vmem:[%s5454 + $0x78] sm:$0xff]
    %v5471 = vld [vmem:[%s5454 + $0x80] sm:$0xff]
    %v5472 = vld [vmem:[%s5454 + $0x88] sm:$0xff]
    %v5473 = vld [vmem:[%s5454 + $0x90] sm:$0xff]
    %v5474 = vld [vmem:[%s5454 + $0x98] sm:$0xff]
    %v5475 = vld [vmem:[%s5454 + $0xa0] sm:$0xff]
    %v5476 = vld [vmem:[%s5454 + $0xa8] sm:$0xff]
    %v5477 = vld [vmem:[%s5454 + $0xb0] sm:$0xff]
    %v5478 = vld [vmem:[%s5454 + $0xb8] sm:$0xff]
    %v5479 = vld [vmem:[%s5454 + $0xc0] sm:$0xff]
    %v5480 = vld [vmem:[%s5454 + $0xc8] sm:$0xff]
    %v5481 = vld [vmem:[%s5454 + $0xd0] sm:$0xff]
    %v5482 = vld [vmem:[%s5454 + $0xd8] sm:$0xff]
    %v5483 = vld [vmem:[%s5454 + $0xe0] sm:$0xff]
    %v5484 = vld [vmem:[%s5454 + $0xe8] sm:$0xff]
    %v5485 = vld [vmem:[%s5454 + $0xf0] sm:$0xff]
    %v5486 = vld [vmem:[%s5454 + $0xf8] sm:$0xff]
    %v5487 = vld [vmem:[%s5454 + $0x100] sm:$0xff]
    %v5488 = vld [vmem:[%s5454 + $0x108] sm:$0xff]
    %v5489 = vld [vmem:[%s5454 + $0x110] sm:$0xff]
    %v5490 = vld [vmem:[%s5454 + $0x118] sm:$0xff]
    %v5491 = vld [vmem:[%s5454 + $0x120] sm:$0xff]
    %v5492 = vld [vmem:[%s5454 + $0x128] sm:$0xff]
    %v5493 = vld [vmem:[%s5454 + $0x130] sm:$0xff]
    %v5494 = vld [vmem:[%s5454 + $0x138] sm:$0xff]
    %v5495 = vld [vmem:[%s5454 + $0x140] sm:$0xff]
    %v5496 = vld [vmem:[%s5454 + $0x148] sm:$0xff]
    %v5497 = vld [vmem:[%s5454 + $0x150] sm:$0xff]
    %v5498 = vld [vmem:[%s5454 + $0x158] sm:$0xff]
    %v5499 = vld [vmem:[%s5454 + $0x160] sm:$0xff]
    %v5500 = vld [vmem:[%s5454 + $0x168] sm:$0xff]
    %v5501 = vld [vmem:[%s5454 + $0x170] sm:$0xff]
    %v5502 = vld [vmem:[%s5454 + $0x178] sm:$0xff]
    %v5503 = vrot.slane %v4768, 2
    %v5504 = vrot.slane %v4769, 2
    %v5505 = vrot.slane %v4770, 2
    %5509 = vmatprep.subr.mxu0 0.0
    %5510 = vmatpush1.msra.mxu0 %v5470
    %5511 = vmatprep.subr.mxu0 0.0
    %5512 = vmatpush1.msra.mxu0 %v5469
    %5513 = vmatprep.subr.mxu0 0.0
    %5514 = vmatpush1.msra.mxu0 %v5468
    %5515 = vmatprep.subr.mxu0 0.0
    %5516 = vmatpush1.msra.mxu0 %v5467
    %5517 = vmatprep.subr.mxu0 0.0
    %5518 = vmatpush1.msra.mxu0 %v5466
    %5519 = vmatprep.subr.mxu0 0.0
    %5520 = vmatpush1.msra.mxu0 %v5465
    %5521 = vmatprep.subr.mxu0 0.0
    %5522 = vmatpush1.msra.mxu0 %v5464
    %5523 = vmatprep.subr.mxu0 0.0
    %5524 = vmatpush1.msra.mxu0 %v5463
    %5525 = vmatprep.subr.mxu0 0.0
    %5526 = vmatpush1.msra.mxu0 %v5462
    %5527 = vmatprep.subr.mxu0 0.0
    %5528 = vmatpush1.msra.mxu0 %v5461
    %5529 = vmatprep.subr.mxu0 0.0
    %5530 = vmatpush1.msra.mxu0 %v5460
    %5531 = vmatprep.subr.mxu0 0.0
    %5532 = vmatpush1.msra.mxu0 %v5459
    %5533 = vmatprep.subr.mxu0 0.0
    %5534 = vmatpush1.msra.mxu0 %v5458
    %5535 = vmatprep.subr.mxu0 0.0
    %5536 = vmatpush1.msra.mxu0 %v5457
    %5537 = vmatprep.subr.mxu0 0.0
    %5538 = vmatpush1.msra.mxu0 %v5456
    %5539 = vmatprep.subr.mxu0 0.0
    %5540 = vmatpush1.msra.mxu0 %v5455
    %5541 = vmatprep.subr.mxu0 0.0
    %5542 = vmatpush2.msra.mxu0 %v5486
    %5543 = vmatprep.subr.mxu0 0.0
    %5544 = vmatpush2.msra.mxu0 %v5485
    %5545 = vmatprep.subr.mxu0 0.0
    %5546 = vmatpush2.msra.mxu0 %v5484
    %5547 = vmatprep.subr.mxu0 0.0
    %5548 = vmatpush2.msra.mxu0 %v5483
    %5549 = vmatprep.subr.mxu0 0.0
    %5550 = vmatpush2.msra.mxu0 %v5482
    %5551 = vmatprep.subr.mxu0 0.0
    %5552 = vmatpush2.msra.mxu0 %v5481
    %5553 = vmatprep.subr.mxu0 0.0
    %5554 = vmatpush2.msra.mxu0 %v5480
    %5555 = vmatprep.subr.mxu0 0.0
    %5556 = vmatpush2.msra.mxu0 %v5479
    %5557 = vmatprep.subr.mxu0 0.0
    %5558 = vmatpush2.msra.mxu0 %v5478
    %5559 = vmatprep.subr.mxu0 0.0
    %5560 = vmatpush2.msra.mxu0 %v5477
    %5561 = vmatprep.subr.mxu0 0.0
    %5562 = vmatpush2.msra.mxu0 %v5476
    %5563 = vmatprep.subr.mxu0 0.0
    %5564 = vmatpush2.msra.mxu0 %v5475
    %5565 = vmatprep.subr.mxu0 0.0
    %5566 = vmatpush2.msra.mxu0 %v5474
    %5567 = vmatprep.subr.mxu0 0.0
    %5568 = vmatpush2.msra.mxu0 %v5473
    %5569 = vmatprep.subr.mxu0 0.0
    %5570 = vmatpush2.msra.mxu0 %v5472
    %5571 = vmatprep.subr.mxu0 0.0
    %5572 = vmatpush2.msra.mxu0 %v5471
    %5573 = vmatprep.mubr.f32.mxu0 %v5504
    %5574 = vmatmul.mubr.f32.gmra.mxu0 %v5503
    %v5575 = vpop.f32.mrf.mxu0
    %v5576 = vadd.f32 0.0, %v5575
    %v5577 = vpop.f32.mrf.mxu0
    %5578 = vdwg.mxu0
    %5579 = vmatprep.subr.mxu0 0.0
    %5580 = vmatpush1.msra.mxu0 %v5502
    %5581 = vmatprep.subr.mxu0 0.0
    %5582 = vmatpush1.msra.mxu0 %v5501
    %5583 = vmatprep.subr.mxu0 0.0
    %5584 = vmatpush1.msra.mxu0 %v5500
    %5585 = vmatprep.subr.mxu0 0.0
    %5586 = vmatpush1.msra.mxu0 %v5499
    %5587 = vmatprep.subr.mxu0 0.0
    %5588 = vmatpush1.msra.mxu0 %v5498
    %5589 = vmatprep.subr.mxu0 0.0
    %5590 = vmatpush1.msra.mxu0 %v5497
    %5591 = vmatprep.subr.mxu0 0.0
    %5592 = vmatpush1.msra.mxu0 %v5496
    %5593 = vmatprep.subr.mxu0 0.0
    %5594 = vmatpush1.msra.mxu0 %v5495
    %5595 = vmatprep.subr.mxu0 0.0
    %5596 = vmatpush1.msra.mxu0 %v5494
    %5597 = vmatprep.subr.mxu0 0.0
    %5598 = vmatpush1.msra.mxu0 %v5493
    %5599 = vmatprep.subr.mxu0 0.0
    %5600 = vmatpush1.msra.mxu0 %v5492
    %5601 = vmatprep.subr.mxu0 0.0
    %5602 = vmatpush1.msra.mxu0 %v5491
    %5603 = vmatprep.subr.mxu0 0.0
    %5604 = vmatpush1.msra.mxu0 %v5490
    %5605 = vmatprep.subr.mxu0 0.0
    %5606 = vmatpush1.msra.mxu0 %v5489
    %5607 = vmatprep.subr.mxu0 0.0
    %5608 = vmatpush1.msra.mxu0 %v5488
    %5609 = vmatprep.subr.mxu0 0.0
    %5610 = vmatpush1.msra.mxu0 %v5487
    %5611 = vmatprep.subr.mxu0 0.0
    %5612 = vmatpush2.msra.mxu0 0.0
    %5613 = vmatprep.subr.mxu0 0.0
    %5614 = vmatpush2.msra.mxu0 0.0
    %5615 = vmatprep.subr.mxu0 0.0
    %5616 = vmatpush2.msra.mxu0 0.0
    %5617 = vmatprep.subr.mxu0 0.0
    %5618 = vmatpush2.msra.mxu0 0.0
    %5619 = vmatprep.subr.mxu0 0.0
    %5620 = vmatpush2.msra.mxu0 0.0
    %5621 = vmatprep.subr.mxu0 0.0
    %5622 = vmatpush2.msra.mxu0 0.0
    %5623 = vmatprep.subr.mxu0 0.0
    %5624 = vmatpush2.msra.mxu0 0.0
    %5625 = vmatprep.subr.mxu0 0.0
    %5626 = vmatpush2.msra.mxu0 0.0
    %5627 = vmatprep.subr.mxu0 0.0
    %5628 = vmatpush2.msra.mxu0 0.0
    %5629 = vmatprep.subr.mxu0 0.0
    %5630 = vmatpush2.msra.mxu0 0.0
    %5631 = vmatprep.subr.mxu0 0.0
    %5632 = vmatpush2.msra.mxu0 0.0
    %5633 = vmatprep.subr.mxu0 0.0
    %5634 = vmatpush2.msra.mxu0 0.0
    %5635 = vmatprep.subr.mxu0 0.0
    %5636 = vmatpush2.msra.mxu0 0.0
    %5637 = vmatprep.subr.mxu0 0.0
    %5638 = vmatpush2.msra.mxu0 0.0
    %5639 = vmatprep.subr.mxu0 0.0
    %5640 = vmatpush2.msra.mxu0 0.0
    %5641 = vmatprep.subr.mxu0 0.0
    %5642 = vmatpush2.msra.mxu0 0.0
    %5643 = vmatprep.mubr.f32.mxu0 0.0
    %5644 = vmatmul.mubr.f32.gmra.mxu0 %v5505
    %v5645 = vpop.f32.mrf.mxu0
    %v5646 = vadd.f32 %v5576, %v5645
    %v5647 = vpop.f32.mrf.mxu0
    %5648 = vdwg.mxu0
    %v5649 = vadd.f32 %v5303, %v5646
    %v5650 = vrot.slane %v4771, 2
    %v5651 = vrot.slane %v4772, 2
    %v5652 = vrot.slane %v4773, 2
    %5656 = vmatprep.subr.mxu0 0.0
    %5657 = vmatpush1.msra.mxu0 %v5470
    %5658 = vmatprep.subr.mxu0 0.0
    %5659 = vmatpush1.msra.mxu0 %v5469
    %5660 = vmatprep.subr.mxu0 0.0
    %5661 = vmatpush1.msra.mxu0 %v5468
    %5662 = vmatprep.subr.mxu0 0.0
    %5663 = vmatpush1.msra.mxu0 %v5467
    %5664 = vmatprep.subr.mxu0 0.0
    %5665 = vmatpush1.msra.mxu0 %v5466
    %5666 = vmatprep.subr.mxu0 0.0
    %5667 = vmatpush1.msra.mxu0 %v5465
    %5668 = vmatprep.subr.mxu0 0.0
    %5669 = vmatpush1.msra.mxu0 %v5464
    %5670 = vmatprep.subr.mxu0 0.0
    %5671 = vmatpush1.msra.mxu0 %v5463
    %5672 = vmatprep.subr.mxu0 0.0
    %5673 = vmatpush1.msra.mxu0 %v5462
    %5674 = vmatprep.subr.mxu0 0.0
    %5675 = vmatpush1.msra.mxu0 %v5461
    %5676 = vmatprep.subr.mxu0 0.0
    %5677 = vmatpush1.msra.mxu0 %v5460
    %5678 = vmatprep.subr.mxu0 0.0
    %5679 = vmatpush1.msra.mxu0 %v5459
    %5680 = vmatprep.subr.mxu0 0.0
    %5681 = vmatpush1.msra.mxu0 %v5458
    %5682 = vmatprep.subr.mxu0 0.0
    %5683 = vmatpush1.msra.mxu0 %v5457
    %5684 = vmatprep.subr.mxu0 0.0
    %5685 = vmatpush1.msra.mxu0 %v5456
    %5686 = vmatprep.subr.mxu0 0.0
    %5687 = vmatpush1.msra.mxu0 %v5455
    %5688 = vmatprep.subr.mxu0 0.0
    %5689 = vmatpush2.msra.mxu0 %v5486
    %5690 = vmatprep.subr.mxu0 0.0
    %5691 = vmatpush2.msra.mxu0 %v5485
    %5692 = vmatprep.subr.mxu0 0.0
    %5693 = vmatpush2.msra.mxu0 %v5484
    %5694 = vmatprep.subr.mxu0 0.0
    %5695 = vmatpush2.msra.mxu0 %v5483
    %5696 = vmatprep.subr.mxu0 0.0
    %5697 = vmatpush2.msra.mxu0 %v5482
    %5698 = vmatprep.subr.mxu0 0.0
    %5699 = vmatpush2.msra.mxu0 %v5481
    %5700 = vmatprep.subr.mxu0 0.0
    %5701 = vmatpush2.msra.mxu0 %v5480
    %5702 = vmatprep.subr.mxu0 0.0
    %5703 = vmatpush2.msra.mxu0 %v5479
    %5704 = vmatprep.subr.mxu0 0.0
    %5705 = vmatpush2.msra.mxu0 %v5478
    %5706 = vmatprep.subr.mxu0 0.0
    %5707 = vmatpush2.msra.mxu0 %v5477
    %5708 = vmatprep.subr.mxu0 0.0
    %5709 = vmatpush2.msra.mxu0 %v5476
    %5710 = vmatprep.subr.mxu0 0.0
    %5711 = vmatpush2.msra.mxu0 %v5475
    %5712 = vmatprep.subr.mxu0 0.0
    %5713 = vmatpush2.msra.mxu0 %v5474
    %5714 = vmatprep.subr.mxu0 0.0
    %5715 = vmatpush2.msra.mxu0 %v5473
    %5716 = vmatprep.subr.mxu0 0.0
    %5717 = vmatpush2.msra.mxu0 %v5472
    %5718 = vmatprep.subr.mxu0 0.0
    %5719 = vmatpush2.msra.mxu0 %v5471
    %5720 = vmatprep.mubr.f32.mxu0 %v5651
    %5721 = vmatmul.mubr.f32.gmra.mxu0 %v5650
    %v5722 = vpop.f32.mrf.mxu0
    %v5723 = vadd.f32 0.0, %v5722
    %v5724 = vpop.f32.mrf.mxu0
    %5725 = vdwg.mxu0
    %5726 = vmatprep.subr.mxu0 0.0
    %5727 = vmatpush1.msra.mxu0 %v5502
    %5728 = vmatprep.subr.mxu0 0.0
    %5729 = vmatpush1.msra.mxu0 %v5501
    %5730 = vmatprep.subr.mxu0 0.0
    %5731 = vmatpush1.msra.mxu0 %v5500
    %5732 = vmatprep.subr.mxu0 0.0
    %5733 = vmatpush1.msra.mxu0 %v5499
    %5734 = vmatprep.subr.mxu0 0.0
    %5735 = vmatpush1.msra.mxu0 %v5498
    %5736 = vmatprep.subr.mxu0 0.0
    %5737 = vmatpush1.msra.mxu0 %v5497
    %5738 = vmatprep.subr.mxu0 0.0
    %5739 = vmatpush1.msra.mxu0 %v5496
    %5740 = vmatprep.subr.mxu0 0.0
    %5741 = vmatpush1.msra.mxu0 %v5495
    %5742 = vmatprep.subr.mxu0 0.0
    %5743 = vmatpush1.msra.mxu0 %v5494
    %5744 = vmatprep.subr.mxu0 0.0
    %5745 = vmatpush1.msra.mxu0 %v5493
    %5746 = vmatprep.subr.mxu0 0.0
    %5747 = vmatpush1.msra.mxu0 %v5492
    %5748 = vmatprep.subr.mxu0 0.0
    %5749 = vmatpush1.msra.mxu0 %v5491
    %5750 = vmatprep.subr.mxu0 0.0
    %5751 = vmatpush1.msra.mxu0 %v5490
    %5752 = vmatprep.subr.mxu0 0.0
    %5753 = vmatpush1.msra.mxu0 %v5489
    %5754 = vmatprep.subr.mxu0 0.0
    %5755 = vmatpush1.msra.mxu0 %v5488
    %5756 = vmatprep.subr.mxu0 0.0
    %5757 = vmatpush1.msra.mxu0 %v5487
    %5758 = vmatprep.subr.mxu0 0.0
    %5759 = vmatpush2.msra.mxu0 0.0
    %5760 = vmatprep.subr.mxu0 0.0
    %5761 = vmatpush2.msra.mxu0 0.0
    %5762 = vmatprep.subr.mxu0 0.0
    %5763 = vmatpush2.msra.mxu0 0.0
    %5764 = vmatprep.subr.mxu0 0.0
    %5765 = vmatpush2.msra.mxu0 0.0
    %5766 = vmatprep.subr.mxu0 0.0
    %5767 = vmatpush2.msra.mxu0 0.0
    %5768 = vmatprep.subr.mxu0 0.0
    %5769 = vmatpush2.msra.mxu0 0.0
    %5770 = vmatprep.subr.mxu0 0.0
    %5771 = vmatpush2.msra.mxu0 0.0
    %5772 = vmatprep.subr.mxu0 0.0
    %5773 = vmatpush2.msra.mxu0 0.0
    %5774 = vmatprep.subr.mxu0 0.0
    %5775 = vmatpush2.msra.mxu0 0.0
    %5776 = vmatprep.subr.mxu0 0.0
    %5777 = vmatpush2.msra.mxu0 0.0
    %5778 = vmatprep.subr.mxu0 0.0
    %5779 = vmatpush2.msra.mxu0 0.0
    %5780 = vmatprep.subr.mxu0 0.0
    %5781 = vmatpush2.msra.mxu0 0.0
    %5782 = vmatprep.subr.mxu0 0.0
    %5783 = vmatpush2.msra.mxu0 0.0
    %5784 = vmatprep.subr.mxu0 0.0
    %5785 = vmatpush2.msra.mxu0 0.0
    %5786 = vmatprep.subr.mxu0 0.0
    %5787 = vmatpush2.msra.mxu0 0.0
    %5788 = vmatprep.subr.mxu0 0.0
    %5789 = vmatpush2.msra.mxu0 0.0
    %5790 = vmatprep.mubr.f32.mxu0 0.0
    %5791 = vmatmul.mubr.f32.gmra.mxu0 %v5652
    %v5792 = vpop.f32.mrf.mxu0
    %v5793 = vadd.f32 %v5723, %v5792
    %v5794 = vpop.f32.mrf.mxu0
    %5795 = vdwg.mxu0
    %v5796 = vadd.f32 %v5453, %v5793
    %s5797 = scalar_lea.vmem [#allocation13], 1152
    %v5798 = vld [vmem:[%s5797] sm:$0xff]
    %v5799 = vld [vmem:[%s5797 + $0x8] sm:$0xff]
    %v5800 = vld [vmem:[%s5797 + $0x10] sm:$0xff]
    %v5801 = vld [vmem:[%s5797 + $0x18] sm:$0xff]
    %v5802 = vld [vmem:[%s5797 + $0x20] sm:$0xff]
    %v5803 = vld [vmem:[%s5797 + $0x28] sm:$0xff]
    %v5804 = vld [vmem:[%s5797 + $0x30] sm:$0xff]
    %v5805 = vld [vmem:[%s5797 + $0x38] sm:$0xff]
    %v5806 = vld [vmem:[%s5797 + $0x40] sm:$0xff]
    %v5807 = vld [vmem:[%s5797 + $0x48] sm:$0xff]
    %v5808 = vld [vmem:[%s5797 + $0x50] sm:$0xff]
    %v5809 = vld [vmem:[%s5797 + $0x58] sm:$0xff]
    %v5810 = vld [vmem:[%s5797 + $0x60] sm:$0xff]
    %v5811 = vld [vmem:[%s5797 + $0x68] sm:$0xff]
    %v5812 = vld [vmem:[%s5797 + $0x70] sm:$0xff]
    %v5813 = vld [vmem:[%s5797 + $0x78] sm:$0xff]
    %v5814 = vld [vmem:[%s5797 + $0x80] sm:$0xff]
    %v5815 = vld [vmem:[%s5797 + $0x88] sm:$0xff]
    %v5816 = vld [vmem:[%s5797 + $0x90] sm:$0xff]
    %v5817 = vld [vmem:[%s5797 + $0x98] sm:$0xff]
    %v5818 = vld [vmem:[%s5797 + $0xa0] sm:$0xff]
    %v5819 = vld [vmem:[%s5797 + $0xa8] sm:$0xff]
    %v5820 = vld [vmem:[%s5797 + $0xb0] sm:$0xff]
    %v5821 = vld [vmem:[%s5797 + $0xb8] sm:$0xff]
    %v5822 = vld [vmem:[%s5797 + $0xc0] sm:$0xff]
    %v5823 = vld [vmem:[%s5797 + $0xc8] sm:$0xff]
    %v5824 = vld [vmem:[%s5797 + $0xd0] sm:$0xff]
    %v5825 = vld [vmem:[%s5797 + $0xd8] sm:$0xff]
    %v5826 = vld [vmem:[%s5797 + $0xe0] sm:$0xff]
    %v5827 = vld [vmem:[%s5797 + $0xe8] sm:$0xff]
    %v5828 = vld [vmem:[%s5797 + $0xf0] sm:$0xff]
    %v5829 = vld [vmem:[%s5797 + $0xf8] sm:$0xff]
    %v5830 = vld [vmem:[%s5797 + $0x100] sm:$0xff]
    %v5831 = vld [vmem:[%s5797 + $0x108] sm:$0xff]
    %v5832 = vld [vmem:[%s5797 + $0x110] sm:$0xff]
    %v5833 = vld [vmem:[%s5797 + $0x118] sm:$0xff]
    %v5834 = vld [vmem:[%s5797 + $0x120] sm:$0xff]
    %v5835 = vld [vmem:[%s5797 + $0x128] sm:$0xff]
    %v5836 = vld [vmem:[%s5797 + $0x130] sm:$0xff]
    %v5837 = vld [vmem:[%s5797 + $0x138] sm:$0xff]
    %v5838 = vld [vmem:[%s5797 + $0x140] sm:$0xff]
    %v5839 = vld [vmem:[%s5797 + $0x148] sm:$0xff]
    %v5840 = vld [vmem:[%s5797 + $0x150] sm:$0xff]
    %v5841 = vld [vmem:[%s5797 + $0x158] sm:$0xff]
    %v5842 = vld [vmem:[%s5797 + $0x160] sm:$0xff]
    %v5843 = vld [vmem:[%s5797 + $0x168] sm:$0xff]
    %v5844 = vld [vmem:[%s5797 + $0x170] sm:$0xff]
    %v5845 = vld [vmem:[%s5797 + $0x178] sm:$0xff]
    %v5846 = vrot.slane %v4768, 3
    %v5847 = vrot.slane %v4769, 3
    %v5848 = vrot.slane %v4770, 3
    %5852 = vmatprep.subr.mxu0 0.0
    %5853 = vmatpush1.msra.mxu0 %v5813
    %5854 = vmatprep.subr.mxu0 0.0
    %5855 = vmatpush1.msra.mxu0 %v5812
    %5856 = vmatprep.subr.mxu0 0.0
    %5857 = vmatpush1.msra.mxu0 %v5811
    %5858 = vmatprep.subr.mxu0 0.0
    %5859 = vmatpush1.msra.mxu0 %v5810
    %5860 = vmatprep.subr.mxu0 0.0
    %5861 = vmatpush1.msra.mxu0 %v5809
    %5862 = vmatprep.subr.mxu0 0.0
    %5863 = vmatpush1.msra.mxu0 %v5808
    %5864 = vmatprep.subr.mxu0 0.0
    %5865 = vmatpush1.msra.mxu0 %v5807
    %5866 = vmatprep.subr.mxu0 0.0
    %5867 = vmatpush1.msra.mxu0 %v5806
    %5868 = vmatprep.subr.mxu0 0.0
    %5869 = vmatpush1.msra.mxu0 %v5805
    %5870 = vmatprep.subr.mxu0 0.0
    %5871 = vmatpush1.msra.mxu0 %v5804
    %5872 = vmatprep.subr.mxu0 0.0
    %5873 = vmatpush1.msra.mxu0 %v5803
    %5874 = vmatprep.subr.mxu0 0.0
    %5875 = vmatpush1.msra.mxu0 %v5802
    %5876 = vmatprep.subr.mxu0 0.0
    %5877 = vmatpush1.msra.mxu0 %v5801
    %5878 = vmatprep.subr.mxu0 0.0
    %5879 = vmatpush1.msra.mxu0 %v5800
    %5880 = vmatprep.subr.mxu0 0.0
    %5881 = vmatpush1.msra.mxu0 %v5799
    %5882 = vmatprep.subr.mxu0 0.0
    %5883 = vmatpush1.msra.mxu0 %v5798
    %5884 = vmatprep.subr.mxu0 0.0
    %5885 = vmatpush2.msra.mxu0 %v5829
    %5886 = vmatprep.subr.mxu0 0.0
    %5887 = vmatpush2.msra.mxu0 %v5828
    %5888 = vmatprep.subr.mxu0 0.0
    %5889 = vmatpush2.msra.mxu0 %v5827
    %5890 = vmatprep.subr.mxu0 0.0
    %5891 = vmatpush2.msra.mxu0 %v5826
    %5892 = vmatprep.subr.mxu0 0.0
    %5893 = vmatpush2.msra.mxu0 %v5825
    %5894 = vmatprep.subr.mxu0 0.0
    %5895 = vmatpush2.msra.mxu0 %v5824
    %5896 = vmatprep.subr.mxu0 0.0
    %5897 = vmatpush2.msra.mxu0 %v5823
    %5898 = vmatprep.subr.mxu0 0.0
    %5899 = vmatpush2.msra.mxu0 %v5822
    %5900 = vmatprep.subr.mxu0 0.0
    %5901 = vmatpush2.msra.mxu0 %v5821
    %5902 = vmatprep.subr.mxu0 0.0
    %5903 = vmatpush2.msra.mxu0 %v5820
    %5904 = vmatprep.subr.mxu0 0.0
    %5905 = vmatpush2.msra.mxu0 %v5819
    %5906 = vmatprep.subr.mxu0 0.0
    %5907 = vmatpush2.msra.mxu0 %v5818
    %5908 = vmatprep.subr.mxu0 0.0
    %5909 = vmatpush2.msra.mxu0 %v5817
    %5910 = vmatprep.subr.mxu0 0.0
    %5911 = vmatpush2.msra.mxu0 %v5816
    %5912 = vmatprep.subr.mxu0 0.0
    %5913 = vmatpush2.msra.mxu0 %v5815
    %5914 = vmatprep.subr.mxu0 0.0
    %5915 = vmatpush2.msra.mxu0 %v5814
    %5916 = vmatprep.mubr.f32.mxu0 %v5847
    %5917 = vmatmul.mubr.f32.gmra.mxu0 %v5846
    %v5918 = vpop.f32.mrf.mxu0
    %v5919 = vadd.f32 0.0, %v5918
    %v5920 = vpop.f32.mrf.mxu0
    %5921 = vdwg.mxu0
    %5922 = vmatprep.subr.mxu0 0.0
    %5923 = vmatpush1.msra.mxu0 %v5845
    %5924 = vmatprep.subr.mxu0 0.0
    %5925 = vmatpush1.msra.mxu0 %v5844
    %5926 = vmatprep.subr.mxu0 0.0
    %5927 = vmatpush1.msra.mxu0 %v5843
    %5928 = vmatprep.subr.mxu0 0.0
    %5929 = vmatpush1.msra.mxu0 %v5842
    %5930 = vmatprep.subr.mxu0 0.0
    %5931 = vmatpush1.msra.mxu0 %v5841
    %5932 = vmatprep.subr.mxu0 0.0
    %5933 = vmatpush1.msra.mxu0 %v5840
    %5934 = vmatprep.subr.mxu0 0.0
    %5935 = vmatpush1.msra.mxu0 %v5839
    %5936 = vmatprep.subr.mxu0 0.0
    %5937 = vmatpush1.msra.mxu0 %v5838
    %5938 = vmatprep.subr.mxu0 0.0
    %5939 = vmatpush1.msra.mxu0 %v5837
    %5940 = vmatprep.subr.mxu0 0.0
    %5941 = vmatpush1.msra.mxu0 %v5836
    %5942 = vmatprep.subr.mxu0 0.0
    %5943 = vmatpush1.msra.mxu0 %v5835
    %5944 = vmatprep.subr.mxu0 0.0
    %5945 = vmatpush1.msra.mxu0 %v5834
    %5946 = vmatprep.subr.mxu0 0.0
    %5947 = vmatpush1.msra.mxu0 %v5833
    %5948 = vmatprep.subr.mxu0 0.0
    %5949 = vmatpush1.msra.mxu0 %v5832
    %5950 = vmatprep.subr.mxu0 0.0
    %5951 = vmatpush1.msra.mxu0 %v5831
    %5952 = vmatprep.subr.mxu0 0.0
    %5953 = vmatpush1.msra.mxu0 %v5830
    %5954 = vmatprep.subr.mxu0 0.0
    %5955 = vmatpush2.msra.mxu0 0.0
    %5956 = vmatprep.subr.mxu0 0.0
    %5957 = vmatpush2.msra.mxu0 0.0
    %5958 = vmatprep.subr.mxu0 0.0
    %5959 = vmatpush2.msra.mxu0 0.0
    %5960 = vmatprep.subr.mxu0 0.0
    %5961 = vmatpush2.msra.mxu0 0.0
    %5962 = vmatprep.subr.mxu0 0.0
    %5963 = vmatpush2.msra.mxu0 0.0
    %5964 = vmatprep.subr.mxu0 0.0
    %5965 = vmatpush2.msra.mxu0 0.0
    %5966 = vmatprep.subr.mxu0 0.0
    %5967 = vmatpush2.msra.mxu0 0.0
    %5968 = vmatprep.subr.mxu0 0.0
    %5969 = vmatpush2.msra.mxu0 0.0
    %5970 = vmatprep.subr.mxu0 0.0
    %5971 = vmatpush2.msra.mxu0 0.0
    %5972 = vmatprep.subr.mxu0 0.0
    %5973 = vmatpush2.msra.mxu0 0.0
    %5974 = vmatprep.subr.mxu0 0.0
    %5975 = vmatpush2.msra.mxu0 0.0
    %5976 = vmatprep.subr.mxu0 0.0
    %5977 = vmatpush2.msra.mxu0 0.0
    %5978 = vmatprep.subr.mxu0 0.0
    %5979 = vmatpush2.msra.mxu0 0.0
    %5980 = vmatprep.subr.mxu0 0.0
    %5981 = vmatpush2.msra.mxu0 0.0
    %5982 = vmatprep.subr.mxu0 0.0
    %5983 = vmatpush2.msra.mxu0 0.0
    %5984 = vmatprep.subr.mxu0 0.0
    %5985 = vmatpush2.msra.mxu0 0.0
    %5986 = vmatprep.mubr.f32.mxu0 0.0
    %5987 = vmatmul.mubr.f32.gmra.mxu0 %v5848
    %v5988 = vpop.f32.mrf.mxu0
    %v5989 = vadd.f32 %v5919, %v5988
    %v5990 = vpop.f32.mrf.mxu0
    %5991 = vdwg.mxu0
    %v5992 = vadd.f32 %v5649, %v5989
    %v5993 = vrot.slane %v4771, 3
    %v5994 = vrot.slane %v4772, 3
    %v5995 = vrot.slane %v4773, 3
    %5999 = vmatprep.subr.mxu0 0.0
    %6000 = vmatpush1.msra.mxu0 %v5813
    %6001 = vmatprep.subr.mxu0 0.0
    %6002 = vmatpush1.msra.mxu0 %v5812
    %6003 = vmatprep.subr.mxu0 0.0
    %6004 = vmatpush1.msra.mxu0 %v5811
    %6005 = vmatprep.subr.mxu0 0.0
    %6006 = vmatpush1.msra.mxu0 %v5810
    %6007 = vmatprep.subr.mxu0 0.0
    %6008 = vmatpush1.msra.mxu0 %v5809
    %6009 = vmatprep.subr.mxu0 0.0
    %6010 = vmatpush1.msra.mxu0 %v5808
    %6011 = vmatprep.subr.mxu0 0.0
    %6012 = vmatpush1.msra.mxu0 %v5807
    %6013 = vmatprep.subr.mxu0 0.0
    %6014 = vmatpush1.msra.mxu0 %v5806
    %6015 = vmatprep.subr.mxu0 0.0
    %6016 = vmatpush1.msra.mxu0 %v5805
    %6017 = vmatprep.subr.mxu0 0.0
    %6018 = vmatpush1.msra.mxu0 %v5804
    %6019 = vmatprep.subr.mxu0 0.0
    %6020 = vmatpush1.msra.mxu0 %v5803
    %6021 = vmatprep.subr.mxu0 0.0
    %6022 = vmatpush1.msra.mxu0 %v5802
    %6023 = vmatprep.subr.mxu0 0.0
    %6024 = vmatpush1.msra.mxu0 %v5801
    %6025 = vmatprep.subr.mxu0 0.0
    %6026 = vmatpush1.msra.mxu0 %v5800
    %6027 = vmatprep.subr.mxu0 0.0
    %6028 = vmatpush1.msra.mxu0 %v5799
    %6029 = vmatprep.subr.mxu0 0.0
    %6030 = vmatpush1.msra.mxu0 %v5798
    %6031 = vmatprep.subr.mxu0 0.0
    %6032 = vmatpush2.msra.mxu0 %v5829
    %6033 = vmatprep.subr.mxu0 0.0
    %6034 = vmatpush2.msra.mxu0 %v5828
    %6035 = vmatprep.subr.mxu0 0.0
    %6036 = vmatpush2.msra.mxu0 %v5827
    %6037 = vmatprep.subr.mxu0 0.0
    %6038 = vmatpush2.msra.mxu0 %v5826
    %6039 = vmatprep.subr.mxu0 0.0
    %6040 = vmatpush2.msra.mxu0 %v5825
    %6041 = vmatprep.subr.mxu0 0.0
    %6042 = vmatpush2.msra.mxu0 %v5824
    %6043 = vmatprep.subr.mxu0 0.0
    %6044 = vmatpush2.msra.mxu0 %v5823
    %6045 = vmatprep.subr.mxu0 0.0
    %6046 = vmatpush2.msra.mxu0 %v5822
    %6047 = vmatprep.subr.mxu0 0.0
    %6048 = vmatpush2.msra.mxu0 %v5821
    %6049 = vmatprep.subr.mxu0 0.0
    %6050 = vmatpush2.msra.mxu0 %v5820
    %6051 = vmatprep.subr.mxu0 0.0
    %6052 = vmatpush2.msra.mxu0 %v5819
    %6053 = vmatprep.subr.mxu0 0.0
    %6054 = vmatpush2.msra.mxu0 %v5818
    %6055 = vmatprep.subr.mxu0 0.0
    %6056 = vmatpush2.msra.mxu0 %v5817
    %6057 = vmatprep.subr.mxu0 0.0
    %6058 = vmatpush2.msra.mxu0 %v5816
    %6059 = vmatprep.subr.mxu0 0.0
    %6060 = vmatpush2.msra.mxu0 %v5815
    %6061 = vmatprep.subr.mxu0 0.0
    %6062 = vmatpush2.msra.mxu0 %v5814
    %6063 = vmatprep.mubr.f32.mxu0 %v5994
    %6064 = vmatmul.mubr.f32.gmra.mxu0 %v5993
    %v6065 = vpop.f32.mrf.mxu0
    %v6066 = vadd.f32 0.0, %v6065
    %v6067 = vpop.f32.mrf.mxu0
    %6068 = vdwg.mxu0
    %6069 = vmatprep.subr.mxu0 0.0
    %6070 = vmatpush1.msra.mxu0 %v5845
    %6071 = vmatprep.subr.mxu0 0.0
    %6072 = vmatpush1.msra.mxu0 %v5844
    %6073 = vmatprep.subr.mxu0 0.0
    %6074 = vmatpush1.msra.mxu0 %v5843
    %6075 = vmatprep.subr.mxu0 0.0
    %6076 = vmatpush1.msra.mxu0 %v5842
    %6077 = vmatprep.subr.mxu0 0.0
    %6078 = vmatpush1.msra.mxu0 %v5841
    %6079 = vmatprep.subr.mxu0 0.0
    %6080 = vmatpush1.msra.mxu0 %v5840
    %6081 = vmatprep.subr.mxu0 0.0
    %6082 = vmatpush1.msra.mxu0 %v5839
    %6083 = vmatprep.subr.mxu0 0.0
    %6084 = vmatpush1.msra.mxu0 %v5838
    %6085 = vmatprep.subr.mxu0 0.0
    %6086 = vmatpush1.msra.mxu0 %v5837
    %6087 = vmatprep.subr.mxu0 0.0
    %6088 = vmatpush1.msra.mxu0 %v5836
    %6089 = vmatprep.subr.mxu0 0.0
    %6090 = vmatpush1.msra.mxu0 %v5835
    %6091 = vmatprep.subr.mxu0 0.0
    %6092 = vmatpush1.msra.mxu0 %v5834
    %6093 = vmatprep.subr.mxu0 0.0
    %6094 = vmatpush1.msra.mxu0 %v5833
    %6095 = vmatprep.subr.mxu0 0.0
    %6096 = vmatpush1.msra.mxu0 %v5832
    %6097 = vmatprep.subr.mxu0 0.0
    %6098 = vmatpush1.msra.mxu0 %v5831
    %6099 = vmatprep.subr.mxu0 0.0
    %6100 = vmatpush1.msra.mxu0 %v5830
    %6101 = vmatprep.subr.mxu0 0.0
    %6102 = vmatpush2.msra.mxu0 0.0
    %6103 = vmatprep.subr.mxu0 0.0
    %6104 = vmatpush2.msra.mxu0 0.0
    %6105 = vmatprep.subr.mxu0 0.0
    %6106 = vmatpush2.msra.mxu0 0.0
    %6107 = vmatprep.subr.mxu0 0.0
    %6108 = vmatpush2.msra.mxu0 0.0
    %6109 = vmatprep.subr.mxu0 0.0
    %6110 = vmatpush2.msra.mxu0 0.0
    %6111 = vmatprep.subr.mxu0 0.0
    %6112 = vmatpush2.msra.mxu0 0.0
    %6113 = vmatprep.subr.mxu0 0.0
    %6114 = vmatpush2.msra.mxu0 0.0
    %6115 = vmatprep.subr.mxu0 0.0
    %6116 = vmatpush2.msra.mxu0 0.0
    %6117 = vmatprep.subr.mxu0 0.0
    %6118 = vmatpush2.msra.mxu0 0.0
    %6119 = vmatprep.subr.mxu0 0.0
    %6120 = vmatpush2.msra.mxu0 0.0
    %6121 = vmatprep.subr.mxu0 0.0
    %6122 = vmatpush2.msra.mxu0 0.0
    %6123 = vmatprep.subr.mxu0 0.0
    %6124 = vmatpush2.msra.mxu0 0.0
    %6125 = vmatprep.subr.mxu0 0.0
    %6126 = vmatpush2.msra.mxu0 0.0
    %6127 = vmatprep.subr.mxu0 0.0
    %6128 = vmatpush2.msra.mxu0 0.0
    %6129 = vmatprep.subr.mxu0 0.0
    %6130 = vmatpush2.msra.mxu0 0.0
    %6131 = vmatprep.subr.mxu0 0.0
    %6132 = vmatpush2.msra.mxu0 0.0
    %6133 = vmatprep.mubr.f32.mxu0 0.0
    %6134 = vmatmul.mubr.f32.gmra.mxu0 %v5995
    %v6135 = vpop.f32.mrf.mxu0
    %v6136 = vadd.f32 %v6066, %v6135
    %v6137 = vpop.f32.mrf.mxu0
    %6138 = vdwg.mxu0
    %v6139 = vadd.f32 %v5796, %v6136
    %s6140 = scalar_lea.vmem [#allocation13], 1536
    %v6141 = vld [vmem:[%s6140] sm:$0xff]
    %v6142 = vld [vmem:[%s6140 + $0x8] sm:$0xff]
    %v6143 = vld [vmem:[%s6140 + $0x10] sm:$0xff]
    %v6144 = vld [vmem:[%s6140 + $0x18] sm:$0xff]
    %v6145 = vld [vmem:[%s6140 + $0x20] sm:$0xff]
    %v6146 = vld [vmem:[%s6140 + $0x28] sm:$0xff]
    %v6147 = vld [vmem:[%s6140 + $0x30] sm:$0xff]
    %v6148 = vld [vmem:[%s6140 + $0x38] sm:$0xff]
    %v6149 = vld [vmem:[%s6140 + $0x40] sm:$0xff]
    %v6150 = vld [vmem:[%s6140 + $0x48] sm:$0xff]
    %v6151 = vld [vmem:[%s6140 + $0x50] sm:$0xff]
    %v6152 = vld [vmem:[%s6140 + $0x58] sm:$0xff]
    %v6153 = vld [vmem:[%s6140 + $0x60] sm:$0xff]
    %v6154 = vld [vmem:[%s6140 + $0x68] sm:$0xff]
    %v6155 = vld [vmem:[%s6140 + $0x70] sm:$0xff]
    %v6156 = vld [vmem:[%s6140 + $0x78] sm:$0xff]
    %v6157 = vld [vmem:[%s6140 + $0x80] sm:$0xff]
    %v6158 = vld [vmem:[%s6140 + $0x88] sm:$0xff]
    %v6159 = vld [vmem:[%s6140 + $0x90] sm:$0xff]
    %v6160 = vld [vmem:[%s6140 + $0x98] sm:$0xff]
    %v6161 = vld [vmem:[%s6140 + $0xa0] sm:$0xff]
    %v6162 = vld [vmem:[%s6140 + $0xa8] sm:$0xff]
    %v6163 = vld [vmem:[%s6140 + $0xb0] sm:$0xff]
    %v6164 = vld [vmem:[%s6140 + $0xb8] sm:$0xff]
    %v6165 = vld [vmem:[%s6140 + $0xc0] sm:$0xff]
    %v6166 = vld [vmem:[%s6140 + $0xc8] sm:$0xff]
    %v6167 = vld [vmem:[%s6140 + $0xd0] sm:$0xff]
    %v6168 = vld [vmem:[%s6140 + $0xd8] sm:$0xff]
    %v6169 = vld [vmem:[%s6140 + $0xe0] sm:$0xff]
    %v6170 = vld [vmem:[%s6140 + $0xe8] sm:$0xff]
    %v6171 = vld [vmem:[%s6140 + $0xf0] sm:$0xff]
    %v6172 = vld [vmem:[%s6140 + $0xf8] sm:$0xff]
    %v6173 = vld [vmem:[%s6140 + $0x100] sm:$0xff]
    %v6174 = vld [vmem:[%s6140 + $0x108] sm:$0xff]
    %v6175 = vld [vmem:[%s6140 + $0x110] sm:$0xff]
    %v6176 = vld [vmem:[%s6140 + $0x118] sm:$0xff]
    %v6177 = vld [vmem:[%s6140 + $0x120] sm:$0xff]
    %v6178 = vld [vmem:[%s6140 + $0x128] sm:$0xff]
    %v6179 = vld [vmem:[%s6140 + $0x130] sm:$0xff]
    %v6180 = vld [vmem:[%s6140 + $0x138] sm:$0xff]
    %v6181 = vld [vmem:[%s6140 + $0x140] sm:$0xff]
    %v6182 = vld [vmem:[%s6140 + $0x148] sm:$0xff]
    %v6183 = vld [vmem:[%s6140 + $0x150] sm:$0xff]
    %v6184 = vld [vmem:[%s6140 + $0x158] sm:$0xff]
    %v6185 = vld [vmem:[%s6140 + $0x160] sm:$0xff]
    %v6186 = vld [vmem:[%s6140 + $0x168] sm:$0xff]
    %v6187 = vld [vmem:[%s6140 + $0x170] sm:$0xff]
    %v6188 = vld [vmem:[%s6140 + $0x178] sm:$0xff]
    %v6189 = vrot.slane %v4768, 4
    %v6190 = vrot.slane %v4769, 4
    %v6191 = vrot.slane %v4770, 4
    %6195 = vmatprep.subr.mxu0 0.0
    %6196 = vmatpush1.msra.mxu0 %v6156
    %6197 = vmatprep.subr.mxu0 0.0
    %6198 = vmatpush1.msra.mxu0 %v6155
    %6199 = vmatprep.subr.mxu0 0.0
    %6200 = vmatpush1.msra.mxu0 %v6154
    %6201 = vmatprep.subr.mxu0 0.0
    %6202 = vmatpush1.msra.mxu0 %v6153
    %6203 = vmatprep.subr.mxu0 0.0
    %6204 = vmatpush1.msra.mxu0 %v6152
    %6205 = vmatprep.subr.mxu0 0.0
    %6206 = vmatpush1.msra.mxu0 %v6151
    %6207 = vmatprep.subr.mxu0 0.0
    %6208 = vmatpush1.msra.mxu0 %v6150
    %6209 = vmatprep.subr.mxu0 0.0
    %6210 = vmatpush1.msra.mxu0 %v6149
    %6211 = vmatprep.subr.mxu0 0.0
    %6212 = vmatpush1.msra.mxu0 %v6148
    %6213 = vmatprep.subr.mxu0 0.0
    %6214 = vmatpush1.msra.mxu0 %v6147
    %6215 = vmatprep.subr.mxu0 0.0
    %6216 = vmatpush1.msra.mxu0 %v6146
    %6217 = vmatprep.subr.mxu0 0.0
    %6218 = vmatpush1.msra.mxu0 %v6145
    %6219 = vmatprep.subr.mxu0 0.0
    %6220 = vmatpush1.msra.mxu0 %v6144
    %6221 = vmatprep.subr.mxu0 0.0
    %6222 = vmatpush1.msra.mxu0 %v6143
    %6223 = vmatprep.subr.mxu0 0.0
    %6224 = vmatpush1.msra.mxu0 %v6142
    %6225 = vmatprep.subr.mxu0 0.0
    %6226 = vmatpush1.msra.mxu0 %v6141
    %6227 = vmatprep.subr.mxu0 0.0
    %6228 = vmatpush2.msra.mxu0 %v6172
    %6229 = vmatprep.subr.mxu0 0.0
    %6230 = vmatpush2.msra.mxu0 %v6171
    %6231 = vmatprep.subr.mxu0 0.0
    %6232 = vmatpush2.msra.mxu0 %v6170
    %6233 = vmatprep.subr.mxu0 0.0
    %6234 = vmatpush2.msra.mxu0 %v6169
    %6235 = vmatprep.subr.mxu0 0.0
    %6236 = vmatpush2.msra.mxu0 %v6168
    %6237 = vmatprep.subr.mxu0 0.0
    %6238 = vmatpush2.msra.mxu0 %v6167
    %6239 = vmatprep.subr.mxu0 0.0
    %6240 = vmatpush2.msra.mxu0 %v6166
    %6241 = vmatprep.subr.mxu0 0.0
    %6242 = vmatpush2.msra.mxu0 %v6165
    %6243 = vmatprep.subr.mxu0 0.0
    %6244 = vmatpush2.msra.mxu0 %v6164
    %6245 = vmatprep.subr.mxu0 0.0
    %6246 = vmatpush2.msra.mxu0 %v6163
    %6247 = vmatprep.subr.mxu0 0.0
    %6248 = vmatpush2.msra.mxu0 %v6162
    %6249 = vmatprep.subr.mxu0 0.0
    %6250 = vmatpush2.msra.mxu0 %v6161
    %6251 = vmatprep.subr.mxu0 0.0
    %6252 = vmatpush2.msra.mxu0 %v6160
    %6253 = vmatprep.subr.mxu0 0.0
    %6254 = vmatpush2.msra.mxu0 %v6159
    %6255 = vmatprep.subr.mxu0 0.0
    %6256 = vmatpush2.msra.mxu0 %v6158
    %6257 = vmatprep.subr.mxu0 0.0
    %6258 = vmatpush2.msra.mxu0 %v6157
    %6259 = vmatprep.mubr.f32.mxu0 %v6190
    %6260 = vmatmul.mubr.f32.gmra.mxu0 %v6189
    %v6261 = vpop.f32.mrf.mxu0
    %v6262 = vadd.f32 0.0, %v6261
    %v6263 = vpop.f32.mrf.mxu0
    %6264 = vdwg.mxu0
    %6265 = vmatprep.subr.mxu0 0.0
    %6266 = vmatpush1.msra.mxu0 %v6188
    %6267 = vmatprep.subr.mxu0 0.0
    %6268 = vmatpush1.msra.mxu0 %v6187
    %6269 = vmatprep.subr.mxu0 0.0
    %6270 = vmatpush1.msra.mxu0 %v6186
    %6271 = vmatprep.subr.mxu0 0.0
    %6272 = vmatpush1.msra.mxu0 %v6185
    %6273 = vmatprep.subr.mxu0 0.0
    %6274 = vmatpush1.msra.mxu0 %v6184
    %6275 = vmatprep.subr.mxu0 0.0
    %6276 = vmatpush1.msra.mxu0 %v6183
    %6277 = vmatprep.subr.mxu0 0.0
    %6278 = vmatpush1.msra.mxu0 %v6182
    %6279 = vmatprep.subr.mxu0 0.0
    %6280 = vmatpush1.msra.mxu0 %v6181
    %6281 = vmatprep.subr.mxu0 0.0
    %6282 = vmatpush1.msra.mxu0 %v6180
    %6283 = vmatprep.subr.mxu0 0.0
    %6284 = vmatpush1.msra.mxu0 %v6179
    %6285 = vmatprep.subr.mxu0 0.0
    %6286 = vmatpush1.msra.mxu0 %v6178
    %6287 = vmatprep.subr.mxu0 0.0
    %6288 = vmatpush1.msra.mxu0 %v6177
    %6289 = vmatprep.subr.mxu0 0.0
    %6290 = vmatpush1.msra.mxu0 %v6176
    %6291 = vmatprep.subr.mxu0 0.0
    %6292 = vmatpush1.msra.mxu0 %v6175
    %6293 = vmatprep.subr.mxu0 0.0
    %6294 = vmatpush1.msra.mxu0 %v6174
    %6295 = vmatprep.subr.mxu0 0.0
    %6296 = vmatpush1.msra.mxu0 %v6173
    %6297 = vmatprep.subr.mxu0 0.0
    %6298 = vmatpush2.msra.mxu0 0.0
    %6299 = vmatprep.subr.mxu0 0.0
    %6300 = vmatpush2.msra.mxu0 0.0
    %6301 = vmatprep.subr.mxu0 0.0
    %6302 = vmatpush2.msra.mxu0 0.0
    %6303 = vmatprep.subr.mxu0 0.0
    %6304 = vmatpush2.msra.mxu0 0.0
    %6305 = vmatprep.subr.mxu0 0.0
    %6306 = vmatpush2.msra.mxu0 0.0
    %6307 = vmatprep.subr.mxu0 0.0
    %6308 = vmatpush2.msra.mxu0 0.0
    %6309 = vmatprep.subr.mxu0 0.0
    %6310 = vmatpush2.msra.mxu0 0.0
    %6311 = vmatprep.subr.mxu0 0.0
    %6312 = vmatpush2.msra.mxu0 0.0
    %6313 = vmatprep.subr.mxu0 0.0
    %6314 = vmatpush2.msra.mxu0 0.0
    %6315 = vmatprep.subr.mxu0 0.0
    %6316 = vmatpush2.msra.mxu0 0.0
    %6317 = vmatprep.subr.mxu0 0.0
    %6318 = vmatpush2.msra.mxu0 0.0
    %6319 = vmatprep.subr.mxu0 0.0
    %6320 = vmatpush2.msra.mxu0 0.0
    %6321 = vmatprep.subr.mxu0 0.0
    %6322 = vmatpush2.msra.mxu0 0.0
    %6323 = vmatprep.subr.mxu0 0.0
    %6324 = vmatpush2.msra.mxu0 0.0
    %6325 = vmatprep.subr.mxu0 0.0
    %6326 = vmatpush2.msra.mxu0 0.0
    %6327 = vmatprep.subr.mxu0 0.0
    %6328 = vmatpush2.msra.mxu0 0.0
    %6329 = vmatprep.mubr.f32.mxu0 0.0
    %6330 = vmatmul.mubr.f32.gmra.mxu0 %v6191
    %v6331 = vpop.f32.mrf.mxu0
    %v6332 = vadd.f32 %v6262, %v6331
    %v6333 = vpop.f32.mrf.mxu0
    %6334 = vdwg.mxu0
    %v6335 = vadd.f32 %v5992, %v6332
    %v6336 = vrot.slane %v4771, 4
    %v6337 = vrot.slane %v4772, 4
    %v6338 = vrot.slane %v4773, 4
    %6342 = vmatprep.subr.mxu0 0.0
    %6343 = vmatpush1.msra.mxu0 %v6156
    %6344 = vmatprep.subr.mxu0 0.0
    %6345 = vmatpush1.msra.mxu0 %v6155
    %6346 = vmatprep.subr.mxu0 0.0
    %6347 = vmatpush1.msra.mxu0 %v6154
    %6348 = vmatprep.subr.mxu0 0.0
    %6349 = vmatpush1.msra.mxu0 %v6153
    %6350 = vmatprep.subr.mxu0 0.0
    %6351 = vmatpush1.msra.mxu0 %v6152
    %6352 = vmatprep.subr.mxu0 0.0
    %6353 = vmatpush1.msra.mxu0 %v6151
    %6354 = vmatprep.subr.mxu0 0.0
    %6355 = vmatpush1.msra.mxu0 %v6150
    %6356 = vmatprep.subr.mxu0 0.0
    %6357 = vmatpush1.msra.mxu0 %v6149
    %6358 = vmatprep.subr.mxu0 0.0
    %6359 = vmatpush1.msra.mxu0 %v6148
    %6360 = vmatprep.subr.mxu0 0.0
    %6361 = vmatpush1.msra.mxu0 %v6147
    %6362 = vmatprep.subr.mxu0 0.0
    %6363 = vmatpush1.msra.mxu0 %v6146
    %6364 = vmatprep.subr.mxu0 0.0
    %6365 = vmatpush1.msra.mxu0 %v6145
    %6366 = vmatprep.subr.mxu0 0.0
    %6367 = vmatpush1.msra.mxu0 %v6144
    %6368 = vmatprep.subr.mxu0 0.0
    %6369 = vmatpush1.msra.mxu0 %v6143
    %6370 = vmatprep.subr.mxu0 0.0
    %6371 = vmatpush1.msra.mxu0 %v6142
    %6372 = vmatprep.subr.mxu0 0.0
    %6373 = vmatpush1.msra.mxu0 %v6141
    %6374 = vmatprep.subr.mxu0 0.0
    %6375 = vmatpush2.msra.mxu0 %v6172
    %6376 = vmatprep.subr.mxu0 0.0
    %6377 = vmatpush2.msra.mxu0 %v6171
    %6378 = vmatprep.subr.mxu0 0.0
    %6379 = vmatpush2.msra.mxu0 %v6170
    %6380 = vmatprep.subr.mxu0 0.0
    %6381 = vmatpush2.msra.mxu0 %v6169
    %6382 = vmatprep.subr.mxu0 0.0
    %6383 = vmatpush2.msra.mxu0 %v6168
    %6384 = vmatprep.subr.mxu0 0.0
    %6385 = vmatpush2.msra.mxu0 %v6167
    %6386 = vmatprep.subr.mxu0 0.0
    %6387 = vmatpush2.msra.mxu0 %v6166
    %6388 = vmatprep.subr.mxu0 0.0
    %6389 = vmatpush2.msra.mxu0 %v6165
    %6390 = vmatprep.subr.mxu0 0.0
    %6391 = vmatpush2.msra.mxu0 %v6164
    %6392 = vmatprep.subr.mxu0 0.0
    %6393 = vmatpush2.msra.mxu0 %v6163
    %6394 = vmatprep.subr.mxu0 0.0
    %6395 = vmatpush2.msra.mxu0 %v6162
    %6396 = vmatprep.subr.mxu0 0.0
    %6397 = vmatpush2.msra.mxu0 %v6161
    %6398 = vmatprep.subr.mxu0 0.0
    %6399 = vmatpush2.msra.mxu0 %v6160
    %6400 = vmatprep.subr.mxu0 0.0
    %6401 = vmatpush2.msra.mxu0 %v6159
    %6402 = vmatprep.subr.mxu0 0.0
    %6403 = vmatpush2.msra.mxu0 %v6158
    %6404 = vmatprep.subr.mxu0 0.0
    %6405 = vmatpush2.msra.mxu0 %v6157
    %6406 = vmatprep.mubr.f32.mxu0 %v6337
    %6407 = vmatmul.mubr.f32.gmra.mxu0 %v6336
    %v6408 = vpop.f32.mrf.mxu0
    %v6409 = vadd.f32 0.0, %v6408
    %v6410 = vpop.f32.mrf.mxu0
    %6411 = vdwg.mxu0
    %6412 = vmatprep.subr.mxu0 0.0
    %6413 = vmatpush1.msra.mxu0 %v6188
    %6414 = vmatprep.subr.mxu0 0.0
    %6415 = vmatpush1.msra.mxu0 %v6187
    %6416 = vmatprep.subr.mxu0 0.0
    %6417 = vmatpush1.msra.mxu0 %v6186
    %6418 = vmatprep.subr.mxu0 0.0
    %6419 = vmatpush1.msra.mxu0 %v6185
    %6420 = vmatprep.subr.mxu0 0.0
    %6421 = vmatpush1.msra.mxu0 %v6184
    %6422 = vmatprep.subr.mxu0 0.0
    %6423 = vmatpush1.msra.mxu0 %v6183
    %6424 = vmatprep.subr.mxu0 0.0
    %6425 = vmatpush1.msra.mxu0 %v6182
    %6426 = vmatprep.subr.mxu0 0.0
    %6427 = vmatpush1.msra.mxu0 %v6181
    %6428 = vmatprep.subr.mxu0 0.0
    %6429 = vmatpush1.msra.mxu0 %v6180
    %6430 = vmatprep.subr.mxu0 0.0
    %6431 = vmatpush1.msra.mxu0 %v6179
    %6432 = vmatprep.subr.mxu0 0.0
    %6433 = vmatpush1.msra.mxu0 %v6178
    %6434 = vmatprep.subr.mxu0 0.0
    %6435 = vmatpush1.msra.mxu0 %v6177
    %6436 = vmatprep.subr.mxu0 0.0
    %6437 = vmatpush1.msra.mxu0 %v6176
    %6438 = vmatprep.subr.mxu0 0.0
    %6439 = vmatpush1.msra.mxu0 %v6175
    %6440 = vmatprep.subr.mxu0 0.0
    %6441 = vmatpush1.msra.mxu0 %v6174
    %6442 = vmatprep.subr.mxu0 0.0
    %6443 = vmatpush1.msra.mxu0 %v6173
    %6444 = vmatprep.subr.mxu0 0.0
    %6445 = vmatpush2.msra.mxu0 0.0
    %6446 = vmatprep.subr.mxu0 0.0
    %6447 = vmatpush2.msra.mxu0 0.0
    %6448 = vmatprep.subr.mxu0 0.0
    %6449 = vmatpush2.msra.mxu0 0.0
    %6450 = vmatprep.subr.mxu0 0.0
    %6451 = vmatpush2.msra.mxu0 0.0
    %6452 = vmatprep.subr.mxu0 0.0
    %6453 = vmatpush2.msra.mxu0 0.0
    %6454 = vmatprep.subr.mxu0 0.0
    %6455 = vmatpush2.msra.mxu0 0.0
    %6456 = vmatprep.subr.mxu0 0.0
    %6457 = vmatpush2.msra.mxu0 0.0
    %6458 = vmatprep.subr.mxu0 0.0
    %6459 = vmatpush2.msra.mxu0 0.0
    %6460 = vmatprep.subr.mxu0 0.0
    %6461 = vmatpush2.msra.mxu0 0.0
    %6462 = vmatprep.subr.mxu0 0.0
    %6463 = vmatpush2.msra.mxu0 0.0
    %6464 = vmatprep.subr.mxu0 0.0
    %6465 = vmatpush2.msra.mxu0 0.0
    %6466 = vmatprep.subr.mxu0 0.0
    %6467 = vmatpush2.msra.mxu0 0.0
    %6468 = vmatprep.subr.mxu0 0.0
    %6469 = vmatpush2.msra.mxu0 0.0
    %6470 = vmatprep.subr.mxu0 0.0
    %6471 = vmatpush2.msra.mxu0 0.0
    %6472 = vmatprep.subr.mxu0 0.0
    %6473 = vmatpush2.msra.mxu0 0.0
    %6474 = vmatprep.subr.mxu0 0.0
    %6475 = vmatpush2.msra.mxu0 0.0
    %6476 = vmatprep.mubr.f32.mxu0 0.0
    %6477 = vmatmul.mubr.f32.gmra.mxu0 %v6338
    %v6478 = vpop.f32.mrf.mxu0
    %v6479 = vadd.f32 %v6409, %v6478
    %v6480 = vpop.f32.mrf.mxu0
    %6481 = vdwg.mxu0
    %v6482 = vadd.f32 %v6139, %v6479
    %s6483 = scalar_lea.vmem [#allocation13], 1920
    %v6484 = vld [vmem:[%s6483] sm:$0xff]
    %v6485 = vld [vmem:[%s6483 + $0x8] sm:$0xff]
    %v6486 = vld [vmem:[%s6483 + $0x10] sm:$0xff]
    %v6487 = vld [vmem:[%s6483 + $0x18] sm:$0xff]
    %v6488 = vld [vmem:[%s6483 + $0x20] sm:$0xff]
    %v6489 = vld [vmem:[%s6483 + $0x28] sm:$0xff]
    %v6490 = vld [vmem:[%s6483 + $0x30] sm:$0xff]
    %v6491 = vld [vmem:[%s6483 + $0x38] sm:$0xff]
    %v6492 = vld [vmem:[%s6483 + $0x40] sm:$0xff]
    %v6493 = vld [vmem:[%s6483 + $0x48] sm:$0xff]
    %v6494 = vld [vmem:[%s6483 + $0x50] sm:$0xff]
    %v6495 = vld [vmem:[%s6483 + $0x58] sm:$0xff]
    %v6496 = vld [vmem:[%s6483 + $0x60] sm:$0xff]
    %v6497 = vld [vmem:[%s6483 + $0x68] sm:$0xff]
    %v6498 = vld [vmem:[%s6483 + $0x70] sm:$0xff]
    %v6499 = vld [vmem:[%s6483 + $0x78] sm:$0xff]
    %v6500 = vld [vmem:[%s6483 + $0x80] sm:$0xff]
    %v6501 = vld [vmem:[%s6483 + $0x88] sm:$0xff]
    %v6502 = vld [vmem:[%s6483 + $0x90] sm:$0xff]
    %v6503 = vld [vmem:[%s6483 + $0x98] sm:$0xff]
    %v6504 = vld [vmem:[%s6483 + $0xa0] sm:$0xff]
    %v6505 = vld [vmem:[%s6483 + $0xa8] sm:$0xff]
    %v6506 = vld [vmem:[%s6483 + $0xb0] sm:$0xff]
    %v6507 = vld [vmem:[%s6483 + $0xb8] sm:$0xff]
    %v6508 = vld [vmem:[%s6483 + $0xc0] sm:$0xff]
    %v6509 = vld [vmem:[%s6483 + $0xc8] sm:$0xff]
    %v6510 = vld [vmem:[%s6483 + $0xd0] sm:$0xff]
    %v6511 = vld [vmem:[%s6483 + $0xd8] sm:$0xff]
    %v6512 = vld [vmem:[%s6483 + $0xe0] sm:$0xff]
    %v6513 = vld [vmem:[%s6483 + $0xe8] sm:$0xff]
    %v6514 = vld [vmem:[%s6483 + $0xf0] sm:$0xff]
    %v6515 = vld [vmem:[%s6483 + $0xf8] sm:$0xff]
    %v6516 = vld [vmem:[%s6483 + $0x100] sm:$0xff]
    %v6517 = vld [vmem:[%s6483 + $0x108] sm:$0xff]
    %v6518 = vld [vmem:[%s6483 + $0x110] sm:$0xff]
    %v6519 = vld [vmem:[%s6483 + $0x118] sm:$0xff]
    %v6520 = vld [vmem:[%s6483 + $0x120] sm:$0xff]
    %v6521 = vld [vmem:[%s6483 + $0x128] sm:$0xff]
    %v6522 = vld [vmem:[%s6483 + $0x130] sm:$0xff]
    %v6523 = vld [vmem:[%s6483 + $0x138] sm:$0xff]
    %v6524 = vld [vmem:[%s6483 + $0x140] sm:$0xff]
    %v6525 = vld [vmem:[%s6483 + $0x148] sm:$0xff]
    %v6526 = vld [vmem:[%s6483 + $0x150] sm:$0xff]
    %v6527 = vld [vmem:[%s6483 + $0x158] sm:$0xff]
    %v6528 = vld [vmem:[%s6483 + $0x160] sm:$0xff]
    %v6529 = vld [vmem:[%s6483 + $0x168] sm:$0xff]
    %v6530 = vld [vmem:[%s6483 + $0x170] sm:$0xff]
    %v6531 = vld [vmem:[%s6483 + $0x178] sm:$0xff]
    %v6532 = vrot.slane %v4768, 5
    %v6533 = vrot.slane %v4769, 5
    %v6534 = vrot.slane %v4770, 5
    %6538 = vmatprep.subr.mxu0 0.0
    %6539 = vmatpush1.msra.mxu0 %v6499
    %6540 = vmatprep.subr.mxu0 0.0
    %6541 = vmatpush1.msra.mxu0 %v6498
    %6542 = vmatprep.subr.mxu0 0.0
    %6543 = vmatpush1.msra.mxu0 %v6497
    %6544 = vmatprep.subr.mxu0 0.0
    %6545 = vmatpush1.msra.mxu0 %v6496
    %6546 = vmatprep.subr.mxu0 0.0
    %6547 = vmatpush1.msra.mxu0 %v6495
    %6548 = vmatprep.subr.mxu0 0.0
    %6549 = vmatpush1.msra.mxu0 %v6494
    %6550 = vmatprep.subr.mxu0 0.0
    %6551 = vmatpush1.msra.mxu0 %v6493
    %6552 = vmatprep.subr.mxu0 0.0
    %6553 = vmatpush1.msra.mxu0 %v6492
    %6554 = vmatprep.subr.mxu0 0.0
    %6555 = vmatpush1.msra.mxu0 %v6491
    %6556 = vmatprep.subr.mxu0 0.0
    %6557 = vmatpush1.msra.mxu0 %v6490
    %6558 = vmatprep.subr.mxu0 0.0
    %6559 = vmatpush1.msra.mxu0 %v6489
    %6560 = vmatprep.subr.mxu0 0.0
    %6561 = vmatpush1.msra.mxu0 %v6488
    %6562 = vmatprep.subr.mxu0 0.0
    %6563 = vmatpush1.msra.mxu0 %v6487
    %6564 = vmatprep.subr.mxu0 0.0
    %6565 = vmatpush1.msra.mxu0 %v6486
    %6566 = vmatprep.subr.mxu0 0.0
    %6567 = vmatpush1.msra.mxu0 %v6485
    %6568 = vmatprep.subr.mxu0 0.0
    %6569 = vmatpush1.msra.mxu0 %v6484
    %6570 = vmatprep.subr.mxu0 0.0
    %6571 = vmatpush2.msra.mxu0 %v6515
    %6572 = vmatprep.subr.mxu0 0.0
    %6573 = vmatpush2.msra.mxu0 %v6514
    %6574 = vmatprep.subr.mxu0 0.0
    %6575 = vmatpush2.msra.mxu0 %v6513
    %6576 = vmatprep.subr.mxu0 0.0
    %6577 = vmatpush2.msra.mxu0 %v6512
    %6578 = vmatprep.subr.mxu0 0.0
    %6579 = vmatpush2.msra.mxu0 %v6511
    %6580 = vmatprep.subr.mxu0 0.0
    %6581 = vmatpush2.msra.mxu0 %v6510
    %6582 = vmatprep.subr.mxu0 0.0
    %6583 = vmatpush2.msra.mxu0 %v6509
    %6584 = vmatprep.subr.mxu0 0.0
    %6585 = vmatpush2.msra.mxu0 %v6508
    %6586 = vmatprep.subr.mxu0 0.0
    %6587 = vmatpush2.msra.mxu0 %v6507
    %6588 = vmatprep.subr.mxu0 0.0
    %6589 = vmatpush2.msra.mxu0 %v6506
    %6590 = vmatprep.subr.mxu0 0.0
    %6591 = vmatpush2.msra.mxu0 %v6505
    %6592 = vmatprep.subr.mxu0 0.0
    %6593 = vmatpush2.msra.mxu0 %v6504
    %6594 = vmatprep.subr.mxu0 0.0
    %6595 = vmatpush2.msra.mxu0 %v6503
    %6596 = vmatprep.subr.mxu0 0.0
    %6597 = vmatpush2.msra.mxu0 %v6502
    %6598 = vmatprep.subr.mxu0 0.0
    %6599 = vmatpush2.msra.mxu0 %v6501
    %6600 = vmatprep.subr.mxu0 0.0
    %6601 = vmatpush2.msra.mxu0 %v6500
    %6602 = vmatprep.mubr.f32.mxu0 %v6533
    %6603 = vmatmul.mubr.f32.gmra.mxu0 %v6532
    %v6604 = vpop.f32.mrf.mxu0
    %v6605 = vadd.f32 0.0, %v6604
    %v6606 = vpop.f32.mrf.mxu0
    %6607 = vdwg.mxu0
    %6608 = vmatprep.subr.mxu0 0.0
    %6609 = vmatpush1.msra.mxu0 %v6531
    %6610 = vmatprep.subr.mxu0 0.0
    %6611 = vmatpush1.msra.mxu0 %v6530
    %6612 = vmatprep.subr.mxu0 0.0
    %6613 = vmatpush1.msra.mxu0 %v6529
    %6614 = vmatprep.subr.mxu0 0.0
    %6615 = vmatpush1.msra.mxu0 %v6528
    %6616 = vmatprep.subr.mxu0 0.0
    %6617 = vmatpush1.msra.mxu0 %v6527
    %6618 = vmatprep.subr.mxu0 0.0
    %6619 = vmatpush1.msra.mxu0 %v6526
    %6620 = vmatprep.subr.mxu0 0.0
    %6621 = vmatpush1.msra.mxu0 %v6525
    %6622 = vmatprep.subr.mxu0 0.0
    %6623 = vmatpush1.msra.mxu0 %v6524
    %6624 = vmatprep.subr.mxu0 0.0
    %6625 = vmatpush1.msra.mxu0 %v6523
    %6626 = vmatprep.subr.mxu0 0.0
    %6627 = vmatpush1.msra.mxu0 %v6522
    %6628 = vmatprep.subr.mxu0 0.0
    %6629 = vmatpush1.msra.mxu0 %v6521
    %6630 = vmatprep.subr.mxu0 0.0
    %6631 = vmatpush1.msra.mxu0 %v6520
    %6632 = vmatprep.subr.mxu0 0.0
    %6633 = vmatpush1.msra.mxu0 %v6519
    %6634 = vmatprep.subr.mxu0 0.0
    %6635 = vmatpush1.msra.mxu0 %v6518
    %6636 = vmatprep.subr.mxu0 0.0
    %6637 = vmatpush1.msra.mxu0 %v6517
    %6638 = vmatprep.subr.mxu0 0.0
    %6639 = vmatpush1.msra.mxu0 %v6516
    %6640 = vmatprep.subr.mxu0 0.0
    %6641 = vmatpush2.msra.mxu0 0.0
    %6642 = vmatprep.subr.mxu0 0.0
    %6643 = vmatpush2.msra.mxu0 0.0
    %6644 = vmatprep.subr.mxu0 0.0
    %6645 = vmatpush2.msra.mxu0 0.0
    %6646 = vmatprep.subr.mxu0 0.0
    %6647 = vmatpush2.msra.mxu0 0.0
    %6648 = vmatprep.subr.mxu0 0.0
    %6649 = vmatpush2.msra.mxu0 0.0
    %6650 = vmatprep.subr.mxu0 0.0
    %6651 = vmatpush2.msra.mxu0 0.0
    %6652 = vmatprep.subr.mxu0 0.0
    %6653 = vmatpush2.msra.mxu0 0.0
    %6654 = vmatprep.subr.mxu0 0.0
    %6655 = vmatpush2.msra.mxu0 0.0
    %6656 = vmatprep.subr.mxu0 0.0
    %6657 = vmatpush2.msra.mxu0 0.0
    %6658 = vmatprep.subr.mxu0 0.0
    %6659 = vmatpush2.msra.mxu0 0.0
    %6660 = vmatprep.subr.mxu0 0.0
    %6661 = vmatpush2.msra.mxu0 0.0
    %6662 = vmatprep.subr.mxu0 0.0
    %6663 = vmatpush2.msra.mxu0 0.0
    %6664 = vmatprep.subr.mxu0 0.0
    %6665 = vmatpush2.msra.mxu0 0.0
    %6666 = vmatprep.subr.mxu0 0.0
    %6667 = vmatpush2.msra.mxu0 0.0
    %6668 = vmatprep.subr.mxu0 0.0
    %6669 = vmatpush2.msra.mxu0 0.0
    %6670 = vmatprep.subr.mxu0 0.0
    %6671 = vmatpush2.msra.mxu0 0.0
    %6672 = vmatprep.mubr.f32.mxu0 0.0
    %6673 = vmatmul.mubr.f32.gmra.mxu0 %v6534
    %v6674 = vpop.f32.mrf.mxu0
    %v6675 = vadd.f32 %v6605, %v6674
    %v6676 = vpop.f32.mrf.mxu0
    %6677 = vdwg.mxu0
    %v6678 = vadd.f32 %v6335, %v6675
    %v6679 = vrot.slane %v4771, 5
    %v6680 = vrot.slane %v4772, 5
    %v6681 = vrot.slane %v4773, 5
    %6685 = vmatprep.subr.mxu0 0.0
    %6686 = vmatpush1.msra.mxu0 %v6499
    %6687 = vmatprep.subr.mxu0 0.0
    %6688 = vmatpush1.msra.mxu0 %v6498
    %6689 = vmatprep.subr.mxu0 0.0
    %6690 = vmatpush1.msra.mxu0 %v6497
    %6691 = vmatprep.subr.mxu0 0.0
    %6692 = vmatpush1.msra.mxu0 %v6496
    %6693 = vmatprep.subr.mxu0 0.0
    %6694 = vmatpush1.msra.mxu0 %v6495
    %6695 = vmatprep.subr.mxu0 0.0
    %6696 = vmatpush1.msra.mxu0 %v6494
    %6697 = vmatprep.subr.mxu0 0.0
    %6698 = vmatpush1.msra.mxu0 %v6493
    %6699 = vmatprep.subr.mxu0 0.0
    %6700 = vmatpush1.msra.mxu0 %v6492
    %6701 = vmatprep.subr.mxu0 0.0
    %6702 = vmatpush1.msra.mxu0 %v6491
    %6703 = vmatprep.subr.mxu0 0.0
    %6704 = vmatpush1.msra.mxu0 %v6490
    %6705 = vmatprep.subr.mxu0 0.0
    %6706 = vmatpush1.msra.mxu0 %v6489
    %6707 = vmatprep.subr.mxu0 0.0
    %6708 = vmatpush1.msra.mxu0 %v6488
    %6709 = vmatprep.subr.mxu0 0.0
    %6710 = vmatpush1.msra.mxu0 %v6487
    %6711 = vmatprep.subr.mxu0 0.0
    %6712 = vmatpush1.msra.mxu0 %v6486
    %6713 = vmatprep.subr.mxu0 0.0
    %6714 = vmatpush1.msra.mxu0 %v6485
    %6715 = vmatprep.subr.mxu0 0.0
    %6716 = vmatpush1.msra.mxu0 %v6484
    %6717 = vmatprep.subr.mxu0 0.0
    %6718 = vmatpush2.msra.mxu0 %v6515
    %6719 = vmatprep.subr.mxu0 0.0
    %6720 = vmatpush2.msra.mxu0 %v6514
    %6721 = vmatprep.subr.mxu0 0.0
    %6722 = vmatpush2.msra.mxu0 %v6513
    %6723 = vmatprep.subr.mxu0 0.0
    %6724 = vmatpush2.msra.mxu0 %v6512
    %6725 = vmatprep.subr.mxu0 0.0
    %6726 = vmatpush2.msra.mxu0 %v6511
    %6727 = vmatprep.subr.mxu0 0.0
    %6728 = vmatpush2.msra.mxu0 %v6510
    %6729 = vmatprep.subr.mxu0 0.0
    %6730 = vmatpush2.msra.mxu0 %v6509
    %6731 = vmatprep.subr.mxu0 0.0
    %6732 = vmatpush2.msra.mxu0 %v6508
    %6733 = vmatprep.subr.mxu0 0.0
    %6734 = vmatpush2.msra.mxu0 %v6507
    %6735 = vmatprep.subr.mxu0 0.0
    %6736 = vmatpush2.msra.mxu0 %v6506
    %6737 = vmatprep.subr.mxu0 0.0
    %6738 = vmatpush2.msra.mxu0 %v6505
    %6739 = vmatprep.subr.mxu0 0.0
    %6740 = vmatpush2.msra.mxu0 %v6504
    %6741 = vmatprep.subr.mxu0 0.0
    %6742 = vmatpush2.msra.mxu0 %v6503
    %6743 = vmatprep.subr.mxu0 0.0
    %6744 = vmatpush2.msra.mxu0 %v6502
    %6745 = vmatprep.subr.mxu0 0.0
    %6746 = vmatpush2.msra.mxu0 %v6501
    %6747 = vmatprep.subr.mxu0 0.0
    %6748 = vmatpush2.msra.mxu0 %v6500
    %6749 = vmatprep.mubr.f32.mxu0 %v6680
    %6750 = vmatmul.mubr.f32.gmra.mxu0 %v6679
    %v6751 = vpop.f32.mrf.mxu0
    %v6752 = vadd.f32 0.0, %v6751
    %v6753 = vpop.f32.mrf.mxu0
    %6754 = vdwg.mxu0
    %6755 = vmatprep.subr.mxu0 0.0
    %6756 = vmatpush1.msra.mxu0 %v6531
    %6757 = vmatprep.subr.mxu0 0.0
    %6758 = vmatpush1.msra.mxu0 %v6530
    %6759 = vmatprep.subr.mxu0 0.0
    %6760 = vmatpush1.msra.mxu0 %v6529
    %6761 = vmatprep.subr.mxu0 0.0
    %6762 = vmatpush1.msra.mxu0 %v6528
    %6763 = vmatprep.subr.mxu0 0.0
    %6764 = vmatpush1.msra.mxu0 %v6527
    %6765 = vmatprep.subr.mxu0 0.0
    %6766 = vmatpush1.msra.mxu0 %v6526
    %6767 = vmatprep.subr.mxu0 0.0
    %6768 = vmatpush1.msra.mxu0 %v6525
    %6769 = vmatprep.subr.mxu0 0.0
    %6770 = vmatpush1.msra.mxu0 %v6524
    %6771 = vmatprep.subr.mxu0 0.0
    %6772 = vmatpush1.msra.mxu0 %v6523
    %6773 = vmatprep.subr.mxu0 0.0
    %6774 = vmatpush1.msra.mxu0 %v6522
    %6775 = vmatprep.subr.mxu0 0.0
    %6776 = vmatpush1.msra.mxu0 %v6521
    %6777 = vmatprep.subr.mxu0 0.0
    %6778 = vmatpush1.msra.mxu0 %v6520
    %6779 = vmatprep.subr.mxu0 0.0
    %6780 = vmatpush1.msra.mxu0 %v6519
    %6781 = vmatprep.subr.mxu0 0.0
    %6782 = vmatpush1.msra.mxu0 %v6518
    %6783 = vmatprep.subr.mxu0 0.0
    %6784 = vmatpush1.msra.mxu0 %v6517
    %6785 = vmatprep.subr.mxu0 0.0
    %6786 = vmatpush1.msra.mxu0 %v6516
    %6787 = vmatprep.subr.mxu0 0.0
    %6788 = vmatpush2.msra.mxu0 0.0
    %6789 = vmatprep.subr.mxu0 0.0
    %6790 = vmatpush2.msra.mxu0 0.0
    %6791 = vmatprep.subr.mxu0 0.0
    %6792 = vmatpush2.msra.mxu0 0.0
    %6793 = vmatprep.subr.mxu0 0.0
    %6794 = vmatpush2.msra.mxu0 0.0
    %6795 = vmatprep.subr.mxu0 0.0
    %6796 = vmatpush2.msra.mxu0 0.0
    %6797 = vmatprep.subr.mxu0 0.0
    %6798 = vmatpush2.msra.mxu0 0.0
    %6799 = vmatprep.subr.mxu0 0.0
    %6800 = vmatpush2.msra.mxu0 0.0
    %6801 = vmatprep.subr.mxu0 0.0
    %6802 = vmatpush2.msra.mxu0 0.0
    %6803 = vmatprep.subr.mxu0 0.0
    %6804 = vmatpush2.msra.mxu0 0.0
    %6805 = vmatprep.subr.mxu0 0.0
    %6806 = vmatpush2.msra.mxu0 0.0
    %6807 = vmatprep.subr.mxu0 0.0
    %6808 = vmatpush2.msra.mxu0 0.0
    %6809 = vmatprep.subr.mxu0 0.0
    %6810 = vmatpush2.msra.mxu0 0.0
    %6811 = vmatprep.subr.mxu0 0.0
    %6812 = vmatpush2.msra.mxu0 0.0
    %6813 = vmatprep.subr.mxu0 0.0
    %6814 = vmatpush2.msra.mxu0 0.0
    %6815 = vmatprep.subr.mxu0 0.0
    %6816 = vmatpush2.msra.mxu0 0.0
    %6817 = vmatprep.subr.mxu0 0.0
    %6818 = vmatpush2.msra.mxu0 0.0
    %6819 = vmatprep.mubr.f32.mxu0 0.0
    %6820 = vmatmul.mubr.f32.gmra.mxu0 %v6681
    %v6821 = vpop.f32.mrf.mxu0
    %v6822 = vadd.f32 %v6752, %v6821
    %v6823 = vpop.f32.mrf.mxu0
    %6824 = vdwg.mxu0
    %v6825 = vadd.f32 %v6482, %v6822
    %s6826 = scalar_lea.vmem [#allocation13], 2304
    %v6827 = vld [vmem:[%s6826] sm:$0xff]
    %v6828 = vld [vmem:[%s6826 + $0x8] sm:$0xff]
    %v6829 = vld [vmem:[%s6826 + $0x10] sm:$0xff]
    %v6830 = vld [vmem:[%s6826 + $0x18] sm:$0xff]
    %v6831 = vld [vmem:[%s6826 + $0x20] sm:$0xff]
    %v6832 = vld [vmem:[%s6826 + $0x28] sm:$0xff]
    %v6833 = vld [vmem:[%s6826 + $0x30] sm:$0xff]
    %v6834 = vld [vmem:[%s6826 + $0x38] sm:$0xff]
    %v6835 = vld [vmem:[%s6826 + $0x40] sm:$0xff]
    %v6836 = vld [vmem:[%s6826 + $0x48] sm:$0xff]
    %v6837 = vld [vmem:[%s6826 + $0x50] sm:$0xff]
    %v6838 = vld [vmem:[%s6826 + $0x58] sm:$0xff]
    %v6839 = vld [vmem:[%s6826 + $0x60] sm:$0xff]
    %v6840 = vld [vmem:[%s6826 + $0x68] sm:$0xff]
    %v6841 = vld [vmem:[%s6826 + $0x70] sm:$0xff]
    %v6842 = vld [vmem:[%s6826 + $0x78] sm:$0xff]
    %v6843 = vld [vmem:[%s6826 + $0x80] sm:$0xff]
    %v6844 = vld [vmem:[%s6826 + $0x88] sm:$0xff]
    %v6845 = vld [vmem:[%s6826 + $0x90] sm:$0xff]
    %v6846 = vld [vmem:[%s6826 + $0x98] sm:$0xff]
    %v6847 = vld [vmem:[%s6826 + $0xa0] sm:$0xff]
    %v6848 = vld [vmem:[%s6826 + $0xa8] sm:$0xff]
    %v6849 = vld [vmem:[%s6826 + $0xb0] sm:$0xff]
    %v6850 = vld [vmem:[%s6826 + $0xb8] sm:$0xff]
    %v6851 = vld [vmem:[%s6826 + $0xc0] sm:$0xff]
    %v6852 = vld [vmem:[%s6826 + $0xc8] sm:$0xff]
    %v6853 = vld [vmem:[%s6826 + $0xd0] sm:$0xff]
    %v6854 = vld [vmem:[%s6826 + $0xd8] sm:$0xff]
    %v6855 = vld [vmem:[%s6826 + $0xe0] sm:$0xff]
    %v6856 = vld [vmem:[%s6826 + $0xe8] sm:$0xff]
    %v6857 = vld [vmem:[%s6826 + $0xf0] sm:$0xff]
    %v6858 = vld [vmem:[%s6826 + $0xf8] sm:$0xff]
    %v6859 = vld [vmem:[%s6826 + $0x100] sm:$0xff]
    %v6860 = vld [vmem:[%s6826 + $0x108] sm:$0xff]
    %v6861 = vld [vmem:[%s6826 + $0x110] sm:$0xff]
    %v6862 = vld [vmem:[%s6826 + $0x118] sm:$0xff]
    %v6863 = vld [vmem:[%s6826 + $0x120] sm:$0xff]
    %v6864 = vld [vmem:[%s6826 + $0x128] sm:$0xff]
    %v6865 = vld [vmem:[%s6826 + $0x130] sm:$0xff]
    %v6866 = vld [vmem:[%s6826 + $0x138] sm:$0xff]
    %v6867 = vld [vmem:[%s6826 + $0x140] sm:$0xff]
    %v6868 = vld [vmem:[%s6826 + $0x148] sm:$0xff]
    %v6869 = vld [vmem:[%s6826 + $0x150] sm:$0xff]
    %v6870 = vld [vmem:[%s6826 + $0x158] sm:$0xff]
    %v6871 = vld [vmem:[%s6826 + $0x160] sm:$0xff]
    %v6872 = vld [vmem:[%s6826 + $0x168] sm:$0xff]
    %v6873 = vld [vmem:[%s6826 + $0x170] sm:$0xff]
    %v6874 = vld [vmem:[%s6826 + $0x178] sm:$0xff]
    %v6875 = vrot.slane %v4768, 6
    %v6876 = vrot.slane %v4769, 6
    %v6877 = vrot.slane %v4770, 6
    %6881 = vmatprep.subr.mxu0 0.0
    %6882 = vmatpush1.msra.mxu0 %v6842
    %6883 = vmatprep.subr.mxu0 0.0
    %6884 = vmatpush1.msra.mxu0 %v6841
    %6885 = vmatprep.subr.mxu0 0.0
    %6886 = vmatpush1.msra.mxu0 %v6840
    %6887 = vmatprep.subr.mxu0 0.0
    %6888 = vmatpush1.msra.mxu0 %v6839
    %6889 = vmatprep.subr.mxu0 0.0
    %6890 = vmatpush1.msra.mxu0 %v6838
    %6891 = vmatprep.subr.mxu0 0.0
    %6892 = vmatpush1.msra.mxu0 %v6837
    %6893 = vmatprep.subr.mxu0 0.0
    %6894 = vmatpush1.msra.mxu0 %v6836
    %6895 = vmatprep.subr.mxu0 0.0
    %6896 = vmatpush1.msra.mxu0 %v6835
    %6897 = vmatprep.subr.mxu0 0.0
    %6898 = vmatpush1.msra.mxu0 %v6834
    %6899 = vmatprep.subr.mxu0 0.0
    %6900 = vmatpush1.msra.mxu0 %v6833
    %6901 = vmatprep.subr.mxu0 0.0
    %6902 = vmatpush1.msra.mxu0 %v6832
    %6903 = vmatprep.subr.mxu0 0.0
    %6904 = vmatpush1.msra.mxu0 %v6831
    %6905 = vmatprep.subr.mxu0 0.0
    %6906 = vmatpush1.msra.mxu0 %v6830
    %6907 = vmatprep.subr.mxu0 0.0
    %6908 = vmatpush1.msra.mxu0 %v6829
    %6909 = vmatprep.subr.mxu0 0.0
    %6910 = vmatpush1.msra.mxu0 %v6828
    %6911 = vmatprep.subr.mxu0 0.0
    %6912 = vmatpush1.msra.mxu0 %v6827
    %6913 = vmatprep.subr.mxu0 0.0
    %6914 = vmatpush2.msra.mxu0 %v6858
    %6915 = vmatprep.subr.mxu0 0.0
    %6916 = vmatpush2.msra.mxu0 %v6857
    %6917 = vmatprep.subr.mxu0 0.0
    %6918 = vmatpush2.msra.mxu0 %v6856
    %6919 = vmatprep.subr.mxu0 0.0
    %6920 = vmatpush2.msra.mxu0 %v6855
    %6921 = vmatprep.subr.mxu0 0.0
    %6922 = vmatpush2.msra.mxu0 %v6854
    %6923 = vmatprep.subr.mxu0 0.0
    %6924 = vmatpush2.msra.mxu0 %v6853
    %6925 = vmatprep.subr.mxu0 0.0
    %6926 = vmatpush2.msra.mxu0 %v6852
    %6927 = vmatprep.subr.mxu0 0.0
    %6928 = vmatpush2.msra.mxu0 %v6851
    %6929 = vmatprep.subr.mxu0 0.0
    %6930 = vmatpush2.msra.mxu0 %v6850
    %6931 = vmatprep.subr.mxu0 0.0
    %6932 = vmatpush2.msra.mxu0 %v6849
    %6933 = vmatprep.subr.mxu0 0.0
    %6934 = vmatpush2.msra.mxu0 %v6848
    %6935 = vmatprep.subr.mxu0 0.0
    %6936 = vmatpush2.msra.mxu0 %v6847
    %6937 = vmatprep.subr.mxu0 0.0
    %6938 = vmatpush2.msra.mxu0 %v6846
    %6939 = vmatprep.subr.mxu0 0.0
    %6940 = vmatpush2.msra.mxu0 %v6845
    %6941 = vmatprep.subr.mxu0 0.0
    %6942 = vmatpush2.msra.mxu0 %v6844
    %6943 = vmatprep.subr.mxu0 0.0
    %6944 = vmatpush2.msra.mxu0 %v6843
    %6945 = vmatprep.mubr.f32.mxu0 %v6876
    %6946 = vmatmul.mubr.f32.gmra.mxu0 %v6875
    %v6947 = vpop.f32.mrf.mxu0
    %v6948 = vadd.f32 0.0, %v6947
    %v6949 = vpop.f32.mrf.mxu0
    %6950 = vdwg.mxu0
    %6951 = vmatprep.subr.mxu0 0.0
    %6952 = vmatpush1.msra.mxu0 %v6874
    %6953 = vmatprep.subr.mxu0 0.0
    %6954 = vmatpush1.msra.mxu0 %v6873
    %6955 = vmatprep.subr.mxu0 0.0
    %6956 = vmatpush1.msra.mxu0 %v6872
    %6957 = vmatprep.subr.mxu0 0.0
    %6958 = vmatpush1.msra.mxu0 %v6871
    %6959 = vmatprep.subr.mxu0 0.0
    %6960 = vmatpush1.msra.mxu0 %v6870
    %6961 = vmatprep.subr.mxu0 0.0
    %6962 = vmatpush1.msra.mxu0 %v6869
    %6963 = vmatprep.subr.mxu0 0.0
    %6964 = vmatpush1.msra.mxu0 %v6868
    %6965 = vmatprep.subr.mxu0 0.0
    %6966 = vmatpush1.msra.mxu0 %v6867
    %6967 = vmatprep.subr.mxu0 0.0
    %6968 = vmatpush1.msra.mxu0 %v6866
    %6969 = vmatprep.subr.mxu0 0.0
    %6970 = vmatpush1.msra.mxu0 %v6865
    %6971 = vmatprep.subr.mxu0 0.0
    %6972 = vmatpush1.msra.mxu0 %v6864
    %6973 = vmatprep.subr.mxu0 0.0
    %6974 = vmatpush1.msra.mxu0 %v6863
    %6975 = vmatprep.subr.mxu0 0.0
    %6976 = vmatpush1.msra.mxu0 %v6862
    %6977 = vmatprep.subr.mxu0 0.0
    %6978 = vmatpush1.msra.mxu0 %v6861
    %6979 = vmatprep.subr.mxu0 0.0
    %6980 = vmatpush1.msra.mxu0 %v6860
    %6981 = vmatprep.subr.mxu0 0.0
    %6982 = vmatpush1.msra.mxu0 %v6859
    %6983 = vmatprep.subr.mxu0 0.0
    %6984 = vmatpush2.msra.mxu0 0.0
    %6985 = vmatprep.subr.mxu0 0.0
    %6986 = vmatpush2.msra.mxu0 0.0
    %6987 = vmatprep.subr.mxu0 0.0
    %6988 = vmatpush2.msra.mxu0 0.0
    %6989 = vmatprep.subr.mxu0 0.0
    %6990 = vmatpush2.msra.mxu0 0.0
    %6991 = vmatprep.subr.mxu0 0.0
    %6992 = vmatpush2.msra.mxu0 0.0
    %6993 = vmatprep.subr.mxu0 0.0
    %6994 = vmatpush2.msra.mxu0 0.0
    %6995 = vmatprep.subr.mxu0 0.0
    %6996 = vmatpush2.msra.mxu0 0.0
    %6997 = vmatprep.subr.mxu0 0.0
    %6998 = vmatpush2.msra.mxu0 0.0
    %6999 = vmatprep.subr.mxu0 0.0
    %7000 = vmatpush2.msra.mxu0 0.0
    %7001 = vmatprep.subr.mxu0 0.0
    %7002 = vmatpush2.msra.mxu0 0.0
    %7003 = vmatprep.subr.mxu0 0.0
    %7004 = vmatpush2.msra.mxu0 0.0
    %7005 = vmatprep.subr.mxu0 0.0
    %7006 = vmatpush2.msra.mxu0 0.0
    %7007 = vmatprep.subr.mxu0 0.0
    %7008 = vmatpush2.msra.mxu0 0.0
    %7009 = vmatprep.subr.mxu0 0.0
    %7010 = vmatpush2.msra.mxu0 0.0
    %7011 = vmatprep.subr.mxu0 0.0
    %7012 = vmatpush2.msra.mxu0 0.0
    %7013 = vmatprep.subr.mxu0 0.0
    %7014 = vmatpush2.msra.mxu0 0.0
    %7015 = vmatprep.mubr.f32.mxu0 0.0
    %7016 = vmatmul.mubr.f32.gmra.mxu0 %v6877
    %v7017 = vpop.f32.mrf.mxu0
    %v7018 = vadd.f32 %v6948, %v7017
    %v7019 = vpop.f32.mrf.mxu0
    %7020 = vdwg.mxu0
    %v7021 = vadd.f32 %v6678, %v7018
    %v7022 = vrot.slane %v4771, 6
    %v7023 = vrot.slane %v4772, 6
    %v7024 = vrot.slane %v4773, 6
    %7028 = vmatprep.subr.mxu0 0.0
    %7029 = vmatpush1.msra.mxu0 %v6842
    %7030 = vmatprep.subr.mxu0 0.0
    %7031 = vmatpush1.msra.mxu0 %v6841
    %7032 = vmatprep.subr.mxu0 0.0
    %7033 = vmatpush1.msra.mxu0 %v6840
    %7034 = vmatprep.subr.mxu0 0.0
    %7035 = vmatpush1.msra.mxu0 %v6839
    %7036 = vmatprep.subr.mxu0 0.0
    %7037 = vmatpush1.msra.mxu0 %v6838
    %7038 = vmatprep.subr.mxu0 0.0
    %7039 = vmatpush1.msra.mxu0 %v6837
    %7040 = vmatprep.subr.mxu0 0.0
    %7041 = vmatpush1.msra.mxu0 %v6836
    %7042 = vmatprep.subr.mxu0 0.0
    %7043 = vmatpush1.msra.mxu0 %v6835
    %7044 = vmatprep.subr.mxu0 0.0
    %7045 = vmatpush1.msra.mxu0 %v6834
    %7046 = vmatprep.subr.mxu0 0.0
    %7047 = vmatpush1.msra.mxu0 %v6833
    %7048 = vmatprep.subr.mxu0 0.0
    %7049 = vmatpush1.msra.mxu0 %v6832
    %7050 = vmatprep.subr.mxu0 0.0
    %7051 = vmatpush1.msra.mxu0 %v6831
    %7052 = vmatprep.subr.mxu0 0.0
    %7053 = vmatpush1.msra.mxu0 %v6830
    %7054 = vmatprep.subr.mxu0 0.0
    %7055 = vmatpush1.msra.mxu0 %v6829
    %7056 = vmatprep.subr.mxu0 0.0
    %7057 = vmatpush1.msra.mxu0 %v6828
    %7058 = vmatprep.subr.mxu0 0.0
    %7059 = vmatpush1.msra.mxu0 %v6827
    %7060 = vmatprep.subr.mxu0 0.0
    %7061 = vmatpush2.msra.mxu0 %v6858
    %7062 = vmatprep.subr.mxu0 0.0
    %7063 = vmatpush2.msra.mxu0 %v6857
    %7064 = vmatprep.subr.mxu0 0.0
    %7065 = vmatpush2.msra.mxu0 %v6856
    %7066 = vmatprep.subr.mxu0 0.0
    %7067 = vmatpush2.msra.mxu0 %v6855
    %7068 = vmatprep.subr.mxu0 0.0
    %7069 = vmatpush2.msra.mxu0 %v6854
    %7070 = vmatprep.subr.mxu0 0.0
    %7071 = vmatpush2.msra.mxu0 %v6853
    %7072 = vmatprep.subr.mxu0 0.0
    %7073 = vmatpush2.msra.mxu0 %v6852
    %7074 = vmatprep.subr.mxu0 0.0
    %7075 = vmatpush2.msra.mxu0 %v6851
    %7076 = vmatprep.subr.mxu0 0.0
    %7077 = vmatpush2.msra.mxu0 %v6850
    %7078 = vmatprep.subr.mxu0 0.0
    %7079 = vmatpush2.msra.mxu0 %v6849
    %7080 = vmatprep.subr.mxu0 0.0
    %7081 = vmatpush2.msra.mxu0 %v6848
    %7082 = vmatprep.subr.mxu0 0.0
    %7083 = vmatpush2.msra.mxu0 %v6847
    %7084 = vmatprep.subr.mxu0 0.0
    %7085 = vmatpush2.msra.mxu0 %v6846
    %7086 = vmatprep.subr.mxu0 0.0
    %7087 = vmatpush2.msra.mxu0 %v6845
    %7088 = vmatprep.subr.mxu0 0.0
    %7089 = vmatpush2.msra.mxu0 %v6844
    %7090 = vmatprep.subr.mxu0 0.0
    %7091 = vmatpush2.msra.mxu0 %v6843
    %7092 = vmatprep.mubr.f32.mxu0 %v7023
    %7093 = vmatmul.mubr.f32.gmra.mxu0 %v7022
    %v7094 = vpop.f32.mrf.mxu0
    %v7095 = vadd.f32 0.0, %v7094
    %v7096 = vpop.f32.mrf.mxu0
    %7097 = vdwg.mxu0
    %7098 = vmatprep.subr.mxu0 0.0
    %7099 = vmatpush1.msra.mxu0 %v6874
    %7100 = vmatprep.subr.mxu0 0.0
    %7101 = vmatpush1.msra.mxu0 %v6873
    %7102 = vmatprep.subr.mxu0 0.0
    %7103 = vmatpush1.msra.mxu0 %v6872
    %7104 = vmatprep.subr.mxu0 0.0
    %7105 = vmatpush1.msra.mxu0 %v6871
    %7106 = vmatprep.subr.mxu0 0.0
    %7107 = vmatpush1.msra.mxu0 %v6870
    %7108 = vmatprep.subr.mxu0 0.0
    %7109 = vmatpush1.msra.mxu0 %v6869
    %7110 = vmatprep.subr.mxu0 0.0
    %7111 = vmatpush1.msra.mxu0 %v6868
    %7112 = vmatprep.subr.mxu0 0.0
    %7113 = vmatpush1.msra.mxu0 %v6867
    %7114 = vmatprep.subr.mxu0 0.0
    %7115 = vmatpush1.msra.mxu0 %v6866
    %7116 = vmatprep.subr.mxu0 0.0
    %7117 = vmatpush1.msra.mxu0 %v6865
    %7118 = vmatprep.subr.mxu0 0.0
    %7119 = vmatpush1.msra.mxu0 %v6864
    %7120 = vmatprep.subr.mxu0 0.0
    %7121 = vmatpush1.msra.mxu0 %v6863
    %7122 = vmatprep.subr.mxu0 0.0
    %7123 = vmatpush1.msra.mxu0 %v6862
    %7124 = vmatprep.subr.mxu0 0.0
    %7125 = vmatpush1.msra.mxu0 %v6861
    %7126 = vmatprep.subr.mxu0 0.0
    %7127 = vmatpush1.msra.mxu0 %v6860
    %7128 = vmatprep.subr.mxu0 0.0
    %7129 = vmatpush1.msra.mxu0 %v6859
    %7130 = vmatprep.subr.mxu0 0.0
    %7131 = vmatpush2.msra.mxu0 0.0
    %7132 = vmatprep.subr.mxu0 0.0
    %7133 = vmatpush2.msra.mxu0 0.0
    %7134 = vmatprep.subr.mxu0 0.0
    %7135 = vmatpush2.msra.mxu0 0.0
    %7136 = vmatprep.subr.mxu0 0.0
    %7137 = vmatpush2.msra.mxu0 0.0
    %7138 = vmatprep.subr.mxu0 0.0
    %7139 = vmatpush2.msra.mxu0 0.0
    %7140 = vmatprep.subr.mxu0 0.0
    %7141 = vmatpush2.msra.mxu0 0.0
    %7142 = vmatprep.subr.mxu0 0.0
    %7143 = vmatpush2.msra.mxu0 0.0
    %7144 = vmatprep.subr.mxu0 0.0
    %7145 = vmatpush2.msra.mxu0 0.0
    %7146 = vmatprep.subr.mxu0 0.0
    %7147 = vmatpush2.msra.mxu0 0.0
    %7148 = vmatprep.subr.mxu0 0.0
    %7149 = vmatpush2.msra.mxu0 0.0
    %7150 = vmatprep.subr.mxu0 0.0
    %7151 = vmatpush2.msra.mxu0 0.0
    %7152 = vmatprep.subr.mxu0 0.0
    %7153 = vmatpush2.msra.mxu0 0.0
    %7154 = vmatprep.subr.mxu0 0.0
    %7155 = vmatpush2.msra.mxu0 0.0
    %7156 = vmatprep.subr.mxu0 0.0
    %7157 = vmatpush2.msra.mxu0 0.0
    %7158 = vmatprep.subr.mxu0 0.0
    %7159 = vmatpush2.msra.mxu0 0.0
    %7160 = vmatprep.subr.mxu0 0.0
    %7161 = vmatpush2.msra.mxu0 0.0
    %7162 = vmatprep.mubr.f32.mxu0 0.0
    %7163 = vmatmul.mubr.f32.gmra.mxu0 %v7024
    %v7164 = vpop.f32.mrf.mxu0
    %v7165 = vadd.f32 %v7095, %v7164
    %v7166 = vpop.f32.mrf.mxu0
    %7167 = vdwg.mxu0
    %v7168 = vadd.f32 %v6825, %v7165
    %s7169 = scalar_lea.vmem [#allocation13], 2688
    %v7170 = vld [vmem:[%s7169] sm:$0xff]
    %v7171 = vld [vmem:[%s7169 + $0x8] sm:$0xff]
    %v7172 = vld [vmem:[%s7169 + $0x10] sm:$0xff]
    %v7173 = vld [vmem:[%s7169 + $0x18] sm:$0xff]
    %v7174 = vld [vmem:[%s7169 + $0x20] sm:$0xff]
    %v7175 = vld [vmem:[%s7169 + $0x28] sm:$0xff]
    %v7176 = vld [vmem:[%s7169 + $0x30] sm:$0xff]
    %v7177 = vld [vmem:[%s7169 + $0x38] sm:$0xff]
    %v7178 = vld [vmem:[%s7169 + $0x40] sm:$0xff]
    %v7179 = vld [vmem:[%s7169 + $0x48] sm:$0xff]
    %v7180 = vld [vmem:[%s7169 + $0x50] sm:$0xff]
    %v7181 = vld [vmem:[%s7169 + $0x58] sm:$0xff]
    %v7182 = vld [vmem:[%s7169 + $0x60] sm:$0xff]
    %v7183 = vld [vmem:[%s7169 + $0x68] sm:$0xff]
    %v7184 = vld [vmem:[%s7169 + $0x70] sm:$0xff]
    %v7185 = vld [vmem:[%s7169 + $0x78] sm:$0xff]
    %v7186 = vld [vmem:[%s7169 + $0x80] sm:$0xff]
    %v7187 = vld [vmem:[%s7169 + $0x88] sm:$0xff]
    %v7188 = vld [vmem:[%s7169 + $0x90] sm:$0xff]
    %v7189 = vld [vmem:[%s7169 + $0x98] sm:$0xff]
    %v7190 = vld [vmem:[%s7169 + $0xa0] sm:$0xff]
    %v7191 = vld [vmem:[%s7169 + $0xa8] sm:$0xff]
    %v7192 = vld [vmem:[%s7169 + $0xb0] sm:$0xff]
    %v7193 = vld [vmem:[%s7169 + $0xb8] sm:$0xff]
    %v7194 = vld [vmem:[%s7169 + $0xc0] sm:$0xff]
    %v7195 = vld [vmem:[%s7169 + $0xc8] sm:$0xff]
    %v7196 = vld [vmem:[%s7169 + $0xd0] sm:$0xff]
    %v7197 = vld [vmem:[%s7169 + $0xd8] sm:$0xff]
    %v7198 = vld [vmem:[%s7169 + $0xe0] sm:$0xff]
    %v7199 = vld [vmem:[%s7169 + $0xe8] sm:$0xff]
    %v7200 = vld [vmem:[%s7169 + $0xf0] sm:$0xff]
    %v7201 = vld [vmem:[%s7169 + $0xf8] sm:$0xff]
    %v7202 = vld [vmem:[%s7169 + $0x100] sm:$0xff]
    %v7203 = vld [vmem:[%s7169 + $0x108] sm:$0xff]
    %v7204 = vld [vmem:[%s7169 + $0x110] sm:$0xff]
    %v7205 = vld [vmem:[%s7169 + $0x118] sm:$0xff]
    %v7206 = vld [vmem:[%s7169 + $0x120] sm:$0xff]
    %v7207 = vld [vmem:[%s7169 + $0x128] sm:$0xff]
    %v7208 = vld [vmem:[%s7169 + $0x130] sm:$0xff]
    %v7209 = vld [vmem:[%s7169 + $0x138] sm:$0xff]
    %v7210 = vld [vmem:[%s7169 + $0x140] sm:$0xff]
    %v7211 = vld [vmem:[%s7169 + $0x148] sm:$0xff]
    %v7212 = vld [vmem:[%s7169 + $0x150] sm:$0xff]
    %v7213 = vld [vmem:[%s7169 + $0x158] sm:$0xff]
    %v7214 = vld [vmem:[%s7169 + $0x160] sm:$0xff]
    %v7215 = vld [vmem:[%s7169 + $0x168] sm:$0xff]
    %v7216 = vld [vmem:[%s7169 + $0x170] sm:$0xff]
    %v7217 = vld [vmem:[%s7169 + $0x178] sm:$0xff]
    %v7218 = vrot.slane %v4768, 7
    %v7219 = vrot.slane %v4769, 7
    %v7220 = vrot.slane %v4770, 7
    %7224 = vmatprep.subr.mxu0 0.0
    %7225 = vmatpush1.msra.mxu0 %v7185
    %7226 = vmatprep.subr.mxu0 0.0
    %7227 = vmatpush1.msra.mxu0 %v7184
    %7228 = vmatprep.subr.mxu0 0.0
    %7229 = vmatpush1.msra.mxu0 %v7183
    %7230 = vmatprep.subr.mxu0 0.0
    %7231 = vmatpush1.msra.mxu0 %v7182
    %7232 = vmatprep.subr.mxu0 0.0
    %7233 = vmatpush1.msra.mxu0 %v7181
    %7234 = vmatprep.subr.mxu0 0.0
    %7235 = vmatpush1.msra.mxu0 %v7180
    %7236 = vmatprep.subr.mxu0 0.0
    %7237 = vmatpush1.msra.mxu0 %v7179
    %7238 = vmatprep.subr.mxu0 0.0
    %7239 = vmatpush1.msra.mxu0 %v7178
    %7240 = vmatprep.subr.mxu0 0.0
    %7241 = vmatpush1.msra.mxu0 %v7177
    %7242 = vmatprep.subr.mxu0 0.0
    %7243 = vmatpush1.msra.mxu0 %v7176
    %7244 = vmatprep.subr.mxu0 0.0
    %7245 = vmatpush1.msra.mxu0 %v7175
    %7246 = vmatprep.subr.mxu0 0.0
    %7247 = vmatpush1.msra.mxu0 %v7174
    %7248 = vmatprep.subr.mxu0 0.0
    %7249 = vmatpush1.msra.mxu0 %v7173
    %7250 = vmatprep.subr.mxu0 0.0
    %7251 = vmatpush1.msra.mxu0 %v7172
    %7252 = vmatprep.subr.mxu0 0.0
    %7253 = vmatpush1.msra.mxu0 %v7171
    %7254 = vmatprep.subr.mxu0 0.0
    %7255 = vmatpush1.msra.mxu0 %v7170
    %7256 = vmatprep.subr.mxu0 0.0
    %7257 = vmatpush2.msra.mxu0 %v7201
    %7258 = vmatprep.subr.mxu0 0.0
    %7259 = vmatpush2.msra.mxu0 %v7200
    %7260 = vmatprep.subr.mxu0 0.0
    %7261 = vmatpush2.msra.mxu0 %v7199
    %7262 = vmatprep.subr.mxu0 0.0
    %7263 = vmatpush2.msra.mxu0 %v7198
    %7264 = vmatprep.subr.mxu0 0.0
    %7265 = vmatpush2.msra.mxu0 %v7197
    %7266 = vmatprep.subr.mxu0 0.0
    %7267 = vmatpush2.msra.mxu0 %v7196
    %7268 = vmatprep.subr.mxu0 0.0
    %7269 = vmatpush2.msra.mxu0 %v7195
    %7270 = vmatprep.subr.mxu0 0.0
    %7271 = vmatpush2.msra.mxu0 %v7194
    %7272 = vmatprep.subr.mxu0 0.0
    %7273 = vmatpush2.msra.mxu0 %v7193
    %7274 = vmatprep.subr.mxu0 0.0
    %7275 = vmatpush2.msra.mxu0 %v7192
    %7276 = vmatprep.subr.mxu0 0.0
    %7277 = vmatpush2.msra.mxu0 %v7191
    %7278 = vmatprep.subr.mxu0 0.0
    %7279 = vmatpush2.msra.mxu0 %v7190
    %7280 = vmatprep.subr.mxu0 0.0
    %7281 = vmatpush2.msra.mxu0 %v7189
    %7282 = vmatprep.subr.mxu0 0.0
    %7283 = vmatpush2.msra.mxu0 %v7188
    %7284 = vmatprep.subr.mxu0 0.0
    %7285 = vmatpush2.msra.mxu0 %v7187
    %7286 = vmatprep.subr.mxu0 0.0
    %7287 = vmatpush2.msra.mxu0 %v7186
    %7288 = vmatprep.mubr.f32.mxu0 %v7219
    %7289 = vmatmul.mubr.f32.gmra.mxu0 %v7218
    %v7290 = vpop.f32.mrf.mxu0
    %v7291 = vadd.f32 0.0, %v7290
    %v7292 = vpop.f32.mrf.mxu0
    %7293 = vdwg.mxu0
    %7294 = vmatprep.subr.mxu0 0.0
    %7295 = vmatpush1.msra.mxu0 %v7217
    %7296 = vmatprep.subr.mxu0 0.0
    %7297 = vmatpush1.msra.mxu0 %v7216
    %7298 = vmatprep.subr.mxu0 0.0
    %7299 = vmatpush1.msra.mxu0 %v7215
    %7300 = vmatprep.subr.mxu0 0.0
    %7301 = vmatpush1.msra.mxu0 %v7214
    %7302 = vmatprep.subr.mxu0 0.0
    %7303 = vmatpush1.msra.mxu0 %v7213
    %7304 = vmatprep.subr.mxu0 0.0
    %7305 = vmatpush1.msra.mxu0 %v7212
    %7306 = vmatprep.subr.mxu0 0.0
    %7307 = vmatpush1.msra.mxu0 %v7211
    %7308 = vmatprep.subr.mxu0 0.0
    %7309 = vmatpush1.msra.mxu0 %v7210
    %7310 = vmatprep.subr.mxu0 0.0
    %7311 = vmatpush1.msra.mxu0 %v7209
    %7312 = vmatprep.subr.mxu0 0.0
    %7313 = vmatpush1.msra.mxu0 %v7208
    %7314 = vmatprep.subr.mxu0 0.0
    %7315 = vmatpush1.msra.mxu0 %v7207
    %7316 = vmatprep.subr.mxu0 0.0
    %7317 = vmatpush1.msra.mxu0 %v7206
    %7318 = vmatprep.subr.mxu0 0.0
    %7319 = vmatpush1.msra.mxu0 %v7205
    %7320 = vmatprep.subr.mxu0 0.0
    %7321 = vmatpush1.msra.mxu0 %v7204
    %7322 = vmatprep.subr.mxu0 0.0
    %7323 = vmatpush1.msra.mxu0 %v7203
    %7324 = vmatprep.subr.mxu0 0.0
    %7325 = vmatpush1.msra.mxu0 %v7202
    %7326 = vmatprep.subr.mxu0 0.0
    %7327 = vmatpush2.msra.mxu0 0.0
    %7328 = vmatprep.subr.mxu0 0.0
    %7329 = vmatpush2.msra.mxu0 0.0
    %7330 = vmatprep.subr.mxu0 0.0
    %7331 = vmatpush2.msra.mxu0 0.0
    %7332 = vmatprep.subr.mxu0 0.0
    %7333 = vmatpush2.msra.mxu0 0.0
    %7334 = vmatprep.subr.mxu0 0.0
    %7335 = vmatpush2.msra.mxu0 0.0
    %7336 = vmatprep.subr.mxu0 0.0
    %7337 = vmatpush2.msra.mxu0 0.0
    %7338 = vmatprep.subr.mxu0 0.0
    %7339 = vmatpush2.msra.mxu0 0.0
    %7340 = vmatprep.subr.mxu0 0.0
    %7341 = vmatpush2.msra.mxu0 0.0
    %7342 = vmatprep.subr.mxu0 0.0
    %7343 = vmatpush2.msra.mxu0 0.0
    %7344 = vmatprep.subr.mxu0 0.0
    %7345 = vmatpush2.msra.mxu0 0.0
    %7346 = vmatprep.subr.mxu0 0.0
    %7347 = vmatpush2.msra.mxu0 0.0
    %7348 = vmatprep.subr.mxu0 0.0
    %7349 = vmatpush2.msra.mxu0 0.0
    %7350 = vmatprep.subr.mxu0 0.0
    %7351 = vmatpush2.msra.mxu0 0.0
    %7352 = vmatprep.subr.mxu0 0.0
    %7353 = vmatpush2.msra.mxu0 0.0
    %7354 = vmatprep.subr.mxu0 0.0
    %7355 = vmatpush2.msra.mxu0 0.0
    %7356 = vmatprep.subr.mxu0 0.0
    %7357 = vmatpush2.msra.mxu0 0.0
    %7358 = vmatprep.mubr.f32.mxu0 0.0
    %7359 = vmatmul.mubr.f32.gmra.mxu0 %v7220
    %v7360 = vpop.f32.mrf.mxu0
    %v7361 = vadd.f32 %v7291, %v7360
    %v7362 = vpop.f32.mrf.mxu0
    %7363 = vdwg.mxu0
    %v7364 = vadd.f32 %v7021, %v7361
    %v7365 = vrot.slane %v4771, 7
    %v7366 = vrot.slane %v4772, 7
    %v7367 = vrot.slane %v4773, 7
    %7371 = vmatprep.subr.mxu0 0.0
    %7372 = vmatpush1.msra.mxu0 %v7185
    %7373 = vmatprep.subr.mxu0 0.0
    %7374 = vmatpush1.msra.mxu0 %v7184
    %7375 = vmatprep.subr.mxu0 0.0
    %7376 = vmatpush1.msra.mxu0 %v7183
    %7377 = vmatprep.subr.mxu0 0.0
    %7378 = vmatpush1.msra.mxu0 %v7182
    %7379 = vmatprep.subr.mxu0 0.0
    %7380 = vmatpush1.msra.mxu0 %v7181
    %7381 = vmatprep.subr.mxu0 0.0
    %7382 = vmatpush1.msra.mxu0 %v7180
    %7383 = vmatprep.subr.mxu0 0.0
    %7384 = vmatpush1.msra.mxu0 %v7179
    %7385 = vmatprep.subr.mxu0 0.0
    %7386 = vmatpush1.msra.mxu0 %v7178
    %7387 = vmatprep.subr.mxu0 0.0
    %7388 = vmatpush1.msra.mxu0 %v7177
    %7389 = vmatprep.subr.mxu0 0.0
    %7390 = vmatpush1.msra.mxu0 %v7176
    %7391 = vmatprep.subr.mxu0 0.0
    %7392 = vmatpush1.msra.mxu0 %v7175
    %7393 = vmatprep.subr.mxu0 0.0
    %7394 = vmatpush1.msra.mxu0 %v7174
    %7395 = vmatprep.subr.mxu0 0.0
    %7396 = vmatpush1.msra.mxu0 %v7173
    %7397 = vmatprep.subr.mxu0 0.0
    %7398 = vmatpush1.msra.mxu0 %v7172
    %7399 = vmatprep.subr.mxu0 0.0
    %7400 = vmatpush1.msra.mxu0 %v7171
    %7401 = vmatprep.subr.mxu0 0.0
    %7402 = vmatpush1.msra.mxu0 %v7170
    %7403 = vmatprep.subr.mxu0 0.0
    %7404 = vmatpush2.msra.mxu0 %v7201
    %7405 = vmatprep.subr.mxu0 0.0
    %7406 = vmatpush2.msra.mxu0 %v7200
    %7407 = vmatprep.subr.mxu0 0.0
    %7408 = vmatpush2.msra.mxu0 %v7199
    %7409 = vmatprep.subr.mxu0 0.0
    %7410 = vmatpush2.msra.mxu0 %v7198
    %7411 = vmatprep.subr.mxu0 0.0
    %7412 = vmatpush2.msra.mxu0 %v7197
    %7413 = vmatprep.subr.mxu0 0.0
    %7414 = vmatpush2.msra.mxu0 %v7196
    %7415 = vmatprep.subr.mxu0 0.0
    %7416 = vmatpush2.msra.mxu0 %v7195
    %7417 = vmatprep.subr.mxu0 0.0
    %7418 = vmatpush2.msra.mxu0 %v7194
    %7419 = vmatprep.subr.mxu0 0.0
    %7420 = vmatpush2.msra.mxu0 %v7193
    %7421 = vmatprep.subr.mxu0 0.0
    %7422 = vmatpush2.msra.mxu0 %v7192
    %7423 = vmatprep.subr.mxu0 0.0
    %7424 = vmatpush2.msra.mxu0 %v7191
    %7425 = vmatprep.subr.mxu0 0.0
    %7426 = vmatpush2.msra.mxu0 %v7190
    %7427 = vmatprep.subr.mxu0 0.0
    %7428 = vmatpush2.msra.mxu0 %v7189
    %7429 = vmatprep.subr.mxu0 0.0
    %7430 = vmatpush2.msra.mxu0 %v7188
    %7431 = vmatprep.subr.mxu0 0.0
    %7432 = vmatpush2.msra.mxu0 %v7187
    %7433 = vmatprep.subr.mxu0 0.0
    %7434 = vmatpush2.msra.mxu0 %v7186
    %7435 = vmatprep.mubr.f32.mxu0 %v7366
    %7436 = vmatmul.mubr.f32.gmra.mxu0 %v7365
    %v7437 = vpop.f32.mrf.mxu0
    %v7438 = vadd.f32 0.0, %v7437
    %v7439 = vpop.f32.mrf.mxu0
    %7440 = vdwg.mxu0
    %7441 = vmatprep.subr.mxu0 0.0
    %7442 = vmatpush1.msra.mxu0 %v7217
    %7443 = vmatprep.subr.mxu0 0.0
    %7444 = vmatpush1.msra.mxu0 %v7216
    %7445 = vmatprep.subr.mxu0 0.0
    %7446 = vmatpush1.msra.mxu0 %v7215
    %7447 = vmatprep.subr.mxu0 0.0
    %7448 = vmatpush1.msra.mxu0 %v7214
    %7449 = vmatprep.subr.mxu0 0.0
    %7450 = vmatpush1.msra.mxu0 %v7213
    %7451 = vmatprep.subr.mxu0 0.0
    %7452 = vmatpush1.msra.mxu0 %v7212
    %7453 = vmatprep.subr.mxu0 0.0
    %7454 = vmatpush1.msra.mxu0 %v7211
    %7455 = vmatprep.subr.mxu0 0.0
    %7456 = vmatpush1.msra.mxu0 %v7210
    %7457 = vmatprep.subr.mxu0 0.0
    %7458 = vmatpush1.msra.mxu0 %v7209
    %7459 = vmatprep.subr.mxu0 0.0
    %7460 = vmatpush1.msra.mxu0 %v7208
    %7461 = vmatprep.subr.mxu0 0.0
    %7462 = vmatpush1.msra.mxu0 %v7207
    %7463 = vmatprep.subr.mxu0 0.0
    %7464 = vmatpush1.msra.mxu0 %v7206
    %7465 = vmatprep.subr.mxu0 0.0
    %7466 = vmatpush1.msra.mxu0 %v7205
    %7467 = vmatprep.subr.mxu0 0.0
    %7468 = vmatpush1.msra.mxu0 %v7204
    %7469 = vmatprep.subr.mxu0 0.0
    %7470 = vmatpush1.msra.mxu0 %v7203
    %7471 = vmatprep.subr.mxu0 0.0
    %7472 = vmatpush1.msra.mxu0 %v7202
    %7473 = vmatprep.subr.mxu0 0.0
    %7474 = vmatpush2.msra.mxu0 0.0
    %7475 = vmatprep.subr.mxu0 0.0
    %7476 = vmatpush2.msra.mxu0 0.0
    %7477 = vmatprep.subr.mxu0 0.0
    %7478 = vmatpush2.msra.mxu0 0.0
    %7479 = vmatprep.subr.mxu0 0.0
    %7480 = vmatpush2.msra.mxu0 0.0
    %7481 = vmatprep.subr.mxu0 0.0
    %7482 = vmatpush2.msra.mxu0 0.0
    %7483 = vmatprep.subr.mxu0 0.0
    %7484 = vmatpush2.msra.mxu0 0.0
    %7485 = vmatprep.subr.mxu0 0.0
    %7486 = vmatpush2.msra.mxu0 0.0
    %7487 = vmatprep.subr.mxu0 0.0
    %7488 = vmatpush2.msra.mxu0 0.0
    %7489 = vmatprep.subr.mxu0 0.0
    %7490 = vmatpush2.msra.mxu0 0.0
    %7491 = vmatprep.subr.mxu0 0.0
    %7492 = vmatpush2.msra.mxu0 0.0
    %7493 = vmatprep.subr.mxu0 0.0
    %7494 = vmatpush2.msra.mxu0 0.0
    %7495 = vmatprep.subr.mxu0 0.0
    %7496 = vmatpush2.msra.mxu0 0.0
    %7497 = vmatprep.subr.mxu0 0.0
    %7498 = vmatpush2.msra.mxu0 0.0
    %7499 = vmatprep.subr.mxu0 0.0
    %7500 = vmatpush2.msra.mxu0 0.0
    %7501 = vmatprep.subr.mxu0 0.0
    %7502 = vmatpush2.msra.mxu0 0.0
    %7503 = vmatprep.subr.mxu0 0.0
    %7504 = vmatpush2.msra.mxu0 0.0
    %7505 = vmatprep.mubr.f32.mxu0 0.0
    %7506 = vmatmul.mubr.f32.gmra.mxu0 %v7367
    %v7507 = vpop.f32.mrf.mxu0
    %v7508 = vadd.f32 %v7438, %v7507
    %v7509 = vpop.f32.mrf.mxu0
    %7510 = vdwg.mxu0
    %v7511 = vadd.f32 %v7168, %v7508
    %v7512 = vld [vmem:[#allocation16] sm:$0x1]
    %v7513 = vld [vmem:[#allocation17] sm:$0xff]
    %v7514 = vld [vmem:[#allocation17 + $0x8] sm:$0xff]
    %v7515 = vld [vmem:[#allocation17 + $0x10] sm:$0xff]
    %v7516 = vld [vmem:[#allocation17 + $0x18] sm:$0xff]
    %v7517 = vld [vmem:[#allocation19] sm:$0x1]
    %v7518 = vmax.f32 %v7364, 0.0
    %v7519 = vmul.f32 %v7518, %v7512
    %vm7520 = vcmask 261120
    %v7522 = vsel %vm7520, %v7519, 0
    %7524 = vmatprep.subr.mxu0 0.0
    %7525 = vmatpush1.msra.mxu0 0.0
    %7526 = vmatprep.subr.mxu0 0.0
    %7527 = vmatpush1.msra.mxu0 0.0
    %7528 = vmatprep.subr.mxu0 0.0
    %7529 = vmatpush1.msra.mxu0 0.0
    %7530 = vmatprep.subr.mxu0 0.0
    %7531 = vmatpush1.msra.mxu0 0.0
    %7532 = vmatprep.subr.mxu0 0.0
    %7533 = vmatpush1.msra.mxu0 0.0
    %7534 = vmatprep.subr.mxu0 0.0
    %7535 = vmatpush1.msra.mxu0 0.0
    %7536 = vmatprep.subr.mxu0 0.0
    %7537 = vmatpush1.msra.mxu0 0.0
    %7538 = vmatprep.subr.mxu0 0.0
    %7539 = vmatpush1.msra.mxu0 0.0
    %7540 = vmatprep.subr.mxu0 0.0
    %7541 = vmatpush1.msra.mxu0 0.0
    %7542 = vmatprep.subr.mxu0 0.0
    %7543 = vmatpush1.msra.mxu0 0.0
    %7544 = vmatprep.subr.mxu0 0.0
    %7545 = vmatpush1.msra.mxu0 0.0
    %7546 = vmatprep.subr.mxu0 0.0
    %7547 = vmatpush1.msra.mxu0 0.0
    %7548 = vmatprep.subr.mxu0 0.0
    %7549 = vmatpush1.msra.mxu0 %v7516
    %7550 = vmatprep.subr.mxu0 0.0
    %7551 = vmatpush1.msra.mxu0 %v7515
    %7552 = vmatprep.subr.mxu0 0.0
    %7553 = vmatpush1.msra.mxu0 %v7514
    %7554 = vmatprep.subr.mxu0 0.0
    %7555 = vmatpush1.msra.mxu0 %v7513
    %7556 = vmatprep.subr.mxu0 0.0
    %7557 = vmatpush2.msra.mxu0 0.0
    %7558 = vmatprep.subr.mxu0 0.0
    %7559 = vmatpush2.msra.mxu0 0.0
    %7560 = vmatprep.subr.mxu0 0.0
    %7561 = vmatpush2.msra.mxu0 0.0
    %7562 = vmatprep.subr.mxu0 0.0
    %7563 = vmatpush2.msra.mxu0 0.0
    %7564 = vmatprep.subr.mxu0 0.0
    %7565 = vmatpush2.msra.mxu0 0.0
    %7566 = vmatprep.subr.mxu0 0.0
    %7567 = vmatpush2.msra.mxu0 0.0
    %7568 = vmatprep.subr.mxu0 0.0
    %7569 = vmatpush2.msra.mxu0 0.0
    %7570 = vmatprep.subr.mxu0 0.0
    %7571 = vmatpush2.msra.mxu0 0.0
    %7572 = vmatprep.subr.mxu0 0.0
    %7573 = vmatpush2.msra.mxu0 0.0
    %7574 = vmatprep.subr.mxu0 0.0
    %7575 = vmatpush2.msra.mxu0 0.0
    %7576 = vmatprep.subr.mxu0 0.0
    %7577 = vmatpush2.msra.mxu0 0.0
    %7578 = vmatprep.subr.mxu0 0.0
    %7579 = vmatpush2.msra.mxu0 0.0
    %7580 = vmatprep.subr.mxu0 0.0
    %7581 = vmatpush2.msra.mxu0 0.0
    %7582 = vmatprep.subr.mxu0 0.0
    %7583 = vmatpush2.msra.mxu0 0.0
    %7584 = vmatprep.subr.mxu0 0.0
    %7585 = vmatpush2.msra.mxu0 0.0
    %7586 = vmatprep.subr.mxu0 0.0
    %7587 = vmatpush2.msra.mxu0 0.0
    %7588 = vmatprep.mubr.f32.mxu0 0.0
    %7589 = vmatmul.mubr.f32.gmra.mxu0 %v7522
    %v7590 = vpop.f32.mrf.mxu0
    %v7591 = vadd.f32 %v7517, %v7590
    %v7592 = vpop.f32.mrf.mxu0
    %7593 = vdwg.mxu0
    %v7594 = vmax.f32 %v7511, 0.0
    %v7595 = vmul.f32 %v7594, %v7512
    %v7597 = vsel %vm7520, %v7595, 0
    %7599 = vmatprep.subr.mxu0 0.0
    %7600 = vmatpush1.msra.mxu0 0.0
    %7601 = vmatprep.subr.mxu0 0.0
    %7602 = vmatpush1.msra.mxu0 0.0
    %7603 = vmatprep.subr.mxu0 0.0
    %7604 = vmatpush1.msra.mxu0 0.0
    %7605 = vmatprep.subr.mxu0 0.0
    %7606 = vmatpush1.msra.mxu0 0.0
    %7607 = vmatprep.subr.mxu0 0.0
    %7608 = vmatpush1.msra.mxu0 0.0
    %7609 = vmatprep.subr.mxu0 0.0
    %7610 = vmatpush1.msra.mxu0 0.0
    %7611 = vmatprep.subr.mxu0 0.0
    %7612 = vmatpush1.msra.mxu0 0.0
    %7613 = vmatprep.subr.mxu0 0.0
    %7614 = vmatpush1.msra.mxu0 0.0
    %7615 = vmatprep.subr.mxu0 0.0
    %7616 = vmatpush1.msra.mxu0 0.0
    %7617 = vmatprep.subr.mxu0 0.0
    %7618 = vmatpush1.msra.mxu0 0.0
    %7619 = vmatprep.subr.mxu0 0.0
    %7620 = vmatpush1.msra.mxu0 0.0
    %7621 = vmatprep.subr.mxu0 0.0
    %7622 = vmatpush1.msra.mxu0 0.0
    %7623 = vmatprep.subr.mxu0 0.0
    %7624 = vmatpush1.msra.mxu0 %v7516
    %7625 = vmatprep.subr.mxu0 0.0
    %7626 = vmatpush1.msra.mxu0 %v7515
    %7627 = vmatprep.subr.mxu0 0.0
    %7628 = vmatpush1.msra.mxu0 %v7514
    %7629 = vmatprep.subr.mxu0 0.0
    %7630 = vmatpush1.msra.mxu0 %v7513
    %7631 = vmatprep.subr.mxu0 0.0
    %7632 = vmatpush2.msra.mxu0 0.0
    %7633 = vmatprep.subr.mxu0 0.0
    %7634 = vmatpush2.msra.mxu0 0.0
    %7635 = vmatprep.subr.mxu0 0.0
    %7636 = vmatpush2.msra.mxu0 0.0
    %7637 = vmatprep.subr.mxu0 0.0
    %7638 = vmatpush2.msra.mxu0 0.0
    %7639 = vmatprep.subr.mxu0 0.0
    %7640 = vmatpush2.msra.mxu0 0.0
    %7641 = vmatprep.subr.mxu0 0.0
    %7642 = vmatpush2.msra.mxu0 0.0
    %7643 = vmatprep.subr.mxu0 0.0
    %7644 = vmatpush2.msra.mxu0 0.0
    %7645 = vmatprep.subr.mxu0 0.0
    %7646 = vmatpush2.msra.mxu0 0.0
    %7647 = vmatprep.subr.mxu0 0.0
    %7648 = vmatpush2.msra.mxu0 0.0
    %7649 = vmatprep.subr.mxu0 0.0
    %7650 = vmatpush2.msra.mxu0 0.0
    %7651 = vmatprep.subr.mxu0 0.0
    %7652 = vmatpush2.msra.mxu0 0.0
    %7653 = vmatprep.subr.mxu0 0.0
    %7654 = vmatpush2.msra.mxu0 0.0
    %7655 = vmatprep.subr.mxu0 0.0
    %7656 = vmatpush2.msra.mxu0 0.0
    %7657 = vmatprep.subr.mxu0 0.0
    %7658 = vmatpush2.msra.mxu0 0.0
    %7659 = vmatprep.subr.mxu0 0.0
    %7660 = vmatpush2.msra.mxu0 0.0
    %7661 = vmatprep.subr.mxu0 0.0
    %7662 = vmatpush2.msra.mxu0 0.0
    %7663 = vmatprep.mubr.f32.mxu0 0.0
    %7664 = vmatmul.mubr.f32.gmra.mxu0 %v7597
    %v7665 = vpop.f32.mrf.mxu0
    %v7666 = vadd.f32 %v7517, %v7665
    %v7667 = vpop.f32.mrf.mxu0
    %7668 = vdwg.mxu0
    %v7670 = vrot.slane %v7666, 7
    %vm7672 = vcmask 1040384
    %v7673 = vsel %vm7672, %v7591, %v7670
    %vm7674 = vcmask 74752
    %7675 = vst.msk [vmem:[#allocation20] sm:$0x3] %vm7674, %v7673
    // Predicated region
    $region102: #{_lambda_.1} parent=1 // pred_check
      _
    $region103: #{_lambda_.1} parent=1 // pred_check_branch
      %7677 = sbr.rel (0) target = $region105
    $region104: #{_lambda_.1} parent=1 // pred_region
      %s7679 = ssub.s32 32, 32
      %7680 = vsyncadd [#allocation4], %s7679
      %s7682 = sshll.u32 [#allocation20], 4
      %s7683 = int_to_ptr.vmem [resolvable:$true] %s7682
      %7685 = dma.vmem_to_hbm [thread:$0]  %s7683, 32, %s14, [#allocation4]
    $region105: #{_lambda_.1} parent=1 // pred_fallthru
      _
    // Predicated region
    $region106: #{_lambda_.1} parent=1 // pred_check
      _
    $region107: #{_lambda_.1} parent=1 // pred_check_branch
      %7687 = sbr.rel (0) target = $region109
    $region108: #{_lambda_.1} parent=1 // pred_region
      %7688 = dma.done [#allocation4], 32
    $region109: #{_lambda_.1} parent=1 // pred_fallthru
      _
    %7689 = vsyncpa [#allocation3], 1
    %7690 = vsyncpa [#allocation6], 1
    %7691 = vsyncpa [#allocation9], 1
    %7692 = vsyncpa [#allocation12], 1
    %7693 = vsyncpa [#allocation15], 1
    %7694 = vsyncpa [#allocation18], 1
    %7695 = vsyncpa [#allocation4], 1

</llo_original>
